<compile_context>
chip_gen: v5e
topology: v5e:2x2
jax: 0.10.0
libtpu: 0.0.40
codegen_flags: <defaults>
</compile_context>

<pallas_src>
import math

import jax
import jax.numpy as jnp
from jax import lax
from jax.experimental import pallas as pl
from jax.experimental.pallas import tpu as pltpu

LANE = 128  # TPU lane width; channels / output features are padded to this.


def _round_up(x, m):
    return (x + m - 1) // m * m


# --------------------------- Pallas kernels ----------------------------------

def _make_fused_conv_kernel(*, n_mid, kh1, kw1, w8, l_in, l_act, h_act, oh, ow):
    """Fused conv1 (kh1 x kw1 valid, via s2d) + n_mid 3x3 pad-1 convs.

    Flat layouts (row width w8, lanes = 128 padded channels):
      input  : (l_in , 128) = (h_in  * w8, 128)  conv1's (already padded) image
      act/out: (l_act, 128) = (oh+2) * w8 rows   padded ring included so the
               next 3x3 conv reads zeros at the border; non-valid positions
               are forced to 0 by an iota mask.
    Tap (i, j) of any layer reads flat position p + (i-1)*w8 + (j-1), realized
    with pltpu.roll (aligned, no masked sublane loads).
    """
    def kernel(*refs):
        if n_mid > 0:
            x_ref, w1_ref, b1_ref, wm_ref, bm_ref, o_ref = refs
        else:
            x_ref, w1_ref, b1_ref, o_ref = refs

        # validity mask of the padded activation layout: rows/cols 1..oh/ow
        y_id = lax.broadcasted_iota(jnp.int32, (h_act, w8, LANE), 0)
        x_id = lax.broadcasted_iota(jnp.int32, (h_act, w8, LANE), 1)
        valid = (y_id >= 1) & (y_id <= oh) & (x_id >= 1) & (x_id <= ow)
        maskf = valid.astype(jnp.float32).reshape(l_act, LANE)

        def tap_conv(x32, l_src, kh, kw, get_w):
            acc = jnp.zeros((l_act, LANE), jnp.float32)
            for i in range(kh):
                for j in range(kw):
                    d = (i - 1) * w8 + (j - 1)      # flat read offset of tap
                    s = (-d) % l_src
                    xr = pltpu.roll(x32, s, 0) if s else x32
                    lhs = xr[:l_act, :] if l_src != l_act else xr
                    acc = acc + jnp.dot(lhs.astype(jnp.bfloat16),
                                        get_w(i * kw + j),
                                        preferred_element_type=jnp.float32)
            return acc

        # ---- conv1 (space-to-depth'd 5x5 valid) ----
        x32 = x_ref[...].astype(jnp.float32)                       # (l_in, 128)
        acc = tap_conv(x32, l_in, kh1, kw1, lambda t: w1_ref[t])
        act = maskf * jnp.maximum(acc + b1_ref[...], 0.0)          # f32

        # ---- mid 3x3 / stride 1 / pad 1 convs ----
        for l in range(n_mid):
            acc = tap_conv(act, l_act, 3, 3, lambda t, l=l: wm_ref[l, t])
            act = maskf * jnp.maximum(acc + bm_ref[l], 0.0)

        o_ref[...] = act.astype(o_ref.dtype)

    return kernel


def _head_kernel(x_ref, wc_ref, bc_ref, wl_ref, bl_ref, o_ref):
    """Fused conv2 (full-image -> 1x1) + bias + ReLU + Flatten + Linear."""
    acc = jnp.dot(x_ref[...], wc_ref[...], preferred_element_type=jnp.float32)
    z = jnp.maximum(acc + bc_ref[...], 0.0)                        # (N, 128) f32
    o_ref[...] = jnp.dot(z, wl_ref[...],
                         preferred_element_type=jnp.float32) + bl_ref[...]


# ---------------------------- layer wrappers ----------------------------------

def fused_conv_stack(x_flat, w1_taps, b1_pad, wm_taps, bm_pad,
                     *, kh1, kw1, w8, h_act, oh, ow):
    """One pallas_call for conv1 + all mid layers, grid = (batch,)."""
    n, l_in, _ = x_flat.shape
    l_act = h_act * w8
    assert w8 % 8 == 0 and l_act <= l_in
    n_mid = 0 if wm_taps is None else wm_taps.shape[0]

    kernel = _make_fused_conv_kernel(n_mid=n_mid, kh1=kh1, kw1=kw1, w8=w8,
                                     l_in=l_in, l_act=l_act, h_act=h_act,
                                     oh=oh, ow=ow)
    in_specs = [
        pl.BlockSpec((None, l_in, LANE), lambda i: (i, 0, 0)),
        pl.BlockSpec((kh1 * kw1, LANE, LANE), lambda i: (0, 0, 0)),
        pl.BlockSpec((1, LANE), lambda i: (0, 0)),
    ]
    args = [x_flat, w1_taps, b1_pad]
    if n_mid > 0:
        in_specs += [
            pl.BlockSpec((n_mid, 9, LANE, LANE), lambda i: (0, 0, 0, 0)),
            pl.BlockSpec((n_mid, 1, LANE), lambda i: (0, 0, 0)),
        ]
        args += [wm_taps, bm_pad]

    return pl.pallas_call(
        kernel,
        out_shape=jax.ShapeDtypeStruct((n, l_act, LANE), jnp.bfloat16),
        grid=(n,),
        in_specs=in_specs,
        out_specs=pl.BlockSpec((None, l_act, LANE), lambda i: (i, 0, 0)),
        compiler_params=pltpu.CompilerParams(
            dimension_semantics=("parallel",)),   # both v7x TCs get an image
    )(*args)


def head_layer(xh_bf16, wc_bf16, bc_f32, wl_f32, bl_f32, n_classes):
    """conv2 + ReLU + Flatten + Linear fused in one tiny Pallas call."""
    n, kp = xh_bf16.shape
    out = pl.pallas_call(
        _head_kernel,
        out_shape=jax.ShapeDtypeStruct((n, LANE), jnp.float32),
        grid=(1,),
        in_specs=[
            pl.BlockSpec((n, kp), lambda i: (0, 0)),
            pl.BlockSpec((kp, LANE), lambda i: (0, 0)),
            pl.BlockSpec((1, LANE), lambda i: (0, 0)),
            pl.BlockSpec((LANE, LANE), lambda i: (0, 0)),
            pl.BlockSpec((1, LANE), lambda i: (0, 0)),
        ],
        out_specs=pl.BlockSpec((n, LANE), lambda i: (0, 0)),
        compiler_params=pltpu.CompilerParams(
            dimension_semantics=("arbitrary",)),
    )(xh_bf16, wc_bf16, bc_f32, wl_f32, bl_f32)
    return out[:, :n_classes]


# --------------------------- weight preparation -------------------------------

def _prep_bias(b):
    return jnp.pad(b.astype(jnp.float32), (0, LANE - b.shape[0])).reshape(1, LANE)


def _prep_conv_weight(w_oihw):
    """(Cout, Cin, kh, kw) -> (kh*kw, 128, 128) bf16, tap order t = i*kw + j."""
    co, ci, kh, kw = w_oihw.shape
    assert ci <= LANE and co <= LANE
    w = jnp.transpose(w_oihw, (2, 3, 1, 0))                   # (kh, kw, ci, co)
    w = jnp.pad(w, ((0, 0), (0, 0), (0, LANE - ci), (0, LANE - co)))
    return w.reshape(kh * kw, LANE, LANE).astype(jnp.bfloat16)


def _prep_conv1_weight_s2d(w_oihw, block):
    """25x25/stride-5 conv weight -> equivalent 5x5/stride-1 weight on the
    space-to-depth(5) input; channel order (di, dj, ci) matches the input."""
    co, ci, k, _ = w_oihw.shape
    kb = k // block                                           # 5
    assert block * block * ci <= LANE and co <= LANE
    w = w_oihw.reshape(co, ci, kb, block, kb, block)          # [co,ci,I,di,J,dj]
    w = jnp.transpose(w, (2, 4, 3, 5, 1, 0))                  # (I,J,di,dj,ci,co)
    w = w.reshape(kb, kb, block * block * ci, co)
    w = jnp.pad(w, ((0, 0), (0, 0),
                    (0, LANE - block * block * ci), (0, LANE - co)))
    return w.reshape(kb * kb, LANE, LANE).astype(jnp.bfloat16)


# ------------------------------- forward --------------------------------------

def hhn_sconvb_forward(params, x_nchw, hyper_x):
    # ---- hypernetwork (tiny, plain XLA) ----
    h = jnp.maximum(params["hyper_w1"] @ hyper_x + params["hyper_b1"], 0.0)
    h = params["hyper_w2"] @ h + params["hyper_b2"]
    alpha = jax.nn.softmax(h, axis=0)                         # (dimensions,)
    comb = lambda s: jnp.tensordot(alpha, s, axes=1)          # sum_d alpha_d*P_d

    w1 = comb(params["w_conv1"]); b1 = comb(params["b_conv1"])
    w2 = comb(params["w_conv2"]); b2 = comb(params["b_conv2"])
    wf = comb(params["w_fc3"]);   bf = comb(params["b_fc3"])
    n_units = w1.shape[0]
    n_classes = wf.shape[0]

    # ---- conv1 input: NCHW -> NHWC, pad 1, space-to-depth(5), pad to lanes ----
    block = 5
    kb = w1.shape[2] // block                                 # 5
    x = jnp.transpose(x_nchw, (0, 2, 3, 1))
    x = jnp.pad(x, ((0, 0), (1, 1), (1, 1), (0, 0)))          # conv padding = 1
    n, hp, wp, c = x.shape
    hs, ws = hp // block, wp // block                         # 19, 19
    x = x.reshape(n, hs, block, ws, block, c)
    x = jnp.transpose(x, (0, 1, 3, 2, 4, 5)).reshape(
        n, hs, ws, block * block * c)                         # (N,19,19,75)
    oh, ow = hs - kb + 1, ws - kb + 1                         # 15, 15
    h_act = oh + 2                                            # padded act rows
    w8 = _round_up(max(ws, ow + 2), 8)                        # common row width
    x = jnp.pad(x, ((0, 0), (0, 0), (0, w8 - ws), (0, LANE - x.shape[-1])))
    x_flat = x.reshape(n, hs * w8, LANE).astype(jnp.bfloat16)

    w1_taps = _prep_conv1_weight_s2d(w1, block)
    b1_pad = _prep_bias(b1)

    n_mid = len(params["w_mid"])
    if n_mid > 0:
        wm_taps = jnp.stack([_prep_conv_weight(comb(wl_)) for wl_ in params["w_mid"]])
        bm_pad = jnp.stack([_prep_bias(comb(bl_)) for bl_ in params["b_mid"]])
    else:
        wm_taps = bm_pad = None

    # ---- fused conv stack (single Pallas launch) ----
    act = fused_conv_stack(x_flat, w1_taps, b1_pad, wm_taps, bm_pad,
                           kh1=kb, kw1=kb, w8=w8, h_act=h_act, oh=oh, ow=ow)
    # extract valid (oh, ow, n_units) region from the padded flat layout
    act = act.reshape(n, h_act, w8, LANE)[:, 1:1 + oh, 1:1 + ow, :n_units]

    # ---- head: conv2 (oh x ow -> 1x1) + ReLU + Flatten + Linear ----
    kh2 = w2.shape[2]                                         # == oh (15)
    xh = act.reshape(n, -1)                                   # (N, oh*ow*U) bf16
    kdim = xh.shape[1]
    kp = _round_up(kdim, LANE)
    xh = jnp.pad(xh, ((0, 0), (0, kp - kdim)))
    wc = jnp.transpose(w2, (2, 3, 1, 0)).reshape(kh2 * kh2 * n_units, n_units)
    wc = jnp.pad(wc, ((0, kp - kdim), (0, LANE - n_units))).astype(jnp.bfloat16)
    wl = jnp.pad(wf.T.astype(jnp.float32),
                 ((0, LANE - n_units), (0, LANE - n_classes)))
    return head_layer(xh, wc, _prep_bias(b2), wl, _prep_bias(bf), n_classes)


# ----------------------------- initialization ----------------------------------

def init_params(key, hin, dimensions, n_layers, n_units, n_channels, n_classes=10):
    keys = iter(jax.random.split(key, 64))
    nk = lambda: next(keys)

    def conv_stack(out_c, in_c, k):
        fan_in = in_c * k * k
        bound = 1.0 / math.sqrt(fan_in)   # kaiming_uniform_(a=sqrt(5)) bound
        w = jax.random.uniform(nk(), (dimensions, out_c, in_c, k, k),
                               jnp.float32, -bound, bound)
        b = jax.random.uniform(nk(), (dimensions, out_c), jnp.float32, -bound, bound)
        return w, b

    def linear_stack(out_f, in_f):
        bound = 1.0 / math.sqrt(in_f)
        w = jax.random.uniform(nk(), (dimensions, out_f, in_f),
                               jnp.float32, -bound, bound)
        b = jax.random.uniform(nk(), (dimensions, out_f), jnp.float32, -bound, bound)
        return w, b

    p = {}
    bh1 = 1.0 / math.sqrt(hin)
    bh2 = 1.0 / math.sqrt(64)
    p["hyper_w1"] = jax.random.uniform(nk(), (64, hin), jnp.float32, -bh1, bh1)
    p["hyper_b1"] = jax.random.uniform(nk(), (64,), jnp.float32, -bh1, bh1)
    p["hyper_w2"] = jax.random.uniform(nk(), (dimensions, 64), jnp.float32, -bh2, bh2)
    p["hyper_b2"] = jax.random.uniform(nk(), (dimensions,), jnp.float32, -bh2, bh2)

    p["w_conv1"], p["b_conv1"] = conv_stack(n_units, n_channels, 25)
    p["w_mid"], p["b_mid"] = [], []
    for _ in range(n_layers - 2):
        w, b = conv_stack(n_units, n_units, 3)
        p["w_mid"].append(w); p["b_mid"].append(b)
    p["w_conv2"], p["b_conv2"] = conv_stack(n_units, n_units, 15)
    p["w_fc3"], p["b_fc3"] = linear_stack(n_classes, n_units)
    return p


# ---------------------------------- demo ---------------------------------------

if __name__ == "__main__":
    hin, dimensions = 6, 4
    n_layers, n_units, n_channels, n_classes = 3, 8, 3, 10
    # hw=93: (93 + 2 - 25)//5 + 1 = 15 -> 15x15 feature map -> conv2(15x15) -> 1x1,
    # which the Flatten -> Linear(n_units, n_classes) of the reference requires.
    batch, hw = 2, 93

    key = jax.random.PRNGKey(0)
    k_params, k_x, k_h = jax.random.split(key, 3)
    params = init_params(k_params, hin, dimensions, n_layers, n_units,
                         n_channels, n_classes)
    x = jax.random.normal(k_x, (batch, n_channels, hw, hw), jnp.float32)
    hyper_x = jax.random.normal(k_h, (hin,), jnp.float32)

    logits = jax.jit(hhn_sconvb_forward)(params, x, hyper_x)
    jax.block_until_ready(logits)
    assert logits.shape == (batch, n_classes)
    assert bool(jnp.all(jnp.isfinite(logits)))
    print("KERNEL_OK")
</pallas_src>

<mosaic_0001>
module attributes {stable_mosaic.version = 11 : i64} {
  func.func @kernel(%arg0: i32, %arg1: memref<1x456x128xbf16, #tpu.memory_space<vmem>>, %arg2: memref<25x128x128xbf16, #tpu.memory_space<vmem>>, %arg3: memref<1x128xf32, #tpu.memory_space<vmem>>, %arg4: memref<1x9x128x128xbf16, #tpu.memory_space<vmem>>, %arg5: memref<1x1x128xf32, #tpu.memory_space<vmem>>, %arg6: memref<1x408x128xbf16, #tpu.memory_space<vmem>>) attributes {dimension_semantics = [#tpu.dimension_semantics<parallel>], iteration_bounds = array<i64: 2>, scalar_prefetch = 0 : i64, scratch_operands = 0 : i64, tpu.core_type = #tpu.core_type<tc>, window_params = [{transform_indices = @transform_0, window_bounds = array<i64: 1, 456, 128>}, {pipeline_mode = #tpu.pipeline_mode<synchronous>, transform_indices = @transform_1, window_bounds = array<i64: 25, 128, 128>}, {pipeline_mode = #tpu.pipeline_mode<synchronous>, transform_indices = @transform_2, window_bounds = array<i64: 1, 128>}, {pipeline_mode = #tpu.pipeline_mode<synchronous>, transform_indices = @transform_3, window_bounds = array<i64: 1, 9, 128, 128>}, {pipeline_mode = #tpu.pipeline_mode<synchronous>, transform_indices = @transform_4, window_bounds = array<i64: 1, 1, 128>}, {transform_indices = @transform_5, window_bounds = array<i64: 1, 408, 128>}]} {
    %0 = tpu.iota {dimensions = array<i32: 0>} : vector<17x24x128xi32>
    %1 = tpu.iota {dimensions = array<i32: 1>} : vector<17x24x128xi32>
    %c1_i32 = arith.constant 1 : i32
    %2 = vector.broadcast %c1_i32 : i32 to vector<17x24x128xi32>
    %3 = arith.cmpi sge, %0, %2 : vector<17x24x128xi32>
    %c15_i32 = arith.constant 15 : i32
    %4 = vector.broadcast %c15_i32 : i32 to vector<17x24x128xi32>
    %5 = arith.cmpi sle, %0, %4 : vector<17x24x128xi32>
    %6 = arith.andi %3, %5 : vector<17x24x128xi1>
    %c1_i32_0 = arith.constant 1 : i32
    %7 = vector.broadcast %c1_i32_0 : i32 to vector<17x24x128xi32>
    %8 = arith.cmpi sge, %1, %7 : vector<17x24x128xi32>
    %9 = arith.andi %6, %8 : vector<17x24x128xi1>
    %c15_i32_1 = arith.constant 15 : i32
    %10 = vector.broadcast %c15_i32_1 : i32 to vector<17x24x128xi32>
    %11 = arith.cmpi sle, %1, %10 : vector<17x24x128xi32>
    %12 = arith.andi %9, %11 : vector<17x24x128xi1>
    %13 = arith.extui %12 : vector<17x24x128xi1> to vector<17x24x128xi32>
    %14 = arith.sitofp %13 : vector<17x24x128xi32> to vector<17x24x128xf32>
    %15 = vector.shape_cast %14 : vector<17x24x128xf32> to vector<408x128xf32>
    %c0 = arith.constant 0 : index
    %c0_2 = arith.constant 0 : index
    %c0_3 = arith.constant 0 : index
    %16 = vector.load %arg1[%c0, %c0_2, %c0_3] : memref<1x456x128xbf16, #tpu.memory_space<vmem>>, vector<1x456x128xbf16>
    %17 = vector.shape_cast %16 : vector<1x456x128xbf16> to vector<456x128xbf16>
    %18 = arith.extf %17 : vector<456x128xbf16> to vector<456x128xf32>
    %cst = arith.constant 0.000000e+00 : f32
    %19 = vector.broadcast %cst : f32 to vector<408x128xf32>
    %c25_i32 = arith.constant 25 : i32
    %20 = tpu.dynamic_rotate %18 by %c25_i32 dim 0 : vector<456x128xf32>, i32 -> vector<456x128xf32>
    %21 = vector.extract_strided_slice %20 {offsets = [0, 0], sizes = [408, 128], strides = [1, 1]} : vector<456x128xf32> to vector<408x128xf32>
    %22 = arith.truncf %21 : vector<408x128xf32> to vector<408x128xbf16>
    %c0_4 = arith.constant 0 : index
    %c0_5 = arith.constant 0 : index
    %c0_6 = arith.constant 0 : index
    %23 = vector.load %arg2[%c0_4, %c0_5, %c0_6] : memref<25x128x128xbf16, #tpu.memory_space<vmem>>, vector<1x128x128xbf16>
    %24 = vector.shape_cast %23 : vector<1x128x128xbf16> to vector<128x128xbf16>
    %cst_7 = arith.constant dense<0.000000e+00> : vector<408x128xf32>
    %25 = tpu.matmul %22, %24, %cst_7 {dimension_numbers = #tpu.dot_dimension_numbers<[1], [0], [0], [1], [0, 0, 1, 1], [], []>} : vector<408x128xbf16>, vector<128x128xbf16>, vector<408x128xf32> -> vector<408x128xf32>
    %26 = arith.addf %19, %25 : vector<408x128xf32>
    %c24_i32 = arith.constant 24 : i32
    %27 = tpu.dynamic_rotate %18 by %c24_i32 dim 0 : vector<456x128xf32>, i32 -> vector<456x128xf32>
    %28 = vector.extract_strided_slice %27 {offsets = [0, 0], sizes = [408, 128], strides = [1, 1]} : vector<456x128xf32> to vector<408x128xf32>
    %29 = arith.truncf %28 : vector<408x128xf32> to vector<408x128xbf16>
    %c1 = arith.constant 1 : index
    %c0_8 = arith.constant 0 : index
    %c0_9 = arith.constant 0 : index
    %30 = vector.load %arg2[%c1, %c0_8, %c0_9] : memref<25x128x128xbf16, #tpu.memory_space<vmem>>, vector<1x128x128xbf16>
    %31 = vector.shape_cast %30 : vector<1x128x128xbf16> to vector<128x128xbf16>
    %cst_10 = arith.constant dense<0.000000e+00> : vector<408x128xf32>
    %32 = tpu.matmul %29, %31, %cst_10 {dimension_numbers = #tpu.dot_dimension_numbers<[1], [0], [0], [1], [0, 0, 1, 1], [], []>} : vector<408x128xbf16>, vector<128x128xbf16>, vector<408x128xf32> -> vector<408x128xf32>
    %33 = arith.addf %26, %32 : vector<408x128xf32>
    %c23_i32 = arith.constant 23 : i32
    %34 = tpu.dynamic_rotate %18 by %c23_i32 dim 0 : vector<456x128xf32>, i32 -> vector<456x128xf32>
    %35 = vector.extract_strided_slice %34 {offsets = [0, 0], sizes = [408, 128], strides = [1, 1]} : vector<456x128xf32> to vector<408x128xf32>
    %36 = arith.truncf %35 : vector<408x128xf32> to vector<408x128xbf16>
    %c2 = arith.constant 2 : index
    %c0_11 = arith.constant 0 : index
    %c0_12 = arith.constant 0 : index
    %37 = vector.load %arg2[%c2, %c0_11, %c0_12] : memref<25x128x128xbf16, #tpu.memory_space<vmem>>, vector<1x128x128xbf16>
    %38 = vector.shape_cast %37 : vector<1x128x128xbf16> to vector<128x128xbf16>
    %cst_13 = arith.constant dense<0.000000e+00> : vector<408x128xf32>
    %39 = tpu.matmul %36, %38, %cst_13 {dimension_numbers = #tpu.dot_dimension_numbers<[1], [0], [0], [1], [0, 0, 1, 1], [], []>} : vector<408x128xbf16>, vector<128x128xbf16>, vector<408x128xf32> -> vector<408x128xf32>
    %40 = arith.addf %33, %39 : vector<408x128xf32>
    %c22_i32 = arith.constant 22 : i32
    %41 = tpu.dynamic_rotate %18 by %c22_i32 dim 0 : vector<456x128xf32>, i32 -> vector<456x128xf32>
    %42 = vector.extract_strided_slice %41 {offsets = [0, 0], sizes = [408, 128], strides = [1, 1]} : vector<456x128xf32> to vector<408x128xf32>
    %43 = arith.truncf %42 : vector<408x128xf32> to vector<408x128xbf16>
    %c3 = arith.constant 3 : index
    %c0_14 = arith.constant 0 : index
    %c0_15 = arith.constant 0 : index
    %44 = vector.load %arg2[%c3, %c0_14, %c0_15] : memref<25x128x128xbf16, #tpu.memory_space<vmem>>, vector<1x128x128xbf16>
    %45 = vector.shape_cast %44 : vector<1x128x128xbf16> to vector<128x128xbf16>
    %cst_16 = arith.constant dense<0.000000e+00> : vector<408x128xf32>
    %46 = tpu.matmul %43, %45, %cst_16 {dimension_numbers = #tpu.dot_dimension_numbers<[1], [0], [0], [1], [0, 0, 1, 1], [], []>} : vector<408x128xbf16>, vector<128x128xbf16>, vector<408x128xf32> -> vector<408x128xf32>
    %47 = arith.addf %40, %46 : vector<408x128xf32>
    %c21_i32 = arith.constant 21 : i32
    %48 = tpu.dynamic_rotate %18 by %c21_i32 dim 0 : vector<456x128xf32>, i32 -> vector<456x128xf32>
    %49 = vector.extract_strided_slice %48 {offsets = [0, 0], sizes = [408, 128], strides = [1, 1]} : vector<456x128xf32> to vector<408x128xf32>
    %50 = arith.truncf %49 : vector<408x128xf32> to vector<408x128xbf16>
    %c4 = arith.constant 4 : index
    %c0_17 = arith.constant 0 : index
    %c0_18 = arith.constant 0 : index
    %51 = vector.load %arg2[%c4, %c0_17, %c0_18] : memref<25x128x128xbf16, #tpu.memory_space<vmem>>, vector<1x128x128xbf16>
    %52 = vector.shape_cast %51 : vector<1x128x128xbf16> to vector<128x128xbf16>
    %cst_19 = arith.constant dense<0.000000e+00> : vector<408x128xf32>
    %53 = tpu.matmul %50, %52, %cst_19 {dimension_numbers = #tpu.dot_dimension_numbers<[1], [0], [0], [1], [0, 0, 1, 1], [], []>} : vector<408x128xbf16>, vector<128x128xbf16>, vector<408x128xf32> -> vector<408x128xf32>
    %54 = arith.addf %47, %53 : vector<408x128xf32>
    %c1_i32_20 = arith.constant 1 : i32
    %55 = tpu.dynamic_rotate %18 by %c1_i32_20 dim 0 : vector<456x128xf32>, i32 -> vector<456x128xf32>
    %56 = vector.extract_strided_slice %55 {offsets = [0, 0], sizes = [408, 128], strides = [1, 1]} : vector<456x128xf32> to vector<408x128xf32>
    %57 = arith.truncf %56 : vector<408x128xf32> to vector<408x128xbf16>
    %c5 = arith.constant 5 : index
    %c0_21 = arith.constant 0 : index
    %c0_22 = arith.constant 0 : index
    %58 = vector.load %arg2[%c5, %c0_21, %c0_22] : memref<25x128x128xbf16, #tpu.memory_space<vmem>>, vector<1x128x128xbf16>
    %59 = vector.shape_cast %58 : vector<1x128x128xbf16> to vector<128x128xbf16>
    %cst_23 = arith.constant dense<0.000000e+00> : vector<408x128xf32>
    %60 = tpu.matmul %57, %59, %cst_23 {dimension_numbers = #tpu.dot_dimension_numbers<[1], [0], [0], [1], [0, 0, 1, 1], [], []>} : vector<408x128xbf16>, vector<128x128xbf16>, vector<408x128xf32> -> vector<408x128xf32>
    %61 = arith.addf %54, %60 : vector<408x128xf32>
    %62 = vector.extract_strided_slice %18 {offsets = [0, 0], sizes = [408, 128], strides = [1, 1]} : vector<456x128xf32> to vector<408x128xf32>
    %63 = arith.truncf %62 : vector<408x128xf32> to vector<408x128xbf16>
    %c6 = arith.constant 6 : index
    %c0_24 = arith.constant 0 : index
    %c0_25 = arith.constant 0 : index
    %64 = vector.load %arg2[%c6, %c0_24, %c0_25] : memref<25x128x128xbf16, #tpu.memory_space<vmem>>, vector<1x128x128xbf16>
    %65 = vector.shape_cast %64 : vector<1x128x128xbf16> to vector<128x128xbf16>
    %cst_26 = arith.constant dense<0.000000e+00> : vector<408x128xf32>
    %66 = tpu.matmul %63, %65, %cst_26 {dimension_numbers = #tpu.dot_dimension_numbers<[1], [0], [0], [1], [0, 0, 1, 1], [], []>} : vector<408x128xbf16>, vector<128x128xbf16>, vector<408x128xf32> -> vector<408x128xf32>
    %67 = arith.addf %61, %66 : vector<408x128xf32>
    %c455_i32 = arith.constant 455 : i32
    %68 = tpu.dynamic_rotate %18 by %c455_i32 dim 0 : vector<456x128xf32>, i32 -> vector<456x128xf32>
    %69 = vector.extract_strided_slice %68 {offsets = [0, 0], sizes = [408, 128], strides = [1, 1]} : vector<456x128xf32> to vector<408x128xf32>
    %70 = arith.truncf %69 : vector<408x128xf32> to vector<408x128xbf16>
    %c7 = arith.constant 7 : index
    %c0_27 = arith.constant 0 : index
    %c0_28 = arith.constant 0 : index
    %71 = vector.load %arg2[%c7, %c0_27, %c0_28] : memref<25x128x128xbf16, #tpu.memory_space<vmem>>, vector<1x128x128xbf16>
    %72 = vector.shape_cast %71 : vector<1x128x128xbf16> to vector<128x128xbf16>
    %cst_29 = arith.constant dense<0.000000e+00> : vector<408x128xf32>
    %73 = tpu.matmul %70, %72, %cst_29 {dimension_numbers = #tpu.dot_dimension_numbers<[1], [0], [0], [1], [0, 0, 1, 1], [], []>} : vector<408x128xbf16>, vector<128x128xbf16>, vector<408x128xf32> -> vector<408x128xf32>
    %74 = arith.addf %67, %73 : vector<408x128xf32>
    %c454_i32 = arith.constant 454 : i32
    %75 = tpu.dynamic_rotate %18 by %c454_i32 dim 0 : vector<456x128xf32>, i32 -> vector<456x128xf32>
    %76 = vector.extract_strided_slice %75 {offsets = [0, 0], sizes = [408, 128], strides = [1, 1]} : vector<456x128xf32> to vector<408x128xf32>
    %77 = arith.truncf %76 : vector<408x128xf32> to vector<408x128xbf16>
    %c8 = arith.constant 8 : index
    %c0_30 = arith.constant 0 : index
    %c0_31 = arith.constant 0 : index
    %78 = vector.load %arg2[%c8, %c0_30, %c0_31] : memref<25x128x128xbf16, #tpu.memory_space<vmem>>, vector<1x128x128xbf16>
    %79 = vector.shape_cast %78 : vector<1x128x128xbf16> to vector<128x128xbf16>
    %cst_32 = arith.constant dense<0.000000e+00> : vector<408x128xf32>
    %80 = tpu.matmul %77, %79, %cst_32 {dimension_numbers = #tpu.dot_dimension_numbers<[1], [0], [0], [1], [0, 0, 1, 1], [], []>} : vector<408x128xbf16>, vector<128x128xbf16>, vector<408x128xf32> -> vector<408x128xf32>
    %81 = arith.addf %74, %80 : vector<408x128xf32>
    %c453_i32 = arith.constant 453 : i32
    %82 = tpu.dynamic_rotate %18 by %c453_i32 dim 0 : vector<456x128xf32>, i32 -> vector<456x128xf32>
    %83 = vector.extract_strided_slice %82 {offsets = [0, 0], sizes = [408, 128], strides = [1, 1]} : vector<456x128xf32> to vector<408x128xf32>
    %84 = arith.truncf %83 : vector<408x128xf32> to vector<408x128xbf16>
    %c9 = arith.constant 9 : index
    %c0_33 = arith.constant 0 : index
    %c0_34 = arith.constant 0 : index
    %85 = vector.load %arg2[%c9, %c0_33, %c0_34] : memref<25x128x128xbf16, #tpu.memory_space<vmem>>, vector<1x128x128xbf16>
    %86 = vector.shape_cast %85 : vector<1x128x128xbf16> to vector<128x128xbf16>
    %cst_35 = arith.constant dense<0.000000e+00> : vector<408x128xf32>
    %87 = tpu.matmul %84, %86, %cst_35 {dimension_numbers = #tpu.dot_dimension_numbers<[1], [0], [0], [1], [0, 0, 1, 1], [], []>} : vector<408x128xbf16>, vector<128x128xbf16>, vector<408x128xf32> -> vector<408x128xf32>
    %88 = arith.addf %81, %87 : vector<408x128xf32>
    %c433_i32 = arith.constant 433 : i32
    %89 = tpu.dynamic_rotate %18 by %c433_i32 dim 0 : vector<456x128xf32>, i32 -> vector<456x128xf32>
    %90 = vector.extract_strided_slice %89 {offsets = [0, 0], sizes = [408, 128], strides = [1, 1]} : vector<456x128xf32> to vector<408x128xf32>
    %91 = arith.truncf %90 : vector<408x128xf32> to vector<408x128xbf16>
    %c10 = arith.constant 10 : index
    %c0_36 = arith.constant 0 : index
    %c0_37 = arith.constant 0 : index
    %92 = vector.load %arg2[%c10, %c0_36, %c0_37] : memref<25x128x128xbf16, #tpu.memory_space<vmem>>, vector<1x128x128xbf16>
    %93 = vector.shape_cast %92 : vector<1x128x128xbf16> to vector<128x128xbf16>
    %cst_38 = arith.constant dense<0.000000e+00> : vector<408x128xf32>
    %94 = tpu.matmul %91, %93, %cst_38 {dimension_numbers = #tpu.dot_dimension_numbers<[1], [0], [0], [1], [0, 0, 1, 1], [], []>} : vector<408x128xbf16>, vector<128x128xbf16>, vector<408x128xf32> -> vector<408x128xf32>
    %95 = arith.addf %88, %94 : vector<408x128xf32>
    %c432_i32 = arith.constant 432 : i32
    %96 = tpu.dynamic_rotate %18 by %c432_i32 dim 0 : vector<456x128xf32>, i32 -> vector<456x128xf32>
    %97 = vector.extract_strided_slice %96 {offsets = [0, 0], sizes = [408, 128], strides = [1, 1]} : vector<456x128xf32> to vector<408x128xf32>
    %98 = arith.truncf %97 : vector<408x128xf32> to vector<408x128xbf16>
    %c11 = arith.constant 11 : index
    %c0_39 = arith.constant 0 : index
    %c0_40 = arith.constant 0 : index
    %99 = vector.load %arg2[%c11, %c0_39, %c0_40] : memref<25x128x128xbf16, #tpu.memory_space<vmem>>, vector<1x128x128xbf16>
    %100 = vector.shape_cast %99 : vector<1x128x128xbf16> to vector<128x128xbf16>
    %cst_41 = arith.constant dense<0.000000e+00> : vector<408x128xf32>
    %101 = tpu.matmul %98, %100, %cst_41 {dimension_numbers = #tpu.dot_dimension_numbers<[1], [0], [0], [1], [0, 0, 1, 1], [], []>} : vector<408x128xbf16>, vector<128x128xbf16>, vector<408x128xf32> -> vector<408x128xf32>
    %102 = arith.addf %95, %101 : vector<408x128xf32>
    %c431_i32 = arith.constant 431 : i32
    %103 = tpu.dynamic_rotate %18 by %c431_i32 dim 0 : vector<456x128xf32>, i32 -> vector<456x128xf32>
    %104 = vector.extract_strided_slice %103 {offsets = [0, 0], sizes = [408, 128], strides = [1, 1]} : vector<456x128xf32> to vector<408x128xf32>
    %105 = arith.truncf %104 : vector<408x128xf32> to vector<408x128xbf16>
    %c12 = arith.constant 12 : index
    %c0_42 = arith.constant 0 : index
    %c0_43 = arith.constant 0 : index
    %106 = vector.load %arg2[%c12, %c0_42, %c0_43] : memref<25x128x128xbf16, #tpu.memory_space<vmem>>, vector<1x128x128xbf16>
    %107 = vector.shape_cast %106 : vector<1x128x128xbf16> to vector<128x128xbf16>
    %cst_44 = arith.constant dense<0.000000e+00> : vector<408x128xf32>
    %108 = tpu.matmul %105, %107, %cst_44 {dimension_numbers = #tpu.dot_dimension_numbers<[1], [0], [0], [1], [0, 0, 1, 1], [], []>} : vector<408x128xbf16>, vector<128x128xbf16>, vector<408x128xf32> -> vector<408x128xf32>
    %109 = arith.addf %102, %108 : vector<408x128xf32>
    %c430_i32 = arith.constant 430 : i32
    %110 = tpu.dynamic_rotate %18 by %c430_i32 dim 0 : vector<456x128xf32>, i32 -> vector<456x128xf32>
    %111 = vector.extract_strided_slice %110 {offsets = [0, 0], sizes = [408, 128], strides = [1, 1]} : vector<456x128xf32> to vector<408x128xf32>
    %112 = arith.truncf %111 : vector<408x128xf32> to vector<408x128xbf16>
    %c13 = arith.constant 13 : index
    %c0_45 = arith.constant 0 : index
    %c0_46 = arith.constant 0 : index
    %113 = vector.load %arg2[%c13, %c0_45, %c0_46] : memref<25x128x128xbf16, #tpu.memory_space<vmem>>, vector<1x128x128xbf16>
    %114 = vector.shape_cast %113 : vector<1x128x128xbf16> to vector<128x128xbf16>
    %cst_47 = arith.constant dense<0.000000e+00> : vector<408x128xf32>
    %115 = tpu.matmul %112, %114, %cst_47 {dimension_numbers = #tpu.dot_dimension_numbers<[1], [0], [0], [1], [0, 0, 1, 1], [], []>} : vector<408x128xbf16>, vector<128x128xbf16>, vector<408x128xf32> -> vector<408x128xf32>
    %116 = arith.addf %109, %115 : vector<408x128xf32>
    %c429_i32 = arith.constant 429 : i32
    %117 = tpu.dynamic_rotate %18 by %c429_i32 dim 0 : vector<456x128xf32>, i32 -> vector<456x128xf32>
    %118 = vector.extract_strided_slice %117 {offsets = [0, 0], sizes = [408, 128], strides = [1, 1]} : vector<456x128xf32> to vector<408x128xf32>
    %119 = arith.truncf %118 : vector<408x128xf32> to vector<408x128xbf16>
    %c14 = arith.constant 14 : index
    %c0_48 = arith.constant 0 : index
    %c0_49 = arith.constant 0 : index
    %120 = vector.load %arg2[%c14, %c0_48, %c0_49] : memref<25x128x128xbf16, #tpu.memory_space<vmem>>, vector<1x128x128xbf16>
    %121 = vector.shape_cast %120 : vector<1x128x128xbf16> to vector<128x128xbf16>
    %cst_50 = arith.constant dense<0.000000e+00> : vector<408x128xf32>
    %122 = tpu.matmul %119, %121, %cst_50 {dimension_numbers = #tpu.dot_dimension_numbers<[1], [0], [0], [1], [0, 0, 1, 1], [], []>} : vector<408x128xbf16>, vector<128x128xbf16>, vector<408x128xf32> -> vector<408x128xf32>
    %123 = arith.addf %116, %122 : vector<408x128xf32>
    %c409_i32 = arith.constant 409 : i32
    %124 = tpu.dynamic_rotate %18 by %c409_i32 dim 0 : vector<456x128xf32>, i32 -> vector<456x128xf32>
    %125 = vector.extract_strided_slice %124 {offsets = [0, 0], sizes = [408, 128], strides = [1, 1]} : vector<456x128xf32> to vector<408x128xf32>
    %126 = arith.truncf %125 : vector<408x128xf32> to vector<408x128xbf16>
    %c15 = arith.constant 15 : index
    %c0_51 = arith.constant 0 : index
    %c0_52 = arith.constant 0 : index
    %127 = vector.load %arg2[%c15, %c0_51, %c0_52] : memref<25x128x128xbf16, #tpu.memory_space<vmem>>, vector<1x128x128xbf16>
    %128 = vector.shape_cast %127 : vector<1x128x128xbf16> to vector<128x128xbf16>
    %cst_53 = arith.constant dense<0.000000e+00> : vector<408x128xf32>
    %129 = tpu.matmul %126, %128, %cst_53 {dimension_numbers = #tpu.dot_dimension_numbers<[1], [0], [0], [1], [0, 0, 1, 1], [], []>} : vector<408x128xbf16>, vector<128x128xbf16>, vector<408x128xf32> -> vector<408x128xf32>
    %130 = arith.addf %123, %129 : vector<408x128xf32>
    %c408_i32 = arith.constant 408 : i32
    %131 = tpu.dynamic_rotate %18 by %c408_i32 dim 0 : vector<456x128xf32>, i32 -> vector<456x128xf32>
    %132 = vector.extract_strided_slice %131 {offsets = [0, 0], sizes = [408, 128], strides = [1, 1]} : vector<456x128xf32> to vector<408x128xf32>
    %133 = arith.truncf %132 : vector<408x128xf32> to vector<408x128xbf16>
    %c16 = arith.constant 16 : index
    %c0_54 = arith.constant 0 : index
    %c0_55 = arith.constant 0 : index
    %134 = vector.load %arg2[%c16, %c0_54, %c0_55] : memref<25x128x128xbf16, #tpu.memory_space<vmem>>, vector<1x128x128xbf16>
    %135 = vector.shape_cast %134 : vector<1x128x128xbf16> to vector<128x128xbf16>
    %cst_56 = arith.constant dense<0.000000e+00> : vector<408x128xf32>
    %136 = tpu.matmul %133, %135, %cst_56 {dimension_numbers = #tpu.dot_dimension_numbers<[1], [0], [0], [1], [0, 0, 1, 1], [], []>} : vector<408x128xbf16>, vector<128x128xbf16>, vector<408x128xf32> -> vector<408x128xf32>
    %137 = arith.addf %130, %136 : vector<408x128xf32>
    %c407_i32 = arith.constant 407 : i32
    %138 = tpu.dynamic_rotate %18 by %c407_i32 dim 0 : vector<456x128xf32>, i32 -> vector<456x128xf32>
    %139 = vector.extract_strided_slice %138 {offsets = [0, 0], sizes = [408, 128], strides = [1, 1]} : vector<456x128xf32> to vector<408x128xf32>
    %140 = arith.truncf %139 : vector<408x128xf32> to vector<408x128xbf16>
    %c17 = arith.constant 17 : index
    %c0_57 = arith.constant 0 : index
    %c0_58 = arith.constant 0 : index
    %141 = vector.load %arg2[%c17, %c0_57, %c0_58] : memref<25x128x128xbf16, #tpu.memory_space<vmem>>, vector<1x128x128xbf16>
    %142 = vector.shape_cast %141 : vector<1x128x128xbf16> to vector<128x128xbf16>
    %cst_59 = arith.constant dense<0.000000e+00> : vector<408x128xf32>
    %143 = tpu.matmul %140, %142, %cst_59 {dimension_numbers = #tpu.dot_dimension_numbers<[1], [0], [0], [1], [0, 0, 1, 1], [], []>} : vector<408x128xbf16>, vector<128x128xbf16>, vector<408x128xf32> -> vector<408x128xf32>
    %144 = arith.addf %137, %143 : vector<408x128xf32>
    %c406_i32 = arith.constant 406 : i32
    %145 = tpu.dynamic_rotate %18 by %c406_i32 dim 0 : vector<456x128xf32>, i32 -> vector<456x128xf32>
    %146 = vector.extract_strided_slice %145 {offsets = [0, 0], sizes = [408, 128], strides = [1, 1]} : vector<456x128xf32> to vector<408x128xf32>
    %147 = arith.truncf %146 : vector<408x128xf32> to vector<408x128xbf16>
    %c18 = arith.constant 18 : index
    %c0_60 = arith.constant 0 : index
    %c0_61 = arith.constant 0 : index
    %148 = vector.load %arg2[%c18, %c0_60, %c0_61] : memref<25x128x128xbf16, #tpu.memory_space<vmem>>, vector<1x128x128xbf16>
    %149 = vector.shape_cast %148 : vector<1x128x128xbf16> to vector<128x128xbf16>
    %cst_62 = arith.constant dense<0.000000e+00> : vector<408x128xf32>
    %150 = tpu.matmul %147, %149, %cst_62 {dimension_numbers = #tpu.dot_dimension_numbers<[1], [0], [0], [1], [0, 0, 1, 1], [], []>} : vector<408x128xbf16>, vector<128x128xbf16>, vector<408x128xf32> -> vector<408x128xf32>
    %151 = arith.addf %144, %150 : vector<408x128xf32>
    %c405_i32 = arith.constant 405 : i32
    %152 = tpu.dynamic_rotate %18 by %c405_i32 dim 0 : vector<456x128xf32>, i32 -> vector<456x128xf32>
    %153 = vector.extract_strided_slice %152 {offsets = [0, 0], sizes = [408, 128], strides = [1, 1]} : vector<456x128xf32> to vector<408x128xf32>
    %154 = arith.truncf %153 : vector<408x128xf32> to vector<408x128xbf16>
    %c19 = arith.constant 19 : index
    %c0_63 = arith.constant 0 : index
    %c0_64 = arith.constant 0 : index
    %155 = vector.load %arg2[%c19, %c0_63, %c0_64] : memref<25x128x128xbf16, #tpu.memory_space<vmem>>, vector<1x128x128xbf16>
    %156 = vector.shape_cast %155 : vector<1x128x128xbf16> to vector<128x128xbf16>
    %cst_65 = arith.constant dense<0.000000e+00> : vector<408x128xf32>
    %157 = tpu.matmul %154, %156, %cst_65 {dimension_numbers = #tpu.dot_dimension_numbers<[1], [0], [0], [1], [0, 0, 1, 1], [], []>} : vector<408x128xbf16>, vector<128x128xbf16>, vector<408x128xf32> -> vector<408x128xf32>
    %158 = arith.addf %151, %157 : vector<408x128xf32>
    %c385_i32 = arith.constant 385 : i32
    %159 = tpu.dynamic_rotate %18 by %c385_i32 dim 0 : vector<456x128xf32>, i32 -> vector<456x128xf32>
    %160 = vector.extract_strided_slice %159 {offsets = [0, 0], sizes = [408, 128], strides = [1, 1]} : vector<456x128xf32> to vector<408x128xf32>
    %161 = arith.truncf %160 : vector<408x128xf32> to vector<408x128xbf16>
    %c20 = arith.constant 20 : index
    %c0_66 = arith.constant 0 : index
    %c0_67 = arith.constant 0 : index
    %162 = vector.load %arg2[%c20, %c0_66, %c0_67] : memref<25x128x128xbf16, #tpu.memory_space<vmem>>, vector<1x128x128xbf16>
    %163 = vector.shape_cast %162 : vector<1x128x128xbf16> to vector<128x128xbf16>
    %cst_68 = arith.constant dense<0.000000e+00> : vector<408x128xf32>
    %164 = tpu.matmul %161, %163, %cst_68 {dimension_numbers = #tpu.dot_dimension_numbers<[1], [0], [0], [1], [0, 0, 1, 1], [], []>} : vector<408x128xbf16>, vector<128x128xbf16>, vector<408x128xf32> -> vector<408x128xf32>
    %165 = arith.addf %158, %164 : vector<408x128xf32>
    %c384_i32 = arith.constant 384 : i32
    %166 = tpu.dynamic_rotate %18 by %c384_i32 dim 0 : vector<456x128xf32>, i32 -> vector<456x128xf32>
    %167 = vector.extract_strided_slice %166 {offsets = [0, 0], sizes = [408, 128], strides = [1, 1]} : vector<456x128xf32> to vector<408x128xf32>
    %168 = arith.truncf %167 : vector<408x128xf32> to vector<408x128xbf16>
    %c21 = arith.constant 21 : index
    %c0_69 = arith.constant 0 : index
    %c0_70 = arith.constant 0 : index
    %169 = vector.load %arg2[%c21, %c0_69, %c0_70] : memref<25x128x128xbf16, #tpu.memory_space<vmem>>, vector<1x128x128xbf16>
    %170 = vector.shape_cast %169 : vector<1x128x128xbf16> to vector<128x128xbf16>
    %cst_71 = arith.constant dense<0.000000e+00> : vector<408x128xf32>
    %171 = tpu.matmul %168, %170, %cst_71 {dimension_numbers = #tpu.dot_dimension_numbers<[1], [0], [0], [1], [0, 0, 1, 1], [], []>} : vector<408x128xbf16>, vector<128x128xbf16>, vector<408x128xf32> -> vector<408x128xf32>
    %172 = arith.addf %165, %171 : vector<408x128xf32>
    %c383_i32 = arith.constant 383 : i32
    %173 = tpu.dynamic_rotate %18 by %c383_i32 dim 0 : vector<456x128xf32>, i32 -> vector<456x128xf32>
    %174 = vector.extract_strided_slice %173 {offsets = [0, 0], sizes = [408, 128], strides = [1, 1]} : vector<456x128xf32> to vector<408x128xf32>
    %175 = arith.truncf %174 : vector<408x128xf32> to vector<408x128xbf16>
    %c22 = arith.constant 22 : index
    %c0_72 = arith.constant 0 : index
    %c0_73 = arith.constant 0 : index
    %176 = vector.load %arg2[%c22, %c0_72, %c0_73] : memref<25x128x128xbf16, #tpu.memory_space<vmem>>, vector<1x128x128xbf16>
    %177 = vector.shape_cast %176 : vector<1x128x128xbf16> to vector<128x128xbf16>
    %cst_74 = arith.constant dense<0.000000e+00> : vector<408x128xf32>
    %178 = tpu.matmul %175, %177, %cst_74 {dimension_numbers = #tpu.dot_dimension_numbers<[1], [0], [0], [1], [0, 0, 1, 1], [], []>} : vector<408x128xbf16>, vector<128x128xbf16>, vector<408x128xf32> -> vector<408x128xf32>
    %179 = arith.addf %172, %178 : vector<408x128xf32>
    %c382_i32 = arith.constant 382 : i32
    %180 = tpu.dynamic_rotate %18 by %c382_i32 dim 0 : vector<456x128xf32>, i32 -> vector<456x128xf32>
    %181 = vector.extract_strided_slice %180 {offsets = [0, 0], sizes = [408, 128], strides = [1, 1]} : vector<456x128xf32> to vector<408x128xf32>
    %182 = arith.truncf %181 : vector<408x128xf32> to vector<408x128xbf16>
    %c23 = arith.constant 23 : index
    %c0_75 = arith.constant 0 : index
    %c0_76 = arith.constant 0 : index
    %183 = vector.load %arg2[%c23, %c0_75, %c0_76] : memref<25x128x128xbf16, #tpu.memory_space<vmem>>, vector<1x128x128xbf16>
    %184 = vector.shape_cast %183 : vector<1x128x128xbf16> to vector<128x128xbf16>
    %cst_77 = arith.constant dense<0.000000e+00> : vector<408x128xf32>
    %185 = tpu.matmul %182, %184, %cst_77 {dimension_numbers = #tpu.dot_dimension_numbers<[1], [0], [0], [1], [0, 0, 1, 1], [], []>} : vector<408x128xbf16>, vector<128x128xbf16>, vector<408x128xf32> -> vector<408x128xf32>
    %186 = arith.addf %179, %185 : vector<408x128xf32>
    %c381_i32 = arith.constant 381 : i32
    %187 = tpu.dynamic_rotate %18 by %c381_i32 dim 0 : vector<456x128xf32>, i32 -> vector<456x128xf32>
    %188 = vector.extract_strided_slice %187 {offsets = [0, 0], sizes = [408, 128], strides = [1, 1]} : vector<456x128xf32> to vector<408x128xf32>
    %189 = arith.truncf %188 : vector<408x128xf32> to vector<408x128xbf16>
    %c24 = arith.constant 24 : index
    %c0_78 = arith.constant 0 : index
    %c0_79 = arith.constant 0 : index
    %190 = vector.load %arg2[%c24, %c0_78, %c0_79] : memref<25x128x128xbf16, #tpu.memory_space<vmem>>, vector<1x128x128xbf16>
    %191 = vector.shape_cast %190 : vector<1x128x128xbf16> to vector<128x128xbf16>
    %cst_80 = arith.constant dense<0.000000e+00> : vector<408x128xf32>
    %192 = tpu.matmul %189, %191, %cst_80 {dimension_numbers = #tpu.dot_dimension_numbers<[1], [0], [0], [1], [0, 0, 1, 1], [], []>} : vector<408x128xbf16>, vector<128x128xbf16>, vector<408x128xf32> -> vector<408x128xf32>
    %193 = arith.addf %186, %192 : vector<408x128xf32>
    %c0_81 = arith.constant 0 : index
    %c0_82 = arith.constant 0 : index
    %194 = vector.load %arg3[%c0_81, %c0_82] : memref<1x128xf32, #tpu.memory_space<vmem>>, vector<1x128xf32>
    %195 = vector.broadcast %194 : vector<1x128xf32> to vector<408x128xf32>
    %196 = arith.addf %193, %195 : vector<408x128xf32>
    %cst_83 = arith.constant 0.000000e+00 : f32
    %197 = vector.broadcast %cst_83 : f32 to vector<408x128xf32>
    %198 = arith.maximumf %196, %197 : vector<408x128xf32>
    %199 = arith.mulf %15, %198 : vector<408x128xf32>
    %cst_84 = arith.constant 0.000000e+00 : f32
    %200 = vector.broadcast %cst_84 : f32 to vector<408x128xf32>
    %c25_i32_85 = arith.constant 25 : i32
    %201 = tpu.dynamic_rotate %199 by %c25_i32_85 dim 0 : vector<408x128xf32>, i32 -> vector<408x128xf32>
    %202 = arith.truncf %201 : vector<408x128xf32> to vector<408x128xbf16>
    %c0_86 = arith.constant 0 : index
    %c0_87 = arith.constant 0 : index
    %c0_88 = arith.constant 0 : index
    %c0_89 = arith.constant 0 : index
    %203 = vector.load %arg4[%c0_86, %c0_87, %c0_88, %c0_89] : memref<1x9x128x128xbf16, #tpu.memory_space<vmem>>, vector<1x1x128x128xbf16>
    %204 = vector.shape_cast %203 : vector<1x1x128x128xbf16> to vector<128x128xbf16>
    %cst_90 = arith.constant dense<0.000000e+00> : vector<408x128xf32>
    %205 = tpu.matmul %202, %204, %cst_90 {dimension_numbers = #tpu.dot_dimension_numbers<[1], [0], [0], [1], [0, 0, 1, 1], [], []>} : vector<408x128xbf16>, vector<128x128xbf16>, vector<408x128xf32> -> vector<408x128xf32>
    %206 = arith.addf %200, %205 : vector<408x128xf32>
    %c24_i32_91 = arith.constant 24 : i32
    %207 = tpu.dynamic_rotate %199 by %c24_i32_91 dim 0 : vector<408x128xf32>, i32 -> vector<408x128xf32>
    %208 = arith.truncf %207 : vector<408x128xf32> to vector<408x128xbf16>
    %c0_92 = arith.constant 0 : index
    %c1_93 = arith.constant 1 : index
    %c0_94 = arith.constant 0 : index
    %c0_95 = arith.constant 0 : index
    %209 = vector.load %arg4[%c0_92, %c1_93, %c0_94, %c0_95] : memref<1x9x128x128xbf16, #tpu.memory_space<vmem>>, vector<1x1x128x128xbf16>
    %210 = vector.shape_cast %209 : vector<1x1x128x128xbf16> to vector<128x128xbf16>
    %cst_96 = arith.constant dense<0.000000e+00> : vector<408x128xf32>
    %211 = tpu.matmul %208, %210, %cst_96 {dimension_numbers = #tpu.dot_dimension_numbers<[1], [0], [0], [1], [0, 0, 1, 1], [], []>} : vector<408x128xbf16>, vector<128x128xbf16>, vector<408x128xf32> -> vector<408x128xf32>
    %212 = arith.addf %206, %211 : vector<408x128xf32>
    %c23_i32_97 = arith.constant 23 : i32
    %213 = tpu.dynamic_rotate %199 by %c23_i32_97 dim 0 : vector<408x128xf32>, i32 -> vector<408x128xf32>
    %214 = arith.truncf %213 : vector<408x128xf32> to vector<408x128xbf16>
    %c0_98 = arith.constant 0 : index
    %c2_99 = arith.constant 2 : index
    %c0_100 = arith.constant 0 : index
    %c0_101 = arith.constant 0 : index
    %215 = vector.load %arg4[%c0_98, %c2_99, %c0_100, %c0_101] : memref<1x9x128x128xbf16, #tpu.memory_space<vmem>>, vector<1x1x128x128xbf16>
    %216 = vector.shape_cast %215 : vector<1x1x128x128xbf16> to vector<128x128xbf16>
    %cst_102 = arith.constant dense<0.000000e+00> : vector<408x128xf32>
    %217 = tpu.matmul %214, %216, %cst_102 {dimension_numbers = #tpu.dot_dimension_numbers<[1], [0], [0], [1], [0, 0, 1, 1], [], []>} : vector<408x128xbf16>, vector<128x128xbf16>, vector<408x128xf32> -> vector<408x128xf32>
    %218 = arith.addf %212, %217 : vector<408x128xf32>
    %c1_i32_103 = arith.constant 1 : i32
    %219 = tpu.dynamic_rotate %199 by %c1_i32_103 dim 0 : vector<408x128xf32>, i32 -> vector<408x128xf32>
    %220 = arith.truncf %219 : vector<408x128xf32> to vector<408x128xbf16>
    %c0_104 = arith.constant 0 : index
    %c3_105 = arith.constant 3 : index
    %c0_106 = arith.constant 0 : index
    %c0_107 = arith.constant 0 : index
    %221 = vector.load %arg4[%c0_104, %c3_105, %c0_106, %c0_107] : memref<1x9x128x128xbf16, #tpu.memory_space<vmem>>, vector<1x1x128x128xbf16>
    %222 = vector.shape_cast %221 : vector<1x1x128x128xbf16> to vector<128x128xbf16>
    %cst_108 = arith.constant dense<0.000000e+00> : vector<408x128xf32>
    %223 = tpu.matmul %220, %222, %cst_108 {dimension_numbers = #tpu.dot_dimension_numbers<[1], [0], [0], [1], [0, 0, 1, 1], [], []>} : vector<408x128xbf16>, vector<128x128xbf16>, vector<408x128xf32> -> vector<408x128xf32>
    %224 = arith.addf %218, %223 : vector<408x128xf32>
    %225 = arith.truncf %199 : vector<408x128xf32> to vector<408x128xbf16>
    %c0_109 = arith.constant 0 : index
    %c4_110 = arith.constant 4 : index
    %c0_111 = arith.constant 0 : index
    %c0_112 = arith.constant 0 : index
    %226 = vector.load %arg4[%c0_109, %c4_110, %c0_111, %c0_112] : memref<1x9x128x128xbf16, #tpu.memory_space<vmem>>, vector<1x1x128x128xbf16>
    %227 = vector.shape_cast %226 : vector<1x1x128x128xbf16> to vector<128x128xbf16>
    %cst_113 = arith.constant dense<0.000000e+00> : vector<408x128xf32>
    %228 = tpu.matmul %225, %227, %cst_113 {dimension_numbers = #tpu.dot_dimension_numbers<[1], [0], [0], [1], [0, 0, 1, 1], [], []>} : vector<408x128xbf16>, vector<128x128xbf16>, vector<408x128xf32> -> vector<408x128xf32>
    %229 = arith.addf %224, %228 : vector<408x128xf32>
    %c407_i32_114 = arith.constant 407 : i32
    %230 = tpu.dynamic_rotate %199 by %c407_i32_114 dim 0 : vector<408x128xf32>, i32 -> vector<408x128xf32>
    %231 = arith.truncf %230 : vector<408x128xf32> to vector<408x128xbf16>
    %c0_115 = arith.constant 0 : index
    %c5_116 = arith.constant 5 : index
    %c0_117 = arith.constant 0 : index
    %c0_118 = arith.constant 0 : index
    %232 = vector.load %arg4[%c0_115, %c5_116, %c0_117, %c0_118] : memref<1x9x128x128xbf16, #tpu.memory_space<vmem>>, vector<1x1x128x128xbf16>
    %233 = vector.shape_cast %232 : vector<1x1x128x128xbf16> to vector<128x128xbf16>
    %cst_119 = arith.constant dense<0.000000e+00> : vector<408x128xf32>
    %234 = tpu.matmul %231, %233, %cst_119 {dimension_numbers = #tpu.dot_dimension_numbers<[1], [0], [0], [1], [0, 0, 1, 1], [], []>} : vector<408x128xbf16>, vector<128x128xbf16>, vector<408x128xf32> -> vector<408x128xf32>
    %235 = arith.addf %229, %234 : vector<408x128xf32>
    %c385_i32_120 = arith.constant 385 : i32
    %236 = tpu.dynamic_rotate %199 by %c385_i32_120 dim 0 : vector<408x128xf32>, i32 -> vector<408x128xf32>
    %237 = arith.truncf %236 : vector<408x128xf32> to vector<408x128xbf16>
    %c0_121 = arith.constant 0 : index
    %c6_122 = arith.constant 6 : index
    %c0_123 = arith.constant 0 : index
    %c0_124 = arith.constant 0 : index
    %238 = vector.load %arg4[%c0_121, %c6_122, %c0_123, %c0_124] : memref<1x9x128x128xbf16, #tpu.memory_space<vmem>>, vector<1x1x128x128xbf16>
    %239 = vector.shape_cast %238 : vector<1x1x128x128xbf16> to vector<128x128xbf16>
    %cst_125 = arith.constant dense<0.000000e+00> : vector<408x128xf32>
    %240 = tpu.matmul %237, %239, %cst_125 {dimension_numbers = #tpu.dot_dimension_numbers<[1], [0], [0], [1], [0, 0, 1, 1], [], []>} : vector<408x128xbf16>, vector<128x128xbf16>, vector<408x128xf32> -> vector<408x128xf32>
    %241 = arith.addf %235, %240 : vector<408x128xf32>
    %c384_i32_126 = arith.constant 384 : i32
    %242 = tpu.dynamic_rotate %199 by %c384_i32_126 dim 0 : vector<408x128xf32>, i32 -> vector<408x128xf32>
    %243 = arith.truncf %242 : vector<408x128xf32> to vector<408x128xbf16>
    %c0_127 = arith.constant 0 : index
    %c7_128 = arith.constant 7 : index
    %c0_129 = arith.constant 0 : index
    %c0_130 = arith.constant 0 : index
    %244 = vector.load %arg4[%c0_127, %c7_128, %c0_129, %c0_130] : memref<1x9x128x128xbf16, #tpu.memory_space<vmem>>, vector<1x1x128x128xbf16>
    %245 = vector.shape_cast %244 : vector<1x1x128x128xbf16> to vector<128x128xbf16>
    %cst_131 = arith.constant dense<0.000000e+00> : vector<408x128xf32>
    %246 = tpu.matmul %243, %245, %cst_131 {dimension_numbers = #tpu.dot_dimension_numbers<[1], [0], [0], [1], [0, 0, 1, 1], [], []>} : vector<408x128xbf16>, vector<128x128xbf16>, vector<408x128xf32> -> vector<408x128xf32>
    %247 = arith.addf %241, %246 : vector<408x128xf32>
    %c383_i32_132 = arith.constant 383 : i32
    %248 = tpu.dynamic_rotate %199 by %c383_i32_132 dim 0 : vector<408x128xf32>, i32 -> vector<408x128xf32>
    %249 = arith.truncf %248 : vector<408x128xf32> to vector<408x128xbf16>
    %c0_133 = arith.constant 0 : index
    %c8_134 = arith.constant 8 : index
    %c0_135 = arith.constant 0 : index
    %c0_136 = arith.constant 0 : index
    %250 = vector.load %arg4[%c0_133, %c8_134, %c0_135, %c0_136] : memref<1x9x128x128xbf16, #tpu.memory_space<vmem>>, vector<1x1x128x128xbf16>
    %251 = vector.shape_cast %250 : vector<1x1x128x128xbf16> to vector<128x128xbf16>
    %cst_137 = arith.constant dense<0.000000e+00> : vector<408x128xf32>
    %252 = tpu.matmul %249, %251, %cst_137 {dimension_numbers = #tpu.dot_dimension_numbers<[1], [0], [0], [1], [0, 0, 1, 1], [], []>} : vector<408x128xbf16>, vector<128x128xbf16>, vector<408x128xf32> -> vector<408x128xf32>
    %253 = arith.addf %247, %252 : vector<408x128xf32>
    %c0_138 = arith.constant 0 : index
    %c0_139 = arith.constant 0 : index
    %c0_140 = arith.constant 0 : index
    %254 = vector.load %arg5[%c0_138, %c0_139, %c0_140] : memref<1x1x128xf32, #tpu.memory_space<vmem>>, vector<1x1x128xf32>
    %255 = vector.shape_cast %254 : vector<1x1x128xf32> to vector<1x128xf32>
    %256 = vector.broadcast %255 : vector<1x128xf32> to vector<408x128xf32>
    %257 = arith.addf %253, %256 : vector<408x128xf32>
    %cst_141 = arith.constant 0.000000e+00 : f32
    %258 = vector.broadcast %cst_141 : f32 to vector<408x128xf32>
    %259 = arith.maximumf %257, %258 : vector<408x128xf32>
    %260 = arith.mulf %15, %259 : vector<408x128xf32>
    %261 = arith.truncf %260 : vector<408x128xf32> to vector<408x128xbf16>
    %c0_142 = arith.constant 0 : index
    %c0_143 = arith.constant 0 : index
    %c0_144 = arith.constant 0 : index
    %262 = vector.load %arg6[%c0_142, %c0_143, %c0_144] : memref<1x408x128xbf16, #tpu.memory_space<vmem>>, vector<1x408x128xbf16>
    %263 = vector.shape_cast %262 : vector<1x408x128xbf16> to vector<408x128xbf16>
    %264 = vector.shape_cast %261 : vector<408x128xbf16> to vector<1x408x128xbf16>
    tpu.vector_store %arg6[%c0_142, %c0_143, %c0_144], %264 {strides = array<i32>} : memref<1x408x128xbf16, #tpu.memory_space<vmem>>, vector<1x408x128xbf16>,
    return
  }
  func.func @transform_0(%arg0: i32) -> (i32, i32, i32) {
    %c0_i32 = arith.constant 0 : i32
    %c0_i32_0 = arith.constant 0 : i32
    %c0_i32_1 = arith.constant 0 : i32
    return %arg0, %c0_i32, %c0_i32_0 : i32, i32, i32
  }
  func.func @transform_1(%arg0: i32) -> (i32, i32, i32) {
    %c0_i32 = arith.constant 0 : i32
    %c0_i32_0 = arith.constant 0 : i32
    %c0_i32_1 = arith.constant 0 : i32
    %c0_i32_2 = arith.constant 0 : i32
    return %c0_i32, %c0_i32_0, %c0_i32_1 : i32, i32, i32
  }
  func.func @transform_2(%arg0: i32) -> (i32, i32) {
    %c0_i32 = arith.constant 0 : i32
    %c0_i32_0 = arith.constant 0 : i32
    %c0_i32_1 = arith.constant 0 : i32
    return %c0_i32, %c0_i32_0 : i32, i32
  }
  func.func @transform_3(%arg0: i32) -> (i32, i32, i32, i32) {
    %c0_i32 = arith.constant 0 : i32
    %c0_i32_0 = arith.constant 0 : i32
    %c0_i32_1 = arith.constant 0 : i32
    %c0_i32_2 = arith.constant 0 : i32
    %c0_i32_3 = arith.constant 0 : i32
    return %c0_i32, %c0_i32_0, %c0_i32_1, %c0_i32_2 : i32, i32, i32, i32
  }
  func.func @transform_4(%arg0: i32) -> (i32, i32, i32) {
    %c0_i32 = arith.constant 0 : i32
    %c0_i32_0 = arith.constant 0 : i32
    %c0_i32_1 = arith.constant 0 : i32
    %c0_i32_2 = arith.constant 0 : i32
    return %c0_i32, %c0_i32_0, %c0_i32_1 : i32, i32, i32
  }
  func.func @transform_5(%arg0: i32) -> (i32, i32, i32) {
    %c0_i32 = arith.constant 0 : i32
    %c0_i32_0 = arith.constant 0 : i32
    %c0_i32_1 = arith.constant 0 : i32
    return %arg0, %c0_i32, %c0_i32_0 : i32, i32, i32
  }
}

module attributes {stable_mosaic.version = 11 : i64} {
  func.func @_head_kernel(%arg0: i32, %arg1: memref<2x1920xbf16, #tpu.memory_space<vmem>>, %arg2: memref<1920x128xbf16, #tpu.memory_space<vmem>>, %arg3: memref<1x128xf32, #tpu.memory_space<vmem>>, %arg4: memref<128x128xf32, #tpu.memory_space<vmem>>, %arg5: memref<1x128xf32, #tpu.memory_space<vmem>>, %arg6: memref<2x128xf32, #tpu.memory_space<vmem>>) attributes {dimension_semantics = [#tpu.dimension_semantics<arbitrary>], iteration_bounds = array<i64: 1>, scalar_prefetch = 0 : i64, scratch_operands = 0 : i64, tpu.core_type = #tpu.core_type<tc>, window_params = [{pipeline_mode = #tpu.pipeline_mode<synchronous>, transform_indices = @transform_0, window_bounds = array<i64: 2, 1920>}, {pipeline_mode = #tpu.pipeline_mode<synchronous>, transform_indices = @transform_1, window_bounds = array<i64: 1920, 128>}, {pipeline_mode = #tpu.pipeline_mode<synchronous>, transform_indices = @transform_2, window_bounds = array<i64: 1, 128>}, {pipeline_mode = #tpu.pipeline_mode<synchronous>, transform_indices = @transform_3, window_bounds = array<i64: 128, 128>}, {pipeline_mode = #tpu.pipeline_mode<synchronous>, transform_indices = @transform_4, window_bounds = array<i64: 1, 128>}, {pipeline_mode = #tpu.pipeline_mode<synchronous>, transform_indices = @transform_5, window_bounds = array<i64: 2, 128>}]} {
    %c0 = arith.constant 0 : index
    %c0_0 = arith.constant 0 : index
    %0 = vector.load %arg1[%c0, %c0_0] : memref<2x1920xbf16, #tpu.memory_space<vmem>>, vector<2x1920xbf16>
    %c0_1 = arith.constant 0 : index
    %c0_2 = arith.constant 0 : index
    %1 = vector.load %arg2[%c0_1, %c0_2] : memref<1920x128xbf16, #tpu.memory_space<vmem>>, vector<1920x128xbf16>
    %cst = arith.constant dense<0.000000e+00> : vector<2x128xf32>
    %2 = tpu.matmul %0, %1, %cst {dimension_numbers = #tpu.dot_dimension_numbers<[1], [0], [0], [1], [0, 0, 1, 1], [], []>} : vector<2x1920xbf16>, vector<1920x128xbf16>, vector<2x128xf32> -> vector<2x128xf32>
    %c0_3 = arith.constant 0 : index
    %c0_4 = arith.constant 0 : index
    %3 = vector.load %arg3[%c0_3, %c0_4] : memref<1x128xf32, #tpu.memory_space<vmem>>, vector<1x128xf32>
    %4 = vector.broadcast %3 : vector<1x128xf32> to vector<2x128xf32>
    %5 = arith.addf %2, %4 : vector<2x128xf32>
    %cst_5 = arith.constant 0.000000e+00 : f32
    %6 = vector.broadcast %cst_5 : f32 to vector<2x128xf32>
    %7 = arith.maximumf %5, %6 : vector<2x128xf32>
    %c0_6 = arith.constant 0 : index
    %c0_7 = arith.constant 0 : index
    %8 = vector.load %arg4[%c0_6, %c0_7] : memref<128x128xf32, #tpu.memory_space<vmem>>, vector<128x128xf32>
    %cst_8 = arith.constant dense<0.000000e+00> : vector<2x128xf32>
    %9 = tpu.matmul %7, %8, %cst_8 {dimension_numbers = #tpu.dot_dimension_numbers<[1], [0], [0], [1], [0, 0, 1, 1], [], []>} : vector<2x128xf32>, vector<128x128xf32>, vector<2x128xf32> -> vector<2x128xf32>
    %c0_9 = arith.constant 0 : index
    %c0_10 = arith.constant 0 : index
    %10 = vector.load %arg5[%c0_9, %c0_10] : memref<1x128xf32, #tpu.memory_space<vmem>>, vector<1x128xf32>
    %11 = vector.broadcast %10 : vector<1x128xf32> to vector<2x128xf32>
    %12 = arith.addf %9, %11 : vector<2x128xf32>
    %c0_11 = arith.constant 0 : index
    %c0_12 = arith.constant 0 : index
    %13 = vector.load %arg6[%c0_11, %c0_12] : memref<2x128xf32, #tpu.memory_space<vmem>>, vector<2x128xf32>
    tpu.vector_store %arg6[%c0_11, %c0_12], %12 {strides = array<i32>} : memref<2x128xf32, #tpu.memory_space<vmem>>, vector<2x128xf32>,
    return
  }
  func.func @transform_0(%arg0: i32) -> (i32, i32) {
    %c0_i32 = arith.constant 0 : i32
    %c0_i32_0 = arith.constant 0 : i32
    %c0_i32_1 = arith.constant 0 : i32
    return %c0_i32, %c0_i32_0 : i32, i32
  }
  func.func @transform_1(%arg0: i32) -> (i32, i32) {
    %c0_i32 = arith.constant 0 : i32
    %c0_i32_0 = arith.constant 0 : i32
    %c0_i32_1 = arith.constant 0 : i32
    return %c0_i32, %c0_i32_0 : i32, i32
  }
  func.func @transform_2(%arg0: i32) -> (i32, i32) {
    %c0_i32 = arith.constant 0 : i32
    %c0_i32_0 = arith.constant 0 : i32
    %c0_i32_1 = arith.constant 0 : i32
    return %c0_i32, %c0_i32_0 : i32, i32
  }
  func.func @transform_3(%arg0: i32) -> (i32, i32) {
    %c0_i32 = arith.constant 0 : i32
    %c0_i32_0 = arith.constant 0 : i32
    %c0_i32_1 = arith.constant 0 : i32
    return %c0_i32, %c0_i32_0 : i32, i32
  }
  func.func @transform_4(%arg0: i32) -> (i32, i32) {
    %c0_i32 = arith.constant 0 : i32
    %c0_i32_0 = arith.constant 0 : i32
    %c0_i32_1 = arith.constant 0 : i32
    return %c0_i32, %c0_i32_0 : i32, i32
  }
  func.func @transform_5(%arg0: i32) -> (i32, i32) {
    %c0_i32 = arith.constant 0 : i32
    %c0_i32_0 = arith.constant 0 : i32
    %c0_i32_1 = arith.constant 0 : i32
    return %c0_i32, %c0_i32_0 : i32, i32
  }
}

</mosaic_0001>

<llo_original>
// kernel: hhn_sconvb_forward.3
$region0: #{hhn_sconvb_forward.3}
  #allocation0 [shape = 'u32[]', space=smem, size = 0x4, offset = 0x4, fixed_abs, tag = 'smem constant byte address 0x4 - core index']
  #allocation1 [shape = 'u32[72,128]{1,0:T(1,128)}', space=vmem, size = 0x9000, scoped, tag = 'internal scratch']
  %s0 = inlined_call_operand.vmem [shape: bf16[2,1920], index: 0, kind: input, shape index: {}]
  %s1 = inlined_call_operand.vmem [shape: bf16[1920,128], index: 1, kind: input, shape index: {}]
  %s2 = inlined_call_operand.vmem [shape: f32[1,128], index: 2, kind: input, shape index: {}]
  %s3 = inlined_call_operand.vmem [shape: f32[128,128], index: 3, kind: input, shape index: {}]
  %s4 = inlined_call_operand.vmem [shape: f32[1,128], index: 4, kind: input, shape index: {}]
  %s5 = inlined_call_operand.hbm [shape: f32[2,128], index: 5, kind: output, shape index: {}]
  %s6 = sld [smem:[#allocation0]]
  $region30: #{hhn_sconvb_forward.3} parent=0
    _
  %s8 = ssub.s32 1, %s6
  %s9 = scalar_select 0, %s8, %s6
  $region1: #{hhn_sconvb_forward.3} parent=0
    #allocation2 [shape = 'u8[1024]{0}', space=vmem, size = 0x400, scoped, tag = 'output window, operand 0, single buffered']
    #allocation3 [shape = 's32[1]{0}', space=sflag, size = 0x4, scoped, tag = 'scoped memory for hhn_sconvb_forward.3']
    %10 = vsyncpa [#allocation3], 0
    // Predicated region
    $region2: #{hhn_sconvb_forward.3} parent=1 // pred_check
      _
    $region3: #{hhn_sconvb_forward.3} parent=1 // pred_check_branch
      %12 = sbr.rel (0) target = $region5
    $region4: #{hhn_sconvb_forward.3} parent=1 // pred_region
      _
    $region5: #{hhn_sconvb_forward.3} parent=1 // pred_fallthru
      _
    // Predicated region
    $region6: #{hhn_sconvb_forward.3} parent=1 // pred_check
      _
    $region7: #{hhn_sconvb_forward.3} parent=1 // pred_check_branch
      %14 = sbr.rel (0) target = $region9
    $region8: #{hhn_sconvb_forward.3} parent=1 // pred_region
      _
    $region9: #{hhn_sconvb_forward.3} parent=1 // pred_fallthru
      _
    // Predicated region
    $region10: #{hhn_sconvb_forward.3} parent=1 // pred_check
      _
    $region11: #{hhn_sconvb_forward.3} parent=1 // pred_check_branch
      %16 = sbr.rel (0) target = $region13
    $region12: #{hhn_sconvb_forward.3} parent=1 // pred_region
      _
    $region13: #{hhn_sconvb_forward.3} parent=1 // pred_fallthru
      _
    // Predicated region
    $region14: #{hhn_sconvb_forward.3} parent=1 // pred_check
      _
    $region15: #{hhn_sconvb_forward.3} parent=1 // pred_check_branch
      %18 = sbr.rel (0) target = $region17
    $region16: #{hhn_sconvb_forward.3} parent=1 // pred_region
      _
    $region17: #{hhn_sconvb_forward.3} parent=1 // pred_fallthru
      _
    // Predicated region
    $region18: #{hhn_sconvb_forward.3} parent=1 // pred_check
      _
    $region19: #{hhn_sconvb_forward.3} parent=1 // pred_check_branch
      %20 = sbr.rel (0) target = $region21
    $region20: #{hhn_sconvb_forward.3} parent=1 // pred_region
      _
    $region21: #{hhn_sconvb_forward.3} parent=1 // pred_fallthru
      _
    %v21 = vld [vmem:[%s0] sm:$0xff]
    %v22 = vld [vmem:[%s0 + $0x8] sm:$0x7f]
    %v23 = vld [vmem:[%s1] sm:$0xf]
    %v24 = vld [vmem:[%s1 + $0x4] sm:$0xf]
    %v25 = vld [vmem:[%s1 + $0x8] sm:$0xf]
    %v26 = vld [vmem:[%s1 + $0xc] sm:$0xf]
    %v27 = vld [vmem:[%s1 + $0x10] sm:$0xf]
    %v28 = vld [vmem:[%s1 + $0x14] sm:$0xf]
    %v29 = vld [vmem:[%s1 + $0x18] sm:$0xf]
    %v30 = vld [vmem:[%s1 + $0x1c] sm:$0xf]
    %v31 = vld [vmem:[%s1 + $0x20] sm:$0xf]
    %v32 = vld [vmem:[%s1 + $0x24] sm:$0xf]
    %v33 = vld [vmem:[%s1 + $0x28] sm:$0xf]
    %v34 = vld [vmem:[%s1 + $0x2c] sm:$0xf]
    %v35 = vld [vmem:[%s1 + $0x30] sm:$0xf]
    %v36 = vld [vmem:[%s1 + $0x34] sm:$0xf]
    %v37 = vld [vmem:[%s1 + $0x38] sm:$0xf]
    %v38 = vld [vmem:[%s1 + $0x3c] sm:$0xf]
    %v39 = vld [vmem:[%s1 + $0x40] sm:$0xf]
    %v40 = vld [vmem:[%s1 + $0x44] sm:$0xf]
    %v41 = vld [vmem:[%s1 + $0x48] sm:$0xf]
    %v42 = vld [vmem:[%s1 + $0x4c] sm:$0xf]
    %v43 = vld [vmem:[%s1 + $0x50] sm:$0xf]
    %v44 = vld [vmem:[%s1 + $0x54] sm:$0xf]
    %v45 = vld [vmem:[%s1 + $0x58] sm:$0xf]
    %v46 = vld [vmem:[%s1 + $0x5c] sm:$0xf]
    %v47 = vld [vmem:[%s1 + $0x60] sm:$0xf]
    %v48 = vld [vmem:[%s1 + $0x64] sm:$0xf]
    %v49 = vld [vmem:[%s1 + $0x68] sm:$0xf]
    %v50 = vld [vmem:[%s1 + $0x6c] sm:$0xf]
    %v51 = vld [vmem:[%s1 + $0x70] sm:$0xf]
    %v52 = vld [vmem:[%s1 + $0x74] sm:$0xf]
    %v53 = vld [vmem:[%s1 + $0x78] sm:$0xf]
    %v54 = vld [vmem:[%s1 + $0x7c] sm:$0xf]
    %v55 = vld [vmem:[%s1 + $0x80] sm:$0xf]
    %v56 = vld [vmem:[%s1 + $0x84] sm:$0xf]
    %v57 = vld [vmem:[%s1 + $0x88] sm:$0xf]
    %v58 = vld [vmem:[%s1 + $0x8c] sm:$0xf]
    %v59 = vld [vmem:[%s1 + $0x90] sm:$0xf]
    %v60 = vld [vmem:[%s1 + $0x94] sm:$0xf]
    %v61 = vld [vmem:[%s1 + $0x98] sm:$0xf]
    %v62 = vld [vmem:[%s1 + $0x9c] sm:$0xf]
    %v63 = vld [vmem:[%s1 + $0xa0] sm:$0xf]
    %v64 = vld [vmem:[%s1 + $0xa4] sm:$0xf]
    %v65 = vld [vmem:[%s1 + $0xa8] sm:$0xf]
    %v66 = vld [vmem:[%s1 + $0xac] sm:$0xf]
    %v67 = vld [vmem:[%s1 + $0xb0] sm:$0xf]
    %v68 = vld [vmem:[%s1 + $0xb4] sm:$0xf]
    %v69 = vld [vmem:[%s1 + $0xb8] sm:$0xf]
    %v70 = vld [vmem:[%s1 + $0xbc] sm:$0xf]
    %v71 = vld [vmem:[%s1 + $0xc0] sm:$0xf]
    %v72 = vld [vmem:[%s1 + $0xc4] sm:$0xf]
    %v73 = vld [vmem:[%s1 + $0xc8] sm:$0xf]
    %v74 = vld [vmem:[%s1 + $0xcc] sm:$0xf]
    %v75 = vld [vmem:[%s1 + $0xd0] sm:$0xf]
    %v76 = vld [vmem:[%s1 + $0xd4] sm:$0xf]
    %v77 = vld [vmem:[%s1 + $0xd8] sm:$0xf]
    %v78 = vld [vmem:[%s1 + $0xdc] sm:$0xf]
    %v79 = vld [vmem:[%s1 + $0xe0] sm:$0xf]
    %v80 = vld [vmem:[%s1 + $0xe4] sm:$0xf]
    %v81 = vld [vmem:[%s1 + $0xe8] sm:$0xf]
    %v82 = vld [vmem:[%s1 + $0xec] sm:$0xf]
    %v83 = vld [vmem:[%s1 + $0xf0] sm:$0xf]
    %v84 = vld [vmem:[%s1 + $0xf4] sm:$0xf]
    %v85 = vld [vmem:[%s1 + $0xf8] sm:$0xf]
    %v86 = vld [vmem:[%s1 + $0xfc] sm:$0xf]
    %v87 = vld [vmem:[%s1 + $0x100] sm:$0xf]
    %v88 = vld [vmem:[%s1 + $0x104] sm:$0xf]
    %v89 = vld [vmem:[%s1 + $0x108] sm:$0xf]
    %v90 = vld [vmem:[%s1 + $0x10c] sm:$0xf]
    %v91 = vld [vmem:[%s1 + $0x110] sm:$0xf]
    %v92 = vld [vmem:[%s1 + $0x114] sm:$0xf]
    %v93 = vld [vmem:[%s1 + $0x118] sm:$0xf]
    %v94 = vld [vmem:[%s1 + $0x11c] sm:$0xf]
    %v95 = vld [vmem:[%s1 + $0x120] sm:$0xf]
    %v96 = vld [vmem:[%s1 + $0x124] sm:$0xf]
    %v97 = vld [vmem:[%s1 + $0x128] sm:$0xf]
    %v98 = vld [vmem:[%s1 + $0x12c] sm:$0xf]
    %v99 = vld [vmem:[%s1 + $0x130] sm:$0xf]
    %v100 = vld [vmem:[%s1 + $0x134] sm:$0xf]
    %v101 = vld [vmem:[%s1 + $0x138] sm:$0xf]
    %v102 = vld [vmem:[%s1 + $0x13c] sm:$0xf]
    %v103 = vld [vmem:[%s1 + $0x140] sm:$0xf]
    %v104 = vld [vmem:[%s1 + $0x144] sm:$0xf]
    %v105 = vld [vmem:[%s1 + $0x148] sm:$0xf]
    %v106 = vld [vmem:[%s1 + $0x14c] sm:$0xf]
    %v107 = vld [vmem:[%s1 + $0x150] sm:$0xf]
    %v108 = vld [vmem:[%s1 + $0x154] sm:$0xf]
    %v109 = vld [vmem:[%s1 + $0x158] sm:$0xf]
    %v110 = vld [vmem:[%s1 + $0x15c] sm:$0xf]
    %v111 = vld [vmem:[%s1 + $0x160] sm:$0xf]
    %v112 = vld [vmem:[%s1 + $0x164] sm:$0xf]
    %v113 = vld [vmem:[%s1 + $0x168] sm:$0xf]
    %v114 = vld [vmem:[%s1 + $0x16c] sm:$0xf]
    %v115 = vld [vmem:[%s1 + $0x170] sm:$0xf]
    %v116 = vld [vmem:[%s1 + $0x174] sm:$0xf]
    %v117 = vld [vmem:[%s1 + $0x178] sm:$0xf]
    %v118 = vld [vmem:[%s1 + $0x17c] sm:$0xf]
    %v119 = vld [vmem:[%s1 + $0x180] sm:$0xf]
    %v120 = vld [vmem:[%s1 + $0x184] sm:$0xf]
    %v121 = vld [vmem:[%s1 + $0x188] sm:$0xf]
    %v122 = vld [vmem:[%s1 + $0x18c] sm:$0xf]
    %v123 = vld [vmem:[%s1 + $0x190] sm:$0xf]
    %v124 = vld [vmem:[%s1 + $0x194] sm:$0xf]
    %v125 = vld [vmem:[%s1 + $0x198] sm:$0xf]
    %v126 = vld [vmem:[%s1 + $0x19c] sm:$0xf]
    %v127 = vld [vmem:[%s1 + $0x1a0] sm:$0xf]
    %v128 = vld [vmem:[%s1 + $0x1a4] sm:$0xf]
    %v129 = vld [vmem:[%s1 + $0x1a8] sm:$0xf]
    %v130 = vld [vmem:[%s1 + $0x1ac] sm:$0xf]
    %v131 = vld [vmem:[%s1 + $0x1b0] sm:$0xf]
    %v132 = vld [vmem:[%s1 + $0x1b4] sm:$0xf]
    %v133 = vld [vmem:[%s1 + $0x1b8] sm:$0xf]
    %v134 = vld [vmem:[%s1 + $0x1bc] sm:$0xf]
    %v135 = vld [vmem:[%s1 + $0x1c0] sm:$0xf]
    %v136 = vld [vmem:[%s1 + $0x1c4] sm:$0xf]
    %v137 = vld [vmem:[%s1 + $0x1c8] sm:$0xf]
    %v138 = vld [vmem:[%s1 + $0x1cc] sm:$0xf]
    %v139 = vld [vmem:[%s1 + $0x1d0] sm:$0xf]
    %v140 = vld [vmem:[%s1 + $0x1d4] sm:$0xf]
    %v141 = vld [vmem:[%s1 + $0x1d8] sm:$0xf]
    %v142 = vld [vmem:[%s1 + $0x1dc] sm:$0xf]
    %v143 = vld [vmem:[%s1 + $0x1e0] sm:$0xf]
    %v144 = vld [vmem:[%s1 + $0x1e4] sm:$0xf]
    %v145 = vld [vmem:[%s1 + $0x1e8] sm:$0xf]
    %v146 = vld [vmem:[%s1 + $0x1ec] sm:$0xf]
    %v147 = vld [vmem:[%s1 + $0x1f0] sm:$0xf]
    %v148 = vld [vmem:[%s1 + $0x1f4] sm:$0xf]
    %v149 = vld [vmem:[%s1 + $0x1f8] sm:$0xf]
    %v150 = vld [vmem:[%s1 + $0x1fc] sm:$0xf]
    %v151 = vld [vmem:[%s1 + $0x200] sm:$0xf]
    %v152 = vld [vmem:[%s1 + $0x204] sm:$0xf]
    %v153 = vld [vmem:[%s1 + $0x208] sm:$0xf]
    %v154 = vld [vmem:[%s1 + $0x20c] sm:$0xf]
    %v155 = vld [vmem:[%s1 + $0x210] sm:$0xf]
    %v156 = vld [vmem:[%s1 + $0x214] sm:$0xf]
    %v157 = vld [vmem:[%s1 + $0x218] sm:$0xf]
    %v158 = vld [vmem:[%s1 + $0x21c] sm:$0xf]
    %v159 = vld [vmem:[%s1 + $0x220] sm:$0xf]
    %v160 = vld [vmem:[%s1 + $0x224] sm:$0xf]
    %v161 = vld [vmem:[%s1 + $0x228] sm:$0xf]
    %v162 = vld [vmem:[%s1 + $0x22c] sm:$0xf]
    %v163 = vld [vmem:[%s1 + $0x230] sm:$0xf]
    %v164 = vld [vmem:[%s1 + $0x234] sm:$0xf]
    %v165 = vld [vmem:[%s1 + $0x238] sm:$0xf]
    %v166 = vld [vmem:[%s1 + $0x23c] sm:$0xf]
    %v167 = vld [vmem:[%s1 + $0x240] sm:$0xf]
    %v168 = vld [vmem:[%s1 + $0x244] sm:$0xf]
    %v169 = vld [vmem:[%s1 + $0x248] sm:$0xf]
    %v170 = vld [vmem:[%s1 + $0x24c] sm:$0xf]
    %v171 = vld [vmem:[%s1 + $0x250] sm:$0xf]
    %v172 = vld [vmem:[%s1 + $0x254] sm:$0xf]
    %v173 = vld [vmem:[%s1 + $0x258] sm:$0xf]
    %v174 = vld [vmem:[%s1 + $0x25c] sm:$0xf]
    %v175 = vld [vmem:[%s1 + $0x260] sm:$0xf]
    %v176 = vld [vmem:[%s1 + $0x264] sm:$0xf]
    %v177 = vld [vmem:[%s1 + $0x268] sm:$0xf]
    %v178 = vld [vmem:[%s1 + $0x26c] sm:$0xf]
    %v179 = vld [vmem:[%s1 + $0x270] sm:$0xf]
    %v180 = vld [vmem:[%s1 + $0x274] sm:$0xf]
    %v181 = vld [vmem:[%s1 + $0x278] sm:$0xf]
    %v182 = vld [vmem:[%s1 + $0x27c] sm:$0xf]
    %v183 = vld [vmem:[%s1 + $0x280] sm:$0xf]
    %v184 = vld [vmem:[%s1 + $0x284] sm:$0xf]
    %v185 = vld [vmem:[%s1 + $0x288] sm:$0xf]
    %v186 = vld [vmem:[%s1 + $0x28c] sm:$0xf]
    %v187 = vld [vmem:[%s1 + $0x290] sm:$0xf]
    %v188 = vld [vmem:[%s1 + $0x294] sm:$0xf]
    %v189 = vld [vmem:[%s1 + $0x298] sm:$0xf]
    %v190 = vld [vmem:[%s1 + $0x29c] sm:$0xf]
    %v191 = vld [vmem:[%s1 + $0x2a0] sm:$0xf]
    %v192 = vld [vmem:[%s1 + $0x2a4] sm:$0xf]
    %v193 = vld [vmem:[%s1 + $0x2a8] sm:$0xf]
    %v194 = vld [vmem:[%s1 + $0x2ac] sm:$0xf]
    %v195 = vld [vmem:[%s1 + $0x2b0] sm:$0xf]
    %v196 = vld [vmem:[%s1 + $0x2b4] sm:$0xf]
    %v197 = vld [vmem:[%s1 + $0x2b8] sm:$0xf]
    %v198 = vld [vmem:[%s1 + $0x2bc] sm:$0xf]
    %v199 = vld [vmem:[%s1 + $0x2c0] sm:$0xf]
    %v200 = vld [vmem:[%s1 + $0x2c4] sm:$0xf]
    %v201 = vld [vmem:[%s1 + $0x2c8] sm:$0xf]
    %v202 = vld [vmem:[%s1 + $0x2cc] sm:$0xf]
    %v203 = vld [vmem:[%s1 + $0x2d0] sm:$0xf]
    %v204 = vld [vmem:[%s1 + $0x2d4] sm:$0xf]
    %v205 = vld [vmem:[%s1 + $0x2d8] sm:$0xf]
    %v206 = vld [vmem:[%s1 + $0x2dc] sm:$0xf]
    %v207 = vld [vmem:[%s1 + $0x2e0] sm:$0xf]
    %v208 = vld [vmem:[%s1 + $0x2e4] sm:$0xf]
    %v209 = vld [vmem:[%s1 + $0x2e8] sm:$0xf]
    %v210 = vld [vmem:[%s1 + $0x2ec] sm:$0xf]
    %v211 = vld [vmem:[%s1 + $0x2f0] sm:$0xf]
    %v212 = vld [vmem:[%s1 + $0x2f4] sm:$0xf]
    %v213 = vld [vmem:[%s1 + $0x2f8] sm:$0xf]
    %v214 = vld [vmem:[%s1 + $0x2fc] sm:$0xf]
    %v215 = vld [vmem:[%s1 + $0x300] sm:$0xf]
    %v216 = vld [vmem:[%s1 + $0x304] sm:$0xf]
    %v217 = vld [vmem:[%s1 + $0x308] sm:$0xf]
    %v218 = vld [vmem:[%s1 + $0x30c] sm:$0xf]
    %v219 = vld [vmem:[%s1 + $0x310] sm:$0xf]
    %v220 = vld [vmem:[%s1 + $0x314] sm:$0xf]
    %v221 = vld [vmem:[%s1 + $0x318] sm:$0xf]
    %v222 = vld [vmem:[%s1 + $0x31c] sm:$0xf]
    %v223 = vld [vmem:[%s1 + $0x320] sm:$0xf]
    %v224 = vld [vmem:[%s1 + $0x324] sm:$0xf]
    %v225 = vld [vmem:[%s1 + $0x328] sm:$0xf]
    %v226 = vld [vmem:[%s1 + $0x32c] sm:$0xf]
    %v227 = vld [vmem:[%s1 + $0x330] sm:$0xf]
    %v228 = vld [vmem:[%s1 + $0x334] sm:$0xf]
    %v229 = vld [vmem:[%s1 + $0x338] sm:$0xf]
    %v230 = vld [vmem:[%s1 + $0x33c] sm:$0xf]
    %v231 = vld [vmem:[%s1 + $0x340] sm:$0xf]
    %v232 = vld [vmem:[%s1 + $0x344] sm:$0xf]
    %v233 = vld [vmem:[%s1 + $0x348] sm:$0xf]
    %v234 = vld [vmem:[%s1 + $0x34c] sm:$0xf]
    %v235 = vld [vmem:[%s1 + $0x350] sm:$0xf]
    %v236 = vld [vmem:[%s1 + $0x354] sm:$0xf]
    %v237 = vld [vmem:[%s1 + $0x358] sm:$0xf]
    %v238 = vld [vmem:[%s1 + $0x35c] sm:$0xf]
    %v239 = vld [vmem:[%s1 + $0x360] sm:$0xf]
    %v240 = vld [vmem:[%s1 + $0x364] sm:$0xf]
    %v241 = vld [vmem:[%s1 + $0x368] sm:$0xf]
    %v242 = vld [vmem:[%s1 + $0x36c] sm:$0xf]
    %v243 = vld [vmem:[%s1 + $0x370] sm:$0xf]
    %v244 = vld [vmem:[%s1 + $0x374] sm:$0xf]
    %v245 = vld [vmem:[%s1 + $0x378] sm:$0xf]
    %v246 = vld [vmem:[%s1 + $0x37c] sm:$0xf]
    %v247 = vld [vmem:[%s1 + $0x380] sm:$0xf]
    %v248 = vld [vmem:[%s1 + $0x384] sm:$0xf]
    %v249 = vld [vmem:[%s1 + $0x388] sm:$0xf]
    %v250 = vld [vmem:[%s1 + $0x38c] sm:$0xf]
    %v251 = vld [vmem:[%s1 + $0x390] sm:$0xf]
    %v252 = vld [vmem:[%s1 + $0x394] sm:$0xf]
    %v253 = vld [vmem:[%s1 + $0x398] sm:$0xf]
    %v254 = vld [vmem:[%s1 + $0x39c] sm:$0xf]
    %v255 = vld [vmem:[%s1 + $0x3a0] sm:$0xf]
    %v256 = vld [vmem:[%s1 + $0x3a4] sm:$0xf]
    %v257 = vld [vmem:[%s1 + $0x3a8] sm:$0xf]
    %v258 = vld [vmem:[%s1 + $0x3ac] sm:$0xf]
    %v259 = vld [vmem:[%s1 + $0x3b0] sm:$0xf]
    %v260 = vld [vmem:[%s1 + $0x3b4] sm:$0xf]
    %v261 = vld [vmem:[%s1 + $0x3b8] sm:$0xf]
    %v262 = vld [vmem:[%s1 + $0x3bc] sm:$0xf]
    %v263 = vld [vmem:[%s2] sm:$0x1]
    %v265 = vperm.slane %v263, 0
    %268 = vst [vmem:[#allocation1] ss:$9 sm:$0xff] %v21
    %v269 = vld [vmem:[#allocation1] sm:$0xff]
    %v270 = vld [vmem:[#allocation1 + $0x9] sm:$0xff]
    %v271 = vld [vmem:[#allocation1 + $0x12] sm:$0xff]
    %v272 = vld [vmem:[#allocation1 + $0x1b] sm:$0xff]
    %v273 = vld [vmem:[#allocation1 + $0x24] sm:$0xff]
    %v274 = vld [vmem:[#allocation1 + $0x2d] sm:$0xff]
    %v275 = vld [vmem:[#allocation1 + $0x36] sm:$0xff]
    %v276 = vld [vmem:[#allocation1 + $0x3f] sm:$0xff]
    %278 = vst [vmem:[#allocation1] ss:$9 sm:$0xff] %v22
    %v279 = vld [vmem:[#allocation1] sm:$0xff]
    %v280 = vld [vmem:[#allocation1 + $0x9] sm:$0xff]
    %v281 = vld [vmem:[#allocation1 + $0x12] sm:$0xff]
    %v282 = vld [vmem:[#allocation1 + $0x1b] sm:$0xff]
    %v283 = vld [vmem:[#allocation1 + $0x24] sm:$0xff]
    %v284 = vld [vmem:[#allocation1 + $0x2d] sm:$0xff]
    %v285 = vld [vmem:[#allocation1 + $0x36] sm:$0xff]
    %v541 = vunpack.c.l.b16 %v23
    %v542 = vunpack.c.l.b16 %v24
    %v543 = vunpack.c.l.b16 %v25
    %v544 = vunpack.c.l.b16 %v26
    %v545 = vunpack.c.l.b16 %v27
    %v546 = vunpack.c.l.b16 %v28
    %v547 = vunpack.c.l.b16 %v29
    %v548 = vunpack.c.l.b16 %v30
    %v549 = vunpack.c.l.b16 %v31
    %v550 = vunpack.c.l.b16 %v32
    %v551 = vunpack.c.l.b16 %v33
    %v552 = vunpack.c.l.b16 %v34
    %v553 = vunpack.c.l.b16 %v35
    %v554 = vunpack.c.l.b16 %v36
    %v555 = vunpack.c.l.b16 %v37
    %v556 = vunpack.c.l.b16 %v38
    %v557 = vunpack.c.l.b16 %v39
    %v558 = vunpack.c.l.b16 %v40
    %v559 = vunpack.c.l.b16 %v41
    %v560 = vunpack.c.l.b16 %v42
    %v561 = vunpack.c.l.b16 %v43
    %v562 = vunpack.c.l.b16 %v44
    %v563 = vunpack.c.l.b16 %v45
    %v564 = vunpack.c.l.b16 %v46
    %v565 = vunpack.c.l.b16 %v47
    %v566 = vunpack.c.l.b16 %v48
    %v567 = vunpack.c.l.b16 %v49
    %v568 = vunpack.c.l.b16 %v50
    %v569 = vunpack.c.l.b16 %v51
    %v570 = vunpack.c.l.b16 %v52
    %v571 = vunpack.c.l.b16 %v53
    %v572 = vunpack.c.l.b16 %v54
    %v573 = vunpack.c.l.b16 %v55
    %v574 = vunpack.c.l.b16 %v56
    %v575 = vunpack.c.l.b16 %v57
    %v576 = vunpack.c.l.b16 %v58
    %v577 = vunpack.c.l.b16 %v59
    %v578 = vunpack.c.l.b16 %v60
    %v579 = vunpack.c.l.b16 %v61
    %v580 = vunpack.c.l.b16 %v62
    %v581 = vunpack.c.l.b16 %v63
    %v582 = vunpack.c.l.b16 %v64
    %v583 = vunpack.c.l.b16 %v65
    %v584 = vunpack.c.l.b16 %v66
    %v585 = vunpack.c.l.b16 %v67
    %v586 = vunpack.c.l.b16 %v68
    %v587 = vunpack.c.l.b16 %v69
    %v588 = vunpack.c.l.b16 %v70
    %v589 = vunpack.c.l.b16 %v71
    %v590 = vunpack.c.l.b16 %v72
    %v591 = vunpack.c.l.b16 %v73
    %v592 = vunpack.c.l.b16 %v74
    %v593 = vunpack.c.l.b16 %v75
    %v594 = vunpack.c.l.b16 %v76
    %v595 = vunpack.c.l.b16 %v77
    %v596 = vunpack.c.l.b16 %v78
    %v597 = vunpack.c.l.b16 %v79
    %v598 = vunpack.c.l.b16 %v80
    %v599 = vunpack.c.l.b16 %v81
    %v600 = vunpack.c.l.b16 %v82
    %v601 = vunpack.c.l.b16 %v83
    %v602 = vunpack.c.l.b16 %v84
    %v603 = vunpack.c.l.b16 %v85
    %v604 = vunpack.c.l.b16 %v86
    %v605 = vunpack.c.l.b16 %v87
    %v606 = vunpack.c.l.b16 %v88
    %v607 = vunpack.c.l.b16 %v89
    %v608 = vunpack.c.l.b16 %v90
    %v609 = vunpack.c.l.b16 %v91
    %v610 = vunpack.c.l.b16 %v92
    %v611 = vunpack.c.l.b16 %v93
    %v612 = vunpack.c.l.b16 %v94
    %v613 = vunpack.c.l.b16 %v95
    %v614 = vunpack.c.l.b16 %v96
    %v615 = vunpack.c.l.b16 %v97
    %v616 = vunpack.c.l.b16 %v98
    %v617 = vunpack.c.l.b16 %v99
    %v618 = vunpack.c.l.b16 %v100
    %v619 = vunpack.c.l.b16 %v101
    %v620 = vunpack.c.l.b16 %v102
    %v621 = vunpack.c.l.b16 %v103
    %v622 = vunpack.c.l.b16 %v104
    %v623 = vunpack.c.l.b16 %v105
    %v624 = vunpack.c.l.b16 %v106
    %v625 = vunpack.c.l.b16 %v107
    %v626 = vunpack.c.l.b16 %v108
    %v627 = vunpack.c.l.b16 %v109
    %v628 = vunpack.c.l.b16 %v110
    %v629 = vunpack.c.l.b16 %v111
    %v630 = vunpack.c.l.b16 %v112
    %v631 = vunpack.c.l.b16 %v113
    %v632 = vunpack.c.l.b16 %v114
    %v633 = vunpack.c.l.b16 %v115
    %v634 = vunpack.c.l.b16 %v116
    %v635 = vunpack.c.l.b16 %v117
    %v636 = vunpack.c.l.b16 %v118
    %v637 = vunpack.c.l.b16 %v119
    %v638 = vunpack.c.l.b16 %v120
    %v639 = vunpack.c.l.b16 %v121
    %v640 = vunpack.c.l.b16 %v122
    %v641 = vunpack.c.l.b16 %v123
    %v642 = vunpack.c.l.b16 %v124
    %v643 = vunpack.c.l.b16 %v125
    %v644 = vunpack.c.l.b16 %v126
    %v645 = vunpack.c.l.b16 %v127
    %v646 = vunpack.c.l.b16 %v128
    %v647 = vunpack.c.l.b16 %v129
    %v648 = vunpack.c.l.b16 %v130
    %v649 = vunpack.c.l.b16 %v131
    %v650 = vunpack.c.l.b16 %v132
    %v651 = vunpack.c.l.b16 %v133
    %v652 = vunpack.c.l.b16 %v134
    %v653 = vunpack.c.l.b16 %v135
    %v654 = vunpack.c.l.b16 %v136
    %v655 = vunpack.c.l.b16 %v137
    %v656 = vunpack.c.l.b16 %v138
    %v657 = vunpack.c.l.b16 %v139
    %v658 = vunpack.c.l.b16 %v140
    %v659 = vunpack.c.l.b16 %v141
    %v660 = vunpack.c.l.b16 %v142
    %v661 = vunpack.c.l.b16 %v143
    %v662 = vunpack.c.l.b16 %v144
    %v663 = vunpack.c.l.b16 %v145
    %v664 = vunpack.c.l.b16 %v146
    %v665 = vunpack.c.l.b16 %v147
    %v666 = vunpack.c.l.b16 %v148
    %v667 = vunpack.c.l.b16 %v149
    %v668 = vunpack.c.l.b16 %v150
    %v669 = vunpack.c.l.b16 %v151
    %v670 = vunpack.c.l.b16 %v152
    %v671 = vunpack.c.l.b16 %v153
    %v672 = vunpack.c.l.b16 %v154
    %v673 = vunpack.c.l.b16 %v155
    %v674 = vunpack.c.l.b16 %v156
    %v675 = vunpack.c.l.b16 %v157
    %v676 = vunpack.c.l.b16 %v158
    %v677 = vunpack.c.l.b16 %v159
    %v678 = vunpack.c.l.b16 %v160
    %v679 = vunpack.c.l.b16 %v161
    %v680 = vunpack.c.l.b16 %v162
    %v681 = vunpack.c.l.b16 %v163
    %v682 = vunpack.c.l.b16 %v164
    %v683 = vunpack.c.l.b16 %v165
    %v684 = vunpack.c.l.b16 %v166
    %v685 = vunpack.c.l.b16 %v167
    %v686 = vunpack.c.l.b16 %v168
    %v687 = vunpack.c.l.b16 %v169
    %v688 = vunpack.c.l.b16 %v170
    %v689 = vunpack.c.l.b16 %v171
    %v690 = vunpack.c.l.b16 %v172
    %v691 = vunpack.c.l.b16 %v173
    %v692 = vunpack.c.l.b16 %v174
    %v693 = vunpack.c.l.b16 %v175
    %v694 = vunpack.c.l.b16 %v176
    %v695 = vunpack.c.l.b16 %v177
    %v696 = vunpack.c.l.b16 %v178
    %v697 = vunpack.c.l.b16 %v179
    %v698 = vunpack.c.l.b16 %v180
    %v699 = vunpack.c.l.b16 %v181
    %v700 = vunpack.c.l.b16 %v182
    %v701 = vunpack.c.l.b16 %v183
    %v702 = vunpack.c.l.b16 %v184
    %v703 = vunpack.c.l.b16 %v185
    %v704 = vunpack.c.l.b16 %v186
    %v705 = vunpack.c.l.b16 %v187
    %v706 = vunpack.c.l.b16 %v188
    %v707 = vunpack.c.l.b16 %v189
    %v708 = vunpack.c.l.b16 %v190
    %v709 = vunpack.c.l.b16 %v191
    %v710 = vunpack.c.l.b16 %v192
    %v711 = vunpack.c.l.b16 %v193
    %v712 = vunpack.c.l.b16 %v194
    %v713 = vunpack.c.l.b16 %v195
    %v714 = vunpack.c.l.b16 %v196
    %v715 = vunpack.c.l.b16 %v197
    %v716 = vunpack.c.l.b16 %v198
    %v717 = vunpack.c.l.b16 %v199
    %v718 = vunpack.c.l.b16 %v200
    %v719 = vunpack.c.l.b16 %v201
    %v720 = vunpack.c.l.b16 %v202
    %v721 = vunpack.c.l.b16 %v203
    %v722 = vunpack.c.l.b16 %v204
    %v723 = vunpack.c.l.b16 %v205
    %v724 = vunpack.c.l.b16 %v206
    %v725 = vunpack.c.l.b16 %v207
    %v726 = vunpack.c.l.b16 %v208
    %v727 = vunpack.c.l.b16 %v209
    %v728 = vunpack.c.l.b16 %v210
    %v729 = vunpack.c.l.b16 %v211
    %v730 = vunpack.c.l.b16 %v212
    %v731 = vunpack.c.l.b16 %v213
    %v732 = vunpack.c.l.b16 %v214
    %v733 = vunpack.c.l.b16 %v215
    %v734 = vunpack.c.l.b16 %v216
    %v735 = vunpack.c.l.b16 %v217
    %v736 = vunpack.c.l.b16 %v218
    %v737 = vunpack.c.l.b16 %v219
    %v738 = vunpack.c.l.b16 %v220
    %v739 = vunpack.c.l.b16 %v221
    %v740 = vunpack.c.l.b16 %v222
    %v741 = vunpack.c.l.b16 %v223
    %v742 = vunpack.c.l.b16 %v224
    %v743 = vunpack.c.l.b16 %v225
    %v744 = vunpack.c.l.b16 %v226
    %v745 = vunpack.c.l.b16 %v227
    %v746 = vunpack.c.l.b16 %v228
    %v747 = vunpack.c.l.b16 %v229
    %v748 = vunpack.c.l.b16 %v230
    %v749 = vunpack.c.l.b16 %v231
    %v750 = vunpack.c.l.b16 %v232
    %v751 = vunpack.c.l.b16 %v233
    %v752 = vunpack.c.l.b16 %v234
    %v753 = vunpack.c.l.b16 %v235
    %v754 = vunpack.c.l.b16 %v236
    %v755 = vunpack.c.l.b16 %v237
    %v756 = vunpack.c.l.b16 %v238
    %v757 = vunpack.c.l.b16 %v239
    %v758 = vunpack.c.l.b16 %v240
    %v759 = vunpack.c.l.b16 %v241
    %v760 = vunpack.c.l.b16 %v242
    %v761 = vunpack.c.l.b16 %v243
    %v762 = vunpack.c.l.b16 %v244
    %v763 = vunpack.c.l.b16 %v245
    %v764 = vunpack.c.l.b16 %v246
    %v765 = vunpack.c.l.b16 %v247
    %v766 = vunpack.c.l.b16 %v248
    %v767 = vunpack.c.l.b16 %v249
    %v768 = vunpack.c.l.b16 %v250
    %v769 = vunpack.c.l.b16 %v251
    %v770 = vunpack.c.l.b16 %v252
    %v771 = vunpack.c.l.b16 %v253
    %v772 = vunpack.c.l.b16 %v254
    %v773 = vunpack.c.l.b16 %v255
    %v774 = vunpack.c.l.b16 %v256
    %v775 = vunpack.c.l.b16 %v257
    %v776 = vunpack.c.l.b16 %v258
    %v777 = vunpack.c.l.b16 %v259
    %v778 = vunpack.c.l.b16 %v260
    %v779 = vunpack.c.l.b16 %v261
    %v780 = vunpack.c.l.b16 %v262
    %v781 = vpack.c.b16 %v542, %v541
    %v782 = vpack.c.b16 %v544, %v543
    %v783 = vpack.c.b16 %v546, %v545
    %v784 = vpack.c.b16 %v548, %v547
    %v785 = vpack.c.b16 %v550, %v549
    %v786 = vpack.c.b16 %v552, %v551
    %v787 = vpack.c.b16 %v554, %v553
    %v788 = vpack.c.b16 %v556, %v555
    %v789 = vpack.c.b16 %v558, %v557
    %v790 = vpack.c.b16 %v560, %v559
    %v791 = vpack.c.b16 %v562, %v561
    %v792 = vpack.c.b16 %v564, %v563
    %v793 = vpack.c.b16 %v566, %v565
    %v794 = vpack.c.b16 %v568, %v567
    %v795 = vpack.c.b16 %v570, %v569
    %v796 = vpack.c.b16 %v572, %v571
    %v797 = vpack.c.b16 %v574, %v573
    %v798 = vpack.c.b16 %v576, %v575
    %v799 = vpack.c.b16 %v578, %v577
    %v800 = vpack.c.b16 %v580, %v579
    %v801 = vpack.c.b16 %v582, %v581
    %v802 = vpack.c.b16 %v584, %v583
    %v803 = vpack.c.b16 %v586, %v585
    %v804 = vpack.c.b16 %v588, %v587
    %v805 = vpack.c.b16 %v590, %v589
    %v806 = vpack.c.b16 %v592, %v591
    %v807 = vpack.c.b16 %v594, %v593
    %v808 = vpack.c.b16 %v596, %v595
    %v809 = vpack.c.b16 %v598, %v597
    %v810 = vpack.c.b16 %v600, %v599
    %v811 = vpack.c.b16 %v602, %v601
    %v812 = vpack.c.b16 %v604, %v603
    %v813 = vpack.c.b16 %v606, %v605
    %v814 = vpack.c.b16 %v608, %v607
    %v815 = vpack.c.b16 %v610, %v609
    %v816 = vpack.c.b16 %v612, %v611
    %v817 = vpack.c.b16 %v614, %v613
    %v818 = vpack.c.b16 %v616, %v615
    %v819 = vpack.c.b16 %v618, %v617
    %v820 = vpack.c.b16 %v620, %v619
    %v821 = vpack.c.b16 %v622, %v621
    %v822 = vpack.c.b16 %v624, %v623
    %v823 = vpack.c.b16 %v626, %v625
    %v824 = vpack.c.b16 %v628, %v627
    %v825 = vpack.c.b16 %v630, %v629
    %v826 = vpack.c.b16 %v632, %v631
    %v827 = vpack.c.b16 %v634, %v633
    %v828 = vpack.c.b16 %v636, %v635
    %v829 = vpack.c.b16 %v638, %v637
    %v830 = vpack.c.b16 %v640, %v639
    %v831 = vpack.c.b16 %v642, %v641
    %v832 = vpack.c.b16 %v644, %v643
    %v833 = vpack.c.b16 %v646, %v645
    %v834 = vpack.c.b16 %v648, %v647
    %v835 = vpack.c.b16 %v650, %v649
    %v836 = vpack.c.b16 %v652, %v651
    %v837 = vpack.c.b16 %v654, %v653
    %v838 = vpack.c.b16 %v656, %v655
    %v839 = vpack.c.b16 %v658, %v657
    %v840 = vpack.c.b16 %v660, %v659
    %v841 = vpack.c.b16 %v662, %v661
    %v842 = vpack.c.b16 %v664, %v663
    %v843 = vpack.c.b16 %v666, %v665
    %v844 = vpack.c.b16 %v668, %v667
    %v845 = vpack.c.b16 %v670, %v669
    %v846 = vpack.c.b16 %v672, %v671
    %v847 = vpack.c.b16 %v674, %v673
    %v848 = vpack.c.b16 %v676, %v675
    %v849 = vpack.c.b16 %v678, %v677
    %v850 = vpack.c.b16 %v680, %v679
    %v851 = vpack.c.b16 %v682, %v681
    %v852 = vpack.c.b16 %v684, %v683
    %v853 = vpack.c.b16 %v686, %v685
    %v854 = vpack.c.b16 %v688, %v687
    %v855 = vpack.c.b16 %v690, %v689
    %v856 = vpack.c.b16 %v692, %v691
    %v857 = vpack.c.b16 %v694, %v693
    %v858 = vpack.c.b16 %v696, %v695
    %v859 = vpack.c.b16 %v698, %v697
    %v860 = vpack.c.b16 %v700, %v699
    %v861 = vpack.c.b16 %v702, %v701
    %v862 = vpack.c.b16 %v704, %v703
    %v863 = vpack.c.b16 %v706, %v705
    %v864 = vpack.c.b16 %v708, %v707
    %v865 = vpack.c.b16 %v710, %v709
    %v866 = vpack.c.b16 %v712, %v711
    %v867 = vpack.c.b16 %v714, %v713
    %v868 = vpack.c.b16 %v716, %v715
    %v869 = vpack.c.b16 %v718, %v717
    %v870 = vpack.c.b16 %v720, %v719
    %v871 = vpack.c.b16 %v722, %v721
    %v872 = vpack.c.b16 %v724, %v723
    %v873 = vpack.c.b16 %v726, %v725
    %v874 = vpack.c.b16 %v728, %v727
    %v875 = vpack.c.b16 %v730, %v729
    %v876 = vpack.c.b16 %v732, %v731
    %v877 = vpack.c.b16 %v734, %v733
    %v878 = vpack.c.b16 %v736, %v735
    %v879 = vpack.c.b16 %v738, %v737
    %v880 = vpack.c.b16 %v740, %v739
    %v881 = vpack.c.b16 %v742, %v741
    %v882 = vpack.c.b16 %v744, %v743
    %v883 = vpack.c.b16 %v746, %v745
    %v884 = vpack.c.b16 %v748, %v747
    %v885 = vpack.c.b16 %v750, %v749
    %v886 = vpack.c.b16 %v752, %v751
    %v887 = vpack.c.b16 %v754, %v753
    %v888 = vpack.c.b16 %v756, %v755
    %v889 = vpack.c.b16 %v758, %v757
    %v890 = vpack.c.b16 %v760, %v759
    %v891 = vpack.c.b16 %v762, %v761
    %v892 = vpack.c.b16 %v764, %v763
    %v893 = vpack.c.b16 %v766, %v765
    %v894 = vpack.c.b16 %v768, %v767
    %v895 = vpack.c.b16 %v770, %v769
    %v896 = vpack.c.b16 %v772, %v771
    %v897 = vpack.c.b16 %v774, %v773
    %v898 = vpack.c.b16 %v776, %v775
    %v899 = vpack.c.b16 %v778, %v777
    %v900 = vpack.c.b16 %v780, %v779
    %1021 = vmatpush.bf16.msra.mxu0 %v788
    %1022 = vmatpush.bf16.msra.mxu0 %v787
    %1023 = vmatpush.bf16.msra.mxu0 %v786
    %1024 = vmatpush.bf16.msra.mxu0 %v785
    %1025 = vmatpush.bf16.msra.mxu0 %v784
    %1026 = vmatpush.bf16.msra.mxu0 %v783
    %1027 = vmatpush.bf16.msra.mxu0 %v782
    %1028 = vmatpush.bf16.msra.mxu0 %v781
    %1029 = vmatmul.bf16.gmra.mxu0 %v269
    %v1030 = vpop.f32.mrf.mxu0
    %v1031 = vadd.f32 %v265, %v1030
    %v1032 = vpop.f32.mrf.mxu0
    %1033 = vdwg.mxu0
    %1034 = vmatpush.bf16.msra.mxu0 %v796
    %1035 = vmatpush.bf16.msra.mxu0 %v795
    %1036 = vmatpush.bf16.msra.mxu0 %v794
    %1037 = vmatpush.bf16.msra.mxu0 %v793
    %1038 = vmatpush.bf16.msra.mxu0 %v792
    %1039 = vmatpush.bf16.msra.mxu0 %v791
    %1040 = vmatpush.bf16.msra.mxu0 %v790
    %1041 = vmatpush.bf16.msra.mxu0 %v789
    %1042 = vmatmul.bf16.gmra.mxu0 %v270
    %v1043 = vpop.f32.mrf.mxu0
    %v1044 = vadd.f32 %v1031, %v1043
    %v1045 = vpop.f32.mrf.mxu0
    %1046 = vdwg.mxu0
    %1047 = vmatpush.bf16.msra.mxu0 %v804
    %1048 = vmatpush.bf16.msra.mxu0 %v803
    %1049 = vmatpush.bf16.msra.mxu0 %v802
    %1050 = vmatpush.bf16.msra.mxu0 %v801
    %1051 = vmatpush.bf16.msra.mxu0 %v800
    %1052 = vmatpush.bf16.msra.mxu0 %v799
    %1053 = vmatpush.bf16.msra.mxu0 %v798
    %1054 = vmatpush.bf16.msra.mxu0 %v797
    %1055 = vmatmul.bf16.gmra.mxu0 %v271
    %v1056 = vpop.f32.mrf.mxu0
    %v1057 = vadd.f32 %v1044, %v1056
    %v1058 = vpop.f32.mrf.mxu0
    %1059 = vdwg.mxu0
    %1060 = vmatpush.bf16.msra.mxu0 %v812
    %1061 = vmatpush.bf16.msra.mxu0 %v811
    %1062 = vmatpush.bf16.msra.mxu0 %v810
    %1063 = vmatpush.bf16.msra.mxu0 %v809
    %1064 = vmatpush.bf16.msra.mxu0 %v808
    %1065 = vmatpush.bf16.msra.mxu0 %v807
    %1066 = vmatpush.bf16.msra.mxu0 %v806
    %1067 = vmatpush.bf16.msra.mxu0 %v805
    %1068 = vmatmul.bf16.gmra.mxu0 %v272
    %v1069 = vpop.f32.mrf.mxu0
    %v1070 = vadd.f32 %v1057, %v1069
    %v1071 = vpop.f32.mrf.mxu0
    %1072 = vdwg.mxu0
    %1073 = vmatpush.bf16.msra.mxu0 %v820
    %1074 = vmatpush.bf16.msra.mxu0 %v819
    %1075 = vmatpush.bf16.msra.mxu0 %v818
    %1076 = vmatpush.bf16.msra.mxu0 %v817
    %1077 = vmatpush.bf16.msra.mxu0 %v816
    %1078 = vmatpush.bf16.msra.mxu0 %v815
    %1079 = vmatpush.bf16.msra.mxu0 %v814
    %1080 = vmatpush.bf16.msra.mxu0 %v813
    %1081 = vmatmul.bf16.gmra.mxu0 %v273
    %v1082 = vpop.f32.mrf.mxu0
    %v1083 = vadd.f32 %v1070, %v1082
    %v1084 = vpop.f32.mrf.mxu0
    %1085 = vdwg.mxu0
    %1086 = vmatpush.bf16.msra.mxu0 %v828
    %1087 = vmatpush.bf16.msra.mxu0 %v827
    %1088 = vmatpush.bf16.msra.mxu0 %v826
    %1089 = vmatpush.bf16.msra.mxu0 %v825
    %1090 = vmatpush.bf16.msra.mxu0 %v824
    %1091 = vmatpush.bf16.msra.mxu0 %v823
    %1092 = vmatpush.bf16.msra.mxu0 %v822
    %1093 = vmatpush.bf16.msra.mxu0 %v821
    %1094 = vmatmul.bf16.gmra.mxu0 %v274
    %v1095 = vpop.f32.mrf.mxu0
    %v1096 = vadd.f32 %v1083, %v1095
    %v1097 = vpop.f32.mrf.mxu0
    %1098 = vdwg.mxu0
    %1099 = vmatpush.bf16.msra.mxu0 %v836
    %1100 = vmatpush.bf16.msra.mxu0 %v835
    %1101 = vmatpush.bf16.msra.mxu0 %v834
    %1102 = vmatpush.bf16.msra.mxu0 %v833
    %1103 = vmatpush.bf16.msra.mxu0 %v832
    %1104 = vmatpush.bf16.msra.mxu0 %v831
    %1105 = vmatpush.bf16.msra.mxu0 %v830
    %1106 = vmatpush.bf16.msra.mxu0 %v829
    %1107 = vmatmul.bf16.gmra.mxu0 %v275
    %v1108 = vpop.f32.mrf.mxu0
    %v1109 = vadd.f32 %v1096, %v1108
    %v1110 = vpop.f32.mrf.mxu0
    %1111 = vdwg.mxu0
    %1112 = vmatpush.bf16.msra.mxu0 %v844
    %1113 = vmatpush.bf16.msra.mxu0 %v843
    %1114 = vmatpush.bf16.msra.mxu0 %v842
    %1115 = vmatpush.bf16.msra.mxu0 %v841
    %1116 = vmatpush.bf16.msra.mxu0 %v840
    %1117 = vmatpush.bf16.msra.mxu0 %v839
    %1118 = vmatpush.bf16.msra.mxu0 %v838
    %1119 = vmatpush.bf16.msra.mxu0 %v837
    %1120 = vmatmul.bf16.gmra.mxu0 %v276
    %v1121 = vpop.f32.mrf.mxu0
    %v1122 = vadd.f32 %v1109, %v1121
    %v1123 = vpop.f32.mrf.mxu0
    %1124 = vdwg.mxu0
    %1125 = vmatpush.bf16.msra.mxu0 %v852
    %1126 = vmatpush.bf16.msra.mxu0 %v851
    %1127 = vmatpush.bf16.msra.mxu0 %v850
    %1128 = vmatpush.bf16.msra.mxu0 %v849
    %1129 = vmatpush.bf16.msra.mxu0 %v848
    %1130 = vmatpush.bf16.msra.mxu0 %v847
    %1131 = vmatpush.bf16.msra.mxu0 %v846
    %1132 = vmatpush.bf16.msra.mxu0 %v845
    %1133 = vmatmul.bf16.gmra.mxu0 %v279
    %v1134 = vpop.f32.mrf.mxu0
    %v1135 = vadd.f32 %v1122, %v1134
    %v1136 = vpop.f32.mrf.mxu0
    %1137 = vdwg.mxu0
    %1138 = vmatpush.bf16.msra.mxu0 %v860
    %1139 = vmatpush.bf16.msra.mxu0 %v859
    %1140 = vmatpush.bf16.msra.mxu0 %v858
    %1141 = vmatpush.bf16.msra.mxu0 %v857
    %1142 = vmatpush.bf16.msra.mxu0 %v856
    %1143 = vmatpush.bf16.msra.mxu0 %v855
    %1144 = vmatpush.bf16.msra.mxu0 %v854
    %1145 = vmatpush.bf16.msra.mxu0 %v853
    %1146 = vmatmul.bf16.gmra.mxu0 %v280
    %v1147 = vpop.f32.mrf.mxu0
    %v1148 = vadd.f32 %v1135, %v1147
    %v1149 = vpop.f32.mrf.mxu0
    %1150 = vdwg.mxu0
    %1151 = vmatpush.bf16.msra.mxu0 %v868
    %1152 = vmatpush.bf16.msra.mxu0 %v867
    %1153 = vmatpush.bf16.msra.mxu0 %v866
    %1154 = vmatpush.bf16.msra.mxu0 %v865
    %1155 = vmatpush.bf16.msra.mxu0 %v864
    %1156 = vmatpush.bf16.msra.mxu0 %v863
    %1157 = vmatpush.bf16.msra.mxu0 %v862
    %1158 = vmatpush.bf16.msra.mxu0 %v861
    %1159 = vmatmul.bf16.gmra.mxu0 %v281
    %v1160 = vpop.f32.mrf.mxu0
    %v1161 = vadd.f32 %v1148, %v1160
    %v1162 = vpop.f32.mrf.mxu0
    %1163 = vdwg.mxu0
    %1164 = vmatpush.bf16.msra.mxu0 %v876
    %1165 = vmatpush.bf16.msra.mxu0 %v875
    %1166 = vmatpush.bf16.msra.mxu0 %v874
    %1167 = vmatpush.bf16.msra.mxu0 %v873
    %1168 = vmatpush.bf16.msra.mxu0 %v872
    %1169 = vmatpush.bf16.msra.mxu0 %v871
    %1170 = vmatpush.bf16.msra.mxu0 %v870
    %1171 = vmatpush.bf16.msra.mxu0 %v869
    %1172 = vmatmul.bf16.gmra.mxu0 %v282
    %v1173 = vpop.f32.mrf.mxu0
    %v1174 = vadd.f32 %v1161, %v1173
    %v1175 = vpop.f32.mrf.mxu0
    %1176 = vdwg.mxu0
    %1177 = vmatpush.bf16.msra.mxu0 %v884
    %1178 = vmatpush.bf16.msra.mxu0 %v883
    %1179 = vmatpush.bf16.msra.mxu0 %v882
    %1180 = vmatpush.bf16.msra.mxu0 %v881
    %1181 = vmatpush.bf16.msra.mxu0 %v880
    %1182 = vmatpush.bf16.msra.mxu0 %v879
    %1183 = vmatpush.bf16.msra.mxu0 %v878
    %1184 = vmatpush.bf16.msra.mxu0 %v877
    %1185 = vmatmul.bf16.gmra.mxu0 %v283
    %v1186 = vpop.f32.mrf.mxu0
    %v1187 = vadd.f32 %v1174, %v1186
    %v1188 = vpop.f32.mrf.mxu0
    %1189 = vdwg.mxu0
    %1190 = vmatpush.bf16.msra.mxu0 %v892
    %1191 = vmatpush.bf16.msra.mxu0 %v891
    %1192 = vmatpush.bf16.msra.mxu0 %v890
    %1193 = vmatpush.bf16.msra.mxu0 %v889
    %1194 = vmatpush.bf16.msra.mxu0 %v888
    %1195 = vmatpush.bf16.msra.mxu0 %v887
    %1196 = vmatpush.bf16.msra.mxu0 %v886
    %1197 = vmatpush.bf16.msra.mxu0 %v885
    %1198 = vmatmul.bf16.gmra.mxu0 %v284
    %v1199 = vpop.f32.mrf.mxu0
    %v1200 = vadd.f32 %v1187, %v1199
    %v1201 = vpop.f32.mrf.mxu0
    %1202 = vdwg.mxu0
    %1203 = vmatpush.bf16.msra.mxu0 %v900
    %1204 = vmatpush.bf16.msra.mxu0 %v899
    %1205 = vmatpush.bf16.msra.mxu0 %v898
    %1206 = vmatpush.bf16.msra.mxu0 %v897
    %1207 = vmatpush.bf16.msra.mxu0 %v896
    %1208 = vmatpush.bf16.msra.mxu0 %v895
    %1209 = vmatpush.bf16.msra.mxu0 %v894
    %1210 = vmatpush.bf16.msra.mxu0 %v893
    %1211 = vmatmul.bf16.gmra.mxu0 %v285
    %v1212 = vpop.f32.mrf.mxu0
    %v1213 = vadd.f32 %v1200, %v1212
    %v1214 = vpop.f32.mrf.mxu0
    %1215 = vdwg.mxu0
    %v1216 = vmax.f32 %v1213, 0.0
    %v1217 = vld [vmem:[%s3] sm:$0xff]
    %v1218 = vld [vmem:[%s3 + $0x8] sm:$0xff]
    %v1219 = vld [vmem:[%s3 + $0x10] sm:$0xff]
    %v1220 = vld [vmem:[%s3 + $0x18] sm:$0xff]
    %v1221 = vld [vmem:[%s3 + $0x20] sm:$0xff]
    %v1222 = vld [vmem:[%s3 + $0x28] sm:$0xff]
    %v1223 = vld [vmem:[%s3 + $0x30] sm:$0xff]
    %v1224 = vld [vmem:[%s3 + $0x38] sm:$0xff]
    %v1225 = vld [vmem:[%s3 + $0x40] sm:$0xff]
    %v1226 = vld [vmem:[%s3 + $0x48] sm:$0xff]
    %v1227 = vld [vmem:[%s3 + $0x50] sm:$0xff]
    %v1228 = vld [vmem:[%s3 + $0x58] sm:$0xff]
    %v1229 = vld [vmem:[%s3 + $0x60] sm:$0xff]
    %v1230 = vld [vmem:[%s3 + $0x68] sm:$0xff]
    %v1231 = vld [vmem:[%s3 + $0x70] sm:$0xff]
    %v1232 = vld [vmem:[%s3 + $0x78] sm:$0xff]
    %v1233 = vld [vmem:[%s4] sm:$0x1]
    %v1235 = vperm.slane %v1233, 0
    %1237 = vmatpush.msra.mxu0 %v1232
    %1238 = vmatpush.msra.mxu0 %v1231
    %1239 = vmatpush.msra.mxu0 %v1230
    %1240 = vmatpush.msra.mxu0 %v1229
    %1241 = vmatpush.msra.mxu0 %v1228
    %1242 = vmatpush.msra.mxu0 %v1227
    %1243 = vmatpush.msra.mxu0 %v1226
    %1244 = vmatpush.msra.mxu0 %v1225
    %1245 = vmatpush.msra.mxu0 %v1224
    %1246 = vmatpush.msra.mxu0 %v1223
    %1247 = vmatpush.msra.mxu0 %v1222
    %1248 = vmatpush.msra.mxu0 %v1221
    %1249 = vmatpush.msra.mxu0 %v1220
    %1250 = vmatpush.msra.mxu0 %v1219
    %1251 = vmatpush.msra.mxu0 %v1218
    %1252 = vmatpush.msra.mxu0 %v1217
    %1253 = vmatmul.f32.gmra.mxu0 %v1216
    %v1254 = vpop.f32.mrf.mxu0
    %v1255 = vadd.f32 %v1235, %v1254
    %1256 = vdwg.mxu0
    %1257 = vst [vmem:[#allocation2] sm:$0x3] %v1255
    // Predicated region
    $region22: #{hhn_sconvb_forward.3} parent=1 // pred_check
      _
    $region23: #{hhn_sconvb_forward.3} parent=1 // pred_check_branch
      %1259 = sbr.rel (0) target = $region25
    $region24: #{hhn_sconvb_forward.3} parent=1 // pred_region
      %1261 = vsyncadd [#allocation3], 0
      %s1263 = sshll.u32 [#allocation2], 4
      %s1264 = int_to_ptr.vmem [resolvable:$true] %s1263
      %s1265 = sshll.u32 %s5, 4
      %s1266 = int_to_ptr.hbm [resolvable:$true] %s1265
      %1268 = dma.vmem_to_hbm [thread:$0]  %s1264, 32, %s1266, [#allocation3]
    $region25: #{hhn_sconvb_forward.3} parent=1 // pred_fallthru
      _
    // Predicated region
    $region26: #{hhn_sconvb_forward.3} parent=1 // pred_check
      _
    $region27: #{hhn_sconvb_forward.3} parent=1 // pred_check_branch
      %1270 = sbr.rel (0) target = $region29
    $region28: #{hhn_sconvb_forward.3} parent=1 // pred_region
      %1272 = dma.done [#allocation3], 32
    $region29: #{hhn_sconvb_forward.3} parent=1 // pred_fallthru
      _
    %1273 = vsyncpa [#allocation3], 1

// kernel: hhn_sconvb_forward.2
$region0: #{hhn_sconvb_forward.2}
  #allocation0 [shape = 'u32[]', space=smem, size = 0x4, offset = 0x4, fixed_abs, tag = 'smem constant byte address 0x4 - core index']
  #allocation1 [shape = 'u32[72,128]{1,0:T(1,128)}', space=vmem, size = 0x9000, scoped, tag = 'internal scratch']
  %s0 = inlined_call_operand.vmem [shape: bf16[2,456,128], index: 0, kind: input, shape index: {}]
  %s1 = inlined_call_operand.vmem [shape: bf16[25,128,128], index: 1, kind: input, shape index: {}]
  %s2 = inlined_call_operand.vmem [shape: f32[1,128], index: 2, kind: input, shape index: {}]
  %s3 = inlined_call_operand.vmem [shape: bf16[1,9,128,128], index: 3, kind: input, shape index: {}]
  %s4 = inlined_call_operand.vmem [shape: f32[1,1,128], index: 4, kind: input, shape index: {}]
  %s5 = inlined_call_operand.vmem [shape: bf16[2,408,128], index: 5, kind: output, shape index: {}]
  %s6 = sld [smem:[#allocation0]]
  $region53: #{hhn_sconvb_forward.2} parent=0
    _
  %s8 = ssub.s32 1, %s6
  %s9 = scalar_select 0, %s8, %s6
  loop: start=0, step=1, limit=4
  $region2: #{hhn_sconvb_forward.2} parent=0 // loop_pre_header
    _
  $region3: #{hhn_sconvb_forward.2} parent=0 // loop_header
    %s11 = sphi 0, %s15
    %p12 = scmp.ge.s32.totalorder %s11, 4
    %s21 = sphi 0, %s23
    %s24 = sphi 0, %s21
    %s25 = sphi 0, %s24
    %s41 = sphi 0, %s25
    %s45 = sphi 0, %s45
    %s47 = sphi 0, %s45
    %s48 = sphi 0, %s47
    %s62 = sphi 0, %s48
    %s66 = sphi 0, %s66
    %s68 = sphi 0, %s66
    %s69 = sphi 0, %s68
    %s83 = sphi 0, %s69
    %s87 = sphi 0, %s87
    %s89 = sphi 0, %s87
    %s90 = sphi 0, %s89
    %s104 = sphi 0, %s90
    %s108 = sphi 0, %s108
    %s110 = sphi 0, %s108
    %s111 = sphi 0, %s110
    %s125 = sphi 0, %s111
    %s131 = sphi 0, %s133
    %s134 = sphi 0, %s131
    %s135 = sphi 0, %s134
    %s151 = sphi 0, %s135
  $region4: #{hhn_sconvb_forward.2} parent=0 // loop_header_branch
    %14 = sbr.rel (%p12) target = $region8
  $region5: #{hhn_sconvb_forward.2} parent=0 // loop_body
    %s16 = ssub.s32 %s11, 1
    %s17 = ssub.s32 %s11, 2
    %s18 = sadd.s32 %s11, 1
    %s19 = ssub.s32 %s11, %s18
    %p20 = scmp.eq.s32.totalorder %s19, 0
    %s22 = sadd.s32 %s21, 1
    %s23 = scalar_select %p20, %s21, %s22
    %p26 = pneg %p20
    %p27 = scmp.eq.s32.totalorder %s11, 1
    %p28 = por %p26, %p27
    %p29 = scmp.ne.s32.totalorder %s21, %s24
    %p30 = scmp.eq.s32.totalorder %s11, 0
    %p31 = por %p29, %p30
    %p32 = scmp.ne.s32.totalorder %s21, %s24
    %p33 = scmp.eq.s32.totalorder %s16, 1
    %p34 = por %p32, %p33
    %p35 = scmp.ne.s32.totalorder %s24, %s25
    %p36 = scmp.eq.s32.totalorder %s16, 0
    %p37 = por %p35, %p36
    %p38 = scmp.ne.s32.totalorder %s24, %s25
    %p39 = scmp.eq.s32.totalorder %s17, 1
    %p40 = por %p38, %p39
    %p42 = scmp.ne.s32.totalorder %s25, %s41
    %p43 = scmp.eq.s32.totalorder %s17, 0
    %p44 = por %p42, %p43
    %s46 = sadd.s32 %s45, 1
    %p49 = scmp.eq.s32.totalorder %s11, 1
    %p50 = scmp.ne.s32.totalorder %s45, %s47
    %p51 = scmp.eq.s32.totalorder %s11, 0
    %p52 = por %p50, %p51
    %p53 = scmp.ne.s32.totalorder %s45, %s47
    %p54 = scmp.eq.s32.totalorder %s16, 1
    %p55 = por %p53, %p54
    %p56 = scmp.ne.s32.totalorder %s47, %s48
    %p57 = scmp.eq.s32.totalorder %s16, 0
    %p58 = por %p56, %p57
    %p59 = scmp.ne.s32.totalorder %s47, %s48
    %p60 = scmp.eq.s32.totalorder %s17, 1
    %p61 = por %p59, %p60
    %p63 = scmp.ne.s32.totalorder %s48, %s62
    %p64 = scmp.eq.s32.totalorder %s17, 0
    %p65 = por %p63, %p64
    %s67 = sadd.s32 %s66, 1
    %p70 = scmp.eq.s32.totalorder %s11, 1
    %p71 = scmp.ne.s32.totalorder %s66, %s68
    %p72 = scmp.eq.s32.totalorder %s11, 0
    %p73 = por %p71, %p72
    %p74 = scmp.ne.s32.totalorder %s66, %s68
    %p75 = scmp.eq.s32.totalorder %s16, 1
    %p76 = por %p74, %p75
    %p77 = scmp.ne.s32.totalorder %s68, %s69
    %p78 = scmp.eq.s32.totalorder %s16, 0
    %p79 = por %p77, %p78
    %p80 = scmp.ne.s32.totalorder %s68, %s69
    %p81 = scmp.eq.s32.totalorder %s17, 1
    %p82 = por %p80, %p81
    %p84 = scmp.ne.s32.totalorder %s69, %s83
    %p85 = scmp.eq.s32.totalorder %s17, 0
    %p86 = por %p84, %p85
    %s88 = sadd.s32 %s87, 1
    %p91 = scmp.eq.s32.totalorder %s11, 1
    %p92 = scmp.ne.s32.totalorder %s87, %s89
    %p93 = scmp.eq.s32.totalorder %s11, 0
    %p94 = por %p92, %p93
    %p95 = scmp.ne.s32.totalorder %s87, %s89
    %p96 = scmp.eq.s32.totalorder %s16, 1
    %p97 = por %p95, %p96
    %p98 = scmp.ne.s32.totalorder %s89, %s90
    %p99 = scmp.eq.s32.totalorder %s16, 0
    %p100 = por %p98, %p99
    %p101 = scmp.ne.s32.totalorder %s89, %s90
    %p102 = scmp.eq.s32.totalorder %s17, 1
    %p103 = por %p101, %p102
    %p105 = scmp.ne.s32.totalorder %s90, %s104
    %p106 = scmp.eq.s32.totalorder %s17, 0
    %p107 = por %p105, %p106
    %s109 = sadd.s32 %s108, 1
    %p112 = scmp.eq.s32.totalorder %s11, 1
    %p113 = scmp.ne.s32.totalorder %s108, %s110
    %p114 = scmp.eq.s32.totalorder %s11, 0
    %p115 = por %p113, %p114
    %p116 = scmp.ne.s32.totalorder %s108, %s110
    %p117 = scmp.eq.s32.totalorder %s16, 1
    %p118 = por %p116, %p117
    %p119 = scmp.ne.s32.totalorder %s110, %s111
    %p120 = scmp.eq.s32.totalorder %s16, 0
    %p121 = por %p119, %p120
    %p122 = scmp.ne.s32.totalorder %s110, %s111
    %p123 = scmp.eq.s32.totalorder %s17, 1
    %p124 = por %p122, %p123
    %p126 = scmp.ne.s32.totalorder %s111, %s125
    %p127 = scmp.eq.s32.totalorder %s17, 0
    %p128 = por %p126, %p127
    %s129 = ssub.s32 %s11, %s18
    %p130 = scmp.eq.s32.totalorder %s129, 0
    %s132 = sadd.s32 %s131, 1
    %s133 = scalar_select %p130, %s131, %s132
    %p136 = pneg %p130
    %p137 = scmp.eq.s32.totalorder %s11, 1
    %p138 = por %p136, %p137
    %p139 = scmp.ne.s32.totalorder %s131, %s134
    %p140 = scmp.eq.s32.totalorder %s11, 0
    %p141 = por %p139, %p140
    %p142 = scmp.ne.s32.totalorder %s131, %s134
    %p143 = scmp.eq.s32.totalorder %s16, 1
    %p144 = por %p142, %p143
    %p145 = scmp.ne.s32.totalorder %s134, %s135
    %p146 = scmp.eq.s32.totalorder %s16, 0
    %p147 = por %p145, %p146
    %p148 = scmp.ne.s32.totalorder %s134, %s135
    %p149 = scmp.eq.s32.totalorder %s17, 1
    %p150 = por %p148, %p149
    %p152 = scmp.ne.s32.totalorder %s135, %s151
    %p153 = scmp.eq.s32.totalorder %s17, 0
    %p154 = por %p152, %p153
    %p155 = scmp.le.s32.totalorder 1, %s11
    %p156 = scmp.lt.s32.totalorder %s11, 3
    %p157 = pnand %p155, %p156
    %p158 = pneg %p157
    // Predicated region
    $region9: #{hhn_sconvb_forward.2} parent=5 // pred_check
      _
    $region10: #{hhn_sconvb_forward.2} parent=5 // pred_check_branch
      %160 = sbr.rel (%p157) target = $region12
    $region11: #{hhn_sconvb_forward.2} parent=5 // pred_region
      %s161 = ssub.s32 %s11, 1
      // Predicated region
      $region13: #{hhn_sconvb_forward.2} parent=11 // pred_check
        %p162 = pneg %p58
      $region14: #{hhn_sconvb_forward.2} parent=11 // pred_check_branch
        %164 = sbr.rel (%p162) target = $region16
      $region15: #{hhn_sconvb_forward.2} parent=11 // pred_region
        _
      $region16: #{hhn_sconvb_forward.2} parent=11 // pred_fallthru
        _
      // Predicated region
      $region17: #{hhn_sconvb_forward.2} parent=11 // pred_check
        %p165 = pneg %p79
      $region18: #{hhn_sconvb_forward.2} parent=11 // pred_check_branch
        %167 = sbr.rel (%p165) target = $region20
      $region19: #{hhn_sconvb_forward.2} parent=11 // pred_region
        _
      $region20: #{hhn_sconvb_forward.2} parent=11 // pred_fallthru
        _
      // Predicated region
      $region21: #{hhn_sconvb_forward.2} parent=11 // pred_check
        %p168 = pneg %p100
      $region22: #{hhn_sconvb_forward.2} parent=11 // pred_check_branch
        %170 = sbr.rel (%p168) target = $region24
      $region23: #{hhn_sconvb_forward.2} parent=11 // pred_region
        _
      $region24: #{hhn_sconvb_forward.2} parent=11 // pred_fallthru
        _
      // Predicated region
      $region25: #{hhn_sconvb_forward.2} parent=11 // pred_check
        %p171 = pneg %p121
      $region26: #{hhn_sconvb_forward.2} parent=11 // pred_check_branch
        %173 = sbr.rel (%p171) target = $region28
      $region27: #{hhn_sconvb_forward.2} parent=11 // pred_region
        _
      $region28: #{hhn_sconvb_forward.2} parent=11 // pred_fallthru
        _
    $region12: #{hhn_sconvb_forward.2} parent=5 // pred_fallthru
      _
    %p174 = scmp.lt.s32.totalorder %s11, 2
    // Predicated region
    $region29: #{hhn_sconvb_forward.2} parent=5 // pred_check
      %p175 = pneg %p174
    $region30: #{hhn_sconvb_forward.2} parent=5 // pred_check_branch
      %177 = sbr.rel (%p175) target = $region32
    $region31: #{hhn_sconvb_forward.2} parent=5 // pred_region
      // Predicated region
      $region33: #{hhn_sconvb_forward.2} parent=31 // pred_check
        %p178 = pneg %p31
      $region34: #{hhn_sconvb_forward.2} parent=31 // pred_check_branch
        %180 = sbr.rel (%p178) target = $region36
      $region35: #{hhn_sconvb_forward.2} parent=31 // pred_region
        %p181 = scmp.lt.s32.totalorder %s11, 1
        %s182 = scalar_select %p181, %s11, 1
        %s183 = smul.addr %s182, 57
        %s184 = smul.addr %s183, 4
        %s185 = scalar_lea.vmem %s0, %s184
      $region36: #{hhn_sconvb_forward.2} parent=31 // pred_fallthru
        _
    $region32: #{hhn_sconvb_forward.2} parent=5 // pred_fallthru
      _
    %p186 = scmp.le.s32.totalorder 1, %s11
    %p187 = scmp.lt.s32.totalorder %s11, 3
    %p188 = pnand %p186, %p187
    %p189 = pneg %p188
    // Predicated region
    $region37: #{hhn_sconvb_forward.2} parent=5 // pred_check
      _
    $region38: #{hhn_sconvb_forward.2} parent=5 // pred_check_branch
      %191 = sbr.rel (%p188) target = $region40
    $region39: #{hhn_sconvb_forward.2} parent=5 // pred_region
      %s192 = ssub.s32 %s11, 1
      %p193 = scmp.lt.s32.totalorder %s16, 1
      %s194 = scalar_select %p193, %s16, 1
      %s195 = smul.addr %s194, 57
      %s196 = smul.addr %s195, 4
      %s197 = scalar_lea.vmem %s0, %s196
      %p198 = pneg %p37
      %p199 = pneg %p34
      %p200 = pneg %p58
      %p201 = pneg %p55
      %p202 = pneg %p79
      %p203 = pneg %p76
      %p204 = pneg %p100
      %p205 = pneg %p97
      %p206 = pneg %p121
      %p207 = pneg %p118
      %p208 = pneg %p147
      %p209 = pneg %p144
      %p210 = scmp.lt.s32.totalorder %s16, 1
      %s211 = scalar_select %p210, %s16, 1
      %s212 = smul.addr %s211, 51
      %s213 = smul.addr %s212, 4
      %s214 = scalar_lea.vmem %s5, %s213
      %p215 = scmp.lt.s32.totalorder %s16, 1
      %s216 = scalar_select %p215, %s16, 1
      %s217 = smul.addr %s216, 57
      %s218 = smul.addr %s217, 4
      %s219 = scalar_lea.vmem %s0, %s218
      %p220 = scmp.lt.s32.totalorder %s16, 1
      %s221 = scalar_select %p220, %s16, 1
      %s222 = smul.addr %s221, 51
      %s223 = smul.addr %s222, 4
      %s224 = scalar_lea.vmem %s5, %s223
      %v225 = vlaneseq
      %v226 = vshrl.u32 %v225, 7
      %v227 = vadd.s32 %v226, 8
      %v228 = vadd.s32 %v226, 16
      %vm229 = vcmp.ge.s32.totalorder %v226, 1
      %vm230 = vcmp.ge.s32.totalorder %v227, 1
      %vm231 = vcmp.ge.s32.totalorder %v228, 1
      %vm232 = vmand 0, %vm229
      %vm233 = vmand 0, %vm230
      %vm234 = vmand 0, %vm231
      %vm235 = vmand 1, %vm229
      %vm236 = vmand 1, %vm230
      %vm237 = vmand 1, %vm231
      %vm238 = vcmp.le.s32.totalorder %v226, 15
      %vm239 = vcmp.le.s32.totalorder %v227, 15
      %vm240 = vcmp.le.s32.totalorder %v228, 15
      %vm241 = vmand %vm232, %vm238
      %vm242 = vmand %vm233, %vm239
      %vm243 = vmand %vm234, %vm240
      %vm244 = vmand %vm235, %vm238
      %vm245 = vmand %vm236, %vm239
      %vm246 = vmand %vm237, %vm240
      %v247 = vsel %vm241, 1, 0
      %v248 = vsel %vm242, 1, 0
      %v249 = vsel %vm243, 1, 0
      %v250 = vsel %vm244, 1, 0
      %v251 = vsel %vm245, 1, 0
      %v252 = vsel %vm246, 1, 0
      %v253 = vcvt.s32.f32 %v247
      %v254 = vcvt.s32.f32 %v248
      %v255 = vcvt.s32.f32 %v249
      %v256 = vcvt.s32.f32 %v250
      %v257 = vcvt.s32.f32 %v251
      %v258 = vcvt.s32.f32 %v252
      %v259 = vld [vmem:[%s219] sm:$0xf]
      %v260 = vld [vmem:[%s219 + $0x4] sm:$0xf]
      %v261 = vld [vmem:[%s219 + $0x8] sm:$0xf]
      %v262 = vld [vmem:[%s219 + $0xc] sm:$0xf]
      %v263 = vld [vmem:[%s219 + $0x10] sm:$0xf]
      %v264 = vld [vmem:[%s219 + $0x14] sm:$0xf]
      %v265 = vld [vmem:[%s219 + $0x18] sm:$0xf]
      %v266 = vld [vmem:[%s219 + $0x1c] sm:$0xf]
      %v267 = vld [vmem:[%s219 + $0x20] sm:$0xf]
      %v268 = vld [vmem:[%s219 + $0x24] sm:$0xf]
      %v269 = vld [vmem:[%s219 + $0x28] sm:$0xf]
      %v270 = vld [vmem:[%s219 + $0x2c] sm:$0xf]
      %v271 = vld [vmem:[%s219 + $0x30] sm:$0xf]
      %v272 = vld [vmem:[%s219 + $0x34] sm:$0xf]
      %v273 = vld [vmem:[%s219 + $0x38] sm:$0xf]
      %v274 = vld [vmem:[%s219 + $0x3c] sm:$0xf]
      %v275 = vld [vmem:[%s219 + $0x40] sm:$0xf]
      %v276 = vld [vmem:[%s219 + $0x44] sm:$0xf]
      %v277 = vld [vmem:[%s219 + $0x48] sm:$0xf]
      %v278 = vld [vmem:[%s219 + $0x4c] sm:$0xf]
      %v279 = vld [vmem:[%s219 + $0x50] sm:$0xf]
      %v280 = vld [vmem:[%s219 + $0x54] sm:$0xf]
      %v281 = vld [vmem:[%s219 + $0x58] sm:$0xf]
      %v282 = vld [vmem:[%s219 + $0x5c] sm:$0xf]
      %v283 = vld [vmem:[%s219 + $0x60] sm:$0xf]
      %v284 = vld [vmem:[%s219 + $0x64] sm:$0xf]
      %v285 = vld [vmem:[%s219 + $0x68] sm:$0xf]
      %v286 = vld [vmem:[%s219 + $0x6c] sm:$0xf]
      %v287 = vld [vmem:[%s219 + $0x70] sm:$0xf]
      %v288 = vld [vmem:[%s219 + $0x74] sm:$0xf]
      %v289 = vld [vmem:[%s219 + $0x78] sm:$0xf]
      %v290 = vld [vmem:[%s219 + $0x7c] sm:$0xf]
      %v291 = vld [vmem:[%s219 + $0x80] sm:$0xf]
      %v292 = vld [vmem:[%s219 + $0x84] sm:$0xf]
      %v293 = vld [vmem:[%s219 + $0x88] sm:$0xf]
      %v294 = vld [vmem:[%s219 + $0x8c] sm:$0xf]
      %v295 = vld [vmem:[%s219 + $0x90] sm:$0xf]
      %v296 = vld [vmem:[%s219 + $0x94] sm:$0xf]
      %v297 = vld [vmem:[%s219 + $0x98] sm:$0xf]
      %v298 = vld [vmem:[%s219 + $0x9c] sm:$0xf]
      %v299 = vld [vmem:[%s219 + $0xa0] sm:$0xf]
      %v300 = vld [vmem:[%s219 + $0xa4] sm:$0xf]
      %v301 = vld [vmem:[%s219 + $0xa8] sm:$0xf]
      %v302 = vld [vmem:[%s219 + $0xac] sm:$0xf]
      %v303 = vld [vmem:[%s219 + $0xb0] sm:$0xf]
      %v304 = vld [vmem:[%s219 + $0xb4] sm:$0xf]
      %v305 = vld [vmem:[%s219 + $0xb8] sm:$0xf]
      %v306 = vld [vmem:[%s219 + $0xbc] sm:$0xf]
      %v307 = vld [vmem:[%s219 + $0xc0] sm:$0xf]
      %v308 = vld [vmem:[%s219 + $0xc4] sm:$0xf]
      %v309 = vld [vmem:[%s219 + $0xc8] sm:$0xf]
      %v310 = vld [vmem:[%s219 + $0xcc] sm:$0xf]
      %v311 = vld [vmem:[%s219 + $0xd0] sm:$0xf]
      %v312 = vld [vmem:[%s219 + $0xd4] sm:$0xf]
      %v313 = vld [vmem:[%s219 + $0xd8] sm:$0xf]
      %v314 = vld [vmem:[%s219 + $0xdc] sm:$0xf]
      %v315 = vld [vmem:[%s219 + $0xe0] sm:$0xf]
      %v316 = vunpack.c.l.bf16 %v259
      %v317 = vunpack.c.l.bf16 %v260
      %v318 = vunpack.c.l.bf16 %v261
      %v319 = vunpack.c.l.bf16 %v262
      %v320 = vunpack.c.l.bf16 %v263
      %v321 = vunpack.c.l.bf16 %v264
      %v322 = vunpack.c.l.bf16 %v265
      %v323 = vunpack.c.l.bf16 %v266
      %v324 = vunpack.c.l.bf16 %v267
      %v325 = vunpack.c.l.bf16 %v268
      %v326 = vunpack.c.l.bf16 %v269
      %v327 = vunpack.c.l.bf16 %v270
      %v328 = vunpack.c.l.bf16 %v271
      %v329 = vunpack.c.l.bf16 %v272
      %v330 = vunpack.c.l.bf16 %v273
      %v331 = vunpack.c.l.bf16 %v274
      %v332 = vunpack.c.l.bf16 %v275
      %v333 = vunpack.c.l.bf16 %v276
      %v334 = vunpack.c.l.bf16 %v277
      %v335 = vunpack.c.l.bf16 %v278
      %v336 = vunpack.c.l.bf16 %v279
      %v337 = vunpack.c.l.bf16 %v280
      %v338 = vunpack.c.l.bf16 %v281
      %v339 = vunpack.c.l.bf16 %v282
      %v340 = vunpack.c.l.bf16 %v283
      %v341 = vunpack.c.l.bf16 %v284
      %v342 = vunpack.c.l.bf16 %v285
      %v343 = vunpack.c.l.bf16 %v286
      %v344 = vunpack.c.l.bf16 %v287
      %v345 = vunpack.c.l.bf16 %v288
      %v346 = vunpack.c.l.bf16 %v289
      %v347 = vunpack.c.l.bf16 %v290
      %v348 = vunpack.c.l.bf16 %v291
      %v349 = vunpack.c.l.bf16 %v292
      %v350 = vunpack.c.l.bf16 %v293
      %v351 = vunpack.c.l.bf16 %v294
      %v352 = vunpack.c.l.bf16 %v295
      %v353 = vunpack.c.l.bf16 %v296
      %v354 = vunpack.c.l.bf16 %v297
      %v355 = vunpack.c.l.bf16 %v298
      %v356 = vunpack.c.l.bf16 %v299
      %v357 = vunpack.c.l.bf16 %v300
      %v358 = vunpack.c.l.bf16 %v301
      %v359 = vunpack.c.l.bf16 %v302
      %v360 = vunpack.c.l.bf16 %v303
      %v361 = vunpack.c.l.bf16 %v304
      %v362 = vunpack.c.l.bf16 %v305
      %v363 = vunpack.c.l.bf16 %v306
      %v364 = vunpack.c.l.bf16 %v307
      %v365 = vunpack.c.l.bf16 %v308
      %v366 = vunpack.c.l.bf16 %v309
      %v367 = vunpack.c.l.bf16 %v310
      %v368 = vunpack.c.l.bf16 %v311
      %v369 = vunpack.c.l.bf16 %v312
      %v370 = vunpack.c.l.bf16 %v313
      %v371 = vunpack.c.l.bf16 %v314
      %v372 = vunpack.c.l.bf16 %v315
      %v373 = vrot.slane %v316, 7
      %v374 = vrot.slane %v317, 7
      %v375 = vrot.slane %v318, 7
      %v376 = vrot.slane %v319, 7
      %v377 = vrot.slane %v320, 7
      %v378 = vrot.slane %v321, 7
      %v379 = vrot.slane %v322, 7
      %v380 = vrot.slane %v323, 7
      %v381 = vrot.slane %v324, 7
      %v382 = vrot.slane %v325, 7
      %v383 = vrot.slane %v326, 7
      %v384 = vrot.slane %v327, 7
      %v385 = vrot.slane %v328, 7
      %v386 = vrot.slane %v329, 7
      %v387 = vrot.slane %v330, 7
      %v388 = vrot.slane %v331, 7
      %v389 = vrot.slane %v332, 7
      %v390 = vrot.slane %v333, 7
      %v391 = vrot.slane %v334, 7
      %v392 = vrot.slane %v335, 7
      %v393 = vrot.slane %v336, 7
      %v394 = vrot.slane %v337, 7
      %v395 = vrot.slane %v338, 7
      %v396 = vrot.slane %v339, 7
      %v397 = vrot.slane %v340, 7
      %v398 = vrot.slane %v341, 7
      %v399 = vrot.slane %v342, 7
      %v400 = vrot.slane %v343, 7
      %v401 = vrot.slane %v344, 7
      %v402 = vrot.slane %v345, 7
      %v403 = vrot.slane %v346, 7
      %v404 = vrot.slane %v347, 7
      %v405 = vrot.slane %v348, 7
      %v406 = vrot.slane %v349, 7
      %v407 = vrot.slane %v350, 7
      %v408 = vrot.slane %v351, 7
      %v409 = vrot.slane %v352, 7
      %v410 = vrot.slane %v353, 7
      %v411 = vrot.slane %v354, 7
      %v412 = vrot.slane %v355, 7
      %v413 = vrot.slane %v356, 7
      %v414 = vrot.slane %v357, 7
      %v415 = vrot.slane %v358, 7
      %v416 = vrot.slane %v359, 7
      %v417 = vrot.slane %v360, 7
      %v418 = vrot.slane %v361, 7
      %v419 = vrot.slane %v362, 7
      %v420 = vrot.slane %v363, 7
      %v421 = vrot.slane %v369, 7
      %v422 = vrot.slane %v370, 7
      %v423 = vrot.slane %v371, 7
      %v424 = vrot.slane %v372, 7
      %vm425 = vcmp.lt.s32.totalorder %v226, 1
      %v426 = vsel %vm425, %v423, %v424
      %v427 = vsel %vm425, %v422, %v423
      %v428 = vsel %vm425, %v421, %v422
      %v429 = vsel %vm425, %v419, %v420
      %v430 = vsel %vm425, %v418, %v419
      %v431 = vsel %vm425, %v417, %v418
      %v432 = vsel %vm425, %v416, %v417
      %v433 = vsel %vm425, %v415, %v416
      %v434 = vsel %vm425, %v414, %v415
      %v435 = vsel %vm425, %v413, %v414
      %v436 = vsel %vm425, %v412, %v413
      %v437 = vsel %vm425, %v411, %v412
      %v438 = vsel %vm425, %v410, %v411
      %v439 = vsel %vm425, %v409, %v410
      %v440 = vsel %vm425, %v408, %v409
      %v441 = vsel %vm425, %v407, %v408
      %v442 = vsel %vm425, %v406, %v407
      %v443 = vsel %vm425, %v405, %v406
      %v444 = vsel %vm425, %v404, %v405
      %v445 = vsel %vm425, %v403, %v404
      %v446 = vsel %vm425, %v402, %v403
      %v447 = vsel %vm425, %v401, %v402
      %v448 = vsel %vm425, %v400, %v401
      %v449 = vsel %vm425, %v399, %v400
      %v450 = vsel %vm425, %v398, %v399
      %v451 = vsel %vm425, %v397, %v398
      %v452 = vsel %vm425, %v396, %v397
      %v453 = vsel %vm425, %v395, %v396
      %v454 = vsel %vm425, %v394, %v395
      %v455 = vsel %vm425, %v393, %v394
      %v456 = vsel %vm425, %v392, %v393
      %v457 = vsel %vm425, %v391, %v392
      %v458 = vsel %vm425, %v390, %v391
      %v459 = vsel %vm425, %v389, %v390
      %v460 = vsel %vm425, %v388, %v389
      %v461 = vsel %vm425, %v387, %v388
      %v462 = vsel %vm425, %v386, %v387
      %v463 = vsel %vm425, %v385, %v386
      %v464 = vsel %vm425, %v384, %v385
      %v465 = vsel %vm425, %v383, %v384
      %v466 = vsel %vm425, %v382, %v383
      %v467 = vsel %vm425, %v381, %v382
      %v468 = vsel %vm425, %v380, %v381
      %v469 = vsel %vm425, %v379, %v380
      %v470 = vsel %vm425, %v378, %v379
      %v471 = vsel %vm425, %v377, %v378
      %v472 = vsel %vm425, %v376, %v377
      %v473 = vsel %vm425, %v375, %v376
      %v474 = vsel %vm425, %v374, %v375
      %v475 = vsel %vm425, %v373, %v374
      %v476 = vsel %vm425, %v424, %v373
      %v477 = vpack.c.bf16 %v427, %v428
      %v478 = vpack.c.bf16 %v476, %v426
      %v479 = vpack.c.bf16 %v474, %v475
      %v480 = vpack.c.bf16 %v472, %v473
      %v481 = vpack.c.bf16 %v470, %v471
      %v482 = vpack.c.bf16 %v468, %v469
      %v483 = vpack.c.bf16 %v466, %v467
      %v484 = vpack.c.bf16 %v464, %v465
      %v485 = vpack.c.bf16 %v462, %v463
      %v486 = vpack.c.bf16 %v460, %v461
      %v487 = vpack.c.bf16 %v458, %v459
      %v488 = vpack.c.bf16 %v456, %v457
      %v489 = vpack.c.bf16 %v454, %v455
      %v490 = vpack.c.bf16 %v452, %v453
      %v491 = vpack.c.bf16 %v450, %v451
      %v492 = vpack.c.bf16 %v448, %v449
      %v493 = vpack.c.bf16 %v446, %v447
      %v494 = vpack.c.bf16 %v444, %v445
      %v495 = vpack.c.bf16 %v442, %v443
      %v496 = vpack.c.bf16 %v440, %v441
      %v497 = vpack.c.bf16 %v438, %v439
      %v498 = vpack.c.bf16 %v436, %v437
      %v499 = vpack.c.bf16 %v434, %v435
      %v500 = vpack.c.bf16 %v432, %v433
      %v501 = vpack.c.bf16 %v430, %v431
      %v502 = vpack.c.bf16 %v429, %v429
      %v503 = vld [vmem:[%s1] sm:$0xf]
      %v504 = vld [vmem:[%s1 + $0x4] sm:$0xf]
      %v505 = vld [vmem:[%s1 + $0x8] sm:$0xf]
      %v506 = vld [vmem:[%s1 + $0xc] sm:$0xf]
      %v507 = vld [vmem:[%s1 + $0x10] sm:$0xf]
      %v508 = vld [vmem:[%s1 + $0x14] sm:$0xf]
      %v509 = vld [vmem:[%s1 + $0x18] sm:$0xf]
      %v510 = vld [vmem:[%s1 + $0x1c] sm:$0xf]
      %v511 = vld [vmem:[%s1 + $0x20] sm:$0xf]
      %v512 = vld [vmem:[%s1 + $0x24] sm:$0xf]
      %v513 = vld [vmem:[%s1 + $0x28] sm:$0xf]
      %v514 = vld [vmem:[%s1 + $0x2c] sm:$0xf]
      %v515 = vld [vmem:[%s1 + $0x30] sm:$0xf]
      %v516 = vld [vmem:[%s1 + $0x34] sm:$0xf]
      %v517 = vld [vmem:[%s1 + $0x38] sm:$0xf]
      %v518 = vld [vmem:[%s1 + $0x3c] sm:$0xf]
      %v519 = vpack.c.bf16 %v371, %v370
      %v520 = vpack.c.bf16 %v316, %v372
      %v521 = vpack.c.bf16 %v318, %v317
      %v522 = vpack.c.bf16 %v320, %v319
      %v523 = vpack.c.bf16 %v322, %v321
      %v524 = vpack.c.bf16 %v324, %v323
      %v525 = vpack.c.bf16 %v326, %v325
      %v526 = vpack.c.bf16 %v328, %v327
      %v527 = vpack.c.bf16 %v330, %v329
      %v528 = vpack.c.bf16 %v332, %v331
      %v529 = vpack.c.bf16 %v334, %v333
      %v530 = vpack.c.bf16 %v336, %v335
      %v531 = vpack.c.bf16 %v338, %v337
      %v532 = vpack.c.bf16 %v340, %v339
      %v533 = vpack.c.bf16 %v342, %v341
      %v534 = vpack.c.bf16 %v344, %v343
      %v535 = vpack.c.bf16 %v346, %v345
      %v536 = vpack.c.bf16 %v348, %v347
      %v537 = vpack.c.bf16 %v350, %v349
      %v538 = vpack.c.bf16 %v352, %v351
      %v539 = vpack.c.bf16 %v354, %v353
      %v540 = vpack.c.bf16 %v356, %v355
      %v541 = vpack.c.bf16 %v358, %v357
      %v542 = vpack.c.bf16 %v360, %v359
      %v543 = vpack.c.bf16 %v362, %v361
      %v544 = vpack.c.bf16 %v363, %v363
      %s545 = scalar_lea.vmem %s1, 64
      %v546 = vld [vmem:[%s545] sm:$0xf]
      %v547 = vld [vmem:[%s545 + $0x4] sm:$0xf]
      %v548 = vld [vmem:[%s545 + $0x8] sm:$0xf]
      %v549 = vld [vmem:[%s545 + $0xc] sm:$0xf]
      %v550 = vld [vmem:[%s545 + $0x10] sm:$0xf]
      %v551 = vld [vmem:[%s545 + $0x14] sm:$0xf]
      %v552 = vld [vmem:[%s545 + $0x18] sm:$0xf]
      %v553 = vld [vmem:[%s545 + $0x1c] sm:$0xf]
      %v554 = vld [vmem:[%s545 + $0x20] sm:$0xf]
      %v555 = vld [vmem:[%s545 + $0x24] sm:$0xf]
      %v556 = vld [vmem:[%s545 + $0x28] sm:$0xf]
      %v557 = vld [vmem:[%s545 + $0x2c] sm:$0xf]
      %v558 = vld [vmem:[%s545 + $0x30] sm:$0xf]
      %v559 = vld [vmem:[%s545 + $0x34] sm:$0xf]
      %v560 = vld [vmem:[%s545 + $0x38] sm:$0xf]
      %v561 = vld [vmem:[%s545 + $0x3c] sm:$0xf]
      %v578 = vunpack.c.l.b16 %v546
      %v579 = vunpack.c.l.b16 %v547
      %v580 = vunpack.c.l.b16 %v548
      %v581 = vunpack.c.l.b16 %v549
      %v582 = vunpack.c.l.b16 %v550
      %v583 = vunpack.c.l.b16 %v551
      %v584 = vunpack.c.l.b16 %v552
      %v585 = vunpack.c.l.b16 %v553
      %v586 = vunpack.c.l.b16 %v554
      %v587 = vunpack.c.l.b16 %v555
      %v588 = vunpack.c.l.b16 %v556
      %v589 = vunpack.c.l.b16 %v557
      %v590 = vunpack.c.l.b16 %v558
      %v591 = vunpack.c.l.b16 %v559
      %v592 = vunpack.c.l.b16 %v560
      %v593 = vunpack.c.l.b16 %v561
      %v594 = vpack.c.b16 %v579, %v578
      %v595 = vpack.c.b16 %v581, %v580
      %v596 = vpack.c.b16 %v583, %v582
      %v597 = vpack.c.b16 %v585, %v584
      %v598 = vpack.c.b16 %v587, %v586
      %v599 = vpack.c.b16 %v589, %v588
      %v600 = vpack.c.b16 %v591, %v590
      %v601 = vpack.c.b16 %v593, %v592
      %610 = vmatpush.bf16.msra.mxu0 %v601
      %611 = vmatpush.bf16.msra.mxu0 %v600
      %612 = vmatpush.bf16.msra.mxu0 %v599
      %613 = vmatpush.bf16.msra.mxu0 %v598
      %614 = vmatpush.bf16.msra.mxu0 %v597
      %615 = vmatpush.bf16.msra.mxu0 %v596
      %616 = vmatpush.bf16.msra.mxu0 %v595
      %617 = vmatpush.bf16.msra.mxu0 %v594
      %618 = vmatmul.bf16.gmra.mxu0 %v519
      %v619 = vpop.f32.mrf.mxu0
      %v620 = vadd.f32 0.0, %v619
      %v621 = vpop.f32.mrf.mxu0
      %v622 = vadd.f32 0.0, %v621
      %623 = vmatmul.bf16.gmra.mxu0 %v520
      %v624 = vpop.f32.mrf.mxu0
      %v625 = vadd.f32 0.0, %v624
      %v626 = vpop.f32.mrf.mxu0
      %v627 = vadd.f32 0.0, %v626
      %628 = vmatmul.bf16.gmra.mxu0 %v521
      %v629 = vpop.f32.mrf.mxu0
      %v630 = vadd.f32 0.0, %v629
      %v631 = vpop.f32.mrf.mxu0
      %v632 = vadd.f32 0.0, %v631
      %633 = vmatmul.bf16.gmra.mxu0 %v522
      %v634 = vpop.f32.mrf.mxu0
      %v635 = vadd.f32 0.0, %v634
      %v636 = vpop.f32.mrf.mxu0
      %v637 = vadd.f32 0.0, %v636
      %638 = vmatmul.bf16.gmra.mxu0 %v523
      %v639 = vpop.f32.mrf.mxu0
      %v640 = vadd.f32 0.0, %v639
      %v641 = vpop.f32.mrf.mxu0
      %v642 = vadd.f32 0.0, %v641
      %643 = vmatmul.bf16.gmra.mxu0 %v524
      %v644 = vpop.f32.mrf.mxu0
      %v645 = vadd.f32 0.0, %v644
      %v646 = vpop.f32.mrf.mxu0
      %v647 = vadd.f32 0.0, %v646
      %648 = vmatmul.bf16.gmra.mxu0 %v525
      %v649 = vpop.f32.mrf.mxu0
      %v650 = vadd.f32 0.0, %v649
      %v651 = vpop.f32.mrf.mxu0
      %v652 = vadd.f32 0.0, %v651
      %653 = vmatmul.bf16.gmra.mxu0 %v526
      %v654 = vpop.f32.mrf.mxu0
      %v655 = vadd.f32 0.0, %v654
      %v656 = vpop.f32.mrf.mxu0
      %v657 = vadd.f32 0.0, %v656
      %658 = vmatmul.bf16.gmra.mxu0 %v527
      %v659 = vpop.f32.mrf.mxu0
      %v660 = vadd.f32 0.0, %v659
      %v661 = vpop.f32.mrf.mxu0
      %v662 = vadd.f32 0.0, %v661
      %663 = vmatmul.bf16.gmra.mxu0 %v528
      %v664 = vpop.f32.mrf.mxu0
      %v665 = vadd.f32 0.0, %v664
      %v666 = vpop.f32.mrf.mxu0
      %v667 = vadd.f32 0.0, %v666
      %668 = vmatmul.bf16.gmra.mxu0 %v529
      %v669 = vpop.f32.mrf.mxu0
      %v670 = vadd.f32 0.0, %v669
      %v671 = vpop.f32.mrf.mxu0
      %v672 = vadd.f32 0.0, %v671
      %673 = vmatmul.bf16.gmra.mxu0 %v530
      %v674 = vpop.f32.mrf.mxu0
      %v675 = vadd.f32 0.0, %v674
      %v676 = vpop.f32.mrf.mxu0
      %v677 = vadd.f32 0.0, %v676
      %678 = vmatmul.bf16.gmra.mxu0 %v531
      %v679 = vpop.f32.mrf.mxu0
      %v680 = vadd.f32 0.0, %v679
      %v681 = vpop.f32.mrf.mxu0
      %v682 = vadd.f32 0.0, %v681
      %683 = vmatmul.bf16.gmra.mxu0 %v532
      %v684 = vpop.f32.mrf.mxu0
      %v685 = vadd.f32 0.0, %v684
      %v686 = vpop.f32.mrf.mxu0
      %v687 = vadd.f32 0.0, %v686
      %688 = vmatmul.bf16.gmra.mxu0 %v533
      %v689 = vpop.f32.mrf.mxu0
      %v690 = vadd.f32 0.0, %v689
      %v691 = vpop.f32.mrf.mxu0
      %v692 = vadd.f32 0.0, %v691
      %693 = vmatmul.bf16.gmra.mxu0 %v534
      %v694 = vpop.f32.mrf.mxu0
      %v695 = vadd.f32 0.0, %v694
      %v696 = vpop.f32.mrf.mxu0
      %v697 = vadd.f32 0.0, %v696
      %698 = vmatmul.bf16.gmra.mxu0 %v535
      %v699 = vpop.f32.mrf.mxu0
      %v700 = vadd.f32 0.0, %v699
      %v701 = vpop.f32.mrf.mxu0
      %v702 = vadd.f32 0.0, %v701
      %703 = vmatmul.bf16.gmra.mxu0 %v536
      %v704 = vpop.f32.mrf.mxu0
      %v705 = vadd.f32 0.0, %v704
      %v706 = vpop.f32.mrf.mxu0
      %v707 = vadd.f32 0.0, %v706
      %708 = vmatmul.bf16.gmra.mxu0 %v537
      %v709 = vpop.f32.mrf.mxu0
      %v710 = vadd.f32 0.0, %v709
      %v711 = vpop.f32.mrf.mxu0
      %v712 = vadd.f32 0.0, %v711
      %713 = vmatmul.bf16.gmra.mxu0 %v538
      %v714 = vpop.f32.mrf.mxu0
      %v715 = vadd.f32 0.0, %v714
      %v716 = vpop.f32.mrf.mxu0
      %v717 = vadd.f32 0.0, %v716
      %718 = vmatmul.bf16.gmra.mxu0 %v539
      %v719 = vpop.f32.mrf.mxu0
      %v720 = vadd.f32 0.0, %v719
      %v721 = vpop.f32.mrf.mxu0
      %v722 = vadd.f32 0.0, %v721
      %723 = vmatmul.bf16.gmra.mxu0 %v540
      %v724 = vpop.f32.mrf.mxu0
      %v725 = vadd.f32 0.0, %v724
      %v726 = vpop.f32.mrf.mxu0
      %v727 = vadd.f32 0.0, %v726
      %728 = vmatmul.bf16.gmra.mxu0 %v541
      %v729 = vpop.f32.mrf.mxu0
      %v730 = vadd.f32 0.0, %v729
      %v731 = vpop.f32.mrf.mxu0
      %v732 = vadd.f32 0.0, %v731
      %733 = vmatmul.bf16.gmra.mxu0 %v542
      %v734 = vpop.f32.mrf.mxu0
      %v735 = vadd.f32 0.0, %v734
      %v736 = vpop.f32.mrf.mxu0
      %v737 = vadd.f32 0.0, %v736
      %738 = vmatmul.bf16.gmra.mxu0 %v543
      %v739 = vpop.f32.mrf.mxu0
      %v740 = vadd.f32 0.0, %v739
      %v741 = vpop.f32.mrf.mxu0
      %v742 = vadd.f32 0.0, %v741
      %743 = vmatmul.bf16.gmra.mxu0 %v544
      %v744 = vpop.f32.mrf.mxu0
      %v745 = vadd.f32 0.0, %v744
      %v746 = vpop.f32.mrf.mxu0
      %747 = vdwg.mxu0
      %v764 = vunpack.c.l.b16 %v503
      %v765 = vunpack.c.l.b16 %v504
      %v766 = vunpack.c.l.b16 %v505
      %v767 = vunpack.c.l.b16 %v506
      %v768 = vunpack.c.l.b16 %v507
      %v769 = vunpack.c.l.b16 %v508
      %v770 = vunpack.c.l.b16 %v509
      %v771 = vunpack.c.l.b16 %v510
      %v772 = vunpack.c.l.b16 %v511
      %v773 = vunpack.c.l.b16 %v512
      %v774 = vunpack.c.l.b16 %v513
      %v775 = vunpack.c.l.b16 %v514
      %v776 = vunpack.c.l.b16 %v515
      %v777 = vunpack.c.l.b16 %v516
      %v778 = vunpack.c.l.b16 %v517
      %v779 = vunpack.c.l.b16 %v518
      %v780 = vpack.c.b16 %v765, %v764
      %v781 = vpack.c.b16 %v767, %v766
      %v782 = vpack.c.b16 %v769, %v768
      %v783 = vpack.c.b16 %v771, %v770
      %v784 = vpack.c.b16 %v773, %v772
      %v785 = vpack.c.b16 %v775, %v774
      %v786 = vpack.c.b16 %v777, %v776
      %v787 = vpack.c.b16 %v779, %v778
      %796 = vmatpush.bf16.msra.mxu0 %v787
      %797 = vmatpush.bf16.msra.mxu0 %v786
      %798 = vmatpush.bf16.msra.mxu0 %v785
      %799 = vmatpush.bf16.msra.mxu0 %v784
      %800 = vmatpush.bf16.msra.mxu0 %v783
      %801 = vmatpush.bf16.msra.mxu0 %v782
      %802 = vmatpush.bf16.msra.mxu0 %v781
      %803 = vmatpush.bf16.msra.mxu0 %v780
      %804 = vmatmul.bf16.gmra.mxu0 %v477
      %v805 = vpop.f32.mrf.mxu0
      %v806 = vadd.f32 %v620, %v805
      %v807 = vpop.f32.mrf.mxu0
      %v808 = vadd.f32 %v622, %v807
      %809 = vmatmul.bf16.gmra.mxu0 %v478
      %v810 = vpop.f32.mrf.mxu0
      %v811 = vadd.f32 %v625, %v810
      %v812 = vpop.f32.mrf.mxu0
      %v813 = vadd.f32 %v627, %v812
      %814 = vmatmul.bf16.gmra.mxu0 %v479
      %v815 = vpop.f32.mrf.mxu0
      %v816 = vadd.f32 %v630, %v815
      %v817 = vpop.f32.mrf.mxu0
      %v818 = vadd.f32 %v632, %v817
      %819 = vmatmul.bf16.gmra.mxu0 %v480
      %v820 = vpop.f32.mrf.mxu0
      %v821 = vadd.f32 %v635, %v820
      %v822 = vpop.f32.mrf.mxu0
      %v823 = vadd.f32 %v637, %v822
      %824 = vmatmul.bf16.gmra.mxu0 %v481
      %v825 = vpop.f32.mrf.mxu0
      %v826 = vadd.f32 %v640, %v825
      %v827 = vpop.f32.mrf.mxu0
      %v828 = vadd.f32 %v642, %v827
      %829 = vmatmul.bf16.gmra.mxu0 %v482
      %v830 = vpop.f32.mrf.mxu0
      %v831 = vadd.f32 %v645, %v830
      %v832 = vpop.f32.mrf.mxu0
      %v833 = vadd.f32 %v647, %v832
      %834 = vmatmul.bf16.gmra.mxu0 %v483
      %v835 = vpop.f32.mrf.mxu0
      %v836 = vadd.f32 %v650, %v835
      %v837 = vpop.f32.mrf.mxu0
      %v838 = vadd.f32 %v652, %v837
      %839 = vmatmul.bf16.gmra.mxu0 %v484
      %v840 = vpop.f32.mrf.mxu0
      %v841 = vadd.f32 %v655, %v840
      %v842 = vpop.f32.mrf.mxu0
      %v843 = vadd.f32 %v657, %v842
      %844 = vmatmul.bf16.gmra.mxu0 %v485
      %v845 = vpop.f32.mrf.mxu0
      %v846 = vadd.f32 %v660, %v845
      %v847 = vpop.f32.mrf.mxu0
      %v848 = vadd.f32 %v662, %v847
      %849 = vmatmul.bf16.gmra.mxu0 %v486
      %v850 = vpop.f32.mrf.mxu0
      %v851 = vadd.f32 %v665, %v850
      %v852 = vpop.f32.mrf.mxu0
      %v853 = vadd.f32 %v667, %v852
      %854 = vmatmul.bf16.gmra.mxu0 %v487
      %v855 = vpop.f32.mrf.mxu0
      %v856 = vadd.f32 %v670, %v855
      %v857 = vpop.f32.mrf.mxu0
      %v858 = vadd.f32 %v672, %v857
      %859 = vmatmul.bf16.gmra.mxu0 %v488
      %v860 = vpop.f32.mrf.mxu0
      %v861 = vadd.f32 %v675, %v860
      %v862 = vpop.f32.mrf.mxu0
      %v863 = vadd.f32 %v677, %v862
      %864 = vmatmul.bf16.gmra.mxu0 %v489
      %v865 = vpop.f32.mrf.mxu0
      %v866 = vadd.f32 %v680, %v865
      %v867 = vpop.f32.mrf.mxu0
      %v868 = vadd.f32 %v682, %v867
      %869 = vmatmul.bf16.gmra.mxu0 %v490
      %v870 = vpop.f32.mrf.mxu0
      %v871 = vadd.f32 %v685, %v870
      %v872 = vpop.f32.mrf.mxu0
      %v873 = vadd.f32 %v687, %v872
      %874 = vmatmul.bf16.gmra.mxu0 %v491
      %v875 = vpop.f32.mrf.mxu0
      %v876 = vadd.f32 %v690, %v875
      %v877 = vpop.f32.mrf.mxu0
      %v878 = vadd.f32 %v692, %v877
      %879 = vmatmul.bf16.gmra.mxu0 %v492
      %v880 = vpop.f32.mrf.mxu0
      %v881 = vadd.f32 %v695, %v880
      %v882 = vpop.f32.mrf.mxu0
      %v883 = vadd.f32 %v697, %v882
      %884 = vmatmul.bf16.gmra.mxu0 %v493
      %v885 = vpop.f32.mrf.mxu0
      %v886 = vadd.f32 %v700, %v885
      %v887 = vpop.f32.mrf.mxu0
      %v888 = vadd.f32 %v702, %v887
      %889 = vmatmul.bf16.gmra.mxu0 %v494
      %v890 = vpop.f32.mrf.mxu0
      %v891 = vadd.f32 %v705, %v890
      %v892 = vpop.f32.mrf.mxu0
      %v893 = vadd.f32 %v707, %v892
      %894 = vmatmul.bf16.gmra.mxu0 %v495
      %v895 = vpop.f32.mrf.mxu0
      %v896 = vadd.f32 %v710, %v895
      %v897 = vpop.f32.mrf.mxu0
      %v898 = vadd.f32 %v712, %v897
      %899 = vmatmul.bf16.gmra.mxu0 %v496
      %v900 = vpop.f32.mrf.mxu0
      %v901 = vadd.f32 %v715, %v900
      %v902 = vpop.f32.mrf.mxu0
      %v903 = vadd.f32 %v717, %v902
      %904 = vmatmul.bf16.gmra.mxu0 %v497
      %v905 = vpop.f32.mrf.mxu0
      %v906 = vadd.f32 %v720, %v905
      %v907 = vpop.f32.mrf.mxu0
      %v908 = vadd.f32 %v722, %v907
      %909 = vmatmul.bf16.gmra.mxu0 %v498
      %v910 = vpop.f32.mrf.mxu0
      %v911 = vadd.f32 %v725, %v910
      %v912 = vpop.f32.mrf.mxu0
      %v913 = vadd.f32 %v727, %v912
      %914 = vmatmul.bf16.gmra.mxu0 %v499
      %v915 = vpop.f32.mrf.mxu0
      %v916 = vadd.f32 %v730, %v915
      %v917 = vpop.f32.mrf.mxu0
      %v918 = vadd.f32 %v732, %v917
      %919 = vmatmul.bf16.gmra.mxu0 %v500
      %v920 = vpop.f32.mrf.mxu0
      %v921 = vadd.f32 %v735, %v920
      %v922 = vpop.f32.mrf.mxu0
      %v923 = vadd.f32 %v737, %v922
      %924 = vmatmul.bf16.gmra.mxu0 %v501
      %v925 = vpop.f32.mrf.mxu0
      %v926 = vadd.f32 %v740, %v925
      %v927 = vpop.f32.mrf.mxu0
      %v928 = vadd.f32 %v742, %v927
      %929 = vmatmul.bf16.gmra.mxu0 %v502
      %v930 = vpop.f32.mrf.mxu0
      %v931 = vadd.f32 %v745, %v930
      %v932 = vpop.f32.mrf.mxu0
      %933 = vdwg.mxu0
      %v934 = vrot.slane %v316, 1
      %v935 = vrot.slane %v317, 1
      %v936 = vrot.slane %v318, 1
      %v937 = vrot.slane %v319, 1
      %v938 = vrot.slane %v320, 1
      %v939 = vrot.slane %v321, 1
      %v940 = vrot.slane %v322, 1
      %v941 = vrot.slane %v323, 1
      %v942 = vrot.slane %v324, 1
      %v943 = vrot.slane %v325, 1
      %v944 = vrot.slane %v326, 1
      %v945 = vrot.slane %v327, 1
      %v946 = vrot.slane %v328, 1
      %v947 = vrot.slane %v329, 1
      %v948 = vrot.slane %v330, 1
      %v949 = vrot.slane %v331, 1
      %v950 = vrot.slane %v332, 1
      %v951 = vrot.slane %v333, 1
      %v952 = vrot.slane %v334, 1
      %v953 = vrot.slane %v335, 1
      %v954 = vrot.slane %v336, 1
      %v955 = vrot.slane %v337, 1
      %v956 = vrot.slane %v338, 1
      %v957 = vrot.slane %v339, 1
      %v958 = vrot.slane %v340, 1
      %v959 = vrot.slane %v341, 1
      %v960 = vrot.slane %v342, 1
      %v961 = vrot.slane %v343, 1
      %v962 = vrot.slane %v344, 1
      %v963 = vrot.slane %v345, 1
      %v964 = vrot.slane %v346, 1
      %v965 = vrot.slane %v347, 1
      %v966 = vrot.slane %v348, 1
      %v967 = vrot.slane %v349, 1
      %v968 = vrot.slane %v350, 1
      %v969 = vrot.slane %v351, 1
      %v970 = vrot.slane %v352, 1
      %v971 = vrot.slane %v353, 1
      %v972 = vrot.slane %v354, 1
      %v973 = vrot.slane %v355, 1
      %v974 = vrot.slane %v356, 1
      %v975 = vrot.slane %v357, 1
      %v976 = vrot.slane %v358, 1
      %v977 = vrot.slane %v359, 1
      %v978 = vrot.slane %v360, 1
      %v979 = vrot.slane %v361, 1
      %v980 = vrot.slane %v362, 1
      %v981 = vrot.slane %v363, 1
      %v982 = vrot.slane %v364, 1
      %v983 = vrot.slane %v370, 1
      %v984 = vrot.slane %v371, 1
      %v985 = vrot.slane %v372, 1
      %vm986 = vcmp.lt.s32.totalorder %v226, 7
      %v987 = vsel %vm986, %v984, %v985
      %v988 = vsel %vm986, %v983, %v984
      %v989 = vsel %vm986, %v981, %v982
      %v990 = vsel %vm986, %v980, %v981
      %v991 = vsel %vm986, %v979, %v980
      %v992 = vsel %vm986, %v978, %v979
      %v993 = vsel %vm986, %v977, %v978
      %v994 = vsel %vm986, %v976, %v977
      %v995 = vsel %vm986, %v975, %v976
      %v996 = vsel %vm986, %v974, %v975
      %v997 = vsel %vm986, %v973, %v974
      %v998 = vsel %vm986, %v972, %v973
      %v999 = vsel %vm986, %v971, %v972
      %v1000 = vsel %vm986, %v970, %v971
      %v1001 = vsel %vm986, %v969, %v970
      %v1002 = vsel %vm986, %v968, %v969
      %v1003 = vsel %vm986, %v967, %v968
      %v1004 = vsel %vm986, %v966, %v967
      %v1005 = vsel %vm986, %v965, %v966
      %v1006 = vsel %vm986, %v964, %v965
      %v1007 = vsel %vm986, %v963, %v964
      %v1008 = vsel %vm986, %v962, %v963
      %v1009 = vsel %vm986, %v961, %v962
      %v1010 = vsel %vm986, %v960, %v961
      %v1011 = vsel %vm986, %v959, %v960
      %v1012 = vsel %vm986, %v958, %v959
      %v1013 = vsel %vm986, %v957, %v958
      %v1014 = vsel %vm986, %v956, %v957
      %v1015 = vsel %vm986, %v955, %v956
      %v1016 = vsel %vm986, %v954, %v955
      %v1017 = vsel %vm986, %v953, %v954
      %v1018 = vsel %vm986, %v952, %v953
      %v1019 = vsel %vm986, %v951, %v952
      %v1020 = vsel %vm986, %v950, %v951
      %v1021 = vsel %vm986, %v949, %v950
      %v1022 = vsel %vm986, %v948, %v949
      %v1023 = vsel %vm986, %v947, %v948
      %v1024 = vsel %vm986, %v946, %v947
      %v1025 = vsel %vm986, %v945, %v946
      %v1026 = vsel %vm986, %v944, %v945
      %v1027 = vsel %vm986, %v943, %v944
      %v1028 = vsel %vm986, %v942, %v943
      %v1029 = vsel %vm986, %v941, %v942
      %v1030 = vsel %vm986, %v940, %v941
      %v1031 = vsel %vm986, %v939, %v940
      %v1032 = vsel %vm986, %v938, %v939
      %v1033 = vsel %vm986, %v937, %v938
      %v1034 = vsel %vm986, %v936, %v937
      %v1035 = vsel %vm986, %v935, %v936
      %v1036 = vsel %vm986, %v934, %v935
      %v1037 = vsel %vm986, %v985, %v934
      %v1038 = vpack.c.bf16 %v987, %v988
      %v1039 = vpack.c.bf16 %v1036, %v1037
      %v1040 = vpack.c.bf16 %v1034, %v1035
      %v1041 = vpack.c.bf16 %v1032, %v1033
      %v1042 = vpack.c.bf16 %v1030, %v1031
      %v1043 = vpack.c.bf16 %v1028, %v1029
      %v1044 = vpack.c.bf16 %v1026, %v1027
      %v1045 = vpack.c.bf16 %v1024, %v1025
      %v1046 = vpack.c.bf16 %v1022, %v1023
      %v1047 = vpack.c.bf16 %v1020, %v1021
      %v1048 = vpack.c.bf16 %v1018, %v1019
      %v1049 = vpack.c.bf16 %v1016, %v1017
      %v1050 = vpack.c.bf16 %v1014, %v1015
      %v1051 = vpack.c.bf16 %v1012, %v1013
      %v1052 = vpack.c.bf16 %v1010, %v1011
      %v1053 = vpack.c.bf16 %v1008, %v1009
      %v1054 = vpack.c.bf16 %v1006, %v1007
      %v1055 = vpack.c.bf16 %v1004, %v1005
      %v1056 = vpack.c.bf16 %v1002, %v1003
      %v1057 = vpack.c.bf16 %v1000, %v1001
      %v1058 = vpack.c.bf16 %v998, %v999
      %v1059 = vpack.c.bf16 %v996, %v997
      %v1060 = vpack.c.bf16 %v994, %v995
      %v1061 = vpack.c.bf16 %v992, %v993
      %v1062 = vpack.c.bf16 %v990, %v991
      %v1063 = vpack.c.bf16 %v989, %v989
      %s1064 = scalar_lea.vmem %s1, 128
      %v1065 = vld [vmem:[%s1064] sm:$0xf]
      %v1066 = vld [vmem:[%s1064 + $0x4] sm:$0xf]
      %v1067 = vld [vmem:[%s1064 + $0x8] sm:$0xf]
      %v1068 = vld [vmem:[%s1064 + $0xc] sm:$0xf]
      %v1069 = vld [vmem:[%s1064 + $0x10] sm:$0xf]
      %v1070 = vld [vmem:[%s1064 + $0x14] sm:$0xf]
      %v1071 = vld [vmem:[%s1064 + $0x18] sm:$0xf]
      %v1072 = vld [vmem:[%s1064 + $0x1c] sm:$0xf]
      %v1073 = vld [vmem:[%s1064 + $0x20] sm:$0xf]
      %v1074 = vld [vmem:[%s1064 + $0x24] sm:$0xf]
      %v1075 = vld [vmem:[%s1064 + $0x28] sm:$0xf]
      %v1076 = vld [vmem:[%s1064 + $0x2c] sm:$0xf]
      %v1077 = vld [vmem:[%s1064 + $0x30] sm:$0xf]
      %v1078 = vld [vmem:[%s1064 + $0x34] sm:$0xf]
      %v1079 = vld [vmem:[%s1064 + $0x38] sm:$0xf]
      %v1080 = vld [vmem:[%s1064 + $0x3c] sm:$0xf]
      %v1097 = vunpack.c.l.b16 %v1065
      %v1098 = vunpack.c.l.b16 %v1066
      %v1099 = vunpack.c.l.b16 %v1067
      %v1100 = vunpack.c.l.b16 %v1068
      %v1101 = vunpack.c.l.b16 %v1069
      %v1102 = vunpack.c.l.b16 %v1070
      %v1103 = vunpack.c.l.b16 %v1071
      %v1104 = vunpack.c.l.b16 %v1072
      %v1105 = vunpack.c.l.b16 %v1073
      %v1106 = vunpack.c.l.b16 %v1074
      %v1107 = vunpack.c.l.b16 %v1075
      %v1108 = vunpack.c.l.b16 %v1076
      %v1109 = vunpack.c.l.b16 %v1077
      %v1110 = vunpack.c.l.b16 %v1078
      %v1111 = vunpack.c.l.b16 %v1079
      %v1112 = vunpack.c.l.b16 %v1080
      %v1113 = vpack.c.b16 %v1098, %v1097
      %v1114 = vpack.c.b16 %v1100, %v1099
      %v1115 = vpack.c.b16 %v1102, %v1101
      %v1116 = vpack.c.b16 %v1104, %v1103
      %v1117 = vpack.c.b16 %v1106, %v1105
      %v1118 = vpack.c.b16 %v1108, %v1107
      %v1119 = vpack.c.b16 %v1110, %v1109
      %v1120 = vpack.c.b16 %v1112, %v1111
      %1129 = vmatpush.bf16.msra.mxu0 %v1120
      %1130 = vmatpush.bf16.msra.mxu0 %v1119
      %1131 = vmatpush.bf16.msra.mxu0 %v1118
      %1132 = vmatpush.bf16.msra.mxu0 %v1117
      %1133 = vmatpush.bf16.msra.mxu0 %v1116
      %1134 = vmatpush.bf16.msra.mxu0 %v1115
      %1135 = vmatpush.bf16.msra.mxu0 %v1114
      %1136 = vmatpush.bf16.msra.mxu0 %v1113
      %1137 = vmatmul.bf16.gmra.mxu0 %v1038
      %v1138 = vpop.f32.mrf.mxu0
      %v1139 = vadd.f32 0.0, %v1138
      %v1140 = vpop.f32.mrf.mxu0
      %v1141 = vadd.f32 0.0, %v1140
      %1142 = vmatmul.bf16.gmra.mxu0 %v1039
      %v1143 = vpop.f32.mrf.mxu0
      %v1144 = vadd.f32 0.0, %v1143
      %v1145 = vpop.f32.mrf.mxu0
      %v1146 = vadd.f32 0.0, %v1145
      %1147 = vmatmul.bf16.gmra.mxu0 %v1040
      %v1148 = vpop.f32.mrf.mxu0
      %v1149 = vadd.f32 0.0, %v1148
      %v1150 = vpop.f32.mrf.mxu0
      %v1151 = vadd.f32 0.0, %v1150
      %1152 = vmatmul.bf16.gmra.mxu0 %v1041
      %v1153 = vpop.f32.mrf.mxu0
      %v1154 = vadd.f32 0.0, %v1153
      %v1155 = vpop.f32.mrf.mxu0
      %v1156 = vadd.f32 0.0, %v1155
      %1157 = vmatmul.bf16.gmra.mxu0 %v1042
      %v1158 = vpop.f32.mrf.mxu0
      %v1159 = vadd.f32 0.0, %v1158
      %v1160 = vpop.f32.mrf.mxu0
      %v1161 = vadd.f32 0.0, %v1160
      %1162 = vmatmul.bf16.gmra.mxu0 %v1043
      %v1163 = vpop.f32.mrf.mxu0
      %v1164 = vadd.f32 0.0, %v1163
      %v1165 = vpop.f32.mrf.mxu0
      %v1166 = vadd.f32 0.0, %v1165
      %1167 = vmatmul.bf16.gmra.mxu0 %v1044
      %v1168 = vpop.f32.mrf.mxu0
      %v1169 = vadd.f32 0.0, %v1168
      %v1170 = vpop.f32.mrf.mxu0
      %v1171 = vadd.f32 0.0, %v1170
      %1172 = vmatmul.bf16.gmra.mxu0 %v1045
      %v1173 = vpop.f32.mrf.mxu0
      %v1174 = vadd.f32 0.0, %v1173
      %v1175 = vpop.f32.mrf.mxu0
      %v1176 = vadd.f32 0.0, %v1175
      %1177 = vmatmul.bf16.gmra.mxu0 %v1046
      %v1178 = vpop.f32.mrf.mxu0
      %v1179 = vadd.f32 0.0, %v1178
      %v1180 = vpop.f32.mrf.mxu0
      %v1181 = vadd.f32 0.0, %v1180
      %1182 = vmatmul.bf16.gmra.mxu0 %v1047
      %v1183 = vpop.f32.mrf.mxu0
      %v1184 = vadd.f32 0.0, %v1183
      %v1185 = vpop.f32.mrf.mxu0
      %v1186 = vadd.f32 0.0, %v1185
      %1187 = vmatmul.bf16.gmra.mxu0 %v1048
      %v1188 = vpop.f32.mrf.mxu0
      %v1189 = vadd.f32 0.0, %v1188
      %v1190 = vpop.f32.mrf.mxu0
      %v1191 = vadd.f32 0.0, %v1190
      %1192 = vmatmul.bf16.gmra.mxu0 %v1049
      %v1193 = vpop.f32.mrf.mxu0
      %v1194 = vadd.f32 0.0, %v1193
      %v1195 = vpop.f32.mrf.mxu0
      %v1196 = vadd.f32 0.0, %v1195
      %1197 = vmatmul.bf16.gmra.mxu0 %v1050
      %v1198 = vpop.f32.mrf.mxu0
      %v1199 = vadd.f32 0.0, %v1198
      %v1200 = vpop.f32.mrf.mxu0
      %v1201 = vadd.f32 0.0, %v1200
      %1202 = vmatmul.bf16.gmra.mxu0 %v1051
      %v1203 = vpop.f32.mrf.mxu0
      %v1204 = vadd.f32 0.0, %v1203
      %v1205 = vpop.f32.mrf.mxu0
      %v1206 = vadd.f32 0.0, %v1205
      %1207 = vmatmul.bf16.gmra.mxu0 %v1052
      %v1208 = vpop.f32.mrf.mxu0
      %v1209 = vadd.f32 0.0, %v1208
      %v1210 = vpop.f32.mrf.mxu0
      %v1211 = vadd.f32 0.0, %v1210
      %1212 = vmatmul.bf16.gmra.mxu0 %v1053
      %v1213 = vpop.f32.mrf.mxu0
      %v1214 = vadd.f32 0.0, %v1213
      %v1215 = vpop.f32.mrf.mxu0
      %v1216 = vadd.f32 0.0, %v1215
      %1217 = vmatmul.bf16.gmra.mxu0 %v1054
      %v1218 = vpop.f32.mrf.mxu0
      %v1219 = vadd.f32 0.0, %v1218
      %v1220 = vpop.f32.mrf.mxu0
      %v1221 = vadd.f32 0.0, %v1220
      %1222 = vmatmul.bf16.gmra.mxu0 %v1055
      %v1223 = vpop.f32.mrf.mxu0
      %v1224 = vadd.f32 0.0, %v1223
      %v1225 = vpop.f32.mrf.mxu0
      %v1226 = vadd.f32 0.0, %v1225
      %1227 = vmatmul.bf16.gmra.mxu0 %v1056
      %v1228 = vpop.f32.mrf.mxu0
      %v1229 = vadd.f32 0.0, %v1228
      %v1230 = vpop.f32.mrf.mxu0
      %v1231 = vadd.f32 0.0, %v1230
      %1232 = vmatmul.bf16.gmra.mxu0 %v1057
      %v1233 = vpop.f32.mrf.mxu0
      %v1234 = vadd.f32 0.0, %v1233
      %v1235 = vpop.f32.mrf.mxu0
      %v1236 = vadd.f32 0.0, %v1235
      %1237 = vmatmul.bf16.gmra.mxu0 %v1058
      %v1238 = vpop.f32.mrf.mxu0
      %v1239 = vadd.f32 0.0, %v1238
      %v1240 = vpop.f32.mrf.mxu0
      %v1241 = vadd.f32 0.0, %v1240
      %1242 = vmatmul.bf16.gmra.mxu0 %v1059
      %v1243 = vpop.f32.mrf.mxu0
      %v1244 = vadd.f32 0.0, %v1243
      %v1245 = vpop.f32.mrf.mxu0
      %v1246 = vadd.f32 0.0, %v1245
      %1247 = vmatmul.bf16.gmra.mxu0 %v1060
      %v1248 = vpop.f32.mrf.mxu0
      %v1249 = vadd.f32 0.0, %v1248
      %v1250 = vpop.f32.mrf.mxu0
      %v1251 = vadd.f32 0.0, %v1250
      %1252 = vmatmul.bf16.gmra.mxu0 %v1061
      %v1253 = vpop.f32.mrf.mxu0
      %v1254 = vadd.f32 0.0, %v1253
      %v1255 = vpop.f32.mrf.mxu0
      %v1256 = vadd.f32 0.0, %v1255
      %1257 = vmatmul.bf16.gmra.mxu0 %v1062
      %v1258 = vpop.f32.mrf.mxu0
      %v1259 = vadd.f32 0.0, %v1258
      %v1260 = vpop.f32.mrf.mxu0
      %v1261 = vadd.f32 0.0, %v1260
      %1262 = vmatmul.bf16.gmra.mxu0 %v1063
      %v1263 = vpop.f32.mrf.mxu0
      %v1264 = vadd.f32 0.0, %v1263
      %v1265 = vpop.f32.mrf.mxu0
      %1266 = vdwg.mxu0
      %v1267 = vadd.f32 %v806, %v1139
      %v1268 = vadd.f32 %v808, %v1141
      %v1269 = vadd.f32 %v811, %v1144
      %v1270 = vadd.f32 %v813, %v1146
      %v1271 = vadd.f32 %v816, %v1149
      %v1272 = vadd.f32 %v818, %v1151
      %v1273 = vadd.f32 %v821, %v1154
      %v1274 = vadd.f32 %v823, %v1156
      %v1275 = vadd.f32 %v826, %v1159
      %v1276 = vadd.f32 %v828, %v1161
      %v1277 = vadd.f32 %v831, %v1164
      %v1278 = vadd.f32 %v833, %v1166
      %v1279 = vadd.f32 %v836, %v1169
      %v1280 = vadd.f32 %v838, %v1171
      %v1281 = vadd.f32 %v841, %v1174
      %v1282 = vadd.f32 %v843, %v1176
      %v1283 = vadd.f32 %v846, %v1179
      %v1284 = vadd.f32 %v848, %v1181
      %v1285 = vadd.f32 %v851, %v1184
      %v1286 = vadd.f32 %v853, %v1186
      %v1287 = vadd.f32 %v856, %v1189
      %v1288 = vadd.f32 %v858, %v1191
      %v1289 = vadd.f32 %v861, %v1194
      %v1290 = vadd.f32 %v863, %v1196
      %v1291 = vadd.f32 %v866, %v1199
      %v1292 = vadd.f32 %v868, %v1201
      %v1293 = vadd.f32 %v871, %v1204
      %v1294 = vadd.f32 %v873, %v1206
      %v1295 = vadd.f32 %v876, %v1209
      %v1296 = vadd.f32 %v878, %v1211
      %v1297 = vadd.f32 %v881, %v1214
      %v1298 = vadd.f32 %v883, %v1216
      %v1299 = vadd.f32 %v886, %v1219
      %v1300 = vadd.f32 %v888, %v1221
      %v1301 = vadd.f32 %v891, %v1224
      %v1302 = vadd.f32 %v893, %v1226
      %v1303 = vadd.f32 %v896, %v1229
      %v1304 = vadd.f32 %v898, %v1231
      %v1305 = vadd.f32 %v901, %v1234
      %v1306 = vadd.f32 %v903, %v1236
      %v1307 = vadd.f32 %v906, %v1239
      %v1308 = vadd.f32 %v908, %v1241
      %v1309 = vadd.f32 %v911, %v1244
      %v1310 = vadd.f32 %v913, %v1246
      %v1311 = vadd.f32 %v916, %v1249
      %v1312 = vadd.f32 %v918, %v1251
      %v1313 = vadd.f32 %v921, %v1254
      %v1314 = vadd.f32 %v923, %v1256
      %v1315 = vadd.f32 %v926, %v1259
      %v1316 = vadd.f32 %v928, %v1261
      %v1317 = vadd.f32 %v931, %v1264
      %v1318 = vrot.slane %v316, 2
      %v1319 = vrot.slane %v317, 2
      %v1320 = vrot.slane %v318, 2
      %v1321 = vrot.slane %v319, 2
      %v1322 = vrot.slane %v320, 2
      %v1323 = vrot.slane %v321, 2
      %v1324 = vrot.slane %v322, 2
      %v1325 = vrot.slane %v323, 2
      %v1326 = vrot.slane %v324, 2
      %v1327 = vrot.slane %v325, 2
      %v1328 = vrot.slane %v326, 2
      %v1329 = vrot.slane %v327, 2
      %v1330 = vrot.slane %v328, 2
      %v1331 = vrot.slane %v329, 2
      %v1332 = vrot.slane %v330, 2
      %v1333 = vrot.slane %v331, 2
      %v1334 = vrot.slane %v332, 2
      %v1335 = vrot.slane %v333, 2
      %v1336 = vrot.slane %v334, 2
      %v1337 = vrot.slane %v335, 2
      %v1338 = vrot.slane %v336, 2
      %v1339 = vrot.slane %v337, 2
      %v1340 = vrot.slane %v338, 2
      %v1341 = vrot.slane %v339, 2
      %v1342 = vrot.slane %v340, 2
      %v1343 = vrot.slane %v341, 2
      %v1344 = vrot.slane %v342, 2
      %v1345 = vrot.slane %v343, 2
      %v1346 = vrot.slane %v344, 2
      %v1347 = vrot.slane %v345, 2
      %v1348 = vrot.slane %v346, 2
      %v1349 = vrot.slane %v347, 2
      %v1350 = vrot.slane %v348, 2
      %v1351 = vrot.slane %v349, 2
      %v1352 = vrot.slane %v350, 2
      %v1353 = vrot.slane %v351, 2
      %v1354 = vrot.slane %v352, 2
      %v1355 = vrot.slane %v353, 2
      %v1356 = vrot.slane %v354, 2
      %v1357 = vrot.slane %v355, 2
      %v1358 = vrot.slane %v356, 2
      %v1359 = vrot.slane %v357, 2
      %v1360 = vrot.slane %v358, 2
      %v1361 = vrot.slane %v359, 2
      %v1362 = vrot.slane %v360, 2
      %v1363 = vrot.slane %v361, 2
      %v1364 = vrot.slane %v362, 2
      %v1365 = vrot.slane %v363, 2
      %v1366 = vrot.slane %v364, 2
      %v1367 = vrot.slane %v370, 2
      %v1368 = vrot.slane %v371, 2
      %v1369 = vrot.slane %v372, 2
      %vm1370 = vcmp.lt.s32.totalorder %v226, 6
      %v1371 = vsel %vm1370, %v1368, %v1369
      %v1372 = vsel %vm1370, %v1367, %v1368
      %v1373 = vsel %vm1370, %v1365, %v1366
      %v1374 = vsel %vm1370, %v1364, %v1365
      %v1375 = vsel %vm1370, %v1363, %v1364
      %v1376 = vsel %vm1370, %v1362, %v1363
      %v1377 = vsel %vm1370, %v1361, %v1362
      %v1378 = vsel %vm1370, %v1360, %v1361
      %v1379 = vsel %vm1370, %v1359, %v1360
      %v1380 = vsel %vm1370, %v1358, %v1359
      %v1381 = vsel %vm1370, %v1357, %v1358
      %v1382 = vsel %vm1370, %v1356, %v1357
      %v1383 = vsel %vm1370, %v1355, %v1356
      %v1384 = vsel %vm1370, %v1354, %v1355
      %v1385 = vsel %vm1370, %v1353, %v1354
      %v1386 = vsel %vm1370, %v1352, %v1353
      %v1387 = vsel %vm1370, %v1351, %v1352
      %v1388 = vsel %vm1370, %v1350, %v1351
      %v1389 = vsel %vm1370, %v1349, %v1350
      %v1390 = vsel %vm1370, %v1348, %v1349
      %v1391 = vsel %vm1370, %v1347, %v1348
      %v1392 = vsel %vm1370, %v1346, %v1347
      %v1393 = vsel %vm1370, %v1345, %v1346
      %v1394 = vsel %vm1370, %v1344, %v1345
      %v1395 = vsel %vm1370, %v1343, %v1344
      %v1396 = vsel %vm1370, %v1342, %v1343
      %v1397 = vsel %vm1370, %v1341, %v1342
      %v1398 = vsel %vm1370, %v1340, %v1341
      %v1399 = vsel %vm1370, %v1339, %v1340
      %v1400 = vsel %vm1370, %v1338, %v1339
      %v1401 = vsel %vm1370, %v1337, %v1338
      %v1402 = vsel %vm1370, %v1336, %v1337
      %v1403 = vsel %vm1370, %v1335, %v1336
      %v1404 = vsel %vm1370, %v1334, %v1335
      %v1405 = vsel %vm1370, %v1333, %v1334
      %v1406 = vsel %vm1370, %v1332, %v1333
      %v1407 = vsel %vm1370, %v1331, %v1332
      %v1408 = vsel %vm1370, %v1330, %v1331
      %v1409 = vsel %vm1370, %v1329, %v1330
      %v1410 = vsel %vm1370, %v1328, %v1329
      %v1411 = vsel %vm1370, %v1327, %v1328
      %v1412 = vsel %vm1370, %v1326, %v1327
      %v1413 = vsel %vm1370, %v1325, %v1326
      %v1414 = vsel %vm1370, %v1324, %v1325
      %v1415 = vsel %vm1370, %v1323, %v1324
      %v1416 = vsel %vm1370, %v1322, %v1323
      %v1417 = vsel %vm1370, %v1321, %v1322
      %v1418 = vsel %vm1370, %v1320, %v1321
      %v1419 = vsel %vm1370, %v1319, %v1320
      %v1420 = vsel %vm1370, %v1318, %v1319
      %v1421 = vsel %vm1370, %v1369, %v1318
      %v1422 = vpack.c.bf16 %v1371, %v1372
      %v1423 = vpack.c.bf16 %v1420, %v1421
      %v1424 = vpack.c.bf16 %v1418, %v1419
      %v1425 = vpack.c.bf16 %v1416, %v1417
      %v1426 = vpack.c.bf16 %v1414, %v1415
      %v1427 = vpack.c.bf16 %v1412, %v1413
      %v1428 = vpack.c.bf16 %v1410, %v1411
      %v1429 = vpack.c.bf16 %v1408, %v1409
      %v1430 = vpack.c.bf16 %v1406, %v1407
      %v1431 = vpack.c.bf16 %v1404, %v1405
      %v1432 = vpack.c.bf16 %v1402, %v1403
      %v1433 = vpack.c.bf16 %v1400, %v1401
      %v1434 = vpack.c.bf16 %v1398, %v1399
      %v1435 = vpack.c.bf16 %v1396, %v1397
      %v1436 = vpack.c.bf16 %v1394, %v1395
      %v1437 = vpack.c.bf16 %v1392, %v1393
      %v1438 = vpack.c.bf16 %v1390, %v1391
      %v1439 = vpack.c.bf16 %v1388, %v1389
      %v1440 = vpack.c.bf16 %v1386, %v1387
      %v1441 = vpack.c.bf16 %v1384, %v1385
      %v1442 = vpack.c.bf16 %v1382, %v1383
      %v1443 = vpack.c.bf16 %v1380, %v1381
      %v1444 = vpack.c.bf16 %v1378, %v1379
      %v1445 = vpack.c.bf16 %v1376, %v1377
      %v1446 = vpack.c.bf16 %v1374, %v1375
      %v1447 = vpack.c.bf16 %v1373, %v1373
      %s1448 = scalar_lea.vmem %s1, 192
      %v1449 = vld [vmem:[%s1448] sm:$0xf]
      %v1450 = vld [vmem:[%s1448 + $0x4] sm:$0xf]
      %v1451 = vld [vmem:[%s1448 + $0x8] sm:$0xf]
      %v1452 = vld [vmem:[%s1448 + $0xc] sm:$0xf]
      %v1453 = vld [vmem:[%s1448 + $0x10] sm:$0xf]
      %v1454 = vld [vmem:[%s1448 + $0x14] sm:$0xf]
      %v1455 = vld [vmem:[%s1448 + $0x18] sm:$0xf]
      %v1456 = vld [vmem:[%s1448 + $0x1c] sm:$0xf]
      %v1457 = vld [vmem:[%s1448 + $0x20] sm:$0xf]
      %v1458 = vld [vmem:[%s1448 + $0x24] sm:$0xf]
      %v1459 = vld [vmem:[%s1448 + $0x28] sm:$0xf]
      %v1460 = vld [vmem:[%s1448 + $0x2c] sm:$0xf]
      %v1461 = vld [vmem:[%s1448 + $0x30] sm:$0xf]
      %v1462 = vld [vmem:[%s1448 + $0x34] sm:$0xf]
      %v1463 = vld [vmem:[%s1448 + $0x38] sm:$0xf]
      %v1464 = vld [vmem:[%s1448 + $0x3c] sm:$0xf]
      %v1481 = vunpack.c.l.b16 %v1449
      %v1482 = vunpack.c.l.b16 %v1450
      %v1483 = vunpack.c.l.b16 %v1451
      %v1484 = vunpack.c.l.b16 %v1452
      %v1485 = vunpack.c.l.b16 %v1453
      %v1486 = vunpack.c.l.b16 %v1454
      %v1487 = vunpack.c.l.b16 %v1455
      %v1488 = vunpack.c.l.b16 %v1456
      %v1489 = vunpack.c.l.b16 %v1457
      %v1490 = vunpack.c.l.b16 %v1458
      %v1491 = vunpack.c.l.b16 %v1459
      %v1492 = vunpack.c.l.b16 %v1460
      %v1493 = vunpack.c.l.b16 %v1461
      %v1494 = vunpack.c.l.b16 %v1462
      %v1495 = vunpack.c.l.b16 %v1463
      %v1496 = vunpack.c.l.b16 %v1464
      %v1497 = vpack.c.b16 %v1482, %v1481
      %v1498 = vpack.c.b16 %v1484, %v1483
      %v1499 = vpack.c.b16 %v1486, %v1485
      %v1500 = vpack.c.b16 %v1488, %v1487
      %v1501 = vpack.c.b16 %v1490, %v1489
      %v1502 = vpack.c.b16 %v1492, %v1491
      %v1503 = vpack.c.b16 %v1494, %v1493
      %v1504 = vpack.c.b16 %v1496, %v1495
      %1513 = vmatpush.bf16.msra.mxu0 %v1504
      %1514 = vmatpush.bf16.msra.mxu0 %v1503
      %1515 = vmatpush.bf16.msra.mxu0 %v1502
      %1516 = vmatpush.bf16.msra.mxu0 %v1501
      %1517 = vmatpush.bf16.msra.mxu0 %v1500
      %1518 = vmatpush.bf16.msra.mxu0 %v1499
      %1519 = vmatpush.bf16.msra.mxu0 %v1498
      %1520 = vmatpush.bf16.msra.mxu0 %v1497
      %1521 = vmatmul.bf16.gmra.mxu0 %v1422
      %v1522 = vpop.f32.mrf.mxu0
      %v1523 = vadd.f32 0.0, %v1522
      %v1524 = vpop.f32.mrf.mxu0
      %v1525 = vadd.f32 0.0, %v1524
      %1526 = vmatmul.bf16.gmra.mxu0 %v1423
      %v1527 = vpop.f32.mrf.mxu0
      %v1528 = vadd.f32 0.0, %v1527
      %v1529 = vpop.f32.mrf.mxu0
      %v1530 = vadd.f32 0.0, %v1529
      %1531 = vmatmul.bf16.gmra.mxu0 %v1424
      %v1532 = vpop.f32.mrf.mxu0
      %v1533 = vadd.f32 0.0, %v1532
      %v1534 = vpop.f32.mrf.mxu0
      %v1535 = vadd.f32 0.0, %v1534
      %1536 = vmatmul.bf16.gmra.mxu0 %v1425
      %v1537 = vpop.f32.mrf.mxu0
      %v1538 = vadd.f32 0.0, %v1537
      %v1539 = vpop.f32.mrf.mxu0
      %v1540 = vadd.f32 0.0, %v1539
      %1541 = vmatmul.bf16.gmra.mxu0 %v1426
      %v1542 = vpop.f32.mrf.mxu0
      %v1543 = vadd.f32 0.0, %v1542
      %v1544 = vpop.f32.mrf.mxu0
      %v1545 = vadd.f32 0.0, %v1544
      %1546 = vmatmul.bf16.gmra.mxu0 %v1427
      %v1547 = vpop.f32.mrf.mxu0
      %v1548 = vadd.f32 0.0, %v1547
      %v1549 = vpop.f32.mrf.mxu0
      %v1550 = vadd.f32 0.0, %v1549
      %1551 = vmatmul.bf16.gmra.mxu0 %v1428
      %v1552 = vpop.f32.mrf.mxu0
      %v1553 = vadd.f32 0.0, %v1552
      %v1554 = vpop.f32.mrf.mxu0
      %v1555 = vadd.f32 0.0, %v1554
      %1556 = vmatmul.bf16.gmra.mxu0 %v1429
      %v1557 = vpop.f32.mrf.mxu0
      %v1558 = vadd.f32 0.0, %v1557
      %v1559 = vpop.f32.mrf.mxu0
      %v1560 = vadd.f32 0.0, %v1559
      %1561 = vmatmul.bf16.gmra.mxu0 %v1430
      %v1562 = vpop.f32.mrf.mxu0
      %v1563 = vadd.f32 0.0, %v1562
      %v1564 = vpop.f32.mrf.mxu0
      %v1565 = vadd.f32 0.0, %v1564
      %1566 = vmatmul.bf16.gmra.mxu0 %v1431
      %v1567 = vpop.f32.mrf.mxu0
      %v1568 = vadd.f32 0.0, %v1567
      %v1569 = vpop.f32.mrf.mxu0
      %v1570 = vadd.f32 0.0, %v1569
      %1571 = vmatmul.bf16.gmra.mxu0 %v1432
      %v1572 = vpop.f32.mrf.mxu0
      %v1573 = vadd.f32 0.0, %v1572
      %v1574 = vpop.f32.mrf.mxu0
      %v1575 = vadd.f32 0.0, %v1574
      %1576 = vmatmul.bf16.gmra.mxu0 %v1433
      %v1577 = vpop.f32.mrf.mxu0
      %v1578 = vadd.f32 0.0, %v1577
      %v1579 = vpop.f32.mrf.mxu0
      %v1580 = vadd.f32 0.0, %v1579
      %1581 = vmatmul.bf16.gmra.mxu0 %v1434
      %v1582 = vpop.f32.mrf.mxu0
      %v1583 = vadd.f32 0.0, %v1582
      %v1584 = vpop.f32.mrf.mxu0
      %v1585 = vadd.f32 0.0, %v1584
      %1586 = vmatmul.bf16.gmra.mxu0 %v1435
      %v1587 = vpop.f32.mrf.mxu0
      %v1588 = vadd.f32 0.0, %v1587
      %v1589 = vpop.f32.mrf.mxu0
      %v1590 = vadd.f32 0.0, %v1589
      %1591 = vmatmul.bf16.gmra.mxu0 %v1436
      %v1592 = vpop.f32.mrf.mxu0
      %v1593 = vadd.f32 0.0, %v1592
      %v1594 = vpop.f32.mrf.mxu0
      %v1595 = vadd.f32 0.0, %v1594
      %1596 = vmatmul.bf16.gmra.mxu0 %v1437
      %v1597 = vpop.f32.mrf.mxu0
      %v1598 = vadd.f32 0.0, %v1597
      %v1599 = vpop.f32.mrf.mxu0
      %v1600 = vadd.f32 0.0, %v1599
      %1601 = vmatmul.bf16.gmra.mxu0 %v1438
      %v1602 = vpop.f32.mrf.mxu0
      %v1603 = vadd.f32 0.0, %v1602
      %v1604 = vpop.f32.mrf.mxu0
      %v1605 = vadd.f32 0.0, %v1604
      %1606 = vmatmul.bf16.gmra.mxu0 %v1439
      %v1607 = vpop.f32.mrf.mxu0
      %v1608 = vadd.f32 0.0, %v1607
      %v1609 = vpop.f32.mrf.mxu0
      %v1610 = vadd.f32 0.0, %v1609
      %1611 = vmatmul.bf16.gmra.mxu0 %v1440
      %v1612 = vpop.f32.mrf.mxu0
      %v1613 = vadd.f32 0.0, %v1612
      %v1614 = vpop.f32.mrf.mxu0
      %v1615 = vadd.f32 0.0, %v1614
      %1616 = vmatmul.bf16.gmra.mxu0 %v1441
      %v1617 = vpop.f32.mrf.mxu0
      %v1618 = vadd.f32 0.0, %v1617
      %v1619 = vpop.f32.mrf.mxu0
      %v1620 = vadd.f32 0.0, %v1619
      %1621 = vmatmul.bf16.gmra.mxu0 %v1442
      %v1622 = vpop.f32.mrf.mxu0
      %v1623 = vadd.f32 0.0, %v1622
      %v1624 = vpop.f32.mrf.mxu0
      %v1625 = vadd.f32 0.0, %v1624
      %1626 = vmatmul.bf16.gmra.mxu0 %v1443
      %v1627 = vpop.f32.mrf.mxu0
      %v1628 = vadd.f32 0.0, %v1627
      %v1629 = vpop.f32.mrf.mxu0
      %v1630 = vadd.f32 0.0, %v1629
      %1631 = vmatmul.bf16.gmra.mxu0 %v1444
      %v1632 = vpop.f32.mrf.mxu0
      %v1633 = vadd.f32 0.0, %v1632
      %v1634 = vpop.f32.mrf.mxu0
      %v1635 = vadd.f32 0.0, %v1634
      %1636 = vmatmul.bf16.gmra.mxu0 %v1445
      %v1637 = vpop.f32.mrf.mxu0
      %v1638 = vadd.f32 0.0, %v1637
      %v1639 = vpop.f32.mrf.mxu0
      %v1640 = vadd.f32 0.0, %v1639
      %1641 = vmatmul.bf16.gmra.mxu0 %v1446
      %v1642 = vpop.f32.mrf.mxu0
      %v1643 = vadd.f32 0.0, %v1642
      %v1644 = vpop.f32.mrf.mxu0
      %v1645 = vadd.f32 0.0, %v1644
      %1646 = vmatmul.bf16.gmra.mxu0 %v1447
      %v1647 = vpop.f32.mrf.mxu0
      %v1648 = vadd.f32 0.0, %v1647
      %v1649 = vpop.f32.mrf.mxu0
      %1650 = vdwg.mxu0
      %v1651 = vadd.f32 %v1267, %v1523
      %v1652 = vadd.f32 %v1268, %v1525
      %v1653 = vadd.f32 %v1269, %v1528
      %v1654 = vadd.f32 %v1270, %v1530
      %v1655 = vadd.f32 %v1271, %v1533
      %v1656 = vadd.f32 %v1272, %v1535
      %v1657 = vadd.f32 %v1273, %v1538
      %v1658 = vadd.f32 %v1274, %v1540
      %v1659 = vadd.f32 %v1275, %v1543
      %v1660 = vadd.f32 %v1276, %v1545
      %v1661 = vadd.f32 %v1277, %v1548
      %v1662 = vadd.f32 %v1278, %v1550
      %v1663 = vadd.f32 %v1279, %v1553
      %v1664 = vadd.f32 %v1280, %v1555
      %v1665 = vadd.f32 %v1281, %v1558
      %v1666 = vadd.f32 %v1282, %v1560
      %v1667 = vadd.f32 %v1283, %v1563
      %v1668 = vadd.f32 %v1284, %v1565
      %v1669 = vadd.f32 %v1285, %v1568
      %v1670 = vadd.f32 %v1286, %v1570
      %v1671 = vadd.f32 %v1287, %v1573
      %v1672 = vadd.f32 %v1288, %v1575
      %v1673 = vadd.f32 %v1289, %v1578
      %v1674 = vadd.f32 %v1290, %v1580
      %v1675 = vadd.f32 %v1291, %v1583
      %v1676 = vadd.f32 %v1292, %v1585
      %v1677 = vadd.f32 %v1293, %v1588
      %v1678 = vadd.f32 %v1294, %v1590
      %v1679 = vadd.f32 %v1295, %v1593
      %v1680 = vadd.f32 %v1296, %v1595
      %v1681 = vadd.f32 %v1297, %v1598
      %v1682 = vadd.f32 %v1298, %v1600
      %v1683 = vadd.f32 %v1299, %v1603
      %v1684 = vadd.f32 %v1300, %v1605
      %v1685 = vadd.f32 %v1301, %v1608
      %v1686 = vadd.f32 %v1302, %v1610
      %v1687 = vadd.f32 %v1303, %v1613
      %v1688 = vadd.f32 %v1304, %v1615
      %v1689 = vadd.f32 %v1305, %v1618
      %v1690 = vadd.f32 %v1306, %v1620
      %v1691 = vadd.f32 %v1307, %v1623
      %v1692 = vadd.f32 %v1308, %v1625
      %v1693 = vadd.f32 %v1309, %v1628
      %v1694 = vadd.f32 %v1310, %v1630
      %v1695 = vadd.f32 %v1311, %v1633
      %v1696 = vadd.f32 %v1312, %v1635
      %v1697 = vadd.f32 %v1313, %v1638
      %v1698 = vadd.f32 %v1314, %v1640
      %v1699 = vadd.f32 %v1315, %v1643
      %v1700 = vadd.f32 %v1316, %v1645
      %v1701 = vadd.f32 %v1317, %v1648
      %v1702 = vrot.slane %v316, 3
      %v1703 = vrot.slane %v317, 3
      %v1704 = vrot.slane %v318, 3
      %v1705 = vrot.slane %v319, 3
      %v1706 = vrot.slane %v320, 3
      %v1707 = vrot.slane %v321, 3
      %v1708 = vrot.slane %v322, 3
      %v1709 = vrot.slane %v323, 3
      %v1710 = vrot.slane %v324, 3
      %v1711 = vrot.slane %v325, 3
      %v1712 = vrot.slane %v326, 3
      %v1713 = vrot.slane %v327, 3
      %v1714 = vrot.slane %v328, 3
      %v1715 = vrot.slane %v329, 3
      %v1716 = vrot.slane %v330, 3
      %v1717 = vrot.slane %v331, 3
      %v1718 = vrot.slane %v332, 3
      %v1719 = vrot.slane %v333, 3
      %v1720 = vrot.slane %v334, 3
      %v1721 = vrot.slane %v335, 3
      %v1722 = vrot.slane %v336, 3
      %v1723 = vrot.slane %v337, 3
      %v1724 = vrot.slane %v338, 3
      %v1725 = vrot.slane %v339, 3
      %v1726 = vrot.slane %v340, 3
      %v1727 = vrot.slane %v341, 3
      %v1728 = vrot.slane %v342, 3
      %v1729 = vrot.slane %v343, 3
      %v1730 = vrot.slane %v344, 3
      %v1731 = vrot.slane %v345, 3
      %v1732 = vrot.slane %v346, 3
      %v1733 = vrot.slane %v347, 3
      %v1734 = vrot.slane %v348, 3
      %v1735 = vrot.slane %v349, 3
      %v1736 = vrot.slane %v350, 3
      %v1737 = vrot.slane %v351, 3
      %v1738 = vrot.slane %v352, 3
      %v1739 = vrot.slane %v353, 3
      %v1740 = vrot.slane %v354, 3
      %v1741 = vrot.slane %v355, 3
      %v1742 = vrot.slane %v356, 3
      %v1743 = vrot.slane %v357, 3
      %v1744 = vrot.slane %v358, 3
      %v1745 = vrot.slane %v359, 3
      %v1746 = vrot.slane %v360, 3
      %v1747 = vrot.slane %v361, 3
      %v1748 = vrot.slane %v362, 3
      %v1749 = vrot.slane %v363, 3
      %v1750 = vrot.slane %v364, 3
      %v1751 = vrot.slane %v370, 3
      %v1752 = vrot.slane %v371, 3
      %v1753 = vrot.slane %v372, 3
      %vm1754 = vcmp.lt.s32.totalorder %v226, 5
      %v1755 = vsel %vm1754, %v1752, %v1753
      %v1756 = vsel %vm1754, %v1751, %v1752
      %v1757 = vsel %vm1754, %v1749, %v1750
      %v1758 = vsel %vm1754, %v1748, %v1749
      %v1759 = vsel %vm1754, %v1747, %v1748
      %v1760 = vsel %vm1754, %v1746, %v1747
      %v1761 = vsel %vm1754, %v1745, %v1746
      %v1762 = vsel %vm1754, %v1744, %v1745
      %v1763 = vsel %vm1754, %v1743, %v1744
      %v1764 = vsel %vm1754, %v1742, %v1743
      %v1765 = vsel %vm1754, %v1741, %v1742
      %v1766 = vsel %vm1754, %v1740, %v1741
      %v1767 = vsel %vm1754, %v1739, %v1740
      %v1768 = vsel %vm1754, %v1738, %v1739
      %v1769 = vsel %vm1754, %v1737, %v1738
      %v1770 = vsel %vm1754, %v1736, %v1737
      %v1771 = vsel %vm1754, %v1735, %v1736
      %v1772 = vsel %vm1754, %v1734, %v1735
      %v1773 = vsel %vm1754, %v1733, %v1734
      %v1774 = vsel %vm1754, %v1732, %v1733
      %v1775 = vsel %vm1754, %v1731, %v1732
      %v1776 = vsel %vm1754, %v1730, %v1731
      %v1777 = vsel %vm1754, %v1729, %v1730
      %v1778 = vsel %vm1754, %v1728, %v1729
      %v1779 = vsel %vm1754, %v1727, %v1728
      %v1780 = vsel %vm1754, %v1726, %v1727
      %v1781 = vsel %vm1754, %v1725, %v1726
      %v1782 = vsel %vm1754, %v1724, %v1725
      %v1783 = vsel %vm1754, %v1723, %v1724
      %v1784 = vsel %vm1754, %v1722, %v1723
      %v1785 = vsel %vm1754, %v1721, %v1722
      %v1786 = vsel %vm1754, %v1720, %v1721
      %v1787 = vsel %vm1754, %v1719, %v1720
      %v1788 = vsel %vm1754, %v1718, %v1719
      %v1789 = vsel %vm1754, %v1717, %v1718
      %v1790 = vsel %vm1754, %v1716, %v1717
      %v1791 = vsel %vm1754, %v1715, %v1716
      %v1792 = vsel %vm1754, %v1714, %v1715
      %v1793 = vsel %vm1754, %v1713, %v1714
      %v1794 = vsel %vm1754, %v1712, %v1713
      %v1795 = vsel %vm1754, %v1711, %v1712
      %v1796 = vsel %vm1754, %v1710, %v1711
      %v1797 = vsel %vm1754, %v1709, %v1710
      %v1798 = vsel %vm1754, %v1708, %v1709
      %v1799 = vsel %vm1754, %v1707, %v1708
      %v1800 = vsel %vm1754, %v1706, %v1707
      %v1801 = vsel %vm1754, %v1705, %v1706
      %v1802 = vsel %vm1754, %v1704, %v1705
      %v1803 = vsel %vm1754, %v1703, %v1704
      %v1804 = vsel %vm1754, %v1702, %v1703
      %v1805 = vsel %vm1754, %v1753, %v1702
      %v1806 = vpack.c.bf16 %v1755, %v1756
      %v1807 = vpack.c.bf16 %v1804, %v1805
      %v1808 = vpack.c.bf16 %v1802, %v1803
      %v1809 = vpack.c.bf16 %v1800, %v1801
      %v1810 = vpack.c.bf16 %v1798, %v1799
      %v1811 = vpack.c.bf16 %v1796, %v1797
      %v1812 = vpack.c.bf16 %v1794, %v1795
      %v1813 = vpack.c.bf16 %v1792, %v1793
      %v1814 = vpack.c.bf16 %v1790, %v1791
      %v1815 = vpack.c.bf16 %v1788, %v1789
      %v1816 = vpack.c.bf16 %v1786, %v1787
      %v1817 = vpack.c.bf16 %v1784, %v1785
      %v1818 = vpack.c.bf16 %v1782, %v1783
      %v1819 = vpack.c.bf16 %v1780, %v1781
      %v1820 = vpack.c.bf16 %v1778, %v1779
      %v1821 = vpack.c.bf16 %v1776, %v1777
      %v1822 = vpack.c.bf16 %v1774, %v1775
      %v1823 = vpack.c.bf16 %v1772, %v1773
      %v1824 = vpack.c.bf16 %v1770, %v1771
      %v1825 = vpack.c.bf16 %v1768, %v1769
      %v1826 = vpack.c.bf16 %v1766, %v1767
      %v1827 = vpack.c.bf16 %v1764, %v1765
      %v1828 = vpack.c.bf16 %v1762, %v1763
      %v1829 = vpack.c.bf16 %v1760, %v1761
      %v1830 = vpack.c.bf16 %v1758, %v1759
      %v1831 = vpack.c.bf16 %v1757, %v1757
      %s1832 = scalar_lea.vmem %s1, 256
      %v1833 = vld [vmem:[%s1832] sm:$0xf]
      %v1834 = vld [vmem:[%s1832 + $0x4] sm:$0xf]
      %v1835 = vld [vmem:[%s1832 + $0x8] sm:$0xf]
      %v1836 = vld [vmem:[%s1832 + $0xc] sm:$0xf]
      %v1837 = vld [vmem:[%s1832 + $0x10] sm:$0xf]
      %v1838 = vld [vmem:[%s1832 + $0x14] sm:$0xf]
      %v1839 = vld [vmem:[%s1832 + $0x18] sm:$0xf]
      %v1840 = vld [vmem:[%s1832 + $0x1c] sm:$0xf]
      %v1841 = vld [vmem:[%s1832 + $0x20] sm:$0xf]
      %v1842 = vld [vmem:[%s1832 + $0x24] sm:$0xf]
      %v1843 = vld [vmem:[%s1832 + $0x28] sm:$0xf]
      %v1844 = vld [vmem:[%s1832 + $0x2c] sm:$0xf]
      %v1845 = vld [vmem:[%s1832 + $0x30] sm:$0xf]
      %v1846 = vld [vmem:[%s1832 + $0x34] sm:$0xf]
      %v1847 = vld [vmem:[%s1832 + $0x38] sm:$0xf]
      %v1848 = vld [vmem:[%s1832 + $0x3c] sm:$0xf]
      %v1865 = vunpack.c.l.b16 %v1833
      %v1866 = vunpack.c.l.b16 %v1834
      %v1867 = vunpack.c.l.b16 %v1835
      %v1868 = vunpack.c.l.b16 %v1836
      %v1869 = vunpack.c.l.b16 %v1837
      %v1870 = vunpack.c.l.b16 %v1838
      %v1871 = vunpack.c.l.b16 %v1839
      %v1872 = vunpack.c.l.b16 %v1840
      %v1873 = vunpack.c.l.b16 %v1841
      %v1874 = vunpack.c.l.b16 %v1842
      %v1875 = vunpack.c.l.b16 %v1843
      %v1876 = vunpack.c.l.b16 %v1844
      %v1877 = vunpack.c.l.b16 %v1845
      %v1878 = vunpack.c.l.b16 %v1846
      %v1879 = vunpack.c.l.b16 %v1847
      %v1880 = vunpack.c.l.b16 %v1848
      %v1881 = vpack.c.b16 %v1866, %v1865
      %v1882 = vpack.c.b16 %v1868, %v1867
      %v1883 = vpack.c.b16 %v1870, %v1869
      %v1884 = vpack.c.b16 %v1872, %v1871
      %v1885 = vpack.c.b16 %v1874, %v1873
      %v1886 = vpack.c.b16 %v1876, %v1875
      %v1887 = vpack.c.b16 %v1878, %v1877
      %v1888 = vpack.c.b16 %v1880, %v1879
      %1897 = vmatpush.bf16.msra.mxu0 %v1888
      %1898 = vmatpush.bf16.msra.mxu0 %v1887
      %1899 = vmatpush.bf16.msra.mxu0 %v1886
      %1900 = vmatpush.bf16.msra.mxu0 %v1885
      %1901 = vmatpush.bf16.msra.mxu0 %v1884
      %1902 = vmatpush.bf16.msra.mxu0 %v1883
      %1903 = vmatpush.bf16.msra.mxu0 %v1882
      %1904 = vmatpush.bf16.msra.mxu0 %v1881
      %1905 = vmatmul.bf16.gmra.mxu0 %v1806
      %v1906 = vpop.f32.mrf.mxu0
      %v1907 = vadd.f32 0.0, %v1906
      %v1908 = vpop.f32.mrf.mxu0
      %v1909 = vadd.f32 0.0, %v1908
      %1910 = vmatmul.bf16.gmra.mxu0 %v1807
      %v1911 = vpop.f32.mrf.mxu0
      %v1912 = vadd.f32 0.0, %v1911
      %v1913 = vpop.f32.mrf.mxu0
      %v1914 = vadd.f32 0.0, %v1913
      %1915 = vmatmul.bf16.gmra.mxu0 %v1808
      %v1916 = vpop.f32.mrf.mxu0
      %v1917 = vadd.f32 0.0, %v1916
      %v1918 = vpop.f32.mrf.mxu0
      %v1919 = vadd.f32 0.0, %v1918
      %1920 = vmatmul.bf16.gmra.mxu0 %v1809
      %v1921 = vpop.f32.mrf.mxu0
      %v1922 = vadd.f32 0.0, %v1921
      %v1923 = vpop.f32.mrf.mxu0
      %v1924 = vadd.f32 0.0, %v1923
      %1925 = vmatmul.bf16.gmra.mxu0 %v1810
      %v1926 = vpop.f32.mrf.mxu0
      %v1927 = vadd.f32 0.0, %v1926
      %v1928 = vpop.f32.mrf.mxu0
      %v1929 = vadd.f32 0.0, %v1928
      %1930 = vmatmul.bf16.gmra.mxu0 %v1811
      %v1931 = vpop.f32.mrf.mxu0
      %v1932 = vadd.f32 0.0, %v1931
      %v1933 = vpop.f32.mrf.mxu0
      %v1934 = vadd.f32 0.0, %v1933
      %1935 = vmatmul.bf16.gmra.mxu0 %v1812
      %v1936 = vpop.f32.mrf.mxu0
      %v1937 = vadd.f32 0.0, %v1936
      %v1938 = vpop.f32.mrf.mxu0
      %v1939 = vadd.f32 0.0, %v1938
      %1940 = vmatmul.bf16.gmra.mxu0 %v1813
      %v1941 = vpop.f32.mrf.mxu0
      %v1942 = vadd.f32 0.0, %v1941
      %v1943 = vpop.f32.mrf.mxu0
      %v1944 = vadd.f32 0.0, %v1943
      %1945 = vmatmul.bf16.gmra.mxu0 %v1814
      %v1946 = vpop.f32.mrf.mxu0
      %v1947 = vadd.f32 0.0, %v1946
      %v1948 = vpop.f32.mrf.mxu0
      %v1949 = vadd.f32 0.0, %v1948
      %1950 = vmatmul.bf16.gmra.mxu0 %v1815
      %v1951 = vpop.f32.mrf.mxu0
      %v1952 = vadd.f32 0.0, %v1951
      %v1953 = vpop.f32.mrf.mxu0
      %v1954 = vadd.f32 0.0, %v1953
      %1955 = vmatmul.bf16.gmra.mxu0 %v1816
      %v1956 = vpop.f32.mrf.mxu0
      %v1957 = vadd.f32 0.0, %v1956
      %v1958 = vpop.f32.mrf.mxu0
      %v1959 = vadd.f32 0.0, %v1958
      %1960 = vmatmul.bf16.gmra.mxu0 %v1817
      %v1961 = vpop.f32.mrf.mxu0
      %v1962 = vadd.f32 0.0, %v1961
      %v1963 = vpop.f32.mrf.mxu0
      %v1964 = vadd.f32 0.0, %v1963
      %1965 = vmatmul.bf16.gmra.mxu0 %v1818
      %v1966 = vpop.f32.mrf.mxu0
      %v1967 = vadd.f32 0.0, %v1966
      %v1968 = vpop.f32.mrf.mxu0
      %v1969 = vadd.f32 0.0, %v1968
      %1970 = vmatmul.bf16.gmra.mxu0 %v1819
      %v1971 = vpop.f32.mrf.mxu0
      %v1972 = vadd.f32 0.0, %v1971
      %v1973 = vpop.f32.mrf.mxu0
      %v1974 = vadd.f32 0.0, %v1973
      %1975 = vmatmul.bf16.gmra.mxu0 %v1820
      %v1976 = vpop.f32.mrf.mxu0
      %v1977 = vadd.f32 0.0, %v1976
      %v1978 = vpop.f32.mrf.mxu0
      %v1979 = vadd.f32 0.0, %v1978
      %1980 = vmatmul.bf16.gmra.mxu0 %v1821
      %v1981 = vpop.f32.mrf.mxu0
      %v1982 = vadd.f32 0.0, %v1981
      %v1983 = vpop.f32.mrf.mxu0
      %v1984 = vadd.f32 0.0, %v1983
      %1985 = vmatmul.bf16.gmra.mxu0 %v1822
      %v1986 = vpop.f32.mrf.mxu0
      %v1987 = vadd.f32 0.0, %v1986
      %v1988 = vpop.f32.mrf.mxu0
      %v1989 = vadd.f32 0.0, %v1988
      %1990 = vmatmul.bf16.gmra.mxu0 %v1823
      %v1991 = vpop.f32.mrf.mxu0
      %v1992 = vadd.f32 0.0, %v1991
      %v1993 = vpop.f32.mrf.mxu0
      %v1994 = vadd.f32 0.0, %v1993
      %1995 = vmatmul.bf16.gmra.mxu0 %v1824
      %v1996 = vpop.f32.mrf.mxu0
      %v1997 = vadd.f32 0.0, %v1996
      %v1998 = vpop.f32.mrf.mxu0
      %v1999 = vadd.f32 0.0, %v1998
      %2000 = vmatmul.bf16.gmra.mxu0 %v1825
      %v2001 = vpop.f32.mrf.mxu0
      %v2002 = vadd.f32 0.0, %v2001
      %v2003 = vpop.f32.mrf.mxu0
      %v2004 = vadd.f32 0.0, %v2003
      %2005 = vmatmul.bf16.gmra.mxu0 %v1826
      %v2006 = vpop.f32.mrf.mxu0
      %v2007 = vadd.f32 0.0, %v2006
      %v2008 = vpop.f32.mrf.mxu0
      %v2009 = vadd.f32 0.0, %v2008
      %2010 = vmatmul.bf16.gmra.mxu0 %v1827
      %v2011 = vpop.f32.mrf.mxu0
      %v2012 = vadd.f32 0.0, %v2011
      %v2013 = vpop.f32.mrf.mxu0
      %v2014 = vadd.f32 0.0, %v2013
      %2015 = vmatmul.bf16.gmra.mxu0 %v1828
      %v2016 = vpop.f32.mrf.mxu0
      %v2017 = vadd.f32 0.0, %v2016
      %v2018 = vpop.f32.mrf.mxu0
      %v2019 = vadd.f32 0.0, %v2018
      %2020 = vmatmul.bf16.gmra.mxu0 %v1829
      %v2021 = vpop.f32.mrf.mxu0
      %v2022 = vadd.f32 0.0, %v2021
      %v2023 = vpop.f32.mrf.mxu0
      %v2024 = vadd.f32 0.0, %v2023
      %2025 = vmatmul.bf16.gmra.mxu0 %v1830
      %v2026 = vpop.f32.mrf.mxu0
      %v2027 = vadd.f32 0.0, %v2026
      %v2028 = vpop.f32.mrf.mxu0
      %v2029 = vadd.f32 0.0, %v2028
      %2030 = vmatmul.bf16.gmra.mxu0 %v1831
      %v2031 = vpop.f32.mrf.mxu0
      %v2032 = vadd.f32 0.0, %v2031
      %v2033 = vpop.f32.mrf.mxu0
      %2034 = vdwg.mxu0
      %v2035 = vadd.f32 %v1651, %v1907
      %v2036 = vadd.f32 %v1652, %v1909
      %v2037 = vadd.f32 %v1653, %v1912
      %v2038 = vadd.f32 %v1654, %v1914
      %v2039 = vadd.f32 %v1655, %v1917
      %v2040 = vadd.f32 %v1656, %v1919
      %v2041 = vadd.f32 %v1657, %v1922
      %v2042 = vadd.f32 %v1658, %v1924
      %v2043 = vadd.f32 %v1659, %v1927
      %v2044 = vadd.f32 %v1660, %v1929
      %v2045 = vadd.f32 %v1661, %v1932
      %v2046 = vadd.f32 %v1662, %v1934
      %v2047 = vadd.f32 %v1663, %v1937
      %v2048 = vadd.f32 %v1664, %v1939
      %v2049 = vadd.f32 %v1665, %v1942
      %v2050 = vadd.f32 %v1666, %v1944
      %v2051 = vadd.f32 %v1667, %v1947
      %v2052 = vadd.f32 %v1668, %v1949
      %v2053 = vadd.f32 %v1669, %v1952
      %v2054 = vadd.f32 %v1670, %v1954
      %v2055 = vadd.f32 %v1671, %v1957
      %v2056 = vadd.f32 %v1672, %v1959
      %v2057 = vadd.f32 %v1673, %v1962
      %v2058 = vadd.f32 %v1674, %v1964
      %v2059 = vadd.f32 %v1675, %v1967
      %v2060 = vadd.f32 %v1676, %v1969
      %v2061 = vadd.f32 %v1677, %v1972
      %v2062 = vadd.f32 %v1678, %v1974
      %v2063 = vadd.f32 %v1679, %v1977
      %v2064 = vadd.f32 %v1680, %v1979
      %v2065 = vadd.f32 %v1681, %v1982
      %v2066 = vadd.f32 %v1682, %v1984
      %v2067 = vadd.f32 %v1683, %v1987
      %v2068 = vadd.f32 %v1684, %v1989
      %v2069 = vadd.f32 %v1685, %v1992
      %v2070 = vadd.f32 %v1686, %v1994
      %v2071 = vadd.f32 %v1687, %v1997
      %v2072 = vadd.f32 %v1688, %v1999
      %v2073 = vadd.f32 %v1689, %v2002
      %v2074 = vadd.f32 %v1690, %v2004
      %v2075 = vadd.f32 %v1691, %v2007
      %v2076 = vadd.f32 %v1692, %v2009
      %v2077 = vadd.f32 %v1693, %v2012
      %v2078 = vadd.f32 %v1694, %v2014
      %v2079 = vadd.f32 %v1695, %v2017
      %v2080 = vadd.f32 %v1696, %v2019
      %v2081 = vadd.f32 %v1697, %v2022
      %v2082 = vadd.f32 %v1698, %v2024
      %v2083 = vadd.f32 %v1699, %v2027
      %v2084 = vadd.f32 %v1700, %v2029
      %v2085 = vadd.f32 %v1701, %v2032
      %v2086 = vrot.slane %v364, 7
      %v2087 = vrot.slane %v365, 7
      %v2088 = vrot.slane %v366, 7
      %v2089 = vsel %vm425, %v2087, %v2088
      %v2090 = vsel %vm425, %v2086, %v2087
      %v2091 = vsel %vm425, %v420, %v2086
      %v2092 = vpack.c.bf16 %v475, %v476
      %v2093 = vpack.c.bf16 %v473, %v474
      %v2094 = vpack.c.bf16 %v471, %v472
      %v2095 = vpack.c.bf16 %v469, %v470
      %v2096 = vpack.c.bf16 %v467, %v468
      %v2097 = vpack.c.bf16 %v465, %v466
      %v2098 = vpack.c.bf16 %v463, %v464
      %v2099 = vpack.c.bf16 %v461, %v462
      %v2100 = vpack.c.bf16 %v459, %v460
      %v2101 = vpack.c.bf16 %v457, %v458
      %v2102 = vpack.c.bf16 %v455, %v456
      %v2103 = vpack.c.bf16 %v453, %v454
      %v2104 = vpack.c.bf16 %v451, %v452
      %v2105 = vpack.c.bf16 %v449, %v450
      %v2106 = vpack.c.bf16 %v447, %v448
      %v2107 = vpack.c.bf16 %v445, %v446
      %v2108 = vpack.c.bf16 %v443, %v444
      %v2109 = vpack.c.bf16 %v441, %v442
      %v2110 = vpack.c.bf16 %v439, %v440
      %v2111 = vpack.c.bf16 %v437, %v438
      %v2112 = vpack.c.bf16 %v435, %v436
      %v2113 = vpack.c.bf16 %v433, %v434
      %v2114 = vpack.c.bf16 %v431, %v432
      %v2115 = vpack.c.bf16 %v429, %v430
      %v2116 = vpack.c.bf16 %v2090, %v2091
      %v2117 = vpack.c.bf16 %v2089, %v2089
      %s2118 = scalar_lea.vmem %s1, 320
      %v2119 = vld [vmem:[%s2118] sm:$0xf]
      %v2120 = vld [vmem:[%s2118 + $0x4] sm:$0xf]
      %v2121 = vld [vmem:[%s2118 + $0x8] sm:$0xf]
      %v2122 = vld [vmem:[%s2118 + $0xc] sm:$0xf]
      %v2123 = vld [vmem:[%s2118 + $0x10] sm:$0xf]
      %v2124 = vld [vmem:[%s2118 + $0x14] sm:$0xf]
      %v2125 = vld [vmem:[%s2118 + $0x18] sm:$0xf]
      %v2126 = vld [vmem:[%s2118 + $0x1c] sm:$0xf]
      %v2127 = vld [vmem:[%s2118 + $0x20] sm:$0xf]
      %v2128 = vld [vmem:[%s2118 + $0x24] sm:$0xf]
      %v2129 = vld [vmem:[%s2118 + $0x28] sm:$0xf]
      %v2130 = vld [vmem:[%s2118 + $0x2c] sm:$0xf]
      %v2131 = vld [vmem:[%s2118 + $0x30] sm:$0xf]
      %v2132 = vld [vmem:[%s2118 + $0x34] sm:$0xf]
      %v2133 = vld [vmem:[%s2118 + $0x38] sm:$0xf]
      %v2134 = vld [vmem:[%s2118 + $0x3c] sm:$0xf]
      %v2151 = vunpack.c.l.b16 %v2119
      %v2152 = vunpack.c.l.b16 %v2120
      %v2153 = vunpack.c.l.b16 %v2121
      %v2154 = vunpack.c.l.b16 %v2122
      %v2155 = vunpack.c.l.b16 %v2123
      %v2156 = vunpack.c.l.b16 %v2124
      %v2157 = vunpack.c.l.b16 %v2125
      %v2158 = vunpack.c.l.b16 %v2126
      %v2159 = vunpack.c.l.b16 %v2127
      %v2160 = vunpack.c.l.b16 %v2128
      %v2161 = vunpack.c.l.b16 %v2129
      %v2162 = vunpack.c.l.b16 %v2130
      %v2163 = vunpack.c.l.b16 %v2131
      %v2164 = vunpack.c.l.b16 %v2132
      %v2165 = vunpack.c.l.b16 %v2133
      %v2166 = vunpack.c.l.b16 %v2134
      %v2167 = vpack.c.b16 %v2152, %v2151
      %v2168 = vpack.c.b16 %v2154, %v2153
      %v2169 = vpack.c.b16 %v2156, %v2155
      %v2170 = vpack.c.b16 %v2158, %v2157
      %v2171 = vpack.c.b16 %v2160, %v2159
      %v2172 = vpack.c.b16 %v2162, %v2161
      %v2173 = vpack.c.b16 %v2164, %v2163
      %v2174 = vpack.c.b16 %v2166, %v2165
      %2183 = vmatpush.bf16.msra.mxu0 %v2174
      %2184 = vmatpush.bf16.msra.mxu0 %v2173
      %2185 = vmatpush.bf16.msra.mxu0 %v2172
      %2186 = vmatpush.bf16.msra.mxu0 %v2171
      %2187 = vmatpush.bf16.msra.mxu0 %v2170
      %2188 = vmatpush.bf16.msra.mxu0 %v2169
      %2189 = vmatpush.bf16.msra.mxu0 %v2168
      %2190 = vmatpush.bf16.msra.mxu0 %v2167
      %2191 = vmatmul.bf16.gmra.mxu0 %v2092
      %v2192 = vpop.f32.mrf.mxu0
      %v2193 = vadd.f32 0.0, %v2192
      %v2194 = vpop.f32.mrf.mxu0
      %v2195 = vadd.f32 0.0, %v2194
      %2196 = vmatmul.bf16.gmra.mxu0 %v2093
      %v2197 = vpop.f32.mrf.mxu0
      %v2198 = vadd.f32 0.0, %v2197
      %v2199 = vpop.f32.mrf.mxu0
      %v2200 = vadd.f32 0.0, %v2199
      %2201 = vmatmul.bf16.gmra.mxu0 %v2094
      %v2202 = vpop.f32.mrf.mxu0
      %v2203 = vadd.f32 0.0, %v2202
      %v2204 = vpop.f32.mrf.mxu0
      %v2205 = vadd.f32 0.0, %v2204
      %2206 = vmatmul.bf16.gmra.mxu0 %v2095
      %v2207 = vpop.f32.mrf.mxu0
      %v2208 = vadd.f32 0.0, %v2207
      %v2209 = vpop.f32.mrf.mxu0
      %v2210 = vadd.f32 0.0, %v2209
      %2211 = vmatmul.bf16.gmra.mxu0 %v2096
      %v2212 = vpop.f32.mrf.mxu0
      %v2213 = vadd.f32 0.0, %v2212
      %v2214 = vpop.f32.mrf.mxu0
      %v2215 = vadd.f32 0.0, %v2214
      %2216 = vmatmul.bf16.gmra.mxu0 %v2097
      %v2217 = vpop.f32.mrf.mxu0
      %v2218 = vadd.f32 0.0, %v2217
      %v2219 = vpop.f32.mrf.mxu0
      %v2220 = vadd.f32 0.0, %v2219
      %2221 = vmatmul.bf16.gmra.mxu0 %v2098
      %v2222 = vpop.f32.mrf.mxu0
      %v2223 = vadd.f32 0.0, %v2222
      %v2224 = vpop.f32.mrf.mxu0
      %v2225 = vadd.f32 0.0, %v2224
      %2226 = vmatmul.bf16.gmra.mxu0 %v2099
      %v2227 = vpop.f32.mrf.mxu0
      %v2228 = vadd.f32 0.0, %v2227
      %v2229 = vpop.f32.mrf.mxu0
      %v2230 = vadd.f32 0.0, %v2229
      %2231 = vmatmul.bf16.gmra.mxu0 %v2100
      %v2232 = vpop.f32.mrf.mxu0
      %v2233 = vadd.f32 0.0, %v2232
      %v2234 = vpop.f32.mrf.mxu0
      %v2235 = vadd.f32 0.0, %v2234
      %2236 = vmatmul.bf16.gmra.mxu0 %v2101
      %v2237 = vpop.f32.mrf.mxu0
      %v2238 = vadd.f32 0.0, %v2237
      %v2239 = vpop.f32.mrf.mxu0
      %v2240 = vadd.f32 0.0, %v2239
      %2241 = vmatmul.bf16.gmra.mxu0 %v2102
      %v2242 = vpop.f32.mrf.mxu0
      %v2243 = vadd.f32 0.0, %v2242
      %v2244 = vpop.f32.mrf.mxu0
      %v2245 = vadd.f32 0.0, %v2244
      %2246 = vmatmul.bf16.gmra.mxu0 %v2103
      %v2247 = vpop.f32.mrf.mxu0
      %v2248 = vadd.f32 0.0, %v2247
      %v2249 = vpop.f32.mrf.mxu0
      %v2250 = vadd.f32 0.0, %v2249
      %2251 = vmatmul.bf16.gmra.mxu0 %v2104
      %v2252 = vpop.f32.mrf.mxu0
      %v2253 = vadd.f32 0.0, %v2252
      %v2254 = vpop.f32.mrf.mxu0
      %v2255 = vadd.f32 0.0, %v2254
      %2256 = vmatmul.bf16.gmra.mxu0 %v2105
      %v2257 = vpop.f32.mrf.mxu0
      %v2258 = vadd.f32 0.0, %v2257
      %v2259 = vpop.f32.mrf.mxu0
      %v2260 = vadd.f32 0.0, %v2259
      %2261 = vmatmul.bf16.gmra.mxu0 %v2106
      %v2262 = vpop.f32.mrf.mxu0
      %v2263 = vadd.f32 0.0, %v2262
      %v2264 = vpop.f32.mrf.mxu0
      %v2265 = vadd.f32 0.0, %v2264
      %2266 = vmatmul.bf16.gmra.mxu0 %v2107
      %v2267 = vpop.f32.mrf.mxu0
      %v2268 = vadd.f32 0.0, %v2267
      %v2269 = vpop.f32.mrf.mxu0
      %v2270 = vadd.f32 0.0, %v2269
      %2271 = vmatmul.bf16.gmra.mxu0 %v2108
      %v2272 = vpop.f32.mrf.mxu0
      %v2273 = vadd.f32 0.0, %v2272
      %v2274 = vpop.f32.mrf.mxu0
      %v2275 = vadd.f32 0.0, %v2274
      %2276 = vmatmul.bf16.gmra.mxu0 %v2109
      %v2277 = vpop.f32.mrf.mxu0
      %v2278 = vadd.f32 0.0, %v2277
      %v2279 = vpop.f32.mrf.mxu0
      %v2280 = vadd.f32 0.0, %v2279
      %2281 = vmatmul.bf16.gmra.mxu0 %v2110
      %v2282 = vpop.f32.mrf.mxu0
      %v2283 = vadd.f32 0.0, %v2282
      %v2284 = vpop.f32.mrf.mxu0
      %v2285 = vadd.f32 0.0, %v2284
      %2286 = vmatmul.bf16.gmra.mxu0 %v2111
      %v2287 = vpop.f32.mrf.mxu0
      %v2288 = vadd.f32 0.0, %v2287
      %v2289 = vpop.f32.mrf.mxu0
      %v2290 = vadd.f32 0.0, %v2289
      %2291 = vmatmul.bf16.gmra.mxu0 %v2112
      %v2292 = vpop.f32.mrf.mxu0
      %v2293 = vadd.f32 0.0, %v2292
      %v2294 = vpop.f32.mrf.mxu0
      %v2295 = vadd.f32 0.0, %v2294
      %2296 = vmatmul.bf16.gmra.mxu0 %v2113
      %v2297 = vpop.f32.mrf.mxu0
      %v2298 = vadd.f32 0.0, %v2297
      %v2299 = vpop.f32.mrf.mxu0
      %v2300 = vadd.f32 0.0, %v2299
      %2301 = vmatmul.bf16.gmra.mxu0 %v2114
      %v2302 = vpop.f32.mrf.mxu0
      %v2303 = vadd.f32 0.0, %v2302
      %v2304 = vpop.f32.mrf.mxu0
      %v2305 = vadd.f32 0.0, %v2304
      %2306 = vmatmul.bf16.gmra.mxu0 %v2115
      %v2307 = vpop.f32.mrf.mxu0
      %v2308 = vadd.f32 0.0, %v2307
      %v2309 = vpop.f32.mrf.mxu0
      %v2310 = vadd.f32 0.0, %v2309
      %2311 = vmatmul.bf16.gmra.mxu0 %v2116
      %v2312 = vpop.f32.mrf.mxu0
      %v2313 = vadd.f32 0.0, %v2312
      %v2314 = vpop.f32.mrf.mxu0
      %v2315 = vadd.f32 0.0, %v2314
      %2316 = vmatmul.bf16.gmra.mxu0 %v2117
      %v2317 = vpop.f32.mrf.mxu0
      %v2318 = vadd.f32 0.0, %v2317
      %v2319 = vpop.f32.mrf.mxu0
      %2320 = vdwg.mxu0
      %v2321 = vadd.f32 %v2035, %v2193
      %v2322 = vadd.f32 %v2036, %v2195
      %v2323 = vadd.f32 %v2037, %v2198
      %v2324 = vadd.f32 %v2038, %v2200
      %v2325 = vadd.f32 %v2039, %v2203
      %v2326 = vadd.f32 %v2040, %v2205
      %v2327 = vadd.f32 %v2041, %v2208
      %v2328 = vadd.f32 %v2042, %v2210
      %v2329 = vadd.f32 %v2043, %v2213
      %v2330 = vadd.f32 %v2044, %v2215
      %v2331 = vadd.f32 %v2045, %v2218
      %v2332 = vadd.f32 %v2046, %v2220
      %v2333 = vadd.f32 %v2047, %v2223
      %v2334 = vadd.f32 %v2048, %v2225
      %v2335 = vadd.f32 %v2049, %v2228
      %v2336 = vadd.f32 %v2050, %v2230
      %v2337 = vadd.f32 %v2051, %v2233
      %v2338 = vadd.f32 %v2052, %v2235
      %v2339 = vadd.f32 %v2053, %v2238
      %v2340 = vadd.f32 %v2054, %v2240
      %v2341 = vadd.f32 %v2055, %v2243
      %v2342 = vadd.f32 %v2056, %v2245
      %v2343 = vadd.f32 %v2057, %v2248
      %v2344 = vadd.f32 %v2058, %v2250
      %v2345 = vadd.f32 %v2059, %v2253
      %v2346 = vadd.f32 %v2060, %v2255
      %v2347 = vadd.f32 %v2061, %v2258
      %v2348 = vadd.f32 %v2062, %v2260
      %v2349 = vadd.f32 %v2063, %v2263
      %v2350 = vadd.f32 %v2064, %v2265
      %v2351 = vadd.f32 %v2065, %v2268
      %v2352 = vadd.f32 %v2066, %v2270
      %v2353 = vadd.f32 %v2067, %v2273
      %v2354 = vadd.f32 %v2068, %v2275
      %v2355 = vadd.f32 %v2069, %v2278
      %v2356 = vadd.f32 %v2070, %v2280
      %v2357 = vadd.f32 %v2071, %v2283
      %v2358 = vadd.f32 %v2072, %v2285
      %v2359 = vadd.f32 %v2073, %v2288
      %v2360 = vadd.f32 %v2074, %v2290
      %v2361 = vadd.f32 %v2075, %v2293
      %v2362 = vadd.f32 %v2076, %v2295
      %v2363 = vadd.f32 %v2077, %v2298
      %v2364 = vadd.f32 %v2078, %v2300
      %v2365 = vadd.f32 %v2079, %v2303
      %v2366 = vadd.f32 %v2080, %v2305
      %v2367 = vadd.f32 %v2081, %v2308
      %v2368 = vadd.f32 %v2082, %v2310
      %v2369 = vadd.f32 %v2083, %v2313
      %v2370 = vadd.f32 %v2084, %v2315
      %v2371 = vadd.f32 %v2085, %v2318
      %v2372 = vpack.c.bf16 %v317, %v316
      %v2373 = vpack.c.bf16 %v319, %v318
      %v2374 = vpack.c.bf16 %v321, %v320
      %v2375 = vpack.c.bf16 %v323, %v322
      %v2376 = vpack.c.bf16 %v325, %v324
      %v2377 = vpack.c.bf16 %v327, %v326
      %v2378 = vpack.c.bf16 %v329, %v328
      %v2379 = vpack.c.bf16 %v331, %v330
      %v2380 = vpack.c.bf16 %v333, %v332
      %v2381 = vpack.c.bf16 %v335, %v334
      %v2382 = vpack.c.bf16 %v337, %v336
      %v2383 = vpack.c.bf16 %v339, %v338
      %v2384 = vpack.c.bf16 %v341, %v340
      %v2385 = vpack.c.bf16 %v343, %v342
      %v2386 = vpack.c.bf16 %v345, %v344
      %v2387 = vpack.c.bf16 %v347, %v346
      %v2388 = vpack.c.bf16 %v349, %v348
      %v2389 = vpack.c.bf16 %v351, %v350
      %v2390 = vpack.c.bf16 %v353, %v352
      %v2391 = vpack.c.bf16 %v355, %v354
      %v2392 = vpack.c.bf16 %v357, %v356
      %v2393 = vpack.c.bf16 %v359, %v358
      %v2394 = vpack.c.bf16 %v361, %v360
      %v2395 = vpack.c.bf16 %v363, %v362
      %v2396 = vpack.c.bf16 %v365, %v364
      %v2397 = vpack.c.bf16 %v366, %v366
      %s2398 = scalar_lea.vmem %s1, 384
      %v2399 = vld [vmem:[%s2398] sm:$0xf]
      %v2400 = vld [vmem:[%s2398 + $0x4] sm:$0xf]
      %v2401 = vld [vmem:[%s2398 + $0x8] sm:$0xf]
      %v2402 = vld [vmem:[%s2398 + $0xc] sm:$0xf]
      %v2403 = vld [vmem:[%s2398 + $0x10] sm:$0xf]
      %v2404 = vld [vmem:[%s2398 + $0x14] sm:$0xf]
      %v2405 = vld [vmem:[%s2398 + $0x18] sm:$0xf]
      %v2406 = vld [vmem:[%s2398 + $0x1c] sm:$0xf]
      %v2407 = vld [vmem:[%s2398 + $0x20] sm:$0xf]
      %v2408 = vld [vmem:[%s2398 + $0x24] sm:$0xf]
      %v2409 = vld [vmem:[%s2398 + $0x28] sm:$0xf]
      %v2410 = vld [vmem:[%s2398 + $0x2c] sm:$0xf]
      %v2411 = vld [vmem:[%s2398 + $0x30] sm:$0xf]
      %v2412 = vld [vmem:[%s2398 + $0x34] sm:$0xf]
      %v2413 = vld [vmem:[%s2398 + $0x38] sm:$0xf]
      %v2414 = vld [vmem:[%s2398 + $0x3c] sm:$0xf]
      %v2431 = vunpack.c.l.b16 %v2399
      %v2432 = vunpack.c.l.b16 %v2400
      %v2433 = vunpack.c.l.b16 %v2401
      %v2434 = vunpack.c.l.b16 %v2402
      %v2435 = vunpack.c.l.b16 %v2403
      %v2436 = vunpack.c.l.b16 %v2404
      %v2437 = vunpack.c.l.b16 %v2405
      %v2438 = vunpack.c.l.b16 %v2406
      %v2439 = vunpack.c.l.b16 %v2407
      %v2440 = vunpack.c.l.b16 %v2408
      %v2441 = vunpack.c.l.b16 %v2409
      %v2442 = vunpack.c.l.b16 %v2410
      %v2443 = vunpack.c.l.b16 %v2411
      %v2444 = vunpack.c.l.b16 %v2412
      %v2445 = vunpack.c.l.b16 %v2413
      %v2446 = vunpack.c.l.b16 %v2414
      %v2447 = vpack.c.b16 %v2432, %v2431
      %v2448 = vpack.c.b16 %v2434, %v2433
      %v2449 = vpack.c.b16 %v2436, %v2435
      %v2450 = vpack.c.b16 %v2438, %v2437
      %v2451 = vpack.c.b16 %v2440, %v2439
      %v2452 = vpack.c.b16 %v2442, %v2441
      %v2453 = vpack.c.b16 %v2444, %v2443
      %v2454 = vpack.c.b16 %v2446, %v2445
      %2463 = vmatpush.bf16.msra.mxu0 %v2454
      %2464 = vmatpush.bf16.msra.mxu0 %v2453
      %2465 = vmatpush.bf16.msra.mxu0 %v2452
      %2466 = vmatpush.bf16.msra.mxu0 %v2451
      %2467 = vmatpush.bf16.msra.mxu0 %v2450
      %2468 = vmatpush.bf16.msra.mxu0 %v2449
      %2469 = vmatpush.bf16.msra.mxu0 %v2448
      %2470 = vmatpush.bf16.msra.mxu0 %v2447
      %2471 = vmatmul.bf16.gmra.mxu0 %v2372
      %v2472 = vpop.f32.mrf.mxu0
      %v2473 = vadd.f32 0.0, %v2472
      %v2474 = vpop.f32.mrf.mxu0
      %v2475 = vadd.f32 0.0, %v2474
      %2476 = vmatmul.bf16.gmra.mxu0 %v2373
      %v2477 = vpop.f32.mrf.mxu0
      %v2478 = vadd.f32 0.0, %v2477
      %v2479 = vpop.f32.mrf.mxu0
      %v2480 = vadd.f32 0.0, %v2479
      %2481 = vmatmul.bf16.gmra.mxu0 %v2374
      %v2482 = vpop.f32.mrf.mxu0
      %v2483 = vadd.f32 0.0, %v2482
      %v2484 = vpop.f32.mrf.mxu0
      %v2485 = vadd.f32 0.0, %v2484
      %2486 = vmatmul.bf16.gmra.mxu0 %v2375
      %v2487 = vpop.f32.mrf.mxu0
      %v2488 = vadd.f32 0.0, %v2487
      %v2489 = vpop.f32.mrf.mxu0
      %v2490 = vadd.f32 0.0, %v2489
      %2491 = vmatmul.bf16.gmra.mxu0 %v2376
      %v2492 = vpop.f32.mrf.mxu0
      %v2493 = vadd.f32 0.0, %v2492
      %v2494 = vpop.f32.mrf.mxu0
      %v2495 = vadd.f32 0.0, %v2494
      %2496 = vmatmul.bf16.gmra.mxu0 %v2377
      %v2497 = vpop.f32.mrf.mxu0
      %v2498 = vadd.f32 0.0, %v2497
      %v2499 = vpop.f32.mrf.mxu0
      %v2500 = vadd.f32 0.0, %v2499
      %2501 = vmatmul.bf16.gmra.mxu0 %v2378
      %v2502 = vpop.f32.mrf.mxu0
      %v2503 = vadd.f32 0.0, %v2502
      %v2504 = vpop.f32.mrf.mxu0
      %v2505 = vadd.f32 0.0, %v2504
      %2506 = vmatmul.bf16.gmra.mxu0 %v2379
      %v2507 = vpop.f32.mrf.mxu0
      %v2508 = vadd.f32 0.0, %v2507
      %v2509 = vpop.f32.mrf.mxu0
      %v2510 = vadd.f32 0.0, %v2509
      %2511 = vmatmul.bf16.gmra.mxu0 %v2380
      %v2512 = vpop.f32.mrf.mxu0
      %v2513 = vadd.f32 0.0, %v2512
      %v2514 = vpop.f32.mrf.mxu0
      %v2515 = vadd.f32 0.0, %v2514
      %2516 = vmatmul.bf16.gmra.mxu0 %v2381
      %v2517 = vpop.f32.mrf.mxu0
      %v2518 = vadd.f32 0.0, %v2517
      %v2519 = vpop.f32.mrf.mxu0
      %v2520 = vadd.f32 0.0, %v2519
      %2521 = vmatmul.bf16.gmra.mxu0 %v2382
      %v2522 = vpop.f32.mrf.mxu0
      %v2523 = vadd.f32 0.0, %v2522
      %v2524 = vpop.f32.mrf.mxu0
      %v2525 = vadd.f32 0.0, %v2524
      %2526 = vmatmul.bf16.gmra.mxu0 %v2383
      %v2527 = vpop.f32.mrf.mxu0
      %v2528 = vadd.f32 0.0, %v2527
      %v2529 = vpop.f32.mrf.mxu0
      %v2530 = vadd.f32 0.0, %v2529
      %2531 = vmatmul.bf16.gmra.mxu0 %v2384
      %v2532 = vpop.f32.mrf.mxu0
      %v2533 = vadd.f32 0.0, %v2532
      %v2534 = vpop.f32.mrf.mxu0
      %v2535 = vadd.f32 0.0, %v2534
      %2536 = vmatmul.bf16.gmra.mxu0 %v2385
      %v2537 = vpop.f32.mrf.mxu0
      %v2538 = vadd.f32 0.0, %v2537
      %v2539 = vpop.f32.mrf.mxu0
      %v2540 = vadd.f32 0.0, %v2539
      %2541 = vmatmul.bf16.gmra.mxu0 %v2386
      %v2542 = vpop.f32.mrf.mxu0
      %v2543 = vadd.f32 0.0, %v2542
      %v2544 = vpop.f32.mrf.mxu0
      %v2545 = vadd.f32 0.0, %v2544
      %2546 = vmatmul.bf16.gmra.mxu0 %v2387
      %v2547 = vpop.f32.mrf.mxu0
      %v2548 = vadd.f32 0.0, %v2547
      %v2549 = vpop.f32.mrf.mxu0
      %v2550 = vadd.f32 0.0, %v2549
      %2551 = vmatmul.bf16.gmra.mxu0 %v2388
      %v2552 = vpop.f32.mrf.mxu0
      %v2553 = vadd.f32 0.0, %v2552
      %v2554 = vpop.f32.mrf.mxu0
      %v2555 = vadd.f32 0.0, %v2554
      %2556 = vmatmul.bf16.gmra.mxu0 %v2389
      %v2557 = vpop.f32.mrf.mxu0
      %v2558 = vadd.f32 0.0, %v2557
      %v2559 = vpop.f32.mrf.mxu0
      %v2560 = vadd.f32 0.0, %v2559
      %2561 = vmatmul.bf16.gmra.mxu0 %v2390
      %v2562 = vpop.f32.mrf.mxu0
      %v2563 = vadd.f32 0.0, %v2562
      %v2564 = vpop.f32.mrf.mxu0
      %v2565 = vadd.f32 0.0, %v2564
      %2566 = vmatmul.bf16.gmra.mxu0 %v2391
      %v2567 = vpop.f32.mrf.mxu0
      %v2568 = vadd.f32 0.0, %v2567
      %v2569 = vpop.f32.mrf.mxu0
      %v2570 = vadd.f32 0.0, %v2569
      %2571 = vmatmul.bf16.gmra.mxu0 %v2392
      %v2572 = vpop.f32.mrf.mxu0
      %v2573 = vadd.f32 0.0, %v2572
      %v2574 = vpop.f32.mrf.mxu0
      %v2575 = vadd.f32 0.0, %v2574
      %2576 = vmatmul.bf16.gmra.mxu0 %v2393
      %v2577 = vpop.f32.mrf.mxu0
      %v2578 = vadd.f32 0.0, %v2577
      %v2579 = vpop.f32.mrf.mxu0
      %v2580 = vadd.f32 0.0, %v2579
      %2581 = vmatmul.bf16.gmra.mxu0 %v2394
      %v2582 = vpop.f32.mrf.mxu0
      %v2583 = vadd.f32 0.0, %v2582
      %v2584 = vpop.f32.mrf.mxu0
      %v2585 = vadd.f32 0.0, %v2584
      %2586 = vmatmul.bf16.gmra.mxu0 %v2395
      %v2587 = vpop.f32.mrf.mxu0
      %v2588 = vadd.f32 0.0, %v2587
      %v2589 = vpop.f32.mrf.mxu0
      %v2590 = vadd.f32 0.0, %v2589
      %2591 = vmatmul.bf16.gmra.mxu0 %v2396
      %v2592 = vpop.f32.mrf.mxu0
      %v2593 = vadd.f32 0.0, %v2592
      %v2594 = vpop.f32.mrf.mxu0
      %v2595 = vadd.f32 0.0, %v2594
      %2596 = vmatmul.bf16.gmra.mxu0 %v2397
      %v2597 = vpop.f32.mrf.mxu0
      %v2598 = vadd.f32 0.0, %v2597
      %v2599 = vpop.f32.mrf.mxu0
      %2600 = vdwg.mxu0
      %v2601 = vadd.f32 %v2321, %v2473
      %v2602 = vadd.f32 %v2322, %v2475
      %v2603 = vadd.f32 %v2323, %v2478
      %v2604 = vadd.f32 %v2324, %v2480
      %v2605 = vadd.f32 %v2325, %v2483
      %v2606 = vadd.f32 %v2326, %v2485
      %v2607 = vadd.f32 %v2327, %v2488
      %v2608 = vadd.f32 %v2328, %v2490
      %v2609 = vadd.f32 %v2329, %v2493
      %v2610 = vadd.f32 %v2330, %v2495
      %v2611 = vadd.f32 %v2331, %v2498
      %v2612 = vadd.f32 %v2332, %v2500
      %v2613 = vadd.f32 %v2333, %v2503
      %v2614 = vadd.f32 %v2334, %v2505
      %v2615 = vadd.f32 %v2335, %v2508
      %v2616 = vadd.f32 %v2336, %v2510
      %v2617 = vadd.f32 %v2337, %v2513
      %v2618 = vadd.f32 %v2338, %v2515
      %v2619 = vadd.f32 %v2339, %v2518
      %v2620 = vadd.f32 %v2340, %v2520
      %v2621 = vadd.f32 %v2341, %v2523
      %v2622 = vadd.f32 %v2342, %v2525
      %v2623 = vadd.f32 %v2343, %v2528
      %v2624 = vadd.f32 %v2344, %v2530
      %v2625 = vadd.f32 %v2345, %v2533
      %v2626 = vadd.f32 %v2346, %v2535
      %v2627 = vadd.f32 %v2347, %v2538
      %v2628 = vadd.f32 %v2348, %v2540
      %v2629 = vadd.f32 %v2349, %v2543
      %v2630 = vadd.f32 %v2350, %v2545
      %v2631 = vadd.f32 %v2351, %v2548
      %v2632 = vadd.f32 %v2352, %v2550
      %v2633 = vadd.f32 %v2353, %v2553
      %v2634 = vadd.f32 %v2354, %v2555
      %v2635 = vadd.f32 %v2355, %v2558
      %v2636 = vadd.f32 %v2356, %v2560
      %v2637 = vadd.f32 %v2357, %v2563
      %v2638 = vadd.f32 %v2358, %v2565
      %v2639 = vadd.f32 %v2359, %v2568
      %v2640 = vadd.f32 %v2360, %v2570
      %v2641 = vadd.f32 %v2361, %v2573
      %v2642 = vadd.f32 %v2362, %v2575
      %v2643 = vadd.f32 %v2363, %v2578
      %v2644 = vadd.f32 %v2364, %v2580
      %v2645 = vadd.f32 %v2365, %v2583
      %v2646 = vadd.f32 %v2366, %v2585
      %v2647 = vadd.f32 %v2367, %v2588
      %v2648 = vadd.f32 %v2368, %v2590
      %v2649 = vadd.f32 %v2369, %v2593
      %v2650 = vadd.f32 %v2370, %v2595
      %v2651 = vadd.f32 %v2371, %v2598
      %v2652 = vrot.slane %v365, 1
      %v2653 = vrot.slane %v366, 1
      %v2654 = vrot.slane %v367, 1
      %v2655 = vsel %vm986, %v2653, %v2654
      %v2656 = vsel %vm986, %v2652, %v2653
      %v2657 = vsel %vm986, %v982, %v2652
      %v2658 = vpack.c.bf16 %v1035, %v1036
      %v2659 = vpack.c.bf16 %v1033, %v1034
      %v2660 = vpack.c.bf16 %v1031, %v1032
      %v2661 = vpack.c.bf16 %v1029, %v1030
      %v2662 = vpack.c.bf16 %v1027, %v1028
      %v2663 = vpack.c.bf16 %v1025, %v1026
      %v2664 = vpack.c.bf16 %v1023, %v1024
      %v2665 = vpack.c.bf16 %v1021, %v1022
      %v2666 = vpack.c.bf16 %v1019, %v1020
      %v2667 = vpack.c.bf16 %v1017, %v1018
      %v2668 = vpack.c.bf16 %v1015, %v1016
      %v2669 = vpack.c.bf16 %v1013, %v1014
      %v2670 = vpack.c.bf16 %v1011, %v1012
      %v2671 = vpack.c.bf16 %v1009, %v1010
      %v2672 = vpack.c.bf16 %v1007, %v1008
      %v2673 = vpack.c.bf16 %v1005, %v1006
      %v2674 = vpack.c.bf16 %v1003, %v1004
      %v2675 = vpack.c.bf16 %v1001, %v1002
      %v2676 = vpack.c.bf16 %v999, %v1000
      %v2677 = vpack.c.bf16 %v997, %v998
      %v2678 = vpack.c.bf16 %v995, %v996
      %v2679 = vpack.c.bf16 %v993, %v994
      %v2680 = vpack.c.bf16 %v991, %v992
      %v2681 = vpack.c.bf16 %v989, %v990
      %v2682 = vpack.c.bf16 %v2656, %v2657
      %v2683 = vpack.c.bf16 %v2655, %v2655
      %s2684 = scalar_lea.vmem %s1, 448
      %v2685 = vld [vmem:[%s2684] sm:$0xf]
      %v2686 = vld [vmem:[%s2684 + $0x4] sm:$0xf]
      %v2687 = vld [vmem:[%s2684 + $0x8] sm:$0xf]
      %v2688 = vld [vmem:[%s2684 + $0xc] sm:$0xf]
      %v2689 = vld [vmem:[%s2684 + $0x10] sm:$0xf]
      %v2690 = vld [vmem:[%s2684 + $0x14] sm:$0xf]
      %v2691 = vld [vmem:[%s2684 + $0x18] sm:$0xf]
      %v2692 = vld [vmem:[%s2684 + $0x1c] sm:$0xf]
      %v2693 = vld [vmem:[%s2684 + $0x20] sm:$0xf]
      %v2694 = vld [vmem:[%s2684 + $0x24] sm:$0xf]
      %v2695 = vld [vmem:[%s2684 + $0x28] sm:$0xf]
      %v2696 = vld [vmem:[%s2684 + $0x2c] sm:$0xf]
      %v2697 = vld [vmem:[%s2684 + $0x30] sm:$0xf]
      %v2698 = vld [vmem:[%s2684 + $0x34] sm:$0xf]
      %v2699 = vld [vmem:[%s2684 + $0x38] sm:$0xf]
      %v2700 = vld [vmem:[%s2684 + $0x3c] sm:$0xf]
      %v2717 = vunpack.c.l.b16 %v2685
      %v2718 = vunpack.c.l.b16 %v2686
      %v2719 = vunpack.c.l.b16 %v2687
      %v2720 = vunpack.c.l.b16 %v2688
      %v2721 = vunpack.c.l.b16 %v2689
      %v2722 = vunpack.c.l.b16 %v2690
      %v2723 = vunpack.c.l.b16 %v2691
      %v2724 = vunpack.c.l.b16 %v2692
      %v2725 = vunpack.c.l.b16 %v2693
      %v2726 = vunpack.c.l.b16 %v2694
      %v2727 = vunpack.c.l.b16 %v2695
      %v2728 = vunpack.c.l.b16 %v2696
      %v2729 = vunpack.c.l.b16 %v2697
      %v2730 = vunpack.c.l.b16 %v2698
      %v2731 = vunpack.c.l.b16 %v2699
      %v2732 = vunpack.c.l.b16 %v2700
      %v2733 = vpack.c.b16 %v2718, %v2717
      %v2734 = vpack.c.b16 %v2720, %v2719
      %v2735 = vpack.c.b16 %v2722, %v2721
      %v2736 = vpack.c.b16 %v2724, %v2723
      %v2737 = vpack.c.b16 %v2726, %v2725
      %v2738 = vpack.c.b16 %v2728, %v2727
      %v2739 = vpack.c.b16 %v2730, %v2729
      %v2740 = vpack.c.b16 %v2732, %v2731
      %2749 = vmatpush.bf16.msra.mxu0 %v2740
      %2750 = vmatpush.bf16.msra.mxu0 %v2739
      %2751 = vmatpush.bf16.msra.mxu0 %v2738
      %2752 = vmatpush.bf16.msra.mxu0 %v2737
      %2753 = vmatpush.bf16.msra.mxu0 %v2736
      %2754 = vmatpush.bf16.msra.mxu0 %v2735
      %2755 = vmatpush.bf16.msra.mxu0 %v2734
      %2756 = vmatpush.bf16.msra.mxu0 %v2733
      %2757 = vmatmul.bf16.gmra.mxu0 %v2658
      %v2758 = vpop.f32.mrf.mxu0
      %v2759 = vadd.f32 0.0, %v2758
      %v2760 = vpop.f32.mrf.mxu0
      %v2761 = vadd.f32 0.0, %v2760
      %2762 = vmatmul.bf16.gmra.mxu0 %v2659
      %v2763 = vpop.f32.mrf.mxu0
      %v2764 = vadd.f32 0.0, %v2763
      %v2765 = vpop.f32.mrf.mxu0
      %v2766 = vadd.f32 0.0, %v2765
      %2767 = vmatmul.bf16.gmra.mxu0 %v2660
      %v2768 = vpop.f32.mrf.mxu0
      %v2769 = vadd.f32 0.0, %v2768
      %v2770 = vpop.f32.mrf.mxu0
      %v2771 = vadd.f32 0.0, %v2770
      %2772 = vmatmul.bf16.gmra.mxu0 %v2661
      %v2773 = vpop.f32.mrf.mxu0
      %v2774 = vadd.f32 0.0, %v2773
      %v2775 = vpop.f32.mrf.mxu0
      %v2776 = vadd.f32 0.0, %v2775
      %2777 = vmatmul.bf16.gmra.mxu0 %v2662
      %v2778 = vpop.f32.mrf.mxu0
      %v2779 = vadd.f32 0.0, %v2778
      %v2780 = vpop.f32.mrf.mxu0
      %v2781 = vadd.f32 0.0, %v2780
      %2782 = vmatmul.bf16.gmra.mxu0 %v2663
      %v2783 = vpop.f32.mrf.mxu0
      %v2784 = vadd.f32 0.0, %v2783
      %v2785 = vpop.f32.mrf.mxu0
      %v2786 = vadd.f32 0.0, %v2785
      %2787 = vmatmul.bf16.gmra.mxu0 %v2664
      %v2788 = vpop.f32.mrf.mxu0
      %v2789 = vadd.f32 0.0, %v2788
      %v2790 = vpop.f32.mrf.mxu0
      %v2791 = vadd.f32 0.0, %v2790
      %2792 = vmatmul.bf16.gmra.mxu0 %v2665
      %v2793 = vpop.f32.mrf.mxu0
      %v2794 = vadd.f32 0.0, %v2793
      %v2795 = vpop.f32.mrf.mxu0
      %v2796 = vadd.f32 0.0, %v2795
      %2797 = vmatmul.bf16.gmra.mxu0 %v2666
      %v2798 = vpop.f32.mrf.mxu0
      %v2799 = vadd.f32 0.0, %v2798
      %v2800 = vpop.f32.mrf.mxu0
      %v2801 = vadd.f32 0.0, %v2800
      %2802 = vmatmul.bf16.gmra.mxu0 %v2667
      %v2803 = vpop.f32.mrf.mxu0
      %v2804 = vadd.f32 0.0, %v2803
      %v2805 = vpop.f32.mrf.mxu0
      %v2806 = vadd.f32 0.0, %v2805
      %2807 = vmatmul.bf16.gmra.mxu0 %v2668
      %v2808 = vpop.f32.mrf.mxu0
      %v2809 = vadd.f32 0.0, %v2808
      %v2810 = vpop.f32.mrf.mxu0
      %v2811 = vadd.f32 0.0, %v2810
      %2812 = vmatmul.bf16.gmra.mxu0 %v2669
      %v2813 = vpop.f32.mrf.mxu0
      %v2814 = vadd.f32 0.0, %v2813
      %v2815 = vpop.f32.mrf.mxu0
      %v2816 = vadd.f32 0.0, %v2815
      %2817 = vmatmul.bf16.gmra.mxu0 %v2670
      %v2818 = vpop.f32.mrf.mxu0
      %v2819 = vadd.f32 0.0, %v2818
      %v2820 = vpop.f32.mrf.mxu0
      %v2821 = vadd.f32 0.0, %v2820
      %2822 = vmatmul.bf16.gmra.mxu0 %v2671
      %v2823 = vpop.f32.mrf.mxu0
      %v2824 = vadd.f32 0.0, %v2823
      %v2825 = vpop.f32.mrf.mxu0
      %v2826 = vadd.f32 0.0, %v2825
      %2827 = vmatmul.bf16.gmra.mxu0 %v2672
      %v2828 = vpop.f32.mrf.mxu0
      %v2829 = vadd.f32 0.0, %v2828
      %v2830 = vpop.f32.mrf.mxu0
      %v2831 = vadd.f32 0.0, %v2830
      %2832 = vmatmul.bf16.gmra.mxu0 %v2673
      %v2833 = vpop.f32.mrf.mxu0
      %v2834 = vadd.f32 0.0, %v2833
      %v2835 = vpop.f32.mrf.mxu0
      %v2836 = vadd.f32 0.0, %v2835
      %2837 = vmatmul.bf16.gmra.mxu0 %v2674
      %v2838 = vpop.f32.mrf.mxu0
      %v2839 = vadd.f32 0.0, %v2838
      %v2840 = vpop.f32.mrf.mxu0
      %v2841 = vadd.f32 0.0, %v2840
      %2842 = vmatmul.bf16.gmra.mxu0 %v2675
      %v2843 = vpop.f32.mrf.mxu0
      %v2844 = vadd.f32 0.0, %v2843
      %v2845 = vpop.f32.mrf.mxu0
      %v2846 = vadd.f32 0.0, %v2845
      %2847 = vmatmul.bf16.gmra.mxu0 %v2676
      %v2848 = vpop.f32.mrf.mxu0
      %v2849 = vadd.f32 0.0, %v2848
      %v2850 = vpop.f32.mrf.mxu0
      %v2851 = vadd.f32 0.0, %v2850
      %2852 = vmatmul.bf16.gmra.mxu0 %v2677
      %v2853 = vpop.f32.mrf.mxu0
      %v2854 = vadd.f32 0.0, %v2853
      %v2855 = vpop.f32.mrf.mxu0
      %v2856 = vadd.f32 0.0, %v2855
      %2857 = vmatmul.bf16.gmra.mxu0 %v2678
      %v2858 = vpop.f32.mrf.mxu0
      %v2859 = vadd.f32 0.0, %v2858
      %v2860 = vpop.f32.mrf.mxu0
      %v2861 = vadd.f32 0.0, %v2860
      %2862 = vmatmul.bf16.gmra.mxu0 %v2679
      %v2863 = vpop.f32.mrf.mxu0
      %v2864 = vadd.f32 0.0, %v2863
      %v2865 = vpop.f32.mrf.mxu0
      %v2866 = vadd.f32 0.0, %v2865
      %2867 = vmatmul.bf16.gmra.mxu0 %v2680
      %v2868 = vpop.f32.mrf.mxu0
      %v2869 = vadd.f32 0.0, %v2868
      %v2870 = vpop.f32.mrf.mxu0
      %v2871 = vadd.f32 0.0, %v2870
      %2872 = vmatmul.bf16.gmra.mxu0 %v2681
      %v2873 = vpop.f32.mrf.mxu0
      %v2874 = vadd.f32 0.0, %v2873
      %v2875 = vpop.f32.mrf.mxu0
      %v2876 = vadd.f32 0.0, %v2875
      %2877 = vmatmul.bf16.gmra.mxu0 %v2682
      %v2878 = vpop.f32.mrf.mxu0
      %v2879 = vadd.f32 0.0, %v2878
      %v2880 = vpop.f32.mrf.mxu0
      %v2881 = vadd.f32 0.0, %v2880
      %2882 = vmatmul.bf16.gmra.mxu0 %v2683
      %v2883 = vpop.f32.mrf.mxu0
      %v2884 = vadd.f32 0.0, %v2883
      %v2885 = vpop.f32.mrf.mxu0
      %2886 = vdwg.mxu0
      %v2887 = vadd.f32 %v2601, %v2759
      %v2888 = vadd.f32 %v2602, %v2761
      %v2889 = vadd.f32 %v2603, %v2764
      %v2890 = vadd.f32 %v2604, %v2766
      %v2891 = vadd.f32 %v2605, %v2769
      %v2892 = vadd.f32 %v2606, %v2771
      %v2893 = vadd.f32 %v2607, %v2774
      %v2894 = vadd.f32 %v2608, %v2776
      %v2895 = vadd.f32 %v2609, %v2779
      %v2896 = vadd.f32 %v2610, %v2781
      %v2897 = vadd.f32 %v2611, %v2784
      %v2898 = vadd.f32 %v2612, %v2786
      %v2899 = vadd.f32 %v2613, %v2789
      %v2900 = vadd.f32 %v2614, %v2791
      %v2901 = vadd.f32 %v2615, %v2794
      %v2902 = vadd.f32 %v2616, %v2796
      %v2903 = vadd.f32 %v2617, %v2799
      %v2904 = vadd.f32 %v2618, %v2801
      %v2905 = vadd.f32 %v2619, %v2804
      %v2906 = vadd.f32 %v2620, %v2806
      %v2907 = vadd.f32 %v2621, %v2809
      %v2908 = vadd.f32 %v2622, %v2811
      %v2909 = vadd.f32 %v2623, %v2814
      %v2910 = vadd.f32 %v2624, %v2816
      %v2911 = vadd.f32 %v2625, %v2819
      %v2912 = vadd.f32 %v2626, %v2821
      %v2913 = vadd.f32 %v2627, %v2824
      %v2914 = vadd.f32 %v2628, %v2826
      %v2915 = vadd.f32 %v2629, %v2829
      %v2916 = vadd.f32 %v2630, %v2831
      %v2917 = vadd.f32 %v2631, %v2834
      %v2918 = vadd.f32 %v2632, %v2836
      %v2919 = vadd.f32 %v2633, %v2839
      %v2920 = vadd.f32 %v2634, %v2841
      %v2921 = vadd.f32 %v2635, %v2844
      %v2922 = vadd.f32 %v2636, %v2846
      %v2923 = vadd.f32 %v2637, %v2849
      %v2924 = vadd.f32 %v2638, %v2851
      %v2925 = vadd.f32 %v2639, %v2854
      %v2926 = vadd.f32 %v2640, %v2856
      %v2927 = vadd.f32 %v2641, %v2859
      %v2928 = vadd.f32 %v2642, %v2861
      %v2929 = vadd.f32 %v2643, %v2864
      %v2930 = vadd.f32 %v2644, %v2866
      %v2931 = vadd.f32 %v2645, %v2869
      %v2932 = vadd.f32 %v2646, %v2871
      %v2933 = vadd.f32 %v2647, %v2874
      %v2934 = vadd.f32 %v2648, %v2876
      %v2935 = vadd.f32 %v2649, %v2879
      %v2936 = vadd.f32 %v2650, %v2881
      %v2937 = vadd.f32 %v2651, %v2884
      %v2938 = vrot.slane %v365, 2
      %v2939 = vrot.slane %v366, 2
      %v2940 = vrot.slane %v367, 2
      %v2941 = vsel %vm1370, %v2939, %v2940
      %v2942 = vsel %vm1370, %v2938, %v2939
      %v2943 = vsel %vm1370, %v1366, %v2938
      %v2944 = vpack.c.bf16 %v1419, %v1420
      %v2945 = vpack.c.bf16 %v1417, %v1418
      %v2946 = vpack.c.bf16 %v1415, %v1416
      %v2947 = vpack.c.bf16 %v1413, %v1414
      %v2948 = vpack.c.bf16 %v1411, %v1412
      %v2949 = vpack.c.bf16 %v1409, %v1410
      %v2950 = vpack.c.bf16 %v1407, %v1408
      %v2951 = vpack.c.bf16 %v1405, %v1406
      %v2952 = vpack.c.bf16 %v1403, %v1404
      %v2953 = vpack.c.bf16 %v1401, %v1402
      %v2954 = vpack.c.bf16 %v1399, %v1400
      %v2955 = vpack.c.bf16 %v1397, %v1398
      %v2956 = vpack.c.bf16 %v1395, %v1396
      %v2957 = vpack.c.bf16 %v1393, %v1394
      %v2958 = vpack.c.bf16 %v1391, %v1392
      %v2959 = vpack.c.bf16 %v1389, %v1390
      %v2960 = vpack.c.bf16 %v1387, %v1388
      %v2961 = vpack.c.bf16 %v1385, %v1386
      %v2962 = vpack.c.bf16 %v1383, %v1384
      %v2963 = vpack.c.bf16 %v1381, %v1382
      %v2964 = vpack.c.bf16 %v1379, %v1380
      %v2965 = vpack.c.bf16 %v1377, %v1378
      %v2966 = vpack.c.bf16 %v1375, %v1376
      %v2967 = vpack.c.bf16 %v1373, %v1374
      %v2968 = vpack.c.bf16 %v2942, %v2943
      %v2969 = vpack.c.bf16 %v2941, %v2941
      %s2970 = scalar_lea.vmem %s1, 512
      %v2971 = vld [vmem:[%s2970] sm:$0xf]
      %v2972 = vld [vmem:[%s2970 + $0x4] sm:$0xf]
      %v2973 = vld [vmem:[%s2970 + $0x8] sm:$0xf]
      %v2974 = vld [vmem:[%s2970 + $0xc] sm:$0xf]
      %v2975 = vld [vmem:[%s2970 + $0x10] sm:$0xf]
      %v2976 = vld [vmem:[%s2970 + $0x14] sm:$0xf]
      %v2977 = vld [vmem:[%s2970 + $0x18] sm:$0xf]
      %v2978 = vld [vmem:[%s2970 + $0x1c] sm:$0xf]
      %v2979 = vld [vmem:[%s2970 + $0x20] sm:$0xf]
      %v2980 = vld [vmem:[%s2970 + $0x24] sm:$0xf]
      %v2981 = vld [vmem:[%s2970 + $0x28] sm:$0xf]
      %v2982 = vld [vmem:[%s2970 + $0x2c] sm:$0xf]
      %v2983 = vld [vmem:[%s2970 + $0x30] sm:$0xf]
      %v2984 = vld [vmem:[%s2970 + $0x34] sm:$0xf]
      %v2985 = vld [vmem:[%s2970 + $0x38] sm:$0xf]
      %v2986 = vld [vmem:[%s2970 + $0x3c] sm:$0xf]
      %v3003 = vunpack.c.l.b16 %v2971
      %v3004 = vunpack.c.l.b16 %v2972
      %v3005 = vunpack.c.l.b16 %v2973
      %v3006 = vunpack.c.l.b16 %v2974
      %v3007 = vunpack.c.l.b16 %v2975
      %v3008 = vunpack.c.l.b16 %v2976
      %v3009 = vunpack.c.l.b16 %v2977
      %v3010 = vunpack.c.l.b16 %v2978
      %v3011 = vunpack.c.l.b16 %v2979
      %v3012 = vunpack.c.l.b16 %v2980
      %v3013 = vunpack.c.l.b16 %v2981
      %v3014 = vunpack.c.l.b16 %v2982
      %v3015 = vunpack.c.l.b16 %v2983
      %v3016 = vunpack.c.l.b16 %v2984
      %v3017 = vunpack.c.l.b16 %v2985
      %v3018 = vunpack.c.l.b16 %v2986
      %v3019 = vpack.c.b16 %v3004, %v3003
      %v3020 = vpack.c.b16 %v3006, %v3005
      %v3021 = vpack.c.b16 %v3008, %v3007
      %v3022 = vpack.c.b16 %v3010, %v3009
      %v3023 = vpack.c.b16 %v3012, %v3011
      %v3024 = vpack.c.b16 %v3014, %v3013
      %v3025 = vpack.c.b16 %v3016, %v3015
      %v3026 = vpack.c.b16 %v3018, %v3017
      %3035 = vmatpush.bf16.msra.mxu0 %v3026
      %3036 = vmatpush.bf16.msra.mxu0 %v3025
      %3037 = vmatpush.bf16.msra.mxu0 %v3024
      %3038 = vmatpush.bf16.msra.mxu0 %v3023
      %3039 = vmatpush.bf16.msra.mxu0 %v3022
      %3040 = vmatpush.bf16.msra.mxu0 %v3021
      %3041 = vmatpush.bf16.msra.mxu0 %v3020
      %3042 = vmatpush.bf16.msra.mxu0 %v3019
      %3043 = vmatmul.bf16.gmra.mxu0 %v2944
      %v3044 = vpop.f32.mrf.mxu0
      %v3045 = vadd.f32 0.0, %v3044
      %v3046 = vpop.f32.mrf.mxu0
      %v3047 = vadd.f32 0.0, %v3046
      %3048 = vmatmul.bf16.gmra.mxu0 %v2945
      %v3049 = vpop.f32.mrf.mxu0
      %v3050 = vadd.f32 0.0, %v3049
      %v3051 = vpop.f32.mrf.mxu0
      %v3052 = vadd.f32 0.0, %v3051
      %3053 = vmatmul.bf16.gmra.mxu0 %v2946
      %v3054 = vpop.f32.mrf.mxu0
      %v3055 = vadd.f32 0.0, %v3054
      %v3056 = vpop.f32.mrf.mxu0
      %v3057 = vadd.f32 0.0, %v3056
      %3058 = vmatmul.bf16.gmra.mxu0 %v2947
      %v3059 = vpop.f32.mrf.mxu0
      %v3060 = vadd.f32 0.0, %v3059
      %v3061 = vpop.f32.mrf.mxu0
      %v3062 = vadd.f32 0.0, %v3061
      %3063 = vmatmul.bf16.gmra.mxu0 %v2948
      %v3064 = vpop.f32.mrf.mxu0
      %v3065 = vadd.f32 0.0, %v3064
      %v3066 = vpop.f32.mrf.mxu0
      %v3067 = vadd.f32 0.0, %v3066
      %3068 = vmatmul.bf16.gmra.mxu0 %v2949
      %v3069 = vpop.f32.mrf.mxu0
      %v3070 = vadd.f32 0.0, %v3069
      %v3071 = vpop.f32.mrf.mxu0
      %v3072 = vadd.f32 0.0, %v3071
      %3073 = vmatmul.bf16.gmra.mxu0 %v2950
      %v3074 = vpop.f32.mrf.mxu0
      %v3075 = vadd.f32 0.0, %v3074
      %v3076 = vpop.f32.mrf.mxu0
      %v3077 = vadd.f32 0.0, %v3076
      %3078 = vmatmul.bf16.gmra.mxu0 %v2951
      %v3079 = vpop.f32.mrf.mxu0
      %v3080 = vadd.f32 0.0, %v3079
      %v3081 = vpop.f32.mrf.mxu0
      %v3082 = vadd.f32 0.0, %v3081
      %3083 = vmatmul.bf16.gmra.mxu0 %v2952
      %v3084 = vpop.f32.mrf.mxu0
      %v3085 = vadd.f32 0.0, %v3084
      %v3086 = vpop.f32.mrf.mxu0
      %v3087 = vadd.f32 0.0, %v3086
      %3088 = vmatmul.bf16.gmra.mxu0 %v2953
      %v3089 = vpop.f32.mrf.mxu0
      %v3090 = vadd.f32 0.0, %v3089
      %v3091 = vpop.f32.mrf.mxu0
      %v3092 = vadd.f32 0.0, %v3091
      %3093 = vmatmul.bf16.gmra.mxu0 %v2954
      %v3094 = vpop.f32.mrf.mxu0
      %v3095 = vadd.f32 0.0, %v3094
      %v3096 = vpop.f32.mrf.mxu0
      %v3097 = vadd.f32 0.0, %v3096
      %3098 = vmatmul.bf16.gmra.mxu0 %v2955
      %v3099 = vpop.f32.mrf.mxu0
      %v3100 = vadd.f32 0.0, %v3099
      %v3101 = vpop.f32.mrf.mxu0
      %v3102 = vadd.f32 0.0, %v3101
      %3103 = vmatmul.bf16.gmra.mxu0 %v2956
      %v3104 = vpop.f32.mrf.mxu0
      %v3105 = vadd.f32 0.0, %v3104
      %v3106 = vpop.f32.mrf.mxu0
      %v3107 = vadd.f32 0.0, %v3106
      %3108 = vmatmul.bf16.gmra.mxu0 %v2957
      %v3109 = vpop.f32.mrf.mxu0
      %v3110 = vadd.f32 0.0, %v3109
      %v3111 = vpop.f32.mrf.mxu0
      %v3112 = vadd.f32 0.0, %v3111
      %3113 = vmatmul.bf16.gmra.mxu0 %v2958
      %v3114 = vpop.f32.mrf.mxu0
      %v3115 = vadd.f32 0.0, %v3114
      %v3116 = vpop.f32.mrf.mxu0
      %v3117 = vadd.f32 0.0, %v3116
      %3118 = vmatmul.bf16.gmra.mxu0 %v2959
      %v3119 = vpop.f32.mrf.mxu0
      %v3120 = vadd.f32 0.0, %v3119
      %v3121 = vpop.f32.mrf.mxu0
      %v3122 = vadd.f32 0.0, %v3121
      %3123 = vmatmul.bf16.gmra.mxu0 %v2960
      %v3124 = vpop.f32.mrf.mxu0
      %v3125 = vadd.f32 0.0, %v3124
      %v3126 = vpop.f32.mrf.mxu0
      %v3127 = vadd.f32 0.0, %v3126
      %3128 = vmatmul.bf16.gmra.mxu0 %v2961
      %v3129 = vpop.f32.mrf.mxu0
      %v3130 = vadd.f32 0.0, %v3129
      %v3131 = vpop.f32.mrf.mxu0
      %v3132 = vadd.f32 0.0, %v3131
      %3133 = vmatmul.bf16.gmra.mxu0 %v2962
      %v3134 = vpop.f32.mrf.mxu0
      %v3135 = vadd.f32 0.0, %v3134
      %v3136 = vpop.f32.mrf.mxu0
      %v3137 = vadd.f32 0.0, %v3136
      %3138 = vmatmul.bf16.gmra.mxu0 %v2963
      %v3139 = vpop.f32.mrf.mxu0
      %v3140 = vadd.f32 0.0, %v3139
      %v3141 = vpop.f32.mrf.mxu0
      %v3142 = vadd.f32 0.0, %v3141
      %3143 = vmatmul.bf16.gmra.mxu0 %v2964
      %v3144 = vpop.f32.mrf.mxu0
      %v3145 = vadd.f32 0.0, %v3144
      %v3146 = vpop.f32.mrf.mxu0
      %v3147 = vadd.f32 0.0, %v3146
      %3148 = vmatmul.bf16.gmra.mxu0 %v2965
      %v3149 = vpop.f32.mrf.mxu0
      %v3150 = vadd.f32 0.0, %v3149
      %v3151 = vpop.f32.mrf.mxu0
      %v3152 = vadd.f32 0.0, %v3151
      %3153 = vmatmul.bf16.gmra.mxu0 %v2966
      %v3154 = vpop.f32.mrf.mxu0
      %v3155 = vadd.f32 0.0, %v3154
      %v3156 = vpop.f32.mrf.mxu0
      %v3157 = vadd.f32 0.0, %v3156
      %3158 = vmatmul.bf16.gmra.mxu0 %v2967
      %v3159 = vpop.f32.mrf.mxu0
      %v3160 = vadd.f32 0.0, %v3159
      %v3161 = vpop.f32.mrf.mxu0
      %v3162 = vadd.f32 0.0, %v3161
      %3163 = vmatmul.bf16.gmra.mxu0 %v2968
      %v3164 = vpop.f32.mrf.mxu0
      %v3165 = vadd.f32 0.0, %v3164
      %v3166 = vpop.f32.mrf.mxu0
      %v3167 = vadd.f32 0.0, %v3166
      %3168 = vmatmul.bf16.gmra.mxu0 %v2969
      %v3169 = vpop.f32.mrf.mxu0
      %v3170 = vadd.f32 0.0, %v3169
      %v3171 = vpop.f32.mrf.mxu0
      %3172 = vdwg.mxu0
      %v3173 = vadd.f32 %v2887, %v3045
      %v3174 = vadd.f32 %v2888, %v3047
      %v3175 = vadd.f32 %v2889, %v3050
      %v3176 = vadd.f32 %v2890, %v3052
      %v3177 = vadd.f32 %v2891, %v3055
      %v3178 = vadd.f32 %v2892, %v3057
      %v3179 = vadd.f32 %v2893, %v3060
      %v3180 = vadd.f32 %v2894, %v3062
      %v3181 = vadd.f32 %v2895, %v3065
      %v3182 = vadd.f32 %v2896, %v3067
      %v3183 = vadd.f32 %v2897, %v3070
      %v3184 = vadd.f32 %v2898, %v3072
      %v3185 = vadd.f32 %v2899, %v3075
      %v3186 = vadd.f32 %v2900, %v3077
      %v3187 = vadd.f32 %v2901, %v3080
      %v3188 = vadd.f32 %v2902, %v3082
      %v3189 = vadd.f32 %v2903, %v3085
      %v3190 = vadd.f32 %v2904, %v3087
      %v3191 = vadd.f32 %v2905, %v3090
      %v3192 = vadd.f32 %v2906, %v3092
      %v3193 = vadd.f32 %v2907, %v3095
      %v3194 = vadd.f32 %v2908, %v3097
      %v3195 = vadd.f32 %v2909, %v3100
      %v3196 = vadd.f32 %v2910, %v3102
      %v3197 = vadd.f32 %v2911, %v3105
      %v3198 = vadd.f32 %v2912, %v3107
      %v3199 = vadd.f32 %v2913, %v3110
      %v3200 = vadd.f32 %v2914, %v3112
      %v3201 = vadd.f32 %v2915, %v3115
      %v3202 = vadd.f32 %v2916, %v3117
      %v3203 = vadd.f32 %v2917, %v3120
      %v3204 = vadd.f32 %v2918, %v3122
      %v3205 = vadd.f32 %v2919, %v3125
      %v3206 = vadd.f32 %v2920, %v3127
      %v3207 = vadd.f32 %v2921, %v3130
      %v3208 = vadd.f32 %v2922, %v3132
      %v3209 = vadd.f32 %v2923, %v3135
      %v3210 = vadd.f32 %v2924, %v3137
      %v3211 = vadd.f32 %v2925, %v3140
      %v3212 = vadd.f32 %v2926, %v3142
      %v3213 = vadd.f32 %v2927, %v3145
      %v3214 = vadd.f32 %v2928, %v3147
      %v3215 = vadd.f32 %v2929, %v3150
      %v3216 = vadd.f32 %v2930, %v3152
      %v3217 = vadd.f32 %v2931, %v3155
      %v3218 = vadd.f32 %v2932, %v3157
      %v3219 = vadd.f32 %v2933, %v3160
      %v3220 = vadd.f32 %v2934, %v3162
      %v3221 = vadd.f32 %v2935, %v3165
      %v3222 = vadd.f32 %v2936, %v3167
      %v3223 = vadd.f32 %v2937, %v3170
      %v3224 = vrot.slane %v365, 3
      %v3225 = vrot.slane %v366, 3
      %v3226 = vrot.slane %v367, 3
      %v3227 = vsel %vm1754, %v3225, %v3226
      %v3228 = vsel %vm1754, %v3224, %v3225
      %v3229 = vsel %vm1754, %v1750, %v3224
      %v3230 = vpack.c.bf16 %v1803, %v1804
      %v3231 = vpack.c.bf16 %v1801, %v1802
      %v3232 = vpack.c.bf16 %v1799, %v1800
      %v3233 = vpack.c.bf16 %v1797, %v1798
      %v3234 = vpack.c.bf16 %v1795, %v1796
      %v3235 = vpack.c.bf16 %v1793, %v1794
      %v3236 = vpack.c.bf16 %v1791, %v1792
      %v3237 = vpack.c.bf16 %v1789, %v1790
      %v3238 = vpack.c.bf16 %v1787, %v1788
      %v3239 = vpack.c.bf16 %v1785, %v1786
      %v3240 = vpack.c.bf16 %v1783, %v1784
      %v3241 = vpack.c.bf16 %v1781, %v1782
      %v3242 = vpack.c.bf16 %v1779, %v1780
      %v3243 = vpack.c.bf16 %v1777, %v1778
      %v3244 = vpack.c.bf16 %v1775, %v1776
      %v3245 = vpack.c.bf16 %v1773, %v1774
      %v3246 = vpack.c.bf16 %v1771, %v1772
      %v3247 = vpack.c.bf16 %v1769, %v1770
      %v3248 = vpack.c.bf16 %v1767, %v1768
      %v3249 = vpack.c.bf16 %v1765, %v1766
      %v3250 = vpack.c.bf16 %v1763, %v1764
      %v3251 = vpack.c.bf16 %v1761, %v1762
      %v3252 = vpack.c.bf16 %v1759, %v1760
      %v3253 = vpack.c.bf16 %v1757, %v1758
      %v3254 = vpack.c.bf16 %v3228, %v3229
      %v3255 = vpack.c.bf16 %v3227, %v3227
      %s3256 = scalar_lea.vmem %s1, 576
      %v3257 = vld [vmem:[%s3256] sm:$0xf]
      %v3258 = vld [vmem:[%s3256 + $0x4] sm:$0xf]
      %v3259 = vld [vmem:[%s3256 + $0x8] sm:$0xf]
      %v3260 = vld [vmem:[%s3256 + $0xc] sm:$0xf]
      %v3261 = vld [vmem:[%s3256 + $0x10] sm:$0xf]
      %v3262 = vld [vmem:[%s3256 + $0x14] sm:$0xf]
      %v3263 = vld [vmem:[%s3256 + $0x18] sm:$0xf]
      %v3264 = vld [vmem:[%s3256 + $0x1c] sm:$0xf]
      %v3265 = vld [vmem:[%s3256 + $0x20] sm:$0xf]
      %v3266 = vld [vmem:[%s3256 + $0x24] sm:$0xf]
      %v3267 = vld [vmem:[%s3256 + $0x28] sm:$0xf]
      %v3268 = vld [vmem:[%s3256 + $0x2c] sm:$0xf]
      %v3269 = vld [vmem:[%s3256 + $0x30] sm:$0xf]
      %v3270 = vld [vmem:[%s3256 + $0x34] sm:$0xf]
      %v3271 = vld [vmem:[%s3256 + $0x38] sm:$0xf]
      %v3272 = vld [vmem:[%s3256 + $0x3c] sm:$0xf]
      %v3289 = vunpack.c.l.b16 %v3257
      %v3290 = vunpack.c.l.b16 %v3258
      %v3291 = vunpack.c.l.b16 %v3259
      %v3292 = vunpack.c.l.b16 %v3260
      %v3293 = vunpack.c.l.b16 %v3261
      %v3294 = vunpack.c.l.b16 %v3262
      %v3295 = vunpack.c.l.b16 %v3263
      %v3296 = vunpack.c.l.b16 %v3264
      %v3297 = vunpack.c.l.b16 %v3265
      %v3298 = vunpack.c.l.b16 %v3266
      %v3299 = vunpack.c.l.b16 %v3267
      %v3300 = vunpack.c.l.b16 %v3268
      %v3301 = vunpack.c.l.b16 %v3269
      %v3302 = vunpack.c.l.b16 %v3270
      %v3303 = vunpack.c.l.b16 %v3271
      %v3304 = vunpack.c.l.b16 %v3272
      %v3305 = vpack.c.b16 %v3290, %v3289
      %v3306 = vpack.c.b16 %v3292, %v3291
      %v3307 = vpack.c.b16 %v3294, %v3293
      %v3308 = vpack.c.b16 %v3296, %v3295
      %v3309 = vpack.c.b16 %v3298, %v3297
      %v3310 = vpack.c.b16 %v3300, %v3299
      %v3311 = vpack.c.b16 %v3302, %v3301
      %v3312 = vpack.c.b16 %v3304, %v3303
      %3321 = vmatpush.bf16.msra.mxu0 %v3312
      %3322 = vmatpush.bf16.msra.mxu0 %v3311
      %3323 = vmatpush.bf16.msra.mxu0 %v3310
      %3324 = vmatpush.bf16.msra.mxu0 %v3309
      %3325 = vmatpush.bf16.msra.mxu0 %v3308
      %3326 = vmatpush.bf16.msra.mxu0 %v3307
      %3327 = vmatpush.bf16.msra.mxu0 %v3306
      %3328 = vmatpush.bf16.msra.mxu0 %v3305
      %3329 = vmatmul.bf16.gmra.mxu0 %v3230
      %v3330 = vpop.f32.mrf.mxu0
      %v3331 = vadd.f32 0.0, %v3330
      %v3332 = vpop.f32.mrf.mxu0
      %v3333 = vadd.f32 0.0, %v3332
      %3334 = vmatmul.bf16.gmra.mxu0 %v3231
      %v3335 = vpop.f32.mrf.mxu0
      %v3336 = vadd.f32 0.0, %v3335
      %v3337 = vpop.f32.mrf.mxu0
      %v3338 = vadd.f32 0.0, %v3337
      %3339 = vmatmul.bf16.gmra.mxu0 %v3232
      %v3340 = vpop.f32.mrf.mxu0
      %v3341 = vadd.f32 0.0, %v3340
      %v3342 = vpop.f32.mrf.mxu0
      %v3343 = vadd.f32 0.0, %v3342
      %3344 = vmatmul.bf16.gmra.mxu0 %v3233
      %v3345 = vpop.f32.mrf.mxu0
      %v3346 = vadd.f32 0.0, %v3345
      %v3347 = vpop.f32.mrf.mxu0
      %v3348 = vadd.f32 0.0, %v3347
      %3349 = vmatmul.bf16.gmra.mxu0 %v3234
      %v3350 = vpop.f32.mrf.mxu0
      %v3351 = vadd.f32 0.0, %v3350
      %v3352 = vpop.f32.mrf.mxu0
      %v3353 = vadd.f32 0.0, %v3352
      %3354 = vmatmul.bf16.gmra.mxu0 %v3235
      %v3355 = vpop.f32.mrf.mxu0
      %v3356 = vadd.f32 0.0, %v3355
      %v3357 = vpop.f32.mrf.mxu0
      %v3358 = vadd.f32 0.0, %v3357
      %3359 = vmatmul.bf16.gmra.mxu0 %v3236
      %v3360 = vpop.f32.mrf.mxu0
      %v3361 = vadd.f32 0.0, %v3360
      %v3362 = vpop.f32.mrf.mxu0
      %v3363 = vadd.f32 0.0, %v3362
      %3364 = vmatmul.bf16.gmra.mxu0 %v3237
      %v3365 = vpop.f32.mrf.mxu0
      %v3366 = vadd.f32 0.0, %v3365
      %v3367 = vpop.f32.mrf.mxu0
      %v3368 = vadd.f32 0.0, %v3367
      %3369 = vmatmul.bf16.gmra.mxu0 %v3238
      %v3370 = vpop.f32.mrf.mxu0
      %v3371 = vadd.f32 0.0, %v3370
      %v3372 = vpop.f32.mrf.mxu0
      %v3373 = vadd.f32 0.0, %v3372
      %3374 = vmatmul.bf16.gmra.mxu0 %v3239
      %v3375 = vpop.f32.mrf.mxu0
      %v3376 = vadd.f32 0.0, %v3375
      %v3377 = vpop.f32.mrf.mxu0
      %v3378 = vadd.f32 0.0, %v3377
      %3379 = vmatmul.bf16.gmra.mxu0 %v3240
      %v3380 = vpop.f32.mrf.mxu0
      %v3381 = vadd.f32 0.0, %v3380
      %v3382 = vpop.f32.mrf.mxu0
      %v3383 = vadd.f32 0.0, %v3382
      %3384 = vmatmul.bf16.gmra.mxu0 %v3241
      %v3385 = vpop.f32.mrf.mxu0
      %v3386 = vadd.f32 0.0, %v3385
      %v3387 = vpop.f32.mrf.mxu0
      %v3388 = vadd.f32 0.0, %v3387
      %3389 = vmatmul.bf16.gmra.mxu0 %v3242
      %v3390 = vpop.f32.mrf.mxu0
      %v3391 = vadd.f32 0.0, %v3390
      %v3392 = vpop.f32.mrf.mxu0
      %v3393 = vadd.f32 0.0, %v3392
      %3394 = vmatmul.bf16.gmra.mxu0 %v3243
      %v3395 = vpop.f32.mrf.mxu0
      %v3396 = vadd.f32 0.0, %v3395
      %v3397 = vpop.f32.mrf.mxu0
      %v3398 = vadd.f32 0.0, %v3397
      %3399 = vmatmul.bf16.gmra.mxu0 %v3244
      %v3400 = vpop.f32.mrf.mxu0
      %v3401 = vadd.f32 0.0, %v3400
      %v3402 = vpop.f32.mrf.mxu0
      %v3403 = vadd.f32 0.0, %v3402
      %3404 = vmatmul.bf16.gmra.mxu0 %v3245
      %v3405 = vpop.f32.mrf.mxu0
      %v3406 = vadd.f32 0.0, %v3405
      %v3407 = vpop.f32.mrf.mxu0
      %v3408 = vadd.f32 0.0, %v3407
      %3409 = vmatmul.bf16.gmra.mxu0 %v3246
      %v3410 = vpop.f32.mrf.mxu0
      %v3411 = vadd.f32 0.0, %v3410
      %v3412 = vpop.f32.mrf.mxu0
      %v3413 = vadd.f32 0.0, %v3412
      %3414 = vmatmul.bf16.gmra.mxu0 %v3247
      %v3415 = vpop.f32.mrf.mxu0
      %v3416 = vadd.f32 0.0, %v3415
      %v3417 = vpop.f32.mrf.mxu0
      %v3418 = vadd.f32 0.0, %v3417
      %3419 = vmatmul.bf16.gmra.mxu0 %v3248
      %v3420 = vpop.f32.mrf.mxu0
      %v3421 = vadd.f32 0.0, %v3420
      %v3422 = vpop.f32.mrf.mxu0
      %v3423 = vadd.f32 0.0, %v3422
      %3424 = vmatmul.bf16.gmra.mxu0 %v3249
      %v3425 = vpop.f32.mrf.mxu0
      %v3426 = vadd.f32 0.0, %v3425
      %v3427 = vpop.f32.mrf.mxu0
      %v3428 = vadd.f32 0.0, %v3427
      %3429 = vmatmul.bf16.gmra.mxu0 %v3250
      %v3430 = vpop.f32.mrf.mxu0
      %v3431 = vadd.f32 0.0, %v3430
      %v3432 = vpop.f32.mrf.mxu0
      %v3433 = vadd.f32 0.0, %v3432
      %3434 = vmatmul.bf16.gmra.mxu0 %v3251
      %v3435 = vpop.f32.mrf.mxu0
      %v3436 = vadd.f32 0.0, %v3435
      %v3437 = vpop.f32.mrf.mxu0
      %v3438 = vadd.f32 0.0, %v3437
      %3439 = vmatmul.bf16.gmra.mxu0 %v3252
      %v3440 = vpop.f32.mrf.mxu0
      %v3441 = vadd.f32 0.0, %v3440
      %v3442 = vpop.f32.mrf.mxu0
      %v3443 = vadd.f32 0.0, %v3442
      %3444 = vmatmul.bf16.gmra.mxu0 %v3253
      %v3445 = vpop.f32.mrf.mxu0
      %v3446 = vadd.f32 0.0, %v3445
      %v3447 = vpop.f32.mrf.mxu0
      %v3448 = vadd.f32 0.0, %v3447
      %3449 = vmatmul.bf16.gmra.mxu0 %v3254
      %v3450 = vpop.f32.mrf.mxu0
      %v3451 = vadd.f32 0.0, %v3450
      %v3452 = vpop.f32.mrf.mxu0
      %v3453 = vadd.f32 0.0, %v3452
      %3454 = vmatmul.bf16.gmra.mxu0 %v3255
      %v3455 = vpop.f32.mrf.mxu0
      %v3456 = vadd.f32 0.0, %v3455
      %v3457 = vpop.f32.mrf.mxu0
      %3458 = vdwg.mxu0
      %v3459 = vadd.f32 %v3173, %v3331
      %v3460 = vadd.f32 %v3174, %v3333
      %v3461 = vadd.f32 %v3175, %v3336
      %v3462 = vadd.f32 %v3176, %v3338
      %v3463 = vadd.f32 %v3177, %v3341
      %v3464 = vadd.f32 %v3178, %v3343
      %v3465 = vadd.f32 %v3179, %v3346
      %v3466 = vadd.f32 %v3180, %v3348
      %v3467 = vadd.f32 %v3181, %v3351
      %v3468 = vadd.f32 %v3182, %v3353
      %v3469 = vadd.f32 %v3183, %v3356
      %v3470 = vadd.f32 %v3184, %v3358
      %v3471 = vadd.f32 %v3185, %v3361
      %v3472 = vadd.f32 %v3186, %v3363
      %v3473 = vadd.f32 %v3187, %v3366
      %v3474 = vadd.f32 %v3188, %v3368
      %v3475 = vadd.f32 %v3189, %v3371
      %v3476 = vadd.f32 %v3190, %v3373
      %v3477 = vadd.f32 %v3191, %v3376
      %v3478 = vadd.f32 %v3192, %v3378
      %v3479 = vadd.f32 %v3193, %v3381
      %v3480 = vadd.f32 %v3194, %v3383
      %v3481 = vadd.f32 %v3195, %v3386
      %v3482 = vadd.f32 %v3196, %v3388
      %v3483 = vadd.f32 %v3197, %v3391
      %v3484 = vadd.f32 %v3198, %v3393
      %v3485 = vadd.f32 %v3199, %v3396
      %v3486 = vadd.f32 %v3200, %v3398
      %v3487 = vadd.f32 %v3201, %v3401
      %v3488 = vadd.f32 %v3202, %v3403
      %v3489 = vadd.f32 %v3203, %v3406
      %v3490 = vadd.f32 %v3204, %v3408
      %v3491 = vadd.f32 %v3205, %v3411
      %v3492 = vadd.f32 %v3206, %v3413
      %v3493 = vadd.f32 %v3207, %v3416
      %v3494 = vadd.f32 %v3208, %v3418
      %v3495 = vadd.f32 %v3209, %v3421
      %v3496 = vadd.f32 %v3210, %v3423
      %v3497 = vadd.f32 %v3211, %v3426
      %v3498 = vadd.f32 %v3212, %v3428
      %v3499 = vadd.f32 %v3213, %v3431
      %v3500 = vadd.f32 %v3214, %v3433
      %v3501 = vadd.f32 %v3215, %v3436
      %v3502 = vadd.f32 %v3216, %v3438
      %v3503 = vadd.f32 %v3217, %v3441
      %v3504 = vadd.f32 %v3218, %v3443
      %v3505 = vadd.f32 %v3219, %v3446
      %v3506 = vadd.f32 %v3220, %v3448
      %v3507 = vadd.f32 %v3221, %v3451
      %v3508 = vadd.f32 %v3222, %v3453
      %v3509 = vadd.f32 %v3223, %v3456
      %v3510 = vrot.slane %v367, 7
      %v3511 = vrot.slane %v368, 7
      %v3512 = vsel %vm425, %v3511, %v421
      %v3513 = vsel %vm425, %v3510, %v3511
      %v3514 = vsel %vm425, %v2088, %v3510
      %v3515 = vpack.c.bf16 %v2091, %v429
      %v3516 = vpack.c.bf16 %v2089, %v2090
      %v3517 = vpack.c.bf16 %v3513, %v3514
      %v3518 = vpack.c.bf16 %v3512, %v3512
      %s3519 = scalar_lea.vmem %s1, 640
      %v3520 = vld [vmem:[%s3519] sm:$0xf]
      %v3521 = vld [vmem:[%s3519 + $0x4] sm:$0xf]
      %v3522 = vld [vmem:[%s3519 + $0x8] sm:$0xf]
      %v3523 = vld [vmem:[%s3519 + $0xc] sm:$0xf]
      %v3524 = vld [vmem:[%s3519 + $0x10] sm:$0xf]
      %v3525 = vld [vmem:[%s3519 + $0x14] sm:$0xf]
      %v3526 = vld [vmem:[%s3519 + $0x18] sm:$0xf]
      %v3527 = vld [vmem:[%s3519 + $0x1c] sm:$0xf]
      %v3528 = vld [vmem:[%s3519 + $0x20] sm:$0xf]
      %v3529 = vld [vmem:[%s3519 + $0x24] sm:$0xf]
      %v3530 = vld [vmem:[%s3519 + $0x28] sm:$0xf]
      %v3531 = vld [vmem:[%s3519 + $0x2c] sm:$0xf]
      %v3532 = vld [vmem:[%s3519 + $0x30] sm:$0xf]
      %v3533 = vld [vmem:[%s3519 + $0x34] sm:$0xf]
      %v3534 = vld [vmem:[%s3519 + $0x38] sm:$0xf]
      %v3535 = vld [vmem:[%s3519 + $0x3c] sm:$0xf]
      %v3552 = vunpack.c.l.b16 %v3520
      %v3553 = vunpack.c.l.b16 %v3521
      %v3554 = vunpack.c.l.b16 %v3522
      %v3555 = vunpack.c.l.b16 %v3523
      %v3556 = vunpack.c.l.b16 %v3524
      %v3557 = vunpack.c.l.b16 %v3525
      %v3558 = vunpack.c.l.b16 %v3526
      %v3559 = vunpack.c.l.b16 %v3527
      %v3560 = vunpack.c.l.b16 %v3528
      %v3561 = vunpack.c.l.b16 %v3529
      %v3562 = vunpack.c.l.b16 %v3530
      %v3563 = vunpack.c.l.b16 %v3531
      %v3564 = vunpack.c.l.b16 %v3532
      %v3565 = vunpack.c.l.b16 %v3533
      %v3566 = vunpack.c.l.b16 %v3534
      %v3567 = vunpack.c.l.b16 %v3535
      %v3568 = vpack.c.b16 %v3553, %v3552
      %v3569 = vpack.c.b16 %v3555, %v3554
      %v3570 = vpack.c.b16 %v3557, %v3556
      %v3571 = vpack.c.b16 %v3559, %v3558
      %v3572 = vpack.c.b16 %v3561, %v3560
      %v3573 = vpack.c.b16 %v3563, %v3562
      %v3574 = vpack.c.b16 %v3565, %v3564
      %v3575 = vpack.c.b16 %v3567, %v3566
      %3584 = vmatpush.bf16.msra.mxu0 %v3575
      %3585 = vmatpush.bf16.msra.mxu0 %v3574
      %3586 = vmatpush.bf16.msra.mxu0 %v3573
      %3587 = vmatpush.bf16.msra.mxu0 %v3572
      %3588 = vmatpush.bf16.msra.mxu0 %v3571
      %3589 = vmatpush.bf16.msra.mxu0 %v3570
      %3590 = vmatpush.bf16.msra.mxu0 %v3569
      %3591 = vmatpush.bf16.msra.mxu0 %v3568
      %3592 = vmatmul.bf16.gmra.mxu0 %v480
      %v3593 = vpop.f32.mrf.mxu0
      %v3594 = vadd.f32 0.0, %v3593
      %v3595 = vpop.f32.mrf.mxu0
      %v3596 = vadd.f32 0.0, %v3595
      %3597 = vmatmul.bf16.gmra.mxu0 %v481
      %v3598 = vpop.f32.mrf.mxu0
      %v3599 = vadd.f32 0.0, %v3598
      %v3600 = vpop.f32.mrf.mxu0
      %v3601 = vadd.f32 0.0, %v3600
      %3602 = vmatmul.bf16.gmra.mxu0 %v482
      %v3603 = vpop.f32.mrf.mxu0
      %v3604 = vadd.f32 0.0, %v3603
      %v3605 = vpop.f32.mrf.mxu0
      %v3606 = vadd.f32 0.0, %v3605
      %3607 = vmatmul.bf16.gmra.mxu0 %v483
      %v3608 = vpop.f32.mrf.mxu0
      %v3609 = vadd.f32 0.0, %v3608
      %v3610 = vpop.f32.mrf.mxu0
      %v3611 = vadd.f32 0.0, %v3610
      %3612 = vmatmul.bf16.gmra.mxu0 %v484
      %v3613 = vpop.f32.mrf.mxu0
      %v3614 = vadd.f32 0.0, %v3613
      %v3615 = vpop.f32.mrf.mxu0
      %v3616 = vadd.f32 0.0, %v3615
      %3617 = vmatmul.bf16.gmra.mxu0 %v485
      %v3618 = vpop.f32.mrf.mxu0
      %v3619 = vadd.f32 0.0, %v3618
      %v3620 = vpop.f32.mrf.mxu0
      %v3621 = vadd.f32 0.0, %v3620
      %3622 = vmatmul.bf16.gmra.mxu0 %v486
      %v3623 = vpop.f32.mrf.mxu0
      %v3624 = vadd.f32 0.0, %v3623
      %v3625 = vpop.f32.mrf.mxu0
      %v3626 = vadd.f32 0.0, %v3625
      %3627 = vmatmul.bf16.gmra.mxu0 %v487
      %v3628 = vpop.f32.mrf.mxu0
      %v3629 = vadd.f32 0.0, %v3628
      %v3630 = vpop.f32.mrf.mxu0
      %v3631 = vadd.f32 0.0, %v3630
      %3632 = vmatmul.bf16.gmra.mxu0 %v488
      %v3633 = vpop.f32.mrf.mxu0
      %v3634 = vadd.f32 0.0, %v3633
      %v3635 = vpop.f32.mrf.mxu0
      %v3636 = vadd.f32 0.0, %v3635
      %3637 = vmatmul.bf16.gmra.mxu0 %v489
      %v3638 = vpop.f32.mrf.mxu0
      %v3639 = vadd.f32 0.0, %v3638
      %v3640 = vpop.f32.mrf.mxu0
      %v3641 = vadd.f32 0.0, %v3640
      %3642 = vmatmul.bf16.gmra.mxu0 %v490
      %v3643 = vpop.f32.mrf.mxu0
      %v3644 = vadd.f32 0.0, %v3643
      %v3645 = vpop.f32.mrf.mxu0
      %v3646 = vadd.f32 0.0, %v3645
      %3647 = vmatmul.bf16.gmra.mxu0 %v491
      %v3648 = vpop.f32.mrf.mxu0
      %v3649 = vadd.f32 0.0, %v3648
      %v3650 = vpop.f32.mrf.mxu0
      %v3651 = vadd.f32 0.0, %v3650
      %3652 = vmatmul.bf16.gmra.mxu0 %v492
      %v3653 = vpop.f32.mrf.mxu0
      %v3654 = vadd.f32 0.0, %v3653
      %v3655 = vpop.f32.mrf.mxu0
      %v3656 = vadd.f32 0.0, %v3655
      %3657 = vmatmul.bf16.gmra.mxu0 %v493
      %v3658 = vpop.f32.mrf.mxu0
      %v3659 = vadd.f32 0.0, %v3658
      %v3660 = vpop.f32.mrf.mxu0
      %v3661 = vadd.f32 0.0, %v3660
      %3662 = vmatmul.bf16.gmra.mxu0 %v494
      %v3663 = vpop.f32.mrf.mxu0
      %v3664 = vadd.f32 0.0, %v3663
      %v3665 = vpop.f32.mrf.mxu0
      %v3666 = vadd.f32 0.0, %v3665
      %3667 = vmatmul.bf16.gmra.mxu0 %v495
      %v3668 = vpop.f32.mrf.mxu0
      %v3669 = vadd.f32 0.0, %v3668
      %v3670 = vpop.f32.mrf.mxu0
      %v3671 = vadd.f32 0.0, %v3670
      %3672 = vmatmul.bf16.gmra.mxu0 %v496
      %v3673 = vpop.f32.mrf.mxu0
      %v3674 = vadd.f32 0.0, %v3673
      %v3675 = vpop.f32.mrf.mxu0
      %v3676 = vadd.f32 0.0, %v3675
      %3677 = vmatmul.bf16.gmra.mxu0 %v497
      %v3678 = vpop.f32.mrf.mxu0
      %v3679 = vadd.f32 0.0, %v3678
      %v3680 = vpop.f32.mrf.mxu0
      %v3681 = vadd.f32 0.0, %v3680
      %3682 = vmatmul.bf16.gmra.mxu0 %v498
      %v3683 = vpop.f32.mrf.mxu0
      %v3684 = vadd.f32 0.0, %v3683
      %v3685 = vpop.f32.mrf.mxu0
      %v3686 = vadd.f32 0.0, %v3685
      %3687 = vmatmul.bf16.gmra.mxu0 %v499
      %v3688 = vpop.f32.mrf.mxu0
      %v3689 = vadd.f32 0.0, %v3688
      %v3690 = vpop.f32.mrf.mxu0
      %v3691 = vadd.f32 0.0, %v3690
      %3692 = vmatmul.bf16.gmra.mxu0 %v500
      %v3693 = vpop.f32.mrf.mxu0
      %v3694 = vadd.f32 0.0, %v3693
      %v3695 = vpop.f32.mrf.mxu0
      %v3696 = vadd.f32 0.0, %v3695
      %3697 = vmatmul.bf16.gmra.mxu0 %v501
      %v3698 = vpop.f32.mrf.mxu0
      %v3699 = vadd.f32 0.0, %v3698
      %v3700 = vpop.f32.mrf.mxu0
      %v3701 = vadd.f32 0.0, %v3700
      %3702 = vmatmul.bf16.gmra.mxu0 %v3515
      %v3703 = vpop.f32.mrf.mxu0
      %v3704 = vadd.f32 0.0, %v3703
      %v3705 = vpop.f32.mrf.mxu0
      %v3706 = vadd.f32 0.0, %v3705
      %3707 = vmatmul.bf16.gmra.mxu0 %v3516
      %v3708 = vpop.f32.mrf.mxu0
      %v3709 = vadd.f32 0.0, %v3708
      %v3710 = vpop.f32.mrf.mxu0
      %v3711 = vadd.f32 0.0, %v3710
      %3712 = vmatmul.bf16.gmra.mxu0 %v3517
      %v3713 = vpop.f32.mrf.mxu0
      %v3714 = vadd.f32 0.0, %v3713
      %v3715 = vpop.f32.mrf.mxu0
      %v3716 = vadd.f32 0.0, %v3715
      %3717 = vmatmul.bf16.gmra.mxu0 %v3518
      %v3718 = vpop.f32.mrf.mxu0
      %v3719 = vadd.f32 0.0, %v3718
      %v3720 = vpop.f32.mrf.mxu0
      %3721 = vdwg.mxu0
      %v3722 = vadd.f32 %v3459, %v3594
      %v3723 = vadd.f32 %v3460, %v3596
      %v3724 = vadd.f32 %v3461, %v3599
      %v3725 = vadd.f32 %v3462, %v3601
      %v3726 = vadd.f32 %v3463, %v3604
      %v3727 = vadd.f32 %v3464, %v3606
      %v3728 = vadd.f32 %v3465, %v3609
      %v3729 = vadd.f32 %v3466, %v3611
      %v3730 = vadd.f32 %v3467, %v3614
      %v3731 = vadd.f32 %v3468, %v3616
      %v3732 = vadd.f32 %v3469, %v3619
      %v3733 = vadd.f32 %v3470, %v3621
      %v3734 = vadd.f32 %v3471, %v3624
      %v3735 = vadd.f32 %v3472, %v3626
      %v3736 = vadd.f32 %v3473, %v3629
      %v3737 = vadd.f32 %v3474, %v3631
      %v3738 = vadd.f32 %v3475, %v3634
      %v3739 = vadd.f32 %v3476, %v3636
      %v3740 = vadd.f32 %v3477, %v3639
      %v3741 = vadd.f32 %v3478, %v3641
      %v3742 = vadd.f32 %v3479, %v3644
      %v3743 = vadd.f32 %v3480, %v3646
      %v3744 = vadd.f32 %v3481, %v3649
      %v3745 = vadd.f32 %v3482, %v3651
      %v3746 = vadd.f32 %v3483, %v3654
      %v3747 = vadd.f32 %v3484, %v3656
      %v3748 = vadd.f32 %v3485, %v3659
      %v3749 = vadd.f32 %v3486, %v3661
      %v3750 = vadd.f32 %v3487, %v3664
      %v3751 = vadd.f32 %v3488, %v3666
      %v3752 = vadd.f32 %v3489, %v3669
      %v3753 = vadd.f32 %v3490, %v3671
      %v3754 = vadd.f32 %v3491, %v3674
      %v3755 = vadd.f32 %v3492, %v3676
      %v3756 = vadd.f32 %v3493, %v3679
      %v3757 = vadd.f32 %v3494, %v3681
      %v3758 = vadd.f32 %v3495, %v3684
      %v3759 = vadd.f32 %v3496, %v3686
      %v3760 = vadd.f32 %v3497, %v3689
      %v3761 = vadd.f32 %v3498, %v3691
      %v3762 = vadd.f32 %v3499, %v3694
      %v3763 = vadd.f32 %v3500, %v3696
      %v3764 = vadd.f32 %v3501, %v3699
      %v3765 = vadd.f32 %v3502, %v3701
      %v3766 = vadd.f32 %v3503, %v3704
      %v3767 = vadd.f32 %v3504, %v3706
      %v3768 = vadd.f32 %v3505, %v3709
      %v3769 = vadd.f32 %v3506, %v3711
      %v3770 = vadd.f32 %v3507, %v3714
      %v3771 = vadd.f32 %v3508, %v3716
      %v3772 = vadd.f32 %v3509, %v3719
      %v3773 = vpack.c.bf16 %v364, %v363
      %v3774 = vpack.c.bf16 %v366, %v365
      %v3775 = vpack.c.bf16 %v368, %v367
      %v3776 = vpack.c.bf16 %v369, %v369
      %s3777 = scalar_lea.vmem %s1, 704
      %v3778 = vld [vmem:[%s3777] sm:$0xf]
      %v3779 = vld [vmem:[%s3777 + $0x4] sm:$0xf]
      %v3780 = vld [vmem:[%s3777 + $0x8] sm:$0xf]
      %v3781 = vld [vmem:[%s3777 + $0xc] sm:$0xf]
      %v3782 = vld [vmem:[%s3777 + $0x10] sm:$0xf]
      %v3783 = vld [vmem:[%s3777 + $0x14] sm:$0xf]
      %v3784 = vld [vmem:[%s3777 + $0x18] sm:$0xf]
      %v3785 = vld [vmem:[%s3777 + $0x1c] sm:$0xf]
      %v3786 = vld [vmem:[%s3777 + $0x20] sm:$0xf]
      %v3787 = vld [vmem:[%s3777 + $0x24] sm:$0xf]
      %v3788 = vld [vmem:[%s3777 + $0x28] sm:$0xf]
      %v3789 = vld [vmem:[%s3777 + $0x2c] sm:$0xf]
      %v3790 = vld [vmem:[%s3777 + $0x30] sm:$0xf]
      %v3791 = vld [vmem:[%s3777 + $0x34] sm:$0xf]
      %v3792 = vld [vmem:[%s3777 + $0x38] sm:$0xf]
      %v3793 = vld [vmem:[%s3777 + $0x3c] sm:$0xf]
      %v3810 = vunpack.c.l.b16 %v3778
      %v3811 = vunpack.c.l.b16 %v3779
      %v3812 = vunpack.c.l.b16 %v3780
      %v3813 = vunpack.c.l.b16 %v3781
      %v3814 = vunpack.c.l.b16 %v3782
      %v3815 = vunpack.c.l.b16 %v3783
      %v3816 = vunpack.c.l.b16 %v3784
      %v3817 = vunpack.c.l.b16 %v3785
      %v3818 = vunpack.c.l.b16 %v3786
      %v3819 = vunpack.c.l.b16 %v3787
      %v3820 = vunpack.c.l.b16 %v3788
      %v3821 = vunpack.c.l.b16 %v3789
      %v3822 = vunpack.c.l.b16 %v3790
      %v3823 = vunpack.c.l.b16 %v3791
      %v3824 = vunpack.c.l.b16 %v3792
      %v3825 = vunpack.c.l.b16 %v3793
      %v3826 = vpack.c.b16 %v3811, %v3810
      %v3827 = vpack.c.b16 %v3813, %v3812
      %v3828 = vpack.c.b16 %v3815, %v3814
      %v3829 = vpack.c.b16 %v3817, %v3816
      %v3830 = vpack.c.b16 %v3819, %v3818
      %v3831 = vpack.c.b16 %v3821, %v3820
      %v3832 = vpack.c.b16 %v3823, %v3822
      %v3833 = vpack.c.b16 %v3825, %v3824
      %3842 = vmatpush.bf16.msra.mxu0 %v3833
      %3843 = vmatpush.bf16.msra.mxu0 %v3832
      %3844 = vmatpush.bf16.msra.mxu0 %v3831
      %3845 = vmatpush.bf16.msra.mxu0 %v3830
      %3846 = vmatpush.bf16.msra.mxu0 %v3829
      %3847 = vmatpush.bf16.msra.mxu0 %v3828
      %3848 = vmatpush.bf16.msra.mxu0 %v3827
      %3849 = vmatpush.bf16.msra.mxu0 %v3826
      %3850 = vmatmul.bf16.gmra.mxu0 %v522
      %v3851 = vpop.f32.mrf.mxu0
      %v3852 = vadd.f32 0.0, %v3851
      %v3853 = vpop.f32.mrf.mxu0
      %v3854 = vadd.f32 0.0, %v3853
      %3855 = vmatmul.bf16.gmra.mxu0 %v523
      %v3856 = vpop.f32.mrf.mxu0
      %v3857 = vadd.f32 0.0, %v3856
      %v3858 = vpop.f32.mrf.mxu0
      %v3859 = vadd.f32 0.0, %v3858
      %3860 = vmatmul.bf16.gmra.mxu0 %v524
      %v3861 = vpop.f32.mrf.mxu0
      %v3862 = vadd.f32 0.0, %v3861
      %v3863 = vpop.f32.mrf.mxu0
      %v3864 = vadd.f32 0.0, %v3863
      %3865 = vmatmul.bf16.gmra.mxu0 %v525
      %v3866 = vpop.f32.mrf.mxu0
      %v3867 = vadd.f32 0.0, %v3866
      %v3868 = vpop.f32.mrf.mxu0
      %v3869 = vadd.f32 0.0, %v3868
      %3870 = vmatmul.bf16.gmra.mxu0 %v526
      %v3871 = vpop.f32.mrf.mxu0
      %v3872 = vadd.f32 0.0, %v3871
      %v3873 = vpop.f32.mrf.mxu0
      %v3874 = vadd.f32 0.0, %v3873
      %3875 = vmatmul.bf16.gmra.mxu0 %v527
      %v3876 = vpop.f32.mrf.mxu0
      %v3877 = vadd.f32 0.0, %v3876
      %v3878 = vpop.f32.mrf.mxu0
      %v3879 = vadd.f32 0.0, %v3878
      %3880 = vmatmul.bf16.gmra.mxu0 %v528
      %v3881 = vpop.f32.mrf.mxu0
      %v3882 = vadd.f32 0.0, %v3881
      %v3883 = vpop.f32.mrf.mxu0
      %v3884 = vadd.f32 0.0, %v3883
      %3885 = vmatmul.bf16.gmra.mxu0 %v529
      %v3886 = vpop.f32.mrf.mxu0
      %v3887 = vadd.f32 0.0, %v3886
      %v3888 = vpop.f32.mrf.mxu0
      %v3889 = vadd.f32 0.0, %v3888
      %3890 = vmatmul.bf16.gmra.mxu0 %v530
      %v3891 = vpop.f32.mrf.mxu0
      %v3892 = vadd.f32 0.0, %v3891
      %v3893 = vpop.f32.mrf.mxu0
      %v3894 = vadd.f32 0.0, %v3893
      %3895 = vmatmul.bf16.gmra.mxu0 %v531
      %v3896 = vpop.f32.mrf.mxu0
      %v3897 = vadd.f32 0.0, %v3896
      %v3898 = vpop.f32.mrf.mxu0
      %v3899 = vadd.f32 0.0, %v3898
      %3900 = vmatmul.bf16.gmra.mxu0 %v532
      %v3901 = vpop.f32.mrf.mxu0
      %v3902 = vadd.f32 0.0, %v3901
      %v3903 = vpop.f32.mrf.mxu0
      %v3904 = vadd.f32 0.0, %v3903
      %3905 = vmatmul.bf16.gmra.mxu0 %v533
      %v3906 = vpop.f32.mrf.mxu0
      %v3907 = vadd.f32 0.0, %v3906
      %v3908 = vpop.f32.mrf.mxu0
      %v3909 = vadd.f32 0.0, %v3908
      %3910 = vmatmul.bf16.gmra.mxu0 %v534
      %v3911 = vpop.f32.mrf.mxu0
      %v3912 = vadd.f32 0.0, %v3911
      %v3913 = vpop.f32.mrf.mxu0
      %v3914 = vadd.f32 0.0, %v3913
      %3915 = vmatmul.bf16.gmra.mxu0 %v535
      %v3916 = vpop.f32.mrf.mxu0
      %v3917 = vadd.f32 0.0, %v3916
      %v3918 = vpop.f32.mrf.mxu0
      %v3919 = vadd.f32 0.0, %v3918
      %3920 = vmatmul.bf16.gmra.mxu0 %v536
      %v3921 = vpop.f32.mrf.mxu0
      %v3922 = vadd.f32 0.0, %v3921
      %v3923 = vpop.f32.mrf.mxu0
      %v3924 = vadd.f32 0.0, %v3923
      %3925 = vmatmul.bf16.gmra.mxu0 %v537
      %v3926 = vpop.f32.mrf.mxu0
      %v3927 = vadd.f32 0.0, %v3926
      %v3928 = vpop.f32.mrf.mxu0
      %v3929 = vadd.f32 0.0, %v3928
      %3930 = vmatmul.bf16.gmra.mxu0 %v538
      %v3931 = vpop.f32.mrf.mxu0
      %v3932 = vadd.f32 0.0, %v3931
      %v3933 = vpop.f32.mrf.mxu0
      %v3934 = vadd.f32 0.0, %v3933
      %3935 = vmatmul.bf16.gmra.mxu0 %v539
      %v3936 = vpop.f32.mrf.mxu0
      %v3937 = vadd.f32 0.0, %v3936
      %v3938 = vpop.f32.mrf.mxu0
      %v3939 = vadd.f32 0.0, %v3938
      %3940 = vmatmul.bf16.gmra.mxu0 %v540
      %v3941 = vpop.f32.mrf.mxu0
      %v3942 = vadd.f32 0.0, %v3941
      %v3943 = vpop.f32.mrf.mxu0
      %v3944 = vadd.f32 0.0, %v3943
      %3945 = vmatmul.bf16.gmra.mxu0 %v541
      %v3946 = vpop.f32.mrf.mxu0
      %v3947 = vadd.f32 0.0, %v3946
      %v3948 = vpop.f32.mrf.mxu0
      %v3949 = vadd.f32 0.0, %v3948
      %3950 = vmatmul.bf16.gmra.mxu0 %v542
      %v3951 = vpop.f32.mrf.mxu0
      %v3952 = vadd.f32 0.0, %v3951
      %v3953 = vpop.f32.mrf.mxu0
      %v3954 = vadd.f32 0.0, %v3953
      %3955 = vmatmul.bf16.gmra.mxu0 %v543
      %v3956 = vpop.f32.mrf.mxu0
      %v3957 = vadd.f32 0.0, %v3956
      %v3958 = vpop.f32.mrf.mxu0
      %v3959 = vadd.f32 0.0, %v3958
      %3960 = vmatmul.bf16.gmra.mxu0 %v3773
      %v3961 = vpop.f32.mrf.mxu0
      %v3962 = vadd.f32 0.0, %v3961
      %v3963 = vpop.f32.mrf.mxu0
      %v3964 = vadd.f32 0.0, %v3963
      %3965 = vmatmul.bf16.gmra.mxu0 %v3774
      %v3966 = vpop.f32.mrf.mxu0
      %v3967 = vadd.f32 0.0, %v3966
      %v3968 = vpop.f32.mrf.mxu0
      %v3969 = vadd.f32 0.0, %v3968
      %3970 = vmatmul.bf16.gmra.mxu0 %v3775
      %v3971 = vpop.f32.mrf.mxu0
      %v3972 = vadd.f32 0.0, %v3971
      %v3973 = vpop.f32.mrf.mxu0
      %v3974 = vadd.f32 0.0, %v3973
      %3975 = vmatmul.bf16.gmra.mxu0 %v3776
      %v3976 = vpop.f32.mrf.mxu0
      %v3977 = vadd.f32 0.0, %v3976
      %v3978 = vpop.f32.mrf.mxu0
      %3979 = vdwg.mxu0
      %v3980 = vadd.f32 %v3722, %v3852
      %v3981 = vadd.f32 %v3723, %v3854
      %v3982 = vadd.f32 %v3724, %v3857
      %v3983 = vadd.f32 %v3725, %v3859
      %v3984 = vadd.f32 %v3726, %v3862
      %v3985 = vadd.f32 %v3727, %v3864
      %v3986 = vadd.f32 %v3728, %v3867
      %v3987 = vadd.f32 %v3729, %v3869
      %v3988 = vadd.f32 %v3730, %v3872
      %v3989 = vadd.f32 %v3731, %v3874
      %v3990 = vadd.f32 %v3732, %v3877
      %v3991 = vadd.f32 %v3733, %v3879
      %v3992 = vadd.f32 %v3734, %v3882
      %v3993 = vadd.f32 %v3735, %v3884
      %v3994 = vadd.f32 %v3736, %v3887
      %v3995 = vadd.f32 %v3737, %v3889
      %v3996 = vadd.f32 %v3738, %v3892
      %v3997 = vadd.f32 %v3739, %v3894
      %v3998 = vadd.f32 %v3740, %v3897
      %v3999 = vadd.f32 %v3741, %v3899
      %v4000 = vadd.f32 %v3742, %v3902
      %v4001 = vadd.f32 %v3743, %v3904
      %v4002 = vadd.f32 %v3744, %v3907
      %v4003 = vadd.f32 %v3745, %v3909
      %v4004 = vadd.f32 %v3746, %v3912
      %v4005 = vadd.f32 %v3747, %v3914
      %v4006 = vadd.f32 %v3748, %v3917
      %v4007 = vadd.f32 %v3749, %v3919
      %v4008 = vadd.f32 %v3750, %v3922
      %v4009 = vadd.f32 %v3751, %v3924
      %v4010 = vadd.f32 %v3752, %v3927
      %v4011 = vadd.f32 %v3753, %v3929
      %v4012 = vadd.f32 %v3754, %v3932
      %v4013 = vadd.f32 %v3755, %v3934
      %v4014 = vadd.f32 %v3756, %v3937
      %v4015 = vadd.f32 %v3757, %v3939
      %v4016 = vadd.f32 %v3758, %v3942
      %v4017 = vadd.f32 %v3759, %v3944
      %v4018 = vadd.f32 %v3760, %v3947
      %v4019 = vadd.f32 %v3761, %v3949
      %v4020 = vadd.f32 %v3762, %v3952
      %v4021 = vadd.f32 %v3763, %v3954
      %v4022 = vadd.f32 %v3764, %v3957
      %v4023 = vadd.f32 %v3765, %v3959
      %v4024 = vadd.f32 %v3766, %v3962
      %v4025 = vadd.f32 %v3767, %v3964
      %v4026 = vadd.f32 %v3768, %v3967
      %v4027 = vadd.f32 %v3769, %v3969
      %v4028 = vadd.f32 %v3770, %v3972
      %v4029 = vadd.f32 %v3771, %v3974
      %v4030 = vadd.f32 %v3772, %v3977
      %v4031 = vrot.slane %v368, 1
      %v4032 = vrot.slane %v369, 1
      %v4033 = vsel %vm986, %v4032, %v983
      %v4034 = vsel %vm986, %v4031, %v4032
      %v4035 = vsel %vm986, %v2654, %v4031
      %v4036 = vpack.c.bf16 %v2657, %v989
      %v4037 = vpack.c.bf16 %v2655, %v2656
      %v4038 = vpack.c.bf16 %v4034, %v4035
      %v4039 = vpack.c.bf16 %v4033, %v4033
      %s4040 = scalar_lea.vmem %s1, 768
      %v4041 = vld [vmem:[%s4040] sm:$0xf]
      %v4042 = vld [vmem:[%s4040 + $0x4] sm:$0xf]
      %v4043 = vld [vmem:[%s4040 + $0x8] sm:$0xf]
      %v4044 = vld [vmem:[%s4040 + $0xc] sm:$0xf]
      %v4045 = vld [vmem:[%s4040 + $0x10] sm:$0xf]
      %v4046 = vld [vmem:[%s4040 + $0x14] sm:$0xf]
      %v4047 = vld [vmem:[%s4040 + $0x18] sm:$0xf]
      %v4048 = vld [vmem:[%s4040 + $0x1c] sm:$0xf]
      %v4049 = vld [vmem:[%s4040 + $0x20] sm:$0xf]
      %v4050 = vld [vmem:[%s4040 + $0x24] sm:$0xf]
      %v4051 = vld [vmem:[%s4040 + $0x28] sm:$0xf]
      %v4052 = vld [vmem:[%s4040 + $0x2c] sm:$0xf]
      %v4053 = vld [vmem:[%s4040 + $0x30] sm:$0xf]
      %v4054 = vld [vmem:[%s4040 + $0x34] sm:$0xf]
      %v4055 = vld [vmem:[%s4040 + $0x38] sm:$0xf]
      %v4056 = vld [vmem:[%s4040 + $0x3c] sm:$0xf]
      %v4073 = vunpack.c.l.b16 %v4041
      %v4074 = vunpack.c.l.b16 %v4042
      %v4075 = vunpack.c.l.b16 %v4043
      %v4076 = vunpack.c.l.b16 %v4044
      %v4077 = vunpack.c.l.b16 %v4045
      %v4078 = vunpack.c.l.b16 %v4046
      %v4079 = vunpack.c.l.b16 %v4047
      %v4080 = vunpack.c.l.b16 %v4048
      %v4081 = vunpack.c.l.b16 %v4049
      %v4082 = vunpack.c.l.b16 %v4050
      %v4083 = vunpack.c.l.b16 %v4051
      %v4084 = vunpack.c.l.b16 %v4052
      %v4085 = vunpack.c.l.b16 %v4053
      %v4086 = vunpack.c.l.b16 %v4054
      %v4087 = vunpack.c.l.b16 %v4055
      %v4088 = vunpack.c.l.b16 %v4056
      %v4089 = vpack.c.b16 %v4074, %v4073
      %v4090 = vpack.c.b16 %v4076, %v4075
      %v4091 = vpack.c.b16 %v4078, %v4077
      %v4092 = vpack.c.b16 %v4080, %v4079
      %v4093 = vpack.c.b16 %v4082, %v4081
      %v4094 = vpack.c.b16 %v4084, %v4083
      %v4095 = vpack.c.b16 %v4086, %v4085
      %v4096 = vpack.c.b16 %v4088, %v4087
      %4105 = vmatpush.bf16.msra.mxu0 %v4096
      %4106 = vmatpush.bf16.msra.mxu0 %v4095
      %4107 = vmatpush.bf16.msra.mxu0 %v4094
      %4108 = vmatpush.bf16.msra.mxu0 %v4093
      %4109 = vmatpush.bf16.msra.mxu0 %v4092
      %4110 = vmatpush.bf16.msra.mxu0 %v4091
      %4111 = vmatpush.bf16.msra.mxu0 %v4090
      %4112 = vmatpush.bf16.msra.mxu0 %v4089
      %4113 = vmatmul.bf16.gmra.mxu0 %v1041
      %v4114 = vpop.f32.mrf.mxu0
      %v4115 = vadd.f32 0.0, %v4114
      %v4116 = vpop.f32.mrf.mxu0
      %v4117 = vadd.f32 0.0, %v4116
      %4118 = vmatmul.bf16.gmra.mxu0 %v1042
      %v4119 = vpop.f32.mrf.mxu0
      %v4120 = vadd.f32 0.0, %v4119
      %v4121 = vpop.f32.mrf.mxu0
      %v4122 = vadd.f32 0.0, %v4121
      %4123 = vmatmul.bf16.gmra.mxu0 %v1043
      %v4124 = vpop.f32.mrf.mxu0
      %v4125 = vadd.f32 0.0, %v4124
      %v4126 = vpop.f32.mrf.mxu0
      %v4127 = vadd.f32 0.0, %v4126
      %4128 = vmatmul.bf16.gmra.mxu0 %v1044
      %v4129 = vpop.f32.mrf.mxu0
      %v4130 = vadd.f32 0.0, %v4129
      %v4131 = vpop.f32.mrf.mxu0
      %v4132 = vadd.f32 0.0, %v4131
      %4133 = vmatmul.bf16.gmra.mxu0 %v1045
      %v4134 = vpop.f32.mrf.mxu0
      %v4135 = vadd.f32 0.0, %v4134
      %v4136 = vpop.f32.mrf.mxu0
      %v4137 = vadd.f32 0.0, %v4136
      %4138 = vmatmul.bf16.gmra.mxu0 %v1046
      %v4139 = vpop.f32.mrf.mxu0
      %v4140 = vadd.f32 0.0, %v4139
      %v4141 = vpop.f32.mrf.mxu0
      %v4142 = vadd.f32 0.0, %v4141
      %4143 = vmatmul.bf16.gmra.mxu0 %v1047
      %v4144 = vpop.f32.mrf.mxu0
      %v4145 = vadd.f32 0.0, %v4144
      %v4146 = vpop.f32.mrf.mxu0
      %v4147 = vadd.f32 0.0, %v4146
      %4148 = vmatmul.bf16.gmra.mxu0 %v1048
      %v4149 = vpop.f32.mrf.mxu0
      %v4150 = vadd.f32 0.0, %v4149
      %v4151 = vpop.f32.mrf.mxu0
      %v4152 = vadd.f32 0.0, %v4151
      %4153 = vmatmul.bf16.gmra.mxu0 %v1049
      %v4154 = vpop.f32.mrf.mxu0
      %v4155 = vadd.f32 0.0, %v4154
      %v4156 = vpop.f32.mrf.mxu0
      %v4157 = vadd.f32 0.0, %v4156
      %4158 = vmatmul.bf16.gmra.mxu0 %v1050
      %v4159 = vpop.f32.mrf.mxu0
      %v4160 = vadd.f32 0.0, %v4159
      %v4161 = vpop.f32.mrf.mxu0
      %v4162 = vadd.f32 0.0, %v4161
      %4163 = vmatmul.bf16.gmra.mxu0 %v1051
      %v4164 = vpop.f32.mrf.mxu0
      %v4165 = vadd.f32 0.0, %v4164
      %v4166 = vpop.f32.mrf.mxu0
      %v4167 = vadd.f32 0.0, %v4166
      %4168 = vmatmul.bf16.gmra.mxu0 %v1052
      %v4169 = vpop.f32.mrf.mxu0
      %v4170 = vadd.f32 0.0, %v4169
      %v4171 = vpop.f32.mrf.mxu0
      %v4172 = vadd.f32 0.0, %v4171
      %4173 = vmatmul.bf16.gmra.mxu0 %v1053
      %v4174 = vpop.f32.mrf.mxu0
      %v4175 = vadd.f32 0.0, %v4174
      %v4176 = vpop.f32.mrf.mxu0
      %v4177 = vadd.f32 0.0, %v4176
      %4178 = vmatmul.bf16.gmra.mxu0 %v1054
      %v4179 = vpop.f32.mrf.mxu0
      %v4180 = vadd.f32 0.0, %v4179
      %v4181 = vpop.f32.mrf.mxu0
      %v4182 = vadd.f32 0.0, %v4181
      %4183 = vmatmul.bf16.gmra.mxu0 %v1055
      %v4184 = vpop.f32.mrf.mxu0
      %v4185 = vadd.f32 0.0, %v4184
      %v4186 = vpop.f32.mrf.mxu0
      %v4187 = vadd.f32 0.0, %v4186
      %4188 = vmatmul.bf16.gmra.mxu0 %v1056
      %v4189 = vpop.f32.mrf.mxu0
      %v4190 = vadd.f32 0.0, %v4189
      %v4191 = vpop.f32.mrf.mxu0
      %v4192 = vadd.f32 0.0, %v4191
      %4193 = vmatmul.bf16.gmra.mxu0 %v1057
      %v4194 = vpop.f32.mrf.mxu0
      %v4195 = vadd.f32 0.0, %v4194
      %v4196 = vpop.f32.mrf.mxu0
      %v4197 = vadd.f32 0.0, %v4196
      %4198 = vmatmul.bf16.gmra.mxu0 %v1058
      %v4199 = vpop.f32.mrf.mxu0
      %v4200 = vadd.f32 0.0, %v4199
      %v4201 = vpop.f32.mrf.mxu0
      %v4202 = vadd.f32 0.0, %v4201
      %4203 = vmatmul.bf16.gmra.mxu0 %v1059
      %v4204 = vpop.f32.mrf.mxu0
      %v4205 = vadd.f32 0.0, %v4204
      %v4206 = vpop.f32.mrf.mxu0
      %v4207 = vadd.f32 0.0, %v4206
      %4208 = vmatmul.bf16.gmra.mxu0 %v1060
      %v4209 = vpop.f32.mrf.mxu0
      %v4210 = vadd.f32 0.0, %v4209
      %v4211 = vpop.f32.mrf.mxu0
      %v4212 = vadd.f32 0.0, %v4211
      %4213 = vmatmul.bf16.gmra.mxu0 %v1061
      %v4214 = vpop.f32.mrf.mxu0
      %v4215 = vadd.f32 0.0, %v4214
      %v4216 = vpop.f32.mrf.mxu0
      %v4217 = vadd.f32 0.0, %v4216
      %4218 = vmatmul.bf16.gmra.mxu0 %v1062
      %v4219 = vpop.f32.mrf.mxu0
      %v4220 = vadd.f32 0.0, %v4219
      %v4221 = vpop.f32.mrf.mxu0
      %v4222 = vadd.f32 0.0, %v4221
      %4223 = vmatmul.bf16.gmra.mxu0 %v4036
      %v4224 = vpop.f32.mrf.mxu0
      %v4225 = vadd.f32 0.0, %v4224
      %v4226 = vpop.f32.mrf.mxu0
      %v4227 = vadd.f32 0.0, %v4226
      %4228 = vmatmul.bf16.gmra.mxu0 %v4037
      %v4229 = vpop.f32.mrf.mxu0
      %v4230 = vadd.f32 0.0, %v4229
      %v4231 = vpop.f32.mrf.mxu0
      %v4232 = vadd.f32 0.0, %v4231
      %4233 = vmatmul.bf16.gmra.mxu0 %v4038
      %v4234 = vpop.f32.mrf.mxu0
      %v4235 = vadd.f32 0.0, %v4234
      %v4236 = vpop.f32.mrf.mxu0
      %v4237 = vadd.f32 0.0, %v4236
      %4238 = vmatmul.bf16.gmra.mxu0 %v4039
      %v4239 = vpop.f32.mrf.mxu0
      %v4240 = vadd.f32 0.0, %v4239
      %v4241 = vpop.f32.mrf.mxu0
      %4242 = vdwg.mxu0
      %v4243 = vadd.f32 %v3980, %v4115
      %v4244 = vadd.f32 %v3981, %v4117
      %v4245 = vadd.f32 %v3982, %v4120
      %v4246 = vadd.f32 %v3983, %v4122
      %v4247 = vadd.f32 %v3984, %v4125
      %v4248 = vadd.f32 %v3985, %v4127
      %v4249 = vadd.f32 %v3986, %v4130
      %v4250 = vadd.f32 %v3987, %v4132
      %v4251 = vadd.f32 %v3988, %v4135
      %v4252 = vadd.f32 %v3989, %v4137
      %v4253 = vadd.f32 %v3990, %v4140
      %v4254 = vadd.f32 %v3991, %v4142
      %v4255 = vadd.f32 %v3992, %v4145
      %v4256 = vadd.f32 %v3993, %v4147
      %v4257 = vadd.f32 %v3994, %v4150
      %v4258 = vadd.f32 %v3995, %v4152
      %v4259 = vadd.f32 %v3996, %v4155
      %v4260 = vadd.f32 %v3997, %v4157
      %v4261 = vadd.f32 %v3998, %v4160
      %v4262 = vadd.f32 %v3999, %v4162
      %v4263 = vadd.f32 %v4000, %v4165
      %v4264 = vadd.f32 %v4001, %v4167
      %v4265 = vadd.f32 %v4002, %v4170
      %v4266 = vadd.f32 %v4003, %v4172
      %v4267 = vadd.f32 %v4004, %v4175
      %v4268 = vadd.f32 %v4005, %v4177
      %v4269 = vadd.f32 %v4006, %v4180
      %v4270 = vadd.f32 %v4007, %v4182
      %v4271 = vadd.f32 %v4008, %v4185
      %v4272 = vadd.f32 %v4009, %v4187
      %v4273 = vadd.f32 %v4010, %v4190
      %v4274 = vadd.f32 %v4011, %v4192
      %v4275 = vadd.f32 %v4012, %v4195
      %v4276 = vadd.f32 %v4013, %v4197
      %v4277 = vadd.f32 %v4014, %v4200
      %v4278 = vadd.f32 %v4015, %v4202
      %v4279 = vadd.f32 %v4016, %v4205
      %v4280 = vadd.f32 %v4017, %v4207
      %v4281 = vadd.f32 %v4018, %v4210
      %v4282 = vadd.f32 %v4019, %v4212
      %v4283 = vadd.f32 %v4020, %v4215
      %v4284 = vadd.f32 %v4021, %v4217
      %v4285 = vadd.f32 %v4022, %v4220
      %v4286 = vadd.f32 %v4023, %v4222
      %v4287 = vadd.f32 %v4024, %v4225
      %v4288 = vadd.f32 %v4025, %v4227
      %v4289 = vadd.f32 %v4026, %v4230
      %v4290 = vadd.f32 %v4027, %v4232
      %v4291 = vadd.f32 %v4028, %v4235
      %v4292 = vadd.f32 %v4029, %v4237
      %v4293 = vadd.f32 %v4030, %v4240
      %v4294 = vrot.slane %v368, 2
      %v4295 = vrot.slane %v369, 2
      %v4296 = vsel %vm1370, %v4295, %v1367
      %v4297 = vsel %vm1370, %v4294, %v4295
      %v4298 = vsel %vm1370, %v2940, %v4294
      %v4299 = vpack.c.bf16 %v2943, %v1373
      %v4300 = vpack.c.bf16 %v2941, %v2942
      %v4301 = vpack.c.bf16 %v4297, %v4298
      %v4302 = vpack.c.bf16 %v4296, %v4296
      %s4303 = scalar_lea.vmem %s1, 832
      %v4304 = vld [vmem:[%s4303] sm:$0xf]
      %v4305 = vld [vmem:[%s4303 + $0x4] sm:$0xf]
      %v4306 = vld [vmem:[%s4303 + $0x8] sm:$0xf]
      %v4307 = vld [vmem:[%s4303 + $0xc] sm:$0xf]
      %v4308 = vld [vmem:[%s4303 + $0x10] sm:$0xf]
      %v4309 = vld [vmem:[%s4303 + $0x14] sm:$0xf]
      %v4310 = vld [vmem:[%s4303 + $0x18] sm:$0xf]
      %v4311 = vld [vmem:[%s4303 + $0x1c] sm:$0xf]
      %v4312 = vld [vmem:[%s4303 + $0x20] sm:$0xf]
      %v4313 = vld [vmem:[%s4303 + $0x24] sm:$0xf]
      %v4314 = vld [vmem:[%s4303 + $0x28] sm:$0xf]
      %v4315 = vld [vmem:[%s4303 + $0x2c] sm:$0xf]
      %v4316 = vld [vmem:[%s4303 + $0x30] sm:$0xf]
      %v4317 = vld [vmem:[%s4303 + $0x34] sm:$0xf]
      %v4318 = vld [vmem:[%s4303 + $0x38] sm:$0xf]
      %v4319 = vld [vmem:[%s4303 + $0x3c] sm:$0xf]
      %v4336 = vunpack.c.l.b16 %v4304
      %v4337 = vunpack.c.l.b16 %v4305
      %v4338 = vunpack.c.l.b16 %v4306
      %v4339 = vunpack.c.l.b16 %v4307
      %v4340 = vunpack.c.l.b16 %v4308
      %v4341 = vunpack.c.l.b16 %v4309
      %v4342 = vunpack.c.l.b16 %v4310
      %v4343 = vunpack.c.l.b16 %v4311
      %v4344 = vunpack.c.l.b16 %v4312
      %v4345 = vunpack.c.l.b16 %v4313
      %v4346 = vunpack.c.l.b16 %v4314
      %v4347 = vunpack.c.l.b16 %v4315
      %v4348 = vunpack.c.l.b16 %v4316
      %v4349 = vunpack.c.l.b16 %v4317
      %v4350 = vunpack.c.l.b16 %v4318
      %v4351 = vunpack.c.l.b16 %v4319
      %v4352 = vpack.c.b16 %v4337, %v4336
      %v4353 = vpack.c.b16 %v4339, %v4338
      %v4354 = vpack.c.b16 %v4341, %v4340
      %v4355 = vpack.c.b16 %v4343, %v4342
      %v4356 = vpack.c.b16 %v4345, %v4344
      %v4357 = vpack.c.b16 %v4347, %v4346
      %v4358 = vpack.c.b16 %v4349, %v4348
      %v4359 = vpack.c.b16 %v4351, %v4350
      %4368 = vmatpush.bf16.msra.mxu0 %v4359
      %4369 = vmatpush.bf16.msra.mxu0 %v4358
      %4370 = vmatpush.bf16.msra.mxu0 %v4357
      %4371 = vmatpush.bf16.msra.mxu0 %v4356
      %4372 = vmatpush.bf16.msra.mxu0 %v4355
      %4373 = vmatpush.bf16.msra.mxu0 %v4354
      %4374 = vmatpush.bf16.msra.mxu0 %v4353
      %4375 = vmatpush.bf16.msra.mxu0 %v4352
      %4376 = vmatmul.bf16.gmra.mxu0 %v1425
      %v4377 = vpop.f32.mrf.mxu0
      %v4378 = vadd.f32 0.0, %v4377
      %v4379 = vpop.f32.mrf.mxu0
      %v4380 = vadd.f32 0.0, %v4379
      %4381 = vmatmul.bf16.gmra.mxu0 %v1426
      %v4382 = vpop.f32.mrf.mxu0
      %v4383 = vadd.f32 0.0, %v4382
      %v4384 = vpop.f32.mrf.mxu0
      %v4385 = vadd.f32 0.0, %v4384
      %4386 = vmatmul.bf16.gmra.mxu0 %v1427
      %v4387 = vpop.f32.mrf.mxu0
      %v4388 = vadd.f32 0.0, %v4387
      %v4389 = vpop.f32.mrf.mxu0
      %v4390 = vadd.f32 0.0, %v4389
      %4391 = vmatmul.bf16.gmra.mxu0 %v1428
      %v4392 = vpop.f32.mrf.mxu0
      %v4393 = vadd.f32 0.0, %v4392
      %v4394 = vpop.f32.mrf.mxu0
      %v4395 = vadd.f32 0.0, %v4394
      %4396 = vmatmul.bf16.gmra.mxu0 %v1429
      %v4397 = vpop.f32.mrf.mxu0
      %v4398 = vadd.f32 0.0, %v4397
      %v4399 = vpop.f32.mrf.mxu0
      %v4400 = vadd.f32 0.0, %v4399
      %4401 = vmatmul.bf16.gmra.mxu0 %v1430
      %v4402 = vpop.f32.mrf.mxu0
      %v4403 = vadd.f32 0.0, %v4402
      %v4404 = vpop.f32.mrf.mxu0
      %v4405 = vadd.f32 0.0, %v4404
      %4406 = vmatmul.bf16.gmra.mxu0 %v1431
      %v4407 = vpop.f32.mrf.mxu0
      %v4408 = vadd.f32 0.0, %v4407
      %v4409 = vpop.f32.mrf.mxu0
      %v4410 = vadd.f32 0.0, %v4409
      %4411 = vmatmul.bf16.gmra.mxu0 %v1432
      %v4412 = vpop.f32.mrf.mxu0
      %v4413 = vadd.f32 0.0, %v4412
      %v4414 = vpop.f32.mrf.mxu0
      %v4415 = vadd.f32 0.0, %v4414
      %4416 = vmatmul.bf16.gmra.mxu0 %v1433
      %v4417 = vpop.f32.mrf.mxu0
      %v4418 = vadd.f32 0.0, %v4417
      %v4419 = vpop.f32.mrf.mxu0
      %v4420 = vadd.f32 0.0, %v4419
      %4421 = vmatmul.bf16.gmra.mxu0 %v1434
      %v4422 = vpop.f32.mrf.mxu0
      %v4423 = vadd.f32 0.0, %v4422
      %v4424 = vpop.f32.mrf.mxu0
      %v4425 = vadd.f32 0.0, %v4424
      %4426 = vmatmul.bf16.gmra.mxu0 %v1435
      %v4427 = vpop.f32.mrf.mxu0
      %v4428 = vadd.f32 0.0, %v4427
      %v4429 = vpop.f32.mrf.mxu0
      %v4430 = vadd.f32 0.0, %v4429
      %4431 = vmatmul.bf16.gmra.mxu0 %v1436
      %v4432 = vpop.f32.mrf.mxu0
      %v4433 = vadd.f32 0.0, %v4432
      %v4434 = vpop.f32.mrf.mxu0
      %v4435 = vadd.f32 0.0, %v4434
      %4436 = vmatmul.bf16.gmra.mxu0 %v1437
      %v4437 = vpop.f32.mrf.mxu0
      %v4438 = vadd.f32 0.0, %v4437
      %v4439 = vpop.f32.mrf.mxu0
      %v4440 = vadd.f32 0.0, %v4439
      %4441 = vmatmul.bf16.gmra.mxu0 %v1438
      %v4442 = vpop.f32.mrf.mxu0
      %v4443 = vadd.f32 0.0, %v4442
      %v4444 = vpop.f32.mrf.mxu0
      %v4445 = vadd.f32 0.0, %v4444
      %4446 = vmatmul.bf16.gmra.mxu0 %v1439
      %v4447 = vpop.f32.mrf.mxu0
      %v4448 = vadd.f32 0.0, %v4447
      %v4449 = vpop.f32.mrf.mxu0
      %v4450 = vadd.f32 0.0, %v4449
      %4451 = vmatmul.bf16.gmra.mxu0 %v1440
      %v4452 = vpop.f32.mrf.mxu0
      %v4453 = vadd.f32 0.0, %v4452
      %v4454 = vpop.f32.mrf.mxu0
      %v4455 = vadd.f32 0.0, %v4454
      %4456 = vmatmul.bf16.gmra.mxu0 %v1441
      %v4457 = vpop.f32.mrf.mxu0
      %v4458 = vadd.f32 0.0, %v4457
      %v4459 = vpop.f32.mrf.mxu0
      %v4460 = vadd.f32 0.0, %v4459
      %4461 = vmatmul.bf16.gmra.mxu0 %v1442
      %v4462 = vpop.f32.mrf.mxu0
      %v4463 = vadd.f32 0.0, %v4462
      %v4464 = vpop.f32.mrf.mxu0
      %v4465 = vadd.f32 0.0, %v4464
      %4466 = vmatmul.bf16.gmra.mxu0 %v1443
      %v4467 = vpop.f32.mrf.mxu0
      %v4468 = vadd.f32 0.0, %v4467
      %v4469 = vpop.f32.mrf.mxu0
      %v4470 = vadd.f32 0.0, %v4469
      %4471 = vmatmul.bf16.gmra.mxu0 %v1444
      %v4472 = vpop.f32.mrf.mxu0
      %v4473 = vadd.f32 0.0, %v4472
      %v4474 = vpop.f32.mrf.mxu0
      %v4475 = vadd.f32 0.0, %v4474
      %4476 = vmatmul.bf16.gmra.mxu0 %v1445
      %v4477 = vpop.f32.mrf.mxu0
      %v4478 = vadd.f32 0.0, %v4477
      %v4479 = vpop.f32.mrf.mxu0
      %v4480 = vadd.f32 0.0, %v4479
      %4481 = vmatmul.bf16.gmra.mxu0 %v1446
      %v4482 = vpop.f32.mrf.mxu0
      %v4483 = vadd.f32 0.0, %v4482
      %v4484 = vpop.f32.mrf.mxu0
      %v4485 = vadd.f32 0.0, %v4484
      %4486 = vmatmul.bf16.gmra.mxu0 %v4299
      %v4487 = vpop.f32.mrf.mxu0
      %v4488 = vadd.f32 0.0, %v4487
      %v4489 = vpop.f32.mrf.mxu0
      %v4490 = vadd.f32 0.0, %v4489
      %4491 = vmatmul.bf16.gmra.mxu0 %v4300
      %v4492 = vpop.f32.mrf.mxu0
      %v4493 = vadd.f32 0.0, %v4492
      %v4494 = vpop.f32.mrf.mxu0
      %v4495 = vadd.f32 0.0, %v4494
      %4496 = vmatmul.bf16.gmra.mxu0 %v4301
      %v4497 = vpop.f32.mrf.mxu0
      %v4498 = vadd.f32 0.0, %v4497
      %v4499 = vpop.f32.mrf.mxu0
      %v4500 = vadd.f32 0.0, %v4499
      %4501 = vmatmul.bf16.gmra.mxu0 %v4302
      %v4502 = vpop.f32.mrf.mxu0
      %v4503 = vadd.f32 0.0, %v4502
      %v4504 = vpop.f32.mrf.mxu0
      %4505 = vdwg.mxu0
      %v4506 = vadd.f32 %v4243, %v4378
      %v4507 = vadd.f32 %v4244, %v4380
      %v4508 = vadd.f32 %v4245, %v4383
      %v4509 = vadd.f32 %v4246, %v4385
      %v4510 = vadd.f32 %v4247, %v4388
      %v4511 = vadd.f32 %v4248, %v4390
      %v4512 = vadd.f32 %v4249, %v4393
      %v4513 = vadd.f32 %v4250, %v4395
      %v4514 = vadd.f32 %v4251, %v4398
      %v4515 = vadd.f32 %v4252, %v4400
      %v4516 = vadd.f32 %v4253, %v4403
      %v4517 = vadd.f32 %v4254, %v4405
      %v4518 = vadd.f32 %v4255, %v4408
      %v4519 = vadd.f32 %v4256, %v4410
      %v4520 = vadd.f32 %v4257, %v4413
      %v4521 = vadd.f32 %v4258, %v4415
      %v4522 = vadd.f32 %v4259, %v4418
      %v4523 = vadd.f32 %v4260, %v4420
      %v4524 = vadd.f32 %v4261, %v4423
      %v4525 = vadd.f32 %v4262, %v4425
      %v4526 = vadd.f32 %v4263, %v4428
      %v4527 = vadd.f32 %v4264, %v4430
      %v4528 = vadd.f32 %v4265, %v4433
      %v4529 = vadd.f32 %v4266, %v4435
      %v4530 = vadd.f32 %v4267, %v4438
      %v4531 = vadd.f32 %v4268, %v4440
      %v4532 = vadd.f32 %v4269, %v4443
      %v4533 = vadd.f32 %v4270, %v4445
      %v4534 = vadd.f32 %v4271, %v4448
      %v4535 = vadd.f32 %v4272, %v4450
      %v4536 = vadd.f32 %v4273, %v4453
      %v4537 = vadd.f32 %v4274, %v4455
      %v4538 = vadd.f32 %v4275, %v4458
      %v4539 = vadd.f32 %v4276, %v4460
      %v4540 = vadd.f32 %v4277, %v4463
      %v4541 = vadd.f32 %v4278, %v4465
      %v4542 = vadd.f32 %v4279, %v4468
      %v4543 = vadd.f32 %v4280, %v4470
      %v4544 = vadd.f32 %v4281, %v4473
      %v4545 = vadd.f32 %v4282, %v4475
      %v4546 = vadd.f32 %v4283, %v4478
      %v4547 = vadd.f32 %v4284, %v4480
      %v4548 = vadd.f32 %v4285, %v4483
      %v4549 = vadd.f32 %v4286, %v4485
      %v4550 = vadd.f32 %v4287, %v4488
      %v4551 = vadd.f32 %v4288, %v4490
      %v4552 = vadd.f32 %v4289, %v4493
      %v4553 = vadd.f32 %v4290, %v4495
      %v4554 = vadd.f32 %v4291, %v4498
      %v4555 = vadd.f32 %v4292, %v4500
      %v4556 = vadd.f32 %v4293, %v4503
      %v4557 = vrot.slane %v368, 3
      %v4558 = vrot.slane %v369, 3
      %v4559 = vsel %vm1754, %v4558, %v1751
      %v4560 = vsel %vm1754, %v4557, %v4558
      %v4561 = vsel %vm1754, %v3226, %v4557
      %v4562 = vpack.c.bf16 %v3229, %v1757
      %v4563 = vpack.c.bf16 %v3227, %v3228
      %v4564 = vpack.c.bf16 %v4560, %v4561
      %v4565 = vpack.c.bf16 %v4559, %v4559
      %s4566 = scalar_lea.vmem %s1, 896
      %v4567 = vld [vmem:[%s4566] sm:$0xf]
      %v4568 = vld [vmem:[%s4566 + $0x4] sm:$0xf]
      %v4569 = vld [vmem:[%s4566 + $0x8] sm:$0xf]
      %v4570 = vld [vmem:[%s4566 + $0xc] sm:$0xf]
      %v4571 = vld [vmem:[%s4566 + $0x10] sm:$0xf]
      %v4572 = vld [vmem:[%s4566 + $0x14] sm:$0xf]
      %v4573 = vld [vmem:[%s4566 + $0x18] sm:$0xf]
      %v4574 = vld [vmem:[%s4566 + $0x1c] sm:$0xf]
      %v4575 = vld [vmem:[%s4566 + $0x20] sm:$0xf]
      %v4576 = vld [vmem:[%s4566 + $0x24] sm:$0xf]
      %v4577 = vld [vmem:[%s4566 + $0x28] sm:$0xf]
      %v4578 = vld [vmem:[%s4566 + $0x2c] sm:$0xf]
      %v4579 = vld [vmem:[%s4566 + $0x30] sm:$0xf]
      %v4580 = vld [vmem:[%s4566 + $0x34] sm:$0xf]
      %v4581 = vld [vmem:[%s4566 + $0x38] sm:$0xf]
      %v4582 = vld [vmem:[%s4566 + $0x3c] sm:$0xf]
      %v4599 = vunpack.c.l.b16 %v4567
      %v4600 = vunpack.c.l.b16 %v4568
      %v4601 = vunpack.c.l.b16 %v4569
      %v4602 = vunpack.c.l.b16 %v4570
      %v4603 = vunpack.c.l.b16 %v4571
      %v4604 = vunpack.c.l.b16 %v4572
      %v4605 = vunpack.c.l.b16 %v4573
      %v4606 = vunpack.c.l.b16 %v4574
      %v4607 = vunpack.c.l.b16 %v4575
      %v4608 = vunpack.c.l.b16 %v4576
      %v4609 = vunpack.c.l.b16 %v4577
      %v4610 = vunpack.c.l.b16 %v4578
      %v4611 = vunpack.c.l.b16 %v4579
      %v4612 = vunpack.c.l.b16 %v4580
      %v4613 = vunpack.c.l.b16 %v4581
      %v4614 = vunpack.c.l.b16 %v4582
      %v4615 = vpack.c.b16 %v4600, %v4599
      %v4616 = vpack.c.b16 %v4602, %v4601
      %v4617 = vpack.c.b16 %v4604, %v4603
      %v4618 = vpack.c.b16 %v4606, %v4605
      %v4619 = vpack.c.b16 %v4608, %v4607
      %v4620 = vpack.c.b16 %v4610, %v4609
      %v4621 = vpack.c.b16 %v4612, %v4611
      %v4622 = vpack.c.b16 %v4614, %v4613
      %4631 = vmatpush.bf16.msra.mxu0 %v4622
      %4632 = vmatpush.bf16.msra.mxu0 %v4621
      %4633 = vmatpush.bf16.msra.mxu0 %v4620
      %4634 = vmatpush.bf16.msra.mxu0 %v4619
      %4635 = vmatpush.bf16.msra.mxu0 %v4618
      %4636 = vmatpush.bf16.msra.mxu0 %v4617
      %4637 = vmatpush.bf16.msra.mxu0 %v4616
      %4638 = vmatpush.bf16.msra.mxu0 %v4615
      %4639 = vmatmul.bf16.gmra.mxu0 %v1809
      %v4640 = vpop.f32.mrf.mxu0
      %v4641 = vadd.f32 0.0, %v4640
      %v4642 = vpop.f32.mrf.mxu0
      %v4643 = vadd.f32 0.0, %v4642
      %4644 = vmatmul.bf16.gmra.mxu0 %v1810
      %v4645 = vpop.f32.mrf.mxu0
      %v4646 = vadd.f32 0.0, %v4645
      %v4647 = vpop.f32.mrf.mxu0
      %v4648 = vadd.f32 0.0, %v4647
      %4649 = vmatmul.bf16.gmra.mxu0 %v1811
      %v4650 = vpop.f32.mrf.mxu0
      %v4651 = vadd.f32 0.0, %v4650
      %v4652 = vpop.f32.mrf.mxu0
      %v4653 = vadd.f32 0.0, %v4652
      %4654 = vmatmul.bf16.gmra.mxu0 %v1812
      %v4655 = vpop.f32.mrf.mxu0
      %v4656 = vadd.f32 0.0, %v4655
      %v4657 = vpop.f32.mrf.mxu0
      %v4658 = vadd.f32 0.0, %v4657
      %4659 = vmatmul.bf16.gmra.mxu0 %v1813
      %v4660 = vpop.f32.mrf.mxu0
      %v4661 = vadd.f32 0.0, %v4660
      %v4662 = vpop.f32.mrf.mxu0
      %v4663 = vadd.f32 0.0, %v4662
      %4664 = vmatmul.bf16.gmra.mxu0 %v1814
      %v4665 = vpop.f32.mrf.mxu0
      %v4666 = vadd.f32 0.0, %v4665
      %v4667 = vpop.f32.mrf.mxu0
      %v4668 = vadd.f32 0.0, %v4667
      %4669 = vmatmul.bf16.gmra.mxu0 %v1815
      %v4670 = vpop.f32.mrf.mxu0
      %v4671 = vadd.f32 0.0, %v4670
      %v4672 = vpop.f32.mrf.mxu0
      %v4673 = vadd.f32 0.0, %v4672
      %4674 = vmatmul.bf16.gmra.mxu0 %v1816
      %v4675 = vpop.f32.mrf.mxu0
      %v4676 = vadd.f32 0.0, %v4675
      %v4677 = vpop.f32.mrf.mxu0
      %v4678 = vadd.f32 0.0, %v4677
      %4679 = vmatmul.bf16.gmra.mxu0 %v1817
      %v4680 = vpop.f32.mrf.mxu0
      %v4681 = vadd.f32 0.0, %v4680
      %v4682 = vpop.f32.mrf.mxu0
      %v4683 = vadd.f32 0.0, %v4682
      %4684 = vmatmul.bf16.gmra.mxu0 %v1818
      %v4685 = vpop.f32.mrf.mxu0
      %v4686 = vadd.f32 0.0, %v4685
      %v4687 = vpop.f32.mrf.mxu0
      %v4688 = vadd.f32 0.0, %v4687
      %4689 = vmatmul.bf16.gmra.mxu0 %v1819
      %v4690 = vpop.f32.mrf.mxu0
      %v4691 = vadd.f32 0.0, %v4690
      %v4692 = vpop.f32.mrf.mxu0
      %v4693 = vadd.f32 0.0, %v4692
      %4694 = vmatmul.bf16.gmra.mxu0 %v1820
      %v4695 = vpop.f32.mrf.mxu0
      %v4696 = vadd.f32 0.0, %v4695
      %v4697 = vpop.f32.mrf.mxu0
      %v4698 = vadd.f32 0.0, %v4697
      %4699 = vmatmul.bf16.gmra.mxu0 %v1821
      %v4700 = vpop.f32.mrf.mxu0
      %v4701 = vadd.f32 0.0, %v4700
      %v4702 = vpop.f32.mrf.mxu0
      %v4703 = vadd.f32 0.0, %v4702
      %4704 = vmatmul.bf16.gmra.mxu0 %v1822
      %v4705 = vpop.f32.mrf.mxu0
      %v4706 = vadd.f32 0.0, %v4705
      %v4707 = vpop.f32.mrf.mxu0
      %v4708 = vadd.f32 0.0, %v4707
      %4709 = vmatmul.bf16.gmra.mxu0 %v1823
      %v4710 = vpop.f32.mrf.mxu0
      %v4711 = vadd.f32 0.0, %v4710
      %v4712 = vpop.f32.mrf.mxu0
      %v4713 = vadd.f32 0.0, %v4712
      %4714 = vmatmul.bf16.gmra.mxu0 %v1824
      %v4715 = vpop.f32.mrf.mxu0
      %v4716 = vadd.f32 0.0, %v4715
      %v4717 = vpop.f32.mrf.mxu0
      %v4718 = vadd.f32 0.0, %v4717
      %4719 = vmatmul.bf16.gmra.mxu0 %v1825
      %v4720 = vpop.f32.mrf.mxu0
      %v4721 = vadd.f32 0.0, %v4720
      %v4722 = vpop.f32.mrf.mxu0
      %v4723 = vadd.f32 0.0, %v4722
      %4724 = vmatmul.bf16.gmra.mxu0 %v1826
      %v4725 = vpop.f32.mrf.mxu0
      %v4726 = vadd.f32 0.0, %v4725
      %v4727 = vpop.f32.mrf.mxu0
      %v4728 = vadd.f32 0.0, %v4727
      %4729 = vmatmul.bf16.gmra.mxu0 %v1827
      %v4730 = vpop.f32.mrf.mxu0
      %v4731 = vadd.f32 0.0, %v4730
      %v4732 = vpop.f32.mrf.mxu0
      %v4733 = vadd.f32 0.0, %v4732
      %4734 = vmatmul.bf16.gmra.mxu0 %v1828
      %v4735 = vpop.f32.mrf.mxu0
      %v4736 = vadd.f32 0.0, %v4735
      %v4737 = vpop.f32.mrf.mxu0
      %v4738 = vadd.f32 0.0, %v4737
      %4739 = vmatmul.bf16.gmra.mxu0 %v1829
      %v4740 = vpop.f32.mrf.mxu0
      %v4741 = vadd.f32 0.0, %v4740
      %v4742 = vpop.f32.mrf.mxu0
      %v4743 = vadd.f32 0.0, %v4742
      %4744 = vmatmul.bf16.gmra.mxu0 %v1830
      %v4745 = vpop.f32.mrf.mxu0
      %v4746 = vadd.f32 0.0, %v4745
      %v4747 = vpop.f32.mrf.mxu0
      %v4748 = vadd.f32 0.0, %v4747
      %4749 = vmatmul.bf16.gmra.mxu0 %v4562
      %v4750 = vpop.f32.mrf.mxu0
      %v4751 = vadd.f32 0.0, %v4750
      %v4752 = vpop.f32.mrf.mxu0
      %v4753 = vadd.f32 0.0, %v4752
      %4754 = vmatmul.bf16.gmra.mxu0 %v4563
      %v4755 = vpop.f32.mrf.mxu0
      %v4756 = vadd.f32 0.0, %v4755
      %v4757 = vpop.f32.mrf.mxu0
      %v4758 = vadd.f32 0.0, %v4757
      %4759 = vmatmul.bf16.gmra.mxu0 %v4564
      %v4760 = vpop.f32.mrf.mxu0
      %v4761 = vadd.f32 0.0, %v4760
      %v4762 = vpop.f32.mrf.mxu0
      %v4763 = vadd.f32 0.0, %v4762
      %4764 = vmatmul.bf16.gmra.mxu0 %v4565
      %v4765 = vpop.f32.mrf.mxu0
      %v4766 = vadd.f32 0.0, %v4765
      %v4767 = vpop.f32.mrf.mxu0
      %4768 = vdwg.mxu0
      %v4769 = vadd.f32 %v4506, %v4641
      %v4770 = vadd.f32 %v4507, %v4643
      %v4771 = vadd.f32 %v4508, %v4646
      %v4772 = vadd.f32 %v4509, %v4648
      %v4773 = vadd.f32 %v4510, %v4651
      %v4774 = vadd.f32 %v4511, %v4653
      %v4775 = vadd.f32 %v4512, %v4656
      %v4776 = vadd.f32 %v4513, %v4658
      %v4777 = vadd.f32 %v4514, %v4661
      %v4778 = vadd.f32 %v4515, %v4663
      %v4779 = vadd.f32 %v4516, %v4666
      %v4780 = vadd.f32 %v4517, %v4668
      %v4781 = vadd.f32 %v4518, %v4671
      %v4782 = vadd.f32 %v4519, %v4673
      %v4783 = vadd.f32 %v4520, %v4676
      %v4784 = vadd.f32 %v4521, %v4678
      %v4785 = vadd.f32 %v4522, %v4681
      %v4786 = vadd.f32 %v4523, %v4683
      %v4787 = vadd.f32 %v4524, %v4686
      %v4788 = vadd.f32 %v4525, %v4688
      %v4789 = vadd.f32 %v4526, %v4691
      %v4790 = vadd.f32 %v4527, %v4693
      %v4791 = vadd.f32 %v4528, %v4696
      %v4792 = vadd.f32 %v4529, %v4698
      %v4793 = vadd.f32 %v4530, %v4701
      %v4794 = vadd.f32 %v4531, %v4703
      %v4795 = vadd.f32 %v4532, %v4706
      %v4796 = vadd.f32 %v4533, %v4708
      %v4797 = vadd.f32 %v4534, %v4711
      %v4798 = vadd.f32 %v4535, %v4713
      %v4799 = vadd.f32 %v4536, %v4716
      %v4800 = vadd.f32 %v4537, %v4718
      %v4801 = vadd.f32 %v4538, %v4721
      %v4802 = vadd.f32 %v4539, %v4723
      %v4803 = vadd.f32 %v4540, %v4726
      %v4804 = vadd.f32 %v4541, %v4728
      %v4805 = vadd.f32 %v4542, %v4731
      %v4806 = vadd.f32 %v4543, %v4733
      %v4807 = vadd.f32 %v4544, %v4736
      %v4808 = vadd.f32 %v4545, %v4738
      %v4809 = vadd.f32 %v4546, %v4741
      %v4810 = vadd.f32 %v4547, %v4743
      %v4811 = vadd.f32 %v4548, %v4746
      %v4812 = vadd.f32 %v4549, %v4748
      %v4813 = vadd.f32 %v4550, %v4751
      %v4814 = vadd.f32 %v4551, %v4753
      %v4815 = vadd.f32 %v4552, %v4756
      %v4816 = vadd.f32 %v4553, %v4758
      %v4817 = vadd.f32 %v4554, %v4761
      %v4818 = vadd.f32 %v4555, %v4763
      %v4819 = vadd.f32 %v4556, %v4766
      %v4820 = vpack.c.bf16 %v3514, %v2089
      %v4821 = vpack.c.bf16 %v3512, %v3513
      %v4822 = vpack.c.bf16 %v426, %v426
      %s4823 = scalar_lea.vmem %s1, 960
      %v4824 = vld [vmem:[%s4823] sm:$0xf]
      %v4825 = vld [vmem:[%s4823 + $0x4] sm:$0xf]
      %v4826 = vld [vmem:[%s4823 + $0x8] sm:$0xf]
      %v4827 = vld [vmem:[%s4823 + $0xc] sm:$0xf]
      %v4828 = vld [vmem:[%s4823 + $0x10] sm:$0xf]
      %v4829 = vld [vmem:[%s4823 + $0x14] sm:$0xf]
      %v4830 = vld [vmem:[%s4823 + $0x18] sm:$0xf]
      %v4831 = vld [vmem:[%s4823 + $0x1c] sm:$0xf]
      %v4832 = vld [vmem:[%s4823 + $0x20] sm:$0xf]
      %v4833 = vld [vmem:[%s4823 + $0x24] sm:$0xf]
      %v4834 = vld [vmem:[%s4823 + $0x28] sm:$0xf]
      %v4835 = vld [vmem:[%s4823 + $0x2c] sm:$0xf]
      %v4836 = vld [vmem:[%s4823 + $0x30] sm:$0xf]
      %v4837 = vld [vmem:[%s4823 + $0x34] sm:$0xf]
      %v4838 = vld [vmem:[%s4823 + $0x38] sm:$0xf]
      %v4839 = vld [vmem:[%s4823 + $0x3c] sm:$0xf]
      %v4856 = vunpack.c.l.b16 %v4824
      %v4857 = vunpack.c.l.b16 %v4825
      %v4858 = vunpack.c.l.b16 %v4826
      %v4859 = vunpack.c.l.b16 %v4827
      %v4860 = vunpack.c.l.b16 %v4828
      %v4861 = vunpack.c.l.b16 %v4829
      %v4862 = vunpack.c.l.b16 %v4830
      %v4863 = vunpack.c.l.b16 %v4831
      %v4864 = vunpack.c.l.b16 %v4832
      %v4865 = vunpack.c.l.b16 %v4833
      %v4866 = vunpack.c.l.b16 %v4834
      %v4867 = vunpack.c.l.b16 %v4835
      %v4868 = vunpack.c.l.b16 %v4836
      %v4869 = vunpack.c.l.b16 %v4837
      %v4870 = vunpack.c.l.b16 %v4838
      %v4871 = vunpack.c.l.b16 %v4839
      %v4872 = vpack.c.b16 %v4857, %v4856
      %v4873 = vpack.c.b16 %v4859, %v4858
      %v4874 = vpack.c.b16 %v4861, %v4860
      %v4875 = vpack.c.b16 %v4863, %v4862
      %v4876 = vpack.c.b16 %v4865, %v4864
      %v4877 = vpack.c.b16 %v4867, %v4866
      %v4878 = vpack.c.b16 %v4869, %v4868
      %v4879 = vpack.c.b16 %v4871, %v4870
      %4888 = vmatpush.bf16.msra.mxu0 %v4879
      %4889 = vmatpush.bf16.msra.mxu0 %v4878
      %4890 = vmatpush.bf16.msra.mxu0 %v4877
      %4891 = vmatpush.bf16.msra.mxu0 %v4876
      %4892 = vmatpush.bf16.msra.mxu0 %v4875
      %4893 = vmatpush.bf16.msra.mxu0 %v4874
      %4894 = vmatpush.bf16.msra.mxu0 %v4873
      %4895 = vmatpush.bf16.msra.mxu0 %v4872
      %4896 = vmatmul.bf16.gmra.mxu0 %v2095
      %v4897 = vpop.f32.mrf.mxu0
      %v4898 = vadd.f32 0.0, %v4897
      %v4899 = vpop.f32.mrf.mxu0
      %v4900 = vadd.f32 0.0, %v4899
      %4901 = vmatmul.bf16.gmra.mxu0 %v2096
      %v4902 = vpop.f32.mrf.mxu0
      %v4903 = vadd.f32 0.0, %v4902
      %v4904 = vpop.f32.mrf.mxu0
      %v4905 = vadd.f32 0.0, %v4904
      %4906 = vmatmul.bf16.gmra.mxu0 %v2097
      %v4907 = vpop.f32.mrf.mxu0
      %v4908 = vadd.f32 0.0, %v4907
      %v4909 = vpop.f32.mrf.mxu0
      %v4910 = vadd.f32 0.0, %v4909
      %4911 = vmatmul.bf16.gmra.mxu0 %v2098
      %v4912 = vpop.f32.mrf.mxu0
      %v4913 = vadd.f32 0.0, %v4912
      %v4914 = vpop.f32.mrf.mxu0
      %v4915 = vadd.f32 0.0, %v4914
      %4916 = vmatmul.bf16.gmra.mxu0 %v2099
      %v4917 = vpop.f32.mrf.mxu0
      %v4918 = vadd.f32 0.0, %v4917
      %v4919 = vpop.f32.mrf.mxu0
      %v4920 = vadd.f32 0.0, %v4919
      %4921 = vmatmul.bf16.gmra.mxu0 %v2100
      %v4922 = vpop.f32.mrf.mxu0
      %v4923 = vadd.f32 0.0, %v4922
      %v4924 = vpop.f32.mrf.mxu0
      %v4925 = vadd.f32 0.0, %v4924
      %4926 = vmatmul.bf16.gmra.mxu0 %v2101
      %v4927 = vpop.f32.mrf.mxu0
      %v4928 = vadd.f32 0.0, %v4927
      %v4929 = vpop.f32.mrf.mxu0
      %v4930 = vadd.f32 0.0, %v4929
      %4931 = vmatmul.bf16.gmra.mxu0 %v2102
      %v4932 = vpop.f32.mrf.mxu0
      %v4933 = vadd.f32 0.0, %v4932
      %v4934 = vpop.f32.mrf.mxu0
      %v4935 = vadd.f32 0.0, %v4934
      %4936 = vmatmul.bf16.gmra.mxu0 %v2103
      %v4937 = vpop.f32.mrf.mxu0
      %v4938 = vadd.f32 0.0, %v4937
      %v4939 = vpop.f32.mrf.mxu0
      %v4940 = vadd.f32 0.0, %v4939
      %4941 = vmatmul.bf16.gmra.mxu0 %v2104
      %v4942 = vpop.f32.mrf.mxu0
      %v4943 = vadd.f32 0.0, %v4942
      %v4944 = vpop.f32.mrf.mxu0
      %v4945 = vadd.f32 0.0, %v4944
      %4946 = vmatmul.bf16.gmra.mxu0 %v2105
      %v4947 = vpop.f32.mrf.mxu0
      %v4948 = vadd.f32 0.0, %v4947
      %v4949 = vpop.f32.mrf.mxu0
      %v4950 = vadd.f32 0.0, %v4949
      %4951 = vmatmul.bf16.gmra.mxu0 %v2106
      %v4952 = vpop.f32.mrf.mxu0
      %v4953 = vadd.f32 0.0, %v4952
      %v4954 = vpop.f32.mrf.mxu0
      %v4955 = vadd.f32 0.0, %v4954
      %4956 = vmatmul.bf16.gmra.mxu0 %v2107
      %v4957 = vpop.f32.mrf.mxu0
      %v4958 = vadd.f32 0.0, %v4957
      %v4959 = vpop.f32.mrf.mxu0
      %v4960 = vadd.f32 0.0, %v4959
      %4961 = vmatmul.bf16.gmra.mxu0 %v2108
      %v4962 = vpop.f32.mrf.mxu0
      %v4963 = vadd.f32 0.0, %v4962
      %v4964 = vpop.f32.mrf.mxu0
      %v4965 = vadd.f32 0.0, %v4964
      %4966 = vmatmul.bf16.gmra.mxu0 %v2109
      %v4967 = vpop.f32.mrf.mxu0
      %v4968 = vadd.f32 0.0, %v4967
      %v4969 = vpop.f32.mrf.mxu0
      %v4970 = vadd.f32 0.0, %v4969
      %4971 = vmatmul.bf16.gmra.mxu0 %v2110
      %v4972 = vpop.f32.mrf.mxu0
      %v4973 = vadd.f32 0.0, %v4972
      %v4974 = vpop.f32.mrf.mxu0
      %v4975 = vadd.f32 0.0, %v4974
      %4976 = vmatmul.bf16.gmra.mxu0 %v2111
      %v4977 = vpop.f32.mrf.mxu0
      %v4978 = vadd.f32 0.0, %v4977
      %v4979 = vpop.f32.mrf.mxu0
      %v4980 = vadd.f32 0.0, %v4979
      %4981 = vmatmul.bf16.gmra.mxu0 %v2112
      %v4982 = vpop.f32.mrf.mxu0
      %v4983 = vadd.f32 0.0, %v4982
      %v4984 = vpop.f32.mrf.mxu0
      %v4985 = vadd.f32 0.0, %v4984
      %4986 = vmatmul.bf16.gmra.mxu0 %v2113
      %v4987 = vpop.f32.mrf.mxu0
      %v4988 = vadd.f32 0.0, %v4987
      %v4989 = vpop.f32.mrf.mxu0
      %v4990 = vadd.f32 0.0, %v4989
      %4991 = vmatmul.bf16.gmra.mxu0 %v2114
      %v4992 = vpop.f32.mrf.mxu0
      %v4993 = vadd.f32 0.0, %v4992
      %v4994 = vpop.f32.mrf.mxu0
      %v4995 = vadd.f32 0.0, %v4994
      %4996 = vmatmul.bf16.gmra.mxu0 %v2115
      %v4997 = vpop.f32.mrf.mxu0
      %v4998 = vadd.f32 0.0, %v4997
      %v4999 = vpop.f32.mrf.mxu0
      %v5000 = vadd.f32 0.0, %v4999
      %5001 = vmatmul.bf16.gmra.mxu0 %v2116
      %v5002 = vpop.f32.mrf.mxu0
      %v5003 = vadd.f32 0.0, %v5002
      %v5004 = vpop.f32.mrf.mxu0
      %v5005 = vadd.f32 0.0, %v5004
      %5006 = vmatmul.bf16.gmra.mxu0 %v4820
      %v5007 = vpop.f32.mrf.mxu0
      %v5008 = vadd.f32 0.0, %v5007
      %v5009 = vpop.f32.mrf.mxu0
      %v5010 = vadd.f32 0.0, %v5009
      %5011 = vmatmul.bf16.gmra.mxu0 %v4821
      %v5012 = vpop.f32.mrf.mxu0
      %v5013 = vadd.f32 0.0, %v5012
      %v5014 = vpop.f32.mrf.mxu0
      %v5015 = vadd.f32 0.0, %v5014
      %5016 = vmatmul.bf16.gmra.mxu0 %v477
      %v5017 = vpop.f32.mrf.mxu0
      %v5018 = vadd.f32 0.0, %v5017
      %v5019 = vpop.f32.mrf.mxu0
      %v5020 = vadd.f32 0.0, %v5019
      %5021 = vmatmul.bf16.gmra.mxu0 %v4822
      %v5022 = vpop.f32.mrf.mxu0
      %v5023 = vadd.f32 0.0, %v5022
      %v5024 = vpop.f32.mrf.mxu0
      %5025 = vdwg.mxu0
      %v5026 = vadd.f32 %v4769, %v4898
      %v5027 = vadd.f32 %v4770, %v4900
      %v5028 = vadd.f32 %v4771, %v4903
      %v5029 = vadd.f32 %v4772, %v4905
      %v5030 = vadd.f32 %v4773, %v4908
      %v5031 = vadd.f32 %v4774, %v4910
      %v5032 = vadd.f32 %v4775, %v4913
      %v5033 = vadd.f32 %v4776, %v4915
      %v5034 = vadd.f32 %v4777, %v4918
      %v5035 = vadd.f32 %v4778, %v4920
      %v5036 = vadd.f32 %v4779, %v4923
      %v5037 = vadd.f32 %v4780, %v4925
      %v5038 = vadd.f32 %v4781, %v4928
      %v5039 = vadd.f32 %v4782, %v4930
      %v5040 = vadd.f32 %v4783, %v4933
      %v5041 = vadd.f32 %v4784, %v4935
      %v5042 = vadd.f32 %v4785, %v4938
      %v5043 = vadd.f32 %v4786, %v4940
      %v5044 = vadd.f32 %v4787, %v4943
      %v5045 = vadd.f32 %v4788, %v4945
      %v5046 = vadd.f32 %v4789, %v4948
      %v5047 = vadd.f32 %v4790, %v4950
      %v5048 = vadd.f32 %v4791, %v4953
      %v5049 = vadd.f32 %v4792, %v4955
      %v5050 = vadd.f32 %v4793, %v4958
      %v5051 = vadd.f32 %v4794, %v4960
      %v5052 = vadd.f32 %v4795, %v4963
      %v5053 = vadd.f32 %v4796, %v4965
      %v5054 = vadd.f32 %v4797, %v4968
      %v5055 = vadd.f32 %v4798, %v4970
      %v5056 = vadd.f32 %v4799, %v4973
      %v5057 = vadd.f32 %v4800, %v4975
      %v5058 = vadd.f32 %v4801, %v4978
      %v5059 = vadd.f32 %v4802, %v4980
      %v5060 = vadd.f32 %v4803, %v4983
      %v5061 = vadd.f32 %v4804, %v4985
      %v5062 = vadd.f32 %v4805, %v4988
      %v5063 = vadd.f32 %v4806, %v4990
      %v5064 = vadd.f32 %v4807, %v4993
      %v5065 = vadd.f32 %v4808, %v4995
      %v5066 = vadd.f32 %v4809, %v4998
      %v5067 = vadd.f32 %v4810, %v5000
      %v5068 = vadd.f32 %v4811, %v5003
      %v5069 = vadd.f32 %v4812, %v5005
      %v5070 = vadd.f32 %v4813, %v5008
      %v5071 = vadd.f32 %v4814, %v5010
      %v5072 = vadd.f32 %v4815, %v5013
      %v5073 = vadd.f32 %v4816, %v5015
      %v5074 = vadd.f32 %v4817, %v5018
      %v5075 = vadd.f32 %v4818, %v5020
      %v5076 = vadd.f32 %v4819, %v5023
      %v5077 = vpack.c.bf16 %v367, %v366
      %v5078 = vpack.c.bf16 %v369, %v368
      %v5079 = vpack.c.bf16 %v372, %v372
      %s5080 = scalar_lea.vmem %s1, 1024
      %v5081 = vld [vmem:[%s5080] sm:$0xf]
      %v5082 = vld [vmem:[%s5080 + $0x4] sm:$0xf]
      %v5083 = vld [vmem:[%s5080 + $0x8] sm:$0xf]
      %v5084 = vld [vmem:[%s5080 + $0xc] sm:$0xf]
      %v5085 = vld [vmem:[%s5080 + $0x10] sm:$0xf]
      %v5086 = vld [vmem:[%s5080 + $0x14] sm:$0xf]
      %v5087 = vld [vmem:[%s5080 + $0x18] sm:$0xf]
      %v5088 = vld [vmem:[%s5080 + $0x1c] sm:$0xf]
      %v5089 = vld [vmem:[%s5080 + $0x20] sm:$0xf]
      %v5090 = vld [vmem:[%s5080 + $0x24] sm:$0xf]
      %v5091 = vld [vmem:[%s5080 + $0x28] sm:$0xf]
      %v5092 = vld [vmem:[%s5080 + $0x2c] sm:$0xf]
      %v5093 = vld [vmem:[%s5080 + $0x30] sm:$0xf]
      %v5094 = vld [vmem:[%s5080 + $0x34] sm:$0xf]
      %v5095 = vld [vmem:[%s5080 + $0x38] sm:$0xf]
      %v5096 = vld [vmem:[%s5080 + $0x3c] sm:$0xf]
      %v5113 = vunpack.c.l.b16 %v5081
      %v5114 = vunpack.c.l.b16 %v5082
      %v5115 = vunpack.c.l.b16 %v5083
      %v5116 = vunpack.c.l.b16 %v5084
      %v5117 = vunpack.c.l.b16 %v5085
      %v5118 = vunpack.c.l.b16 %v5086
      %v5119 = vunpack.c.l.b16 %v5087
      %v5120 = vunpack.c.l.b16 %v5088
      %v5121 = vunpack.c.l.b16 %v5089
      %v5122 = vunpack.c.l.b16 %v5090
      %v5123 = vunpack.c.l.b16 %v5091
      %v5124 = vunpack.c.l.b16 %v5092
      %v5125 = vunpack.c.l.b16 %v5093
      %v5126 = vunpack.c.l.b16 %v5094
      %v5127 = vunpack.c.l.b16 %v5095
      %v5128 = vunpack.c.l.b16 %v5096
      %v5129 = vpack.c.b16 %v5114, %v5113
      %v5130 = vpack.c.b16 %v5116, %v5115
      %v5131 = vpack.c.b16 %v5118, %v5117
      %v5132 = vpack.c.b16 %v5120, %v5119
      %v5133 = vpack.c.b16 %v5122, %v5121
      %v5134 = vpack.c.b16 %v5124, %v5123
      %v5135 = vpack.c.b16 %v5126, %v5125
      %v5136 = vpack.c.b16 %v5128, %v5127
      %5145 = vmatpush.bf16.msra.mxu0 %v5136
      %5146 = vmatpush.bf16.msra.mxu0 %v5135
      %5147 = vmatpush.bf16.msra.mxu0 %v5134
      %5148 = vmatpush.bf16.msra.mxu0 %v5133
      %5149 = vmatpush.bf16.msra.mxu0 %v5132
      %5150 = vmatpush.bf16.msra.mxu0 %v5131
      %5151 = vmatpush.bf16.msra.mxu0 %v5130
      %5152 = vmatpush.bf16.msra.mxu0 %v5129
      %5153 = vmatmul.bf16.gmra.mxu0 %v2375
      %v5154 = vpop.f32.mrf.mxu0
      %v5155 = vadd.f32 0.0, %v5154
      %v5156 = vpop.f32.mrf.mxu0
      %v5157 = vadd.f32 0.0, %v5156
      %5158 = vmatmul.bf16.gmra.mxu0 %v2376
      %v5159 = vpop.f32.mrf.mxu0
      %v5160 = vadd.f32 0.0, %v5159
      %v5161 = vpop.f32.mrf.mxu0
      %v5162 = vadd.f32 0.0, %v5161
      %5163 = vmatmul.bf16.gmra.mxu0 %v2377
      %v5164 = vpop.f32.mrf.mxu0
      %v5165 = vadd.f32 0.0, %v5164
      %v5166 = vpop.f32.mrf.mxu0
      %v5167 = vadd.f32 0.0, %v5166
      %5168 = vmatmul.bf16.gmra.mxu0 %v2378
      %v5169 = vpop.f32.mrf.mxu0
      %v5170 = vadd.f32 0.0, %v5169
      %v5171 = vpop.f32.mrf.mxu0
      %v5172 = vadd.f32 0.0, %v5171
      %5173 = vmatmul.bf16.gmra.mxu0 %v2379
      %v5174 = vpop.f32.mrf.mxu0
      %v5175 = vadd.f32 0.0, %v5174
      %v5176 = vpop.f32.mrf.mxu0
      %v5177 = vadd.f32 0.0, %v5176
      %5178 = vmatmul.bf16.gmra.mxu0 %v2380
      %v5179 = vpop.f32.mrf.mxu0
      %v5180 = vadd.f32 0.0, %v5179
      %v5181 = vpop.f32.mrf.mxu0
      %v5182 = vadd.f32 0.0, %v5181
      %5183 = vmatmul.bf16.gmra.mxu0 %v2381
      %v5184 = vpop.f32.mrf.mxu0
      %v5185 = vadd.f32 0.0, %v5184
      %v5186 = vpop.f32.mrf.mxu0
      %v5187 = vadd.f32 0.0, %v5186
      %5188 = vmatmul.bf16.gmra.mxu0 %v2382
      %v5189 = vpop.f32.mrf.mxu0
      %v5190 = vadd.f32 0.0, %v5189
      %v5191 = vpop.f32.mrf.mxu0
      %v5192 = vadd.f32 0.0, %v5191
      %5193 = vmatmul.bf16.gmra.mxu0 %v2383
      %v5194 = vpop.f32.mrf.mxu0
      %v5195 = vadd.f32 0.0, %v5194
      %v5196 = vpop.f32.mrf.mxu0
      %v5197 = vadd.f32 0.0, %v5196
      %5198 = vmatmul.bf16.gmra.mxu0 %v2384
      %v5199 = vpop.f32.mrf.mxu0
      %v5200 = vadd.f32 0.0, %v5199
      %v5201 = vpop.f32.mrf.mxu0
      %v5202 = vadd.f32 0.0, %v5201
      %5203 = vmatmul.bf16.gmra.mxu0 %v2385
      %v5204 = vpop.f32.mrf.mxu0
      %v5205 = vadd.f32 0.0, %v5204
      %v5206 = vpop.f32.mrf.mxu0
      %v5207 = vadd.f32 0.0, %v5206
      %5208 = vmatmul.bf16.gmra.mxu0 %v2386
      %v5209 = vpop.f32.mrf.mxu0
      %v5210 = vadd.f32 0.0, %v5209
      %v5211 = vpop.f32.mrf.mxu0
      %v5212 = vadd.f32 0.0, %v5211
      %5213 = vmatmul.bf16.gmra.mxu0 %v2387
      %v5214 = vpop.f32.mrf.mxu0
      %v5215 = vadd.f32 0.0, %v5214
      %v5216 = vpop.f32.mrf.mxu0
      %v5217 = vadd.f32 0.0, %v5216
      %5218 = vmatmul.bf16.gmra.mxu0 %v2388
      %v5219 = vpop.f32.mrf.mxu0
      %v5220 = vadd.f32 0.0, %v5219
      %v5221 = vpop.f32.mrf.mxu0
      %v5222 = vadd.f32 0.0, %v5221
      %5223 = vmatmul.bf16.gmra.mxu0 %v2389
      %v5224 = vpop.f32.mrf.mxu0
      %v5225 = vadd.f32 0.0, %v5224
      %v5226 = vpop.f32.mrf.mxu0
      %v5227 = vadd.f32 0.0, %v5226
      %5228 = vmatmul.bf16.gmra.mxu0 %v2390
      %v5229 = vpop.f32.mrf.mxu0
      %v5230 = vadd.f32 0.0, %v5229
      %v5231 = vpop.f32.mrf.mxu0
      %v5232 = vadd.f32 0.0, %v5231
      %5233 = vmatmul.bf16.gmra.mxu0 %v2391
      %v5234 = vpop.f32.mrf.mxu0
      %v5235 = vadd.f32 0.0, %v5234
      %v5236 = vpop.f32.mrf.mxu0
      %v5237 = vadd.f32 0.0, %v5236
      %5238 = vmatmul.bf16.gmra.mxu0 %v2392
      %v5239 = vpop.f32.mrf.mxu0
      %v5240 = vadd.f32 0.0, %v5239
      %v5241 = vpop.f32.mrf.mxu0
      %v5242 = vadd.f32 0.0, %v5241
      %5243 = vmatmul.bf16.gmra.mxu0 %v2393
      %v5244 = vpop.f32.mrf.mxu0
      %v5245 = vadd.f32 0.0, %v5244
      %v5246 = vpop.f32.mrf.mxu0
      %v5247 = vadd.f32 0.0, %v5246
      %5248 = vmatmul.bf16.gmra.mxu0 %v2394
      %v5249 = vpop.f32.mrf.mxu0
      %v5250 = vadd.f32 0.0, %v5249
      %v5251 = vpop.f32.mrf.mxu0
      %v5252 = vadd.f32 0.0, %v5251
      %5253 = vmatmul.bf16.gmra.mxu0 %v2395
      %v5254 = vpop.f32.mrf.mxu0
      %v5255 = vadd.f32 0.0, %v5254
      %v5256 = vpop.f32.mrf.mxu0
      %v5257 = vadd.f32 0.0, %v5256
      %5258 = vmatmul.bf16.gmra.mxu0 %v2396
      %v5259 = vpop.f32.mrf.mxu0
      %v5260 = vadd.f32 0.0, %v5259
      %v5261 = vpop.f32.mrf.mxu0
      %v5262 = vadd.f32 0.0, %v5261
      %5263 = vmatmul.bf16.gmra.mxu0 %v5077
      %v5264 = vpop.f32.mrf.mxu0
      %v5265 = vadd.f32 0.0, %v5264
      %v5266 = vpop.f32.mrf.mxu0
      %v5267 = vadd.f32 0.0, %v5266
      %5268 = vmatmul.bf16.gmra.mxu0 %v5078
      %v5269 = vpop.f32.mrf.mxu0
      %v5270 = vadd.f32 0.0, %v5269
      %v5271 = vpop.f32.mrf.mxu0
      %v5272 = vadd.f32 0.0, %v5271
      %5273 = vmatmul.bf16.gmra.mxu0 %v519
      %v5274 = vpop.f32.mrf.mxu0
      %v5275 = vadd.f32 0.0, %v5274
      %v5276 = vpop.f32.mrf.mxu0
      %v5277 = vadd.f32 0.0, %v5276
      %5278 = vmatmul.bf16.gmra.mxu0 %v5079
      %v5279 = vpop.f32.mrf.mxu0
      %v5280 = vadd.f32 0.0, %v5279
      %v5281 = vpop.f32.mrf.mxu0
      %5282 = vdwg.mxu0
      %v5283 = vadd.f32 %v5026, %v5155
      %v5284 = vadd.f32 %v5027, %v5157
      %v5285 = vadd.f32 %v5028, %v5160
      %v5286 = vadd.f32 %v5029, %v5162
      %v5287 = vadd.f32 %v5030, %v5165
      %v5288 = vadd.f32 %v5031, %v5167
      %v5289 = vadd.f32 %v5032, %v5170
      %v5290 = vadd.f32 %v5033, %v5172
      %v5291 = vadd.f32 %v5034, %v5175
      %v5292 = vadd.f32 %v5035, %v5177
      %v5293 = vadd.f32 %v5036, %v5180
      %v5294 = vadd.f32 %v5037, %v5182
      %v5295 = vadd.f32 %v5038, %v5185
      %v5296 = vadd.f32 %v5039, %v5187
      %v5297 = vadd.f32 %v5040, %v5190
      %v5298 = vadd.f32 %v5041, %v5192
      %v5299 = vadd.f32 %v5042, %v5195
      %v5300 = vadd.f32 %v5043, %v5197
      %v5301 = vadd.f32 %v5044, %v5200
      %v5302 = vadd.f32 %v5045, %v5202
      %v5303 = vadd.f32 %v5046, %v5205
      %v5304 = vadd.f32 %v5047, %v5207
      %v5305 = vadd.f32 %v5048, %v5210
      %v5306 = vadd.f32 %v5049, %v5212
      %v5307 = vadd.f32 %v5050, %v5215
      %v5308 = vadd.f32 %v5051, %v5217
      %v5309 = vadd.f32 %v5052, %v5220
      %v5310 = vadd.f32 %v5053, %v5222
      %v5311 = vadd.f32 %v5054, %v5225
      %v5312 = vadd.f32 %v5055, %v5227
      %v5313 = vadd.f32 %v5056, %v5230
      %v5314 = vadd.f32 %v5057, %v5232
      %v5315 = vadd.f32 %v5058, %v5235
      %v5316 = vadd.f32 %v5059, %v5237
      %v5317 = vadd.f32 %v5060, %v5240
      %v5318 = vadd.f32 %v5061, %v5242
      %v5319 = vadd.f32 %v5062, %v5245
      %v5320 = vadd.f32 %v5063, %v5247
      %v5321 = vadd.f32 %v5064, %v5250
      %v5322 = vadd.f32 %v5065, %v5252
      %v5323 = vadd.f32 %v5066, %v5255
      %v5324 = vadd.f32 %v5067, %v5257
      %v5325 = vadd.f32 %v5068, %v5260
      %v5326 = vadd.f32 %v5069, %v5262
      %v5327 = vadd.f32 %v5070, %v5265
      %v5328 = vadd.f32 %v5071, %v5267
      %v5329 = vadd.f32 %v5072, %v5270
      %v5330 = vadd.f32 %v5073, %v5272
      %v5331 = vadd.f32 %v5074, %v5275
      %v5332 = vadd.f32 %v5075, %v5277
      %v5333 = vadd.f32 %v5076, %v5280
      %v5334 = vpack.c.bf16 %v4035, %v2655
      %v5335 = vpack.c.bf16 %v4033, %v4034
      %v5336 = vpack.c.bf16 %v1037, %v1037
      %s5337 = scalar_lea.vmem %s1, 1088
      %v5338 = vld [vmem:[%s5337] sm:$0xf]
      %v5339 = vld [vmem:[%s5337 + $0x4] sm:$0xf]
      %v5340 = vld [vmem:[%s5337 + $0x8] sm:$0xf]
      %v5341 = vld [vmem:[%s5337 + $0xc] sm:$0xf]
      %v5342 = vld [vmem:[%s5337 + $0x10] sm:$0xf]
      %v5343 = vld [vmem:[%s5337 + $0x14] sm:$0xf]
      %v5344 = vld [vmem:[%s5337 + $0x18] sm:$0xf]
      %v5345 = vld [vmem:[%s5337 + $0x1c] sm:$0xf]
      %v5346 = vld [vmem:[%s5337 + $0x20] sm:$0xf]
      %v5347 = vld [vmem:[%s5337 + $0x24] sm:$0xf]
      %v5348 = vld [vmem:[%s5337 + $0x28] sm:$0xf]
      %v5349 = vld [vmem:[%s5337 + $0x2c] sm:$0xf]
      %v5350 = vld [vmem:[%s5337 + $0x30] sm:$0xf]
      %v5351 = vld [vmem:[%s5337 + $0x34] sm:$0xf]
      %v5352 = vld [vmem:[%s5337 + $0x38] sm:$0xf]
      %v5353 = vld [vmem:[%s5337 + $0x3c] sm:$0xf]
      %v5370 = vunpack.c.l.b16 %v5338
      %v5371 = vunpack.c.l.b16 %v5339
      %v5372 = vunpack.c.l.b16 %v5340
      %v5373 = vunpack.c.l.b16 %v5341
      %v5374 = vunpack.c.l.b16 %v5342
      %v5375 = vunpack.c.l.b16 %v5343
      %v5376 = vunpack.c.l.b16 %v5344
      %v5377 = vunpack.c.l.b16 %v5345
      %v5378 = vunpack.c.l.b16 %v5346
      %v5379 = vunpack.c.l.b16 %v5347
      %v5380 = vunpack.c.l.b16 %v5348
      %v5381 = vunpack.c.l.b16 %v5349
      %v5382 = vunpack.c.l.b16 %v5350
      %v5383 = vunpack.c.l.b16 %v5351
      %v5384 = vunpack.c.l.b16 %v5352
      %v5385 = vunpack.c.l.b16 %v5353
      %v5386 = vpack.c.b16 %v5371, %v5370
      %v5387 = vpack.c.b16 %v5373, %v5372
      %v5388 = vpack.c.b16 %v5375, %v5374
      %v5389 = vpack.c.b16 %v5377, %v5376
      %v5390 = vpack.c.b16 %v5379, %v5378
      %v5391 = vpack.c.b16 %v5381, %v5380
      %v5392 = vpack.c.b16 %v5383, %v5382
      %v5393 = vpack.c.b16 %v5385, %v5384
      %5402 = vmatpush.bf16.msra.mxu0 %v5393
      %5403 = vmatpush.bf16.msra.mxu0 %v5392
      %5404 = vmatpush.bf16.msra.mxu0 %v5391
      %5405 = vmatpush.bf16.msra.mxu0 %v5390
      %5406 = vmatpush.bf16.msra.mxu0 %v5389
      %5407 = vmatpush.bf16.msra.mxu0 %v5388
      %5408 = vmatpush.bf16.msra.mxu0 %v5387
      %5409 = vmatpush.bf16.msra.mxu0 %v5386
      %5410 = vmatmul.bf16.gmra.mxu0 %v2661
      %v5411 = vpop.f32.mrf.mxu0
      %v5412 = vadd.f32 0.0, %v5411
      %v5413 = vpop.f32.mrf.mxu0
      %v5414 = vadd.f32 0.0, %v5413
      %5415 = vmatmul.bf16.gmra.mxu0 %v2662
      %v5416 = vpop.f32.mrf.mxu0
      %v5417 = vadd.f32 0.0, %v5416
      %v5418 = vpop.f32.mrf.mxu0
      %v5419 = vadd.f32 0.0, %v5418
      %5420 = vmatmul.bf16.gmra.mxu0 %v2663
      %v5421 = vpop.f32.mrf.mxu0
      %v5422 = vadd.f32 0.0, %v5421
      %v5423 = vpop.f32.mrf.mxu0
      %v5424 = vadd.f32 0.0, %v5423
      %5425 = vmatmul.bf16.gmra.mxu0 %v2664
      %v5426 = vpop.f32.mrf.mxu0
      %v5427 = vadd.f32 0.0, %v5426
      %v5428 = vpop.f32.mrf.mxu0
      %v5429 = vadd.f32 0.0, %v5428
      %5430 = vmatmul.bf16.gmra.mxu0 %v2665
      %v5431 = vpop.f32.mrf.mxu0
      %v5432 = vadd.f32 0.0, %v5431
      %v5433 = vpop.f32.mrf.mxu0
      %v5434 = vadd.f32 0.0, %v5433
      %5435 = vmatmul.bf16.gmra.mxu0 %v2666
      %v5436 = vpop.f32.mrf.mxu0
      %v5437 = vadd.f32 0.0, %v5436
      %v5438 = vpop.f32.mrf.mxu0
      %v5439 = vadd.f32 0.0, %v5438
      %5440 = vmatmul.bf16.gmra.mxu0 %v2667
      %v5441 = vpop.f32.mrf.mxu0
      %v5442 = vadd.f32 0.0, %v5441
      %v5443 = vpop.f32.mrf.mxu0
      %v5444 = vadd.f32 0.0, %v5443
      %5445 = vmatmul.bf16.gmra.mxu0 %v2668
      %v5446 = vpop.f32.mrf.mxu0
      %v5447 = vadd.f32 0.0, %v5446
      %v5448 = vpop.f32.mrf.mxu0
      %v5449 = vadd.f32 0.0, %v5448
      %5450 = vmatmul.bf16.gmra.mxu0 %v2669
      %v5451 = vpop.f32.mrf.mxu0
      %v5452 = vadd.f32 0.0, %v5451
      %v5453 = vpop.f32.mrf.mxu0
      %v5454 = vadd.f32 0.0, %v5453
      %5455 = vmatmul.bf16.gmra.mxu0 %v2670
      %v5456 = vpop.f32.mrf.mxu0
      %v5457 = vadd.f32 0.0, %v5456
      %v5458 = vpop.f32.mrf.mxu0
      %v5459 = vadd.f32 0.0, %v5458
      %5460 = vmatmul.bf16.gmra.mxu0 %v2671
      %v5461 = vpop.f32.mrf.mxu0
      %v5462 = vadd.f32 0.0, %v5461
      %v5463 = vpop.f32.mrf.mxu0
      %v5464 = vadd.f32 0.0, %v5463
      %5465 = vmatmul.bf16.gmra.mxu0 %v2672
      %v5466 = vpop.f32.mrf.mxu0
      %v5467 = vadd.f32 0.0, %v5466
      %v5468 = vpop.f32.mrf.mxu0
      %v5469 = vadd.f32 0.0, %v5468
      %5470 = vmatmul.bf16.gmra.mxu0 %v2673
      %v5471 = vpop.f32.mrf.mxu0
      %v5472 = vadd.f32 0.0, %v5471
      %v5473 = vpop.f32.mrf.mxu0
      %v5474 = vadd.f32 0.0, %v5473
      %5475 = vmatmul.bf16.gmra.mxu0 %v2674
      %v5476 = vpop.f32.mrf.mxu0
      %v5477 = vadd.f32 0.0, %v5476
      %v5478 = vpop.f32.mrf.mxu0
      %v5479 = vadd.f32 0.0, %v5478
      %5480 = vmatmul.bf16.gmra.mxu0 %v2675
      %v5481 = vpop.f32.mrf.mxu0
      %v5482 = vadd.f32 0.0, %v5481
      %v5483 = vpop.f32.mrf.mxu0
      %v5484 = vadd.f32 0.0, %v5483
      %5485 = vmatmul.bf16.gmra.mxu0 %v2676
      %v5486 = vpop.f32.mrf.mxu0
      %v5487 = vadd.f32 0.0, %v5486
      %v5488 = vpop.f32.mrf.mxu0
      %v5489 = vadd.f32 0.0, %v5488
      %5490 = vmatmul.bf16.gmra.mxu0 %v2677
      %v5491 = vpop.f32.mrf.mxu0
      %v5492 = vadd.f32 0.0, %v5491
      %v5493 = vpop.f32.mrf.mxu0
      %v5494 = vadd.f32 0.0, %v5493
      %5495 = vmatmul.bf16.gmra.mxu0 %v2678
      %v5496 = vpop.f32.mrf.mxu0
      %v5497 = vadd.f32 0.0, %v5496
      %v5498 = vpop.f32.mrf.mxu0
      %v5499 = vadd.f32 0.0, %v5498
      %5500 = vmatmul.bf16.gmra.mxu0 %v2679
      %v5501 = vpop.f32.mrf.mxu0
      %v5502 = vadd.f32 0.0, %v5501
      %v5503 = vpop.f32.mrf.mxu0
      %v5504 = vadd.f32 0.0, %v5503
      %5505 = vmatmul.bf16.gmra.mxu0 %v2680
      %v5506 = vpop.f32.mrf.mxu0
      %v5507 = vadd.f32 0.0, %v5506
      %v5508 = vpop.f32.mrf.mxu0
      %v5509 = vadd.f32 0.0, %v5508
      %5510 = vmatmul.bf16.gmra.mxu0 %v2681
      %v5511 = vpop.f32.mrf.mxu0
      %v5512 = vadd.f32 0.0, %v5511
      %v5513 = vpop.f32.mrf.mxu0
      %v5514 = vadd.f32 0.0, %v5513
      %5515 = vmatmul.bf16.gmra.mxu0 %v2682
      %v5516 = vpop.f32.mrf.mxu0
      %v5517 = vadd.f32 0.0, %v5516
      %v5518 = vpop.f32.mrf.mxu0
      %v5519 = vadd.f32 0.0, %v5518
      %5520 = vmatmul.bf16.gmra.mxu0 %v5334
      %v5521 = vpop.f32.mrf.mxu0
      %v5522 = vadd.f32 0.0, %v5521
      %v5523 = vpop.f32.mrf.mxu0
      %v5524 = vadd.f32 0.0, %v5523
      %5525 = vmatmul.bf16.gmra.mxu0 %v5335
      %v5526 = vpop.f32.mrf.mxu0
      %v5527 = vadd.f32 0.0, %v5526
      %v5528 = vpop.f32.mrf.mxu0
      %v5529 = vadd.f32 0.0, %v5528
      %5530 = vmatmul.bf16.gmra.mxu0 %v1038
      %v5531 = vpop.f32.mrf.mxu0
      %v5532 = vadd.f32 0.0, %v5531
      %v5533 = vpop.f32.mrf.mxu0
      %v5534 = vadd.f32 0.0, %v5533
      %5535 = vmatmul.bf16.gmra.mxu0 %v5336
      %v5536 = vpop.f32.mrf.mxu0
      %v5537 = vadd.f32 0.0, %v5536
      %v5538 = vpop.f32.mrf.mxu0
      %5539 = vdwg.mxu0
      %v5540 = vadd.f32 %v5283, %v5412
      %v5541 = vadd.f32 %v5284, %v5414
      %v5542 = vadd.f32 %v5285, %v5417
      %v5543 = vadd.f32 %v5286, %v5419
      %v5544 = vadd.f32 %v5287, %v5422
      %v5545 = vadd.f32 %v5288, %v5424
      %v5546 = vadd.f32 %v5289, %v5427
      %v5547 = vadd.f32 %v5290, %v5429
      %v5548 = vadd.f32 %v5291, %v5432
      %v5549 = vadd.f32 %v5292, %v5434
      %v5550 = vadd.f32 %v5293, %v5437
      %v5551 = vadd.f32 %v5294, %v5439
      %v5552 = vadd.f32 %v5295, %v5442
      %v5553 = vadd.f32 %v5296, %v5444
      %v5554 = vadd.f32 %v5297, %v5447
      %v5555 = vadd.f32 %v5298, %v5449
      %v5556 = vadd.f32 %v5299, %v5452
      %v5557 = vadd.f32 %v5300, %v5454
      %v5558 = vadd.f32 %v5301, %v5457
      %v5559 = vadd.f32 %v5302, %v5459
      %v5560 = vadd.f32 %v5303, %v5462
      %v5561 = vadd.f32 %v5304, %v5464
      %v5562 = vadd.f32 %v5305, %v5467
      %v5563 = vadd.f32 %v5306, %v5469
      %v5564 = vadd.f32 %v5307, %v5472
      %v5565 = vadd.f32 %v5308, %v5474
      %v5566 = vadd.f32 %v5309, %v5477
      %v5567 = vadd.f32 %v5310, %v5479
      %v5568 = vadd.f32 %v5311, %v5482
      %v5569 = vadd.f32 %v5312, %v5484
      %v5570 = vadd.f32 %v5313, %v5487
      %v5571 = vadd.f32 %v5314, %v5489
      %v5572 = vadd.f32 %v5315, %v5492
      %v5573 = vadd.f32 %v5316, %v5494
      %v5574 = vadd.f32 %v5317, %v5497
      %v5575 = vadd.f32 %v5318, %v5499
      %v5576 = vadd.f32 %v5319, %v5502
      %v5577 = vadd.f32 %v5320, %v5504
      %v5578 = vadd.f32 %v5321, %v5507
      %v5579 = vadd.f32 %v5322, %v5509
      %v5580 = vadd.f32 %v5323, %v5512
      %v5581 = vadd.f32 %v5324, %v5514
      %v5582 = vadd.f32 %v5325, %v5517
      %v5583 = vadd.f32 %v5326, %v5519
      %v5584 = vadd.f32 %v5327, %v5522
      %v5585 = vadd.f32 %v5328, %v5524
      %v5586 = vadd.f32 %v5329, %v5527
      %v5587 = vadd.f32 %v5330, %v5529
      %v5588 = vadd.f32 %v5331, %v5532
      %v5589 = vadd.f32 %v5332, %v5534
      %v5590 = vadd.f32 %v5333, %v5537
      %v5591 = vpack.c.bf16 %v4298, %v2941
      %v5592 = vpack.c.bf16 %v4296, %v4297
      %v5593 = vpack.c.bf16 %v1421, %v1421
      %s5594 = scalar_lea.vmem %s1, 1152
      %v5595 = vld [vmem:[%s5594] sm:$0xf]
      %v5596 = vld [vmem:[%s5594 + $0x4] sm:$0xf]
      %v5597 = vld [vmem:[%s5594 + $0x8] sm:$0xf]
      %v5598 = vld [vmem:[%s5594 + $0xc] sm:$0xf]
      %v5599 = vld [vmem:[%s5594 + $0x10] sm:$0xf]
      %v5600 = vld [vmem:[%s5594 + $0x14] sm:$0xf]
      %v5601 = vld [vmem:[%s5594 + $0x18] sm:$0xf]
      %v5602 = vld [vmem:[%s5594 + $0x1c] sm:$0xf]
      %v5603 = vld [vmem:[%s5594 + $0x20] sm:$0xf]
      %v5604 = vld [vmem:[%s5594 + $0x24] sm:$0xf]
      %v5605 = vld [vmem:[%s5594 + $0x28] sm:$0xf]
      %v5606 = vld [vmem:[%s5594 + $0x2c] sm:$0xf]
      %v5607 = vld [vmem:[%s5594 + $0x30] sm:$0xf]
      %v5608 = vld [vmem:[%s5594 + $0x34] sm:$0xf]
      %v5609 = vld [vmem:[%s5594 + $0x38] sm:$0xf]
      %v5610 = vld [vmem:[%s5594 + $0x3c] sm:$0xf]
      %v5627 = vunpack.c.l.b16 %v5595
      %v5628 = vunpack.c.l.b16 %v5596
      %v5629 = vunpack.c.l.b16 %v5597
      %v5630 = vunpack.c.l.b16 %v5598
      %v5631 = vunpack.c.l.b16 %v5599
      %v5632 = vunpack.c.l.b16 %v5600
      %v5633 = vunpack.c.l.b16 %v5601
      %v5634 = vunpack.c.l.b16 %v5602
      %v5635 = vunpack.c.l.b16 %v5603
      %v5636 = vunpack.c.l.b16 %v5604
      %v5637 = vunpack.c.l.b16 %v5605
      %v5638 = vunpack.c.l.b16 %v5606
      %v5639 = vunpack.c.l.b16 %v5607
      %v5640 = vunpack.c.l.b16 %v5608
      %v5641 = vunpack.c.l.b16 %v5609
      %v5642 = vunpack.c.l.b16 %v5610
      %v5643 = vpack.c.b16 %v5628, %v5627
      %v5644 = vpack.c.b16 %v5630, %v5629
      %v5645 = vpack.c.b16 %v5632, %v5631
      %v5646 = vpack.c.b16 %v5634, %v5633
      %v5647 = vpack.c.b16 %v5636, %v5635
      %v5648 = vpack.c.b16 %v5638, %v5637
      %v5649 = vpack.c.b16 %v5640, %v5639
      %v5650 = vpack.c.b16 %v5642, %v5641
      %5659 = vmatpush.bf16.msra.mxu0 %v5650
      %5660 = vmatpush.bf16.msra.mxu0 %v5649
      %5661 = vmatpush.bf16.msra.mxu0 %v5648
      %5662 = vmatpush.bf16.msra.mxu0 %v5647
      %5663 = vmatpush.bf16.msra.mxu0 %v5646
      %5664 = vmatpush.bf16.msra.mxu0 %v5645
      %5665 = vmatpush.bf16.msra.mxu0 %v5644
      %5666 = vmatpush.bf16.msra.mxu0 %v5643
      %5667 = vmatmul.bf16.gmra.mxu0 %v2947
      %v5668 = vpop.f32.mrf.mxu0
      %v5669 = vadd.f32 0.0, %v5668
      %v5670 = vpop.f32.mrf.mxu0
      %v5671 = vadd.f32 0.0, %v5670
      %5672 = vmatmul.bf16.gmra.mxu0 %v2948
      %v5673 = vpop.f32.mrf.mxu0
      %v5674 = vadd.f32 0.0, %v5673
      %v5675 = vpop.f32.mrf.mxu0
      %v5676 = vadd.f32 0.0, %v5675
      %5677 = vmatmul.bf16.gmra.mxu0 %v2949
      %v5678 = vpop.f32.mrf.mxu0
      %v5679 = vadd.f32 0.0, %v5678
      %v5680 = vpop.f32.mrf.mxu0
      %v5681 = vadd.f32 0.0, %v5680
      %5682 = vmatmul.bf16.gmra.mxu0 %v2950
      %v5683 = vpop.f32.mrf.mxu0
      %v5684 = vadd.f32 0.0, %v5683
      %v5685 = vpop.f32.mrf.mxu0
      %v5686 = vadd.f32 0.0, %v5685
      %5687 = vmatmul.bf16.gmra.mxu0 %v2951
      %v5688 = vpop.f32.mrf.mxu0
      %v5689 = vadd.f32 0.0, %v5688
      %v5690 = vpop.f32.mrf.mxu0
      %v5691 = vadd.f32 0.0, %v5690
      %5692 = vmatmul.bf16.gmra.mxu0 %v2952
      %v5693 = vpop.f32.mrf.mxu0
      %v5694 = vadd.f32 0.0, %v5693
      %v5695 = vpop.f32.mrf.mxu0
      %v5696 = vadd.f32 0.0, %v5695
      %5697 = vmatmul.bf16.gmra.mxu0 %v2953
      %v5698 = vpop.f32.mrf.mxu0
      %v5699 = vadd.f32 0.0, %v5698
      %v5700 = vpop.f32.mrf.mxu0
      %v5701 = vadd.f32 0.0, %v5700
      %5702 = vmatmul.bf16.gmra.mxu0 %v2954
      %v5703 = vpop.f32.mrf.mxu0
      %v5704 = vadd.f32 0.0, %v5703
      %v5705 = vpop.f32.mrf.mxu0
      %v5706 = vadd.f32 0.0, %v5705
      %5707 = vmatmul.bf16.gmra.mxu0 %v2955
      %v5708 = vpop.f32.mrf.mxu0
      %v5709 = vadd.f32 0.0, %v5708
      %v5710 = vpop.f32.mrf.mxu0
      %v5711 = vadd.f32 0.0, %v5710
      %5712 = vmatmul.bf16.gmra.mxu0 %v2956
      %v5713 = vpop.f32.mrf.mxu0
      %v5714 = vadd.f32 0.0, %v5713
      %v5715 = vpop.f32.mrf.mxu0
      %v5716 = vadd.f32 0.0, %v5715
      %5717 = vmatmul.bf16.gmra.mxu0 %v2957
      %v5718 = vpop.f32.mrf.mxu0
      %v5719 = vadd.f32 0.0, %v5718
      %v5720 = vpop.f32.mrf.mxu0
      %v5721 = vadd.f32 0.0, %v5720
      %5722 = vmatmul.bf16.gmra.mxu0 %v2958
      %v5723 = vpop.f32.mrf.mxu0
      %v5724 = vadd.f32 0.0, %v5723
      %v5725 = vpop.f32.mrf.mxu0
      %v5726 = vadd.f32 0.0, %v5725
      %5727 = vmatmul.bf16.gmra.mxu0 %v2959
      %v5728 = vpop.f32.mrf.mxu0
      %v5729 = vadd.f32 0.0, %v5728
      %v5730 = vpop.f32.mrf.mxu0
      %v5731 = vadd.f32 0.0, %v5730
      %5732 = vmatmul.bf16.gmra.mxu0 %v2960
      %v5733 = vpop.f32.mrf.mxu0
      %v5734 = vadd.f32 0.0, %v5733
      %v5735 = vpop.f32.mrf.mxu0
      %v5736 = vadd.f32 0.0, %v5735
      %5737 = vmatmul.bf16.gmra.mxu0 %v2961
      %v5738 = vpop.f32.mrf.mxu0
      %v5739 = vadd.f32 0.0, %v5738
      %v5740 = vpop.f32.mrf.mxu0
      %v5741 = vadd.f32 0.0, %v5740
      %5742 = vmatmul.bf16.gmra.mxu0 %v2962
      %v5743 = vpop.f32.mrf.mxu0
      %v5744 = vadd.f32 0.0, %v5743
      %v5745 = vpop.f32.mrf.mxu0
      %v5746 = vadd.f32 0.0, %v5745
      %5747 = vmatmul.bf16.gmra.mxu0 %v2963
      %v5748 = vpop.f32.mrf.mxu0
      %v5749 = vadd.f32 0.0, %v5748
      %v5750 = vpop.f32.mrf.mxu0
      %v5751 = vadd.f32 0.0, %v5750
      %5752 = vmatmul.bf16.gmra.mxu0 %v2964
      %v5753 = vpop.f32.mrf.mxu0
      %v5754 = vadd.f32 0.0, %v5753
      %v5755 = vpop.f32.mrf.mxu0
      %v5756 = vadd.f32 0.0, %v5755
      %5757 = vmatmul.bf16.gmra.mxu0 %v2965
      %v5758 = vpop.f32.mrf.mxu0
      %v5759 = vadd.f32 0.0, %v5758
      %v5760 = vpop.f32.mrf.mxu0
      %v5761 = vadd.f32 0.0, %v5760
      %5762 = vmatmul.bf16.gmra.mxu0 %v2966
      %v5763 = vpop.f32.mrf.mxu0
      %v5764 = vadd.f32 0.0, %v5763
      %v5765 = vpop.f32.mrf.mxu0
      %v5766 = vadd.f32 0.0, %v5765
      %5767 = vmatmul.bf16.gmra.mxu0 %v2967
      %v5768 = vpop.f32.mrf.mxu0
      %v5769 = vadd.f32 0.0, %v5768
      %v5770 = vpop.f32.mrf.mxu0
      %v5771 = vadd.f32 0.0, %v5770
      %5772 = vmatmul.bf16.gmra.mxu0 %v2968
      %v5773 = vpop.f32.mrf.mxu0
      %v5774 = vadd.f32 0.0, %v5773
      %v5775 = vpop.f32.mrf.mxu0
      %v5776 = vadd.f32 0.0, %v5775
      %5777 = vmatmul.bf16.gmra.mxu0 %v5591
      %v5778 = vpop.f32.mrf.mxu0
      %v5779 = vadd.f32 0.0, %v5778
      %v5780 = vpop.f32.mrf.mxu0
      %v5781 = vadd.f32 0.0, %v5780
      %5782 = vmatmul.bf16.gmra.mxu0 %v5592
      %v5783 = vpop.f32.mrf.mxu0
      %v5784 = vadd.f32 0.0, %v5783
      %v5785 = vpop.f32.mrf.mxu0
      %v5786 = vadd.f32 0.0, %v5785
      %5787 = vmatmul.bf16.gmra.mxu0 %v1422
      %v5788 = vpop.f32.mrf.mxu0
      %v5789 = vadd.f32 0.0, %v5788
      %v5790 = vpop.f32.mrf.mxu0
      %v5791 = vadd.f32 0.0, %v5790
      %5792 = vmatmul.bf16.gmra.mxu0 %v5593
      %v5793 = vpop.f32.mrf.mxu0
      %v5794 = vadd.f32 0.0, %v5793
      %v5795 = vpop.f32.mrf.mxu0
      %5796 = vdwg.mxu0
      %v5797 = vadd.f32 %v5540, %v5669
      %v5798 = vadd.f32 %v5541, %v5671
      %v5799 = vadd.f32 %v5542, %v5674
      %v5800 = vadd.f32 %v5543, %v5676
      %v5801 = vadd.f32 %v5544, %v5679
      %v5802 = vadd.f32 %v5545, %v5681
      %v5803 = vadd.f32 %v5546, %v5684
      %v5804 = vadd.f32 %v5547, %v5686
      %v5805 = vadd.f32 %v5548, %v5689
      %v5806 = vadd.f32 %v5549, %v5691
      %v5807 = vadd.f32 %v5550, %v5694
      %v5808 = vadd.f32 %v5551, %v5696
      %v5809 = vadd.f32 %v5552, %v5699
      %v5810 = vadd.f32 %v5553, %v5701
      %v5811 = vadd.f32 %v5554, %v5704
      %v5812 = vadd.f32 %v5555, %v5706
      %v5813 = vadd.f32 %v5556, %v5709
      %v5814 = vadd.f32 %v5557, %v5711
      %v5815 = vadd.f32 %v5558, %v5714
      %v5816 = vadd.f32 %v5559, %v5716
      %v5817 = vadd.f32 %v5560, %v5719
      %v5818 = vadd.f32 %v5561, %v5721
      %v5819 = vadd.f32 %v5562, %v5724
      %v5820 = vadd.f32 %v5563, %v5726
      %v5821 = vadd.f32 %v5564, %v5729
      %v5822 = vadd.f32 %v5565, %v5731
      %v5823 = vadd.f32 %v5566, %v5734
      %v5824 = vadd.f32 %v5567, %v5736
      %v5825 = vadd.f32 %v5568, %v5739
      %v5826 = vadd.f32 %v5569, %v5741
      %v5827 = vadd.f32 %v5570, %v5744
      %v5828 = vadd.f32 %v5571, %v5746
      %v5829 = vadd.f32 %v5572, %v5749
      %v5830 = vadd.f32 %v5573, %v5751
      %v5831 = vadd.f32 %v5574, %v5754
      %v5832 = vadd.f32 %v5575, %v5756
      %v5833 = vadd.f32 %v5576, %v5759
      %v5834 = vadd.f32 %v5577, %v5761
      %v5835 = vadd.f32 %v5578, %v5764
      %v5836 = vadd.f32 %v5579, %v5766
      %v5837 = vadd.f32 %v5580, %v5769
      %v5838 = vadd.f32 %v5581, %v5771
      %v5839 = vadd.f32 %v5582, %v5774
      %v5840 = vadd.f32 %v5583, %v5776
      %v5841 = vadd.f32 %v5584, %v5779
      %v5842 = vadd.f32 %v5585, %v5781
      %v5843 = vadd.f32 %v5586, %v5784
      %v5844 = vadd.f32 %v5587, %v5786
      %v5845 = vadd.f32 %v5588, %v5789
      %v5846 = vadd.f32 %v5589, %v5791
      %v5847 = vadd.f32 %v5590, %v5794
      %v5848 = vpack.c.bf16 %v4561, %v3227
      %v5849 = vpack.c.bf16 %v4559, %v4560
      %v5850 = vpack.c.bf16 %v1805, %v1805
      %s5851 = scalar_lea.vmem %s1, 1216
      %v5852 = vld [vmem:[%s5851] sm:$0xf]
      %v5853 = vld [vmem:[%s5851 + $0x4] sm:$0xf]
      %v5854 = vld [vmem:[%s5851 + $0x8] sm:$0xf]
      %v5855 = vld [vmem:[%s5851 + $0xc] sm:$0xf]
      %v5856 = vld [vmem:[%s5851 + $0x10] sm:$0xf]
      %v5857 = vld [vmem:[%s5851 + $0x14] sm:$0xf]
      %v5858 = vld [vmem:[%s5851 + $0x18] sm:$0xf]
      %v5859 = vld [vmem:[%s5851 + $0x1c] sm:$0xf]
      %v5860 = vld [vmem:[%s5851 + $0x20] sm:$0xf]
      %v5861 = vld [vmem:[%s5851 + $0x24] sm:$0xf]
      %v5862 = vld [vmem:[%s5851 + $0x28] sm:$0xf]
      %v5863 = vld [vmem:[%s5851 + $0x2c] sm:$0xf]
      %v5864 = vld [vmem:[%s5851 + $0x30] sm:$0xf]
      %v5865 = vld [vmem:[%s5851 + $0x34] sm:$0xf]
      %v5866 = vld [vmem:[%s5851 + $0x38] sm:$0xf]
      %v5867 = vld [vmem:[%s5851 + $0x3c] sm:$0xf]
      %v5884 = vunpack.c.l.b16 %v5852
      %v5885 = vunpack.c.l.b16 %v5853
      %v5886 = vunpack.c.l.b16 %v5854
      %v5887 = vunpack.c.l.b16 %v5855
      %v5888 = vunpack.c.l.b16 %v5856
      %v5889 = vunpack.c.l.b16 %v5857
      %v5890 = vunpack.c.l.b16 %v5858
      %v5891 = vunpack.c.l.b16 %v5859
      %v5892 = vunpack.c.l.b16 %v5860
      %v5893 = vunpack.c.l.b16 %v5861
      %v5894 = vunpack.c.l.b16 %v5862
      %v5895 = vunpack.c.l.b16 %v5863
      %v5896 = vunpack.c.l.b16 %v5864
      %v5897 = vunpack.c.l.b16 %v5865
      %v5898 = vunpack.c.l.b16 %v5866
      %v5899 = vunpack.c.l.b16 %v5867
      %v5900 = vpack.c.b16 %v5885, %v5884
      %v5901 = vpack.c.b16 %v5887, %v5886
      %v5902 = vpack.c.b16 %v5889, %v5888
      %v5903 = vpack.c.b16 %v5891, %v5890
      %v5904 = vpack.c.b16 %v5893, %v5892
      %v5905 = vpack.c.b16 %v5895, %v5894
      %v5906 = vpack.c.b16 %v5897, %v5896
      %v5907 = vpack.c.b16 %v5899, %v5898
      %5916 = vmatpush.bf16.msra.mxu0 %v5907
      %5917 = vmatpush.bf16.msra.mxu0 %v5906
      %5918 = vmatpush.bf16.msra.mxu0 %v5905
      %5919 = vmatpush.bf16.msra.mxu0 %v5904
      %5920 = vmatpush.bf16.msra.mxu0 %v5903
      %5921 = vmatpush.bf16.msra.mxu0 %v5902
      %5922 = vmatpush.bf16.msra.mxu0 %v5901
      %5923 = vmatpush.bf16.msra.mxu0 %v5900
      %5924 = vmatmul.bf16.gmra.mxu0 %v3233
      %v5925 = vpop.f32.mrf.mxu0
      %v5926 = vadd.f32 0.0, %v5925
      %v5927 = vpop.f32.mrf.mxu0
      %v5928 = vadd.f32 0.0, %v5927
      %5929 = vmatmul.bf16.gmra.mxu0 %v3234
      %v5930 = vpop.f32.mrf.mxu0
      %v5931 = vadd.f32 0.0, %v5930
      %v5932 = vpop.f32.mrf.mxu0
      %v5933 = vadd.f32 0.0, %v5932
      %5934 = vmatmul.bf16.gmra.mxu0 %v3235
      %v5935 = vpop.f32.mrf.mxu0
      %v5936 = vadd.f32 0.0, %v5935
      %v5937 = vpop.f32.mrf.mxu0
      %v5938 = vadd.f32 0.0, %v5937
      %5939 = vmatmul.bf16.gmra.mxu0 %v3236
      %v5940 = vpop.f32.mrf.mxu0
      %v5941 = vadd.f32 0.0, %v5940
      %v5942 = vpop.f32.mrf.mxu0
      %v5943 = vadd.f32 0.0, %v5942
      %5944 = vmatmul.bf16.gmra.mxu0 %v3237
      %v5945 = vpop.f32.mrf.mxu0
      %v5946 = vadd.f32 0.0, %v5945
      %v5947 = vpop.f32.mrf.mxu0
      %v5948 = vadd.f32 0.0, %v5947
      %5949 = vmatmul.bf16.gmra.mxu0 %v3238
      %v5950 = vpop.f32.mrf.mxu0
      %v5951 = vadd.f32 0.0, %v5950
      %v5952 = vpop.f32.mrf.mxu0
      %v5953 = vadd.f32 0.0, %v5952
      %5954 = vmatmul.bf16.gmra.mxu0 %v3239
      %v5955 = vpop.f32.mrf.mxu0
      %v5956 = vadd.f32 0.0, %v5955
      %v5957 = vpop.f32.mrf.mxu0
      %v5958 = vadd.f32 0.0, %v5957
      %5959 = vmatmul.bf16.gmra.mxu0 %v3240
      %v5960 = vpop.f32.mrf.mxu0
      %v5961 = vadd.f32 0.0, %v5960
      %v5962 = vpop.f32.mrf.mxu0
      %v5963 = vadd.f32 0.0, %v5962
      %5964 = vmatmul.bf16.gmra.mxu0 %v3241
      %v5965 = vpop.f32.mrf.mxu0
      %v5966 = vadd.f32 0.0, %v5965
      %v5967 = vpop.f32.mrf.mxu0
      %v5968 = vadd.f32 0.0, %v5967
      %5969 = vmatmul.bf16.gmra.mxu0 %v3242
      %v5970 = vpop.f32.mrf.mxu0
      %v5971 = vadd.f32 0.0, %v5970
      %v5972 = vpop.f32.mrf.mxu0
      %v5973 = vadd.f32 0.0, %v5972
      %5974 = vmatmul.bf16.gmra.mxu0 %v3243
      %v5975 = vpop.f32.mrf.mxu0
      %v5976 = vadd.f32 0.0, %v5975
      %v5977 = vpop.f32.mrf.mxu0
      %v5978 = vadd.f32 0.0, %v5977
      %5979 = vmatmul.bf16.gmra.mxu0 %v3244
      %v5980 = vpop.f32.mrf.mxu0
      %v5981 = vadd.f32 0.0, %v5980
      %v5982 = vpop.f32.mrf.mxu0
      %v5983 = vadd.f32 0.0, %v5982
      %5984 = vmatmul.bf16.gmra.mxu0 %v3245
      %v5985 = vpop.f32.mrf.mxu0
      %v5986 = vadd.f32 0.0, %v5985
      %v5987 = vpop.f32.mrf.mxu0
      %v5988 = vadd.f32 0.0, %v5987
      %5989 = vmatmul.bf16.gmra.mxu0 %v3246
      %v5990 = vpop.f32.mrf.mxu0
      %v5991 = vadd.f32 0.0, %v5990
      %v5992 = vpop.f32.mrf.mxu0
      %v5993 = vadd.f32 0.0, %v5992
      %5994 = vmatmul.bf16.gmra.mxu0 %v3247
      %v5995 = vpop.f32.mrf.mxu0
      %v5996 = vadd.f32 0.0, %v5995
      %v5997 = vpop.f32.mrf.mxu0
      %v5998 = vadd.f32 0.0, %v5997
      %5999 = vmatmul.bf16.gmra.mxu0 %v3248
      %v6000 = vpop.f32.mrf.mxu0
      %v6001 = vadd.f32 0.0, %v6000
      %v6002 = vpop.f32.mrf.mxu0
      %v6003 = vadd.f32 0.0, %v6002
      %6004 = vmatmul.bf16.gmra.mxu0 %v3249
      %v6005 = vpop.f32.mrf.mxu0
      %v6006 = vadd.f32 0.0, %v6005
      %v6007 = vpop.f32.mrf.mxu0
      %v6008 = vadd.f32 0.0, %v6007
      %6009 = vmatmul.bf16.gmra.mxu0 %v3250
      %v6010 = vpop.f32.mrf.mxu0
      %v6011 = vadd.f32 0.0, %v6010
      %v6012 = vpop.f32.mrf.mxu0
      %v6013 = vadd.f32 0.0, %v6012
      %6014 = vmatmul.bf16.gmra.mxu0 %v3251
      %v6015 = vpop.f32.mrf.mxu0
      %v6016 = vadd.f32 0.0, %v6015
      %v6017 = vpop.f32.mrf.mxu0
      %v6018 = vadd.f32 0.0, %v6017
      %6019 = vmatmul.bf16.gmra.mxu0 %v3252
      %v6020 = vpop.f32.mrf.mxu0
      %v6021 = vadd.f32 0.0, %v6020
      %v6022 = vpop.f32.mrf.mxu0
      %v6023 = vadd.f32 0.0, %v6022
      %6024 = vmatmul.bf16.gmra.mxu0 %v3253
      %v6025 = vpop.f32.mrf.mxu0
      %v6026 = vadd.f32 0.0, %v6025
      %v6027 = vpop.f32.mrf.mxu0
      %v6028 = vadd.f32 0.0, %v6027
      %6029 = vmatmul.bf16.gmra.mxu0 %v3254
      %v6030 = vpop.f32.mrf.mxu0
      %v6031 = vadd.f32 0.0, %v6030
      %v6032 = vpop.f32.mrf.mxu0
      %v6033 = vadd.f32 0.0, %v6032
      %6034 = vmatmul.bf16.gmra.mxu0 %v5848
      %v6035 = vpop.f32.mrf.mxu0
      %v6036 = vadd.f32 0.0, %v6035
      %v6037 = vpop.f32.mrf.mxu0
      %v6038 = vadd.f32 0.0, %v6037
      %6039 = vmatmul.bf16.gmra.mxu0 %v5849
      %v6040 = vpop.f32.mrf.mxu0
      %v6041 = vadd.f32 0.0, %v6040
      %v6042 = vpop.f32.mrf.mxu0
      %v6043 = vadd.f32 0.0, %v6042
      %6044 = vmatmul.bf16.gmra.mxu0 %v1806
      %v6045 = vpop.f32.mrf.mxu0
      %v6046 = vadd.f32 0.0, %v6045
      %v6047 = vpop.f32.mrf.mxu0
      %v6048 = vadd.f32 0.0, %v6047
      %6049 = vmatmul.bf16.gmra.mxu0 %v5850
      %v6050 = vpop.f32.mrf.mxu0
      %v6051 = vadd.f32 0.0, %v6050
      %v6052 = vpop.f32.mrf.mxu0
      %6053 = vdwg.mxu0
      %v6054 = vadd.f32 %v5797, %v5926
      %v6055 = vadd.f32 %v5798, %v5928
      %v6056 = vadd.f32 %v5799, %v5931
      %v6057 = vadd.f32 %v5800, %v5933
      %v6058 = vadd.f32 %v5801, %v5936
      %v6059 = vadd.f32 %v5802, %v5938
      %v6060 = vadd.f32 %v5803, %v5941
      %v6061 = vadd.f32 %v5804, %v5943
      %v6062 = vadd.f32 %v5805, %v5946
      %v6063 = vadd.f32 %v5806, %v5948
      %v6064 = vadd.f32 %v5807, %v5951
      %v6065 = vadd.f32 %v5808, %v5953
      %v6066 = vadd.f32 %v5809, %v5956
      %v6067 = vadd.f32 %v5810, %v5958
      %v6068 = vadd.f32 %v5811, %v5961
      %v6069 = vadd.f32 %v5812, %v5963
      %v6070 = vadd.f32 %v5813, %v5966
      %v6071 = vadd.f32 %v5814, %v5968
      %v6072 = vadd.f32 %v5815, %v5971
      %v6073 = vadd.f32 %v5816, %v5973
      %v6074 = vadd.f32 %v5817, %v5976
      %v6075 = vadd.f32 %v5818, %v5978
      %v6076 = vadd.f32 %v5819, %v5981
      %v6077 = vadd.f32 %v5820, %v5983
      %v6078 = vadd.f32 %v5821, %v5986
      %v6079 = vadd.f32 %v5822, %v5988
      %v6080 = vadd.f32 %v5823, %v5991
      %v6081 = vadd.f32 %v5824, %v5993
      %v6082 = vadd.f32 %v5825, %v5996
      %v6083 = vadd.f32 %v5826, %v5998
      %v6084 = vadd.f32 %v5827, %v6001
      %v6085 = vadd.f32 %v5828, %v6003
      %v6086 = vadd.f32 %v5829, %v6006
      %v6087 = vadd.f32 %v5830, %v6008
      %v6088 = vadd.f32 %v5831, %v6011
      %v6089 = vadd.f32 %v5832, %v6013
      %v6090 = vadd.f32 %v5833, %v6016
      %v6091 = vadd.f32 %v5834, %v6018
      %v6092 = vadd.f32 %v5835, %v6021
      %v6093 = vadd.f32 %v5836, %v6023
      %v6094 = vadd.f32 %v5837, %v6026
      %v6095 = vadd.f32 %v5838, %v6028
      %v6096 = vadd.f32 %v5839, %v6031
      %v6097 = vadd.f32 %v5840, %v6033
      %v6098 = vadd.f32 %v5841, %v6036
      %v6099 = vadd.f32 %v5842, %v6038
      %v6100 = vadd.f32 %v5843, %v6041
      %v6101 = vadd.f32 %v5844, %v6043
      %v6102 = vadd.f32 %v5845, %v6046
      %v6103 = vadd.f32 %v5846, %v6048
      %v6104 = vadd.f32 %v5847, %v6051
      %v6105 = vpack.c.bf16 %v428, %v3512
      %v6106 = vpack.c.bf16 %v426, %v427
      %v6107 = vpack.c.bf16 %v474, %v474
      %s6108 = scalar_lea.vmem %s1, 1280
      %v6109 = vld [vmem:[%s6108] sm:$0xf]
      %v6110 = vld [vmem:[%s6108 + $0x4] sm:$0xf]
      %v6111 = vld [vmem:[%s6108 + $0x8] sm:$0xf]
      %v6112 = vld [vmem:[%s6108 + $0xc] sm:$0xf]
      %v6113 = vld [vmem:[%s6108 + $0x10] sm:$0xf]
      %v6114 = vld [vmem:[%s6108 + $0x14] sm:$0xf]
      %v6115 = vld [vmem:[%s6108 + $0x18] sm:$0xf]
      %v6116 = vld [vmem:[%s6108 + $0x1c] sm:$0xf]
      %v6117 = vld [vmem:[%s6108 + $0x20] sm:$0xf]
      %v6118 = vld [vmem:[%s6108 + $0x24] sm:$0xf]
      %v6119 = vld [vmem:[%s6108 + $0x28] sm:$0xf]
      %v6120 = vld [vmem:[%s6108 + $0x2c] sm:$0xf]
      %v6121 = vld [vmem:[%s6108 + $0x30] sm:$0xf]
      %v6122 = vld [vmem:[%s6108 + $0x34] sm:$0xf]
      %v6123 = vld [vmem:[%s6108 + $0x38] sm:$0xf]
      %v6124 = vld [vmem:[%s6108 + $0x3c] sm:$0xf]
      %v6141 = vunpack.c.l.b16 %v6109
      %v6142 = vunpack.c.l.b16 %v6110
      %v6143 = vunpack.c.l.b16 %v6111
      %v6144 = vunpack.c.l.b16 %v6112
      %v6145 = vunpack.c.l.b16 %v6113
      %v6146 = vunpack.c.l.b16 %v6114
      %v6147 = vunpack.c.l.b16 %v6115
      %v6148 = vunpack.c.l.b16 %v6116
      %v6149 = vunpack.c.l.b16 %v6117
      %v6150 = vunpack.c.l.b16 %v6118
      %v6151 = vunpack.c.l.b16 %v6119
      %v6152 = vunpack.c.l.b16 %v6120
      %v6153 = vunpack.c.l.b16 %v6121
      %v6154 = vunpack.c.l.b16 %v6122
      %v6155 = vunpack.c.l.b16 %v6123
      %v6156 = vunpack.c.l.b16 %v6124
      %v6157 = vpack.c.b16 %v6142, %v6141
      %v6158 = vpack.c.b16 %v6144, %v6143
      %v6159 = vpack.c.b16 %v6146, %v6145
      %v6160 = vpack.c.b16 %v6148, %v6147
      %v6161 = vpack.c.b16 %v6150, %v6149
      %v6162 = vpack.c.b16 %v6152, %v6151
      %v6163 = vpack.c.b16 %v6154, %v6153
      %v6164 = vpack.c.b16 %v6156, %v6155
      %6173 = vmatpush.bf16.msra.mxu0 %v6164
      %6174 = vmatpush.bf16.msra.mxu0 %v6163
      %6175 = vmatpush.bf16.msra.mxu0 %v6162
      %6176 = vmatpush.bf16.msra.mxu0 %v6161
      %6177 = vmatpush.bf16.msra.mxu0 %v6160
      %6178 = vmatpush.bf16.msra.mxu0 %v6159
      %6179 = vmatpush.bf16.msra.mxu0 %v6158
      %6180 = vmatpush.bf16.msra.mxu0 %v6157
      %6181 = vmatmul.bf16.gmra.mxu0 %v483
      %v6182 = vpop.f32.mrf.mxu0
      %v6183 = vadd.f32 0.0, %v6182
      %v6184 = vpop.f32.mrf.mxu0
      %v6185 = vadd.f32 0.0, %v6184
      %6186 = vmatmul.bf16.gmra.mxu0 %v484
      %v6187 = vpop.f32.mrf.mxu0
      %v6188 = vadd.f32 0.0, %v6187
      %v6189 = vpop.f32.mrf.mxu0
      %v6190 = vadd.f32 0.0, %v6189
      %6191 = vmatmul.bf16.gmra.mxu0 %v485
      %v6192 = vpop.f32.mrf.mxu0
      %v6193 = vadd.f32 0.0, %v6192
      %v6194 = vpop.f32.mrf.mxu0
      %v6195 = vadd.f32 0.0, %v6194
      %6196 = vmatmul.bf16.gmra.mxu0 %v486
      %v6197 = vpop.f32.mrf.mxu0
      %v6198 = vadd.f32 0.0, %v6197
      %v6199 = vpop.f32.mrf.mxu0
      %v6200 = vadd.f32 0.0, %v6199
      %6201 = vmatmul.bf16.gmra.mxu0 %v487
      %v6202 = vpop.f32.mrf.mxu0
      %v6203 = vadd.f32 0.0, %v6202
      %v6204 = vpop.f32.mrf.mxu0
      %v6205 = vadd.f32 0.0, %v6204
      %6206 = vmatmul.bf16.gmra.mxu0 %v488
      %v6207 = vpop.f32.mrf.mxu0
      %v6208 = vadd.f32 0.0, %v6207
      %v6209 = vpop.f32.mrf.mxu0
      %v6210 = vadd.f32 0.0, %v6209
      %6211 = vmatmul.bf16.gmra.mxu0 %v489
      %v6212 = vpop.f32.mrf.mxu0
      %v6213 = vadd.f32 0.0, %v6212
      %v6214 = vpop.f32.mrf.mxu0
      %v6215 = vadd.f32 0.0, %v6214
      %6216 = vmatmul.bf16.gmra.mxu0 %v490
      %v6217 = vpop.f32.mrf.mxu0
      %v6218 = vadd.f32 0.0, %v6217
      %v6219 = vpop.f32.mrf.mxu0
      %v6220 = vadd.f32 0.0, %v6219
      %6221 = vmatmul.bf16.gmra.mxu0 %v491
      %v6222 = vpop.f32.mrf.mxu0
      %v6223 = vadd.f32 0.0, %v6222
      %v6224 = vpop.f32.mrf.mxu0
      %v6225 = vadd.f32 0.0, %v6224
      %6226 = vmatmul.bf16.gmra.mxu0 %v492
      %v6227 = vpop.f32.mrf.mxu0
      %v6228 = vadd.f32 0.0, %v6227
      %v6229 = vpop.f32.mrf.mxu0
      %v6230 = vadd.f32 0.0, %v6229
      %6231 = vmatmul.bf16.gmra.mxu0 %v493
      %v6232 = vpop.f32.mrf.mxu0
      %v6233 = vadd.f32 0.0, %v6232
      %v6234 = vpop.f32.mrf.mxu0
      %v6235 = vadd.f32 0.0, %v6234
      %6236 = vmatmul.bf16.gmra.mxu0 %v494
      %v6237 = vpop.f32.mrf.mxu0
      %v6238 = vadd.f32 0.0, %v6237
      %v6239 = vpop.f32.mrf.mxu0
      %v6240 = vadd.f32 0.0, %v6239
      %6241 = vmatmul.bf16.gmra.mxu0 %v495
      %v6242 = vpop.f32.mrf.mxu0
      %v6243 = vadd.f32 0.0, %v6242
      %v6244 = vpop.f32.mrf.mxu0
      %v6245 = vadd.f32 0.0, %v6244
      %6246 = vmatmul.bf16.gmra.mxu0 %v496
      %v6247 = vpop.f32.mrf.mxu0
      %v6248 = vadd.f32 0.0, %v6247
      %v6249 = vpop.f32.mrf.mxu0
      %v6250 = vadd.f32 0.0, %v6249
      %6251 = vmatmul.bf16.gmra.mxu0 %v497
      %v6252 = vpop.f32.mrf.mxu0
      %v6253 = vadd.f32 0.0, %v6252
      %v6254 = vpop.f32.mrf.mxu0
      %v6255 = vadd.f32 0.0, %v6254
      %6256 = vmatmul.bf16.gmra.mxu0 %v498
      %v6257 = vpop.f32.mrf.mxu0
      %v6258 = vadd.f32 0.0, %v6257
      %v6259 = vpop.f32.mrf.mxu0
      %v6260 = vadd.f32 0.0, %v6259
      %6261 = vmatmul.bf16.gmra.mxu0 %v499
      %v6262 = vpop.f32.mrf.mxu0
      %v6263 = vadd.f32 0.0, %v6262
      %v6264 = vpop.f32.mrf.mxu0
      %v6265 = vadd.f32 0.0, %v6264
      %6266 = vmatmul.bf16.gmra.mxu0 %v500
      %v6267 = vpop.f32.mrf.mxu0
      %v6268 = vadd.f32 0.0, %v6267
      %v6269 = vpop.f32.mrf.mxu0
      %v6270 = vadd.f32 0.0, %v6269
      %6271 = vmatmul.bf16.gmra.mxu0 %v501
      %v6272 = vpop.f32.mrf.mxu0
      %v6273 = vadd.f32 0.0, %v6272
      %v6274 = vpop.f32.mrf.mxu0
      %v6275 = vadd.f32 0.0, %v6274
      %6276 = vmatmul.bf16.gmra.mxu0 %v3515
      %v6277 = vpop.f32.mrf.mxu0
      %v6278 = vadd.f32 0.0, %v6277
      %v6279 = vpop.f32.mrf.mxu0
      %v6280 = vadd.f32 0.0, %v6279
      %6281 = vmatmul.bf16.gmra.mxu0 %v3516
      %v6282 = vpop.f32.mrf.mxu0
      %v6283 = vadd.f32 0.0, %v6282
      %v6284 = vpop.f32.mrf.mxu0
      %v6285 = vadd.f32 0.0, %v6284
      %6286 = vmatmul.bf16.gmra.mxu0 %v3517
      %v6287 = vpop.f32.mrf.mxu0
      %v6288 = vadd.f32 0.0, %v6287
      %v6289 = vpop.f32.mrf.mxu0
      %v6290 = vadd.f32 0.0, %v6289
      %6291 = vmatmul.bf16.gmra.mxu0 %v6105
      %v6292 = vpop.f32.mrf.mxu0
      %v6293 = vadd.f32 0.0, %v6292
      %v6294 = vpop.f32.mrf.mxu0
      %v6295 = vadd.f32 0.0, %v6294
      %6296 = vmatmul.bf16.gmra.mxu0 %v6106
      %v6297 = vpop.f32.mrf.mxu0
      %v6298 = vadd.f32 0.0, %v6297
      %v6299 = vpop.f32.mrf.mxu0
      %v6300 = vadd.f32 0.0, %v6299
      %6301 = vmatmul.bf16.gmra.mxu0 %v2092
      %v6302 = vpop.f32.mrf.mxu0
      %v6303 = vadd.f32 0.0, %v6302
      %v6304 = vpop.f32.mrf.mxu0
      %v6305 = vadd.f32 0.0, %v6304
      %6306 = vmatmul.bf16.gmra.mxu0 %v6107
      %v6307 = vpop.f32.mrf.mxu0
      %v6308 = vadd.f32 0.0, %v6307
      %v6309 = vpop.f32.mrf.mxu0
      %6310 = vdwg.mxu0
      %v6311 = vadd.f32 %v6054, %v6183
      %v6312 = vadd.f32 %v6055, %v6185
      %v6313 = vadd.f32 %v6056, %v6188
      %v6314 = vadd.f32 %v6057, %v6190
      %v6315 = vadd.f32 %v6058, %v6193
      %v6316 = vadd.f32 %v6059, %v6195
      %v6317 = vadd.f32 %v6060, %v6198
      %v6318 = vadd.f32 %v6061, %v6200
      %v6319 = vadd.f32 %v6062, %v6203
      %v6320 = vadd.f32 %v6063, %v6205
      %v6321 = vadd.f32 %v6064, %v6208
      %v6322 = vadd.f32 %v6065, %v6210
      %v6323 = vadd.f32 %v6066, %v6213
      %v6324 = vadd.f32 %v6067, %v6215
      %v6325 = vadd.f32 %v6068, %v6218
      %v6326 = vadd.f32 %v6069, %v6220
      %v6327 = vadd.f32 %v6070, %v6223
      %v6328 = vadd.f32 %v6071, %v6225
      %v6329 = vadd.f32 %v6072, %v6228
      %v6330 = vadd.f32 %v6073, %v6230
      %v6331 = vadd.f32 %v6074, %v6233
      %v6332 = vadd.f32 %v6075, %v6235
      %v6333 = vadd.f32 %v6076, %v6238
      %v6334 = vadd.f32 %v6077, %v6240
      %v6335 = vadd.f32 %v6078, %v6243
      %v6336 = vadd.f32 %v6079, %v6245
      %v6337 = vadd.f32 %v6080, %v6248
      %v6338 = vadd.f32 %v6081, %v6250
      %v6339 = vadd.f32 %v6082, %v6253
      %v6340 = vadd.f32 %v6083, %v6255
      %v6341 = vadd.f32 %v6084, %v6258
      %v6342 = vadd.f32 %v6085, %v6260
      %v6343 = vadd.f32 %v6086, %v6263
      %v6344 = vadd.f32 %v6087, %v6265
      %v6345 = vadd.f32 %v6088, %v6268
      %v6346 = vadd.f32 %v6089, %v6270
      %v6347 = vadd.f32 %v6090, %v6273
      %v6348 = vadd.f32 %v6091, %v6275
      %v6349 = vadd.f32 %v6092, %v6278
      %v6350 = vadd.f32 %v6093, %v6280
      %v6351 = vadd.f32 %v6094, %v6283
      %v6352 = vadd.f32 %v6095, %v6285
      %v6353 = vadd.f32 %v6096, %v6288
      %v6354 = vadd.f32 %v6097, %v6290
      %v6355 = vadd.f32 %v6098, %v6293
      %v6356 = vadd.f32 %v6099, %v6295
      %v6357 = vadd.f32 %v6100, %v6298
      %v6358 = vadd.f32 %v6101, %v6300
      %v6359 = vadd.f32 %v6102, %v6303
      %v6360 = vadd.f32 %v6103, %v6305
      %v6361 = vadd.f32 %v6104, %v6308
      %v6362 = vpack.c.bf16 %v370, %v369
      %v6363 = vpack.c.bf16 %v372, %v371
      %v6364 = vpack.c.bf16 %v318, %v318
      %s6365 = scalar_lea.vmem %s1, 1344
      %v6366 = vld [vmem:[%s6365] sm:$0xf]
      %v6367 = vld [vmem:[%s6365 + $0x4] sm:$0xf]
      %v6368 = vld [vmem:[%s6365 + $0x8] sm:$0xf]
      %v6369 = vld [vmem:[%s6365 + $0xc] sm:$0xf]
      %v6370 = vld [vmem:[%s6365 + $0x10] sm:$0xf]
      %v6371 = vld [vmem:[%s6365 + $0x14] sm:$0xf]
      %v6372 = vld [vmem:[%s6365 + $0x18] sm:$0xf]
      %v6373 = vld [vmem:[%s6365 + $0x1c] sm:$0xf]
      %v6374 = vld [vmem:[%s6365 + $0x20] sm:$0xf]
      %v6375 = vld [vmem:[%s6365 + $0x24] sm:$0xf]
      %v6376 = vld [vmem:[%s6365 + $0x28] sm:$0xf]
      %v6377 = vld [vmem:[%s6365 + $0x2c] sm:$0xf]
      %v6378 = vld [vmem:[%s6365 + $0x30] sm:$0xf]
      %v6379 = vld [vmem:[%s6365 + $0x34] sm:$0xf]
      %v6380 = vld [vmem:[%s6365 + $0x38] sm:$0xf]
      %v6381 = vld [vmem:[%s6365 + $0x3c] sm:$0xf]
      %v6398 = vunpack.c.l.b16 %v6366
      %v6399 = vunpack.c.l.b16 %v6367
      %v6400 = vunpack.c.l.b16 %v6368
      %v6401 = vunpack.c.l.b16 %v6369
      %v6402 = vunpack.c.l.b16 %v6370
      %v6403 = vunpack.c.l.b16 %v6371
      %v6404 = vunpack.c.l.b16 %v6372
      %v6405 = vunpack.c.l.b16 %v6373
      %v6406 = vunpack.c.l.b16 %v6374
      %v6407 = vunpack.c.l.b16 %v6375
      %v6408 = vunpack.c.l.b16 %v6376
      %v6409 = vunpack.c.l.b16 %v6377
      %v6410 = vunpack.c.l.b16 %v6378
      %v6411 = vunpack.c.l.b16 %v6379
      %v6412 = vunpack.c.l.b16 %v6380
      %v6413 = vunpack.c.l.b16 %v6381
      %v6414 = vpack.c.b16 %v6399, %v6398
      %v6415 = vpack.c.b16 %v6401, %v6400
      %v6416 = vpack.c.b16 %v6403, %v6402
      %v6417 = vpack.c.b16 %v6405, %v6404
      %v6418 = vpack.c.b16 %v6407, %v6406
      %v6419 = vpack.c.b16 %v6409, %v6408
      %v6420 = vpack.c.b16 %v6411, %v6410
      %v6421 = vpack.c.b16 %v6413, %v6412
      %6430 = vmatpush.bf16.msra.mxu0 %v6421
      %6431 = vmatpush.bf16.msra.mxu0 %v6420
      %6432 = vmatpush.bf16.msra.mxu0 %v6419
      %6433 = vmatpush.bf16.msra.mxu0 %v6418
      %6434 = vmatpush.bf16.msra.mxu0 %v6417
      %6435 = vmatpush.bf16.msra.mxu0 %v6416
      %6436 = vmatpush.bf16.msra.mxu0 %v6415
      %6437 = vmatpush.bf16.msra.mxu0 %v6414
      %6438 = vmatmul.bf16.gmra.mxu0 %v525
      %v6439 = vpop.f32.mrf.mxu0
      %v6440 = vadd.f32 0.0, %v6439
      %v6441 = vpop.f32.mrf.mxu0
      %v6442 = vadd.f32 0.0, %v6441
      %6443 = vmatmul.bf16.gmra.mxu0 %v526
      %v6444 = vpop.f32.mrf.mxu0
      %v6445 = vadd.f32 0.0, %v6444
      %v6446 = vpop.f32.mrf.mxu0
      %v6447 = vadd.f32 0.0, %v6446
      %6448 = vmatmul.bf16.gmra.mxu0 %v527
      %v6449 = vpop.f32.mrf.mxu0
      %v6450 = vadd.f32 0.0, %v6449
      %v6451 = vpop.f32.mrf.mxu0
      %v6452 = vadd.f32 0.0, %v6451
      %6453 = vmatmul.bf16.gmra.mxu0 %v528
      %v6454 = vpop.f32.mrf.mxu0
      %v6455 = vadd.f32 0.0, %v6454
      %v6456 = vpop.f32.mrf.mxu0
      %v6457 = vadd.f32 0.0, %v6456
      %6458 = vmatmul.bf16.gmra.mxu0 %v529
      %v6459 = vpop.f32.mrf.mxu0
      %v6460 = vadd.f32 0.0, %v6459
      %v6461 = vpop.f32.mrf.mxu0
      %v6462 = vadd.f32 0.0, %v6461
      %6463 = vmatmul.bf16.gmra.mxu0 %v530
      %v6464 = vpop.f32.mrf.mxu0
      %v6465 = vadd.f32 0.0, %v6464
      %v6466 = vpop.f32.mrf.mxu0
      %v6467 = vadd.f32 0.0, %v6466
      %6468 = vmatmul.bf16.gmra.mxu0 %v531
      %v6469 = vpop.f32.mrf.mxu0
      %v6470 = vadd.f32 0.0, %v6469
      %v6471 = vpop.f32.mrf.mxu0
      %v6472 = vadd.f32 0.0, %v6471
      %6473 = vmatmul.bf16.gmra.mxu0 %v532
      %v6474 = vpop.f32.mrf.mxu0
      %v6475 = vadd.f32 0.0, %v6474
      %v6476 = vpop.f32.mrf.mxu0
      %v6477 = vadd.f32 0.0, %v6476
      %6478 = vmatmul.bf16.gmra.mxu0 %v533
      %v6479 = vpop.f32.mrf.mxu0
      %v6480 = vadd.f32 0.0, %v6479
      %v6481 = vpop.f32.mrf.mxu0
      %v6482 = vadd.f32 0.0, %v6481
      %6483 = vmatmul.bf16.gmra.mxu0 %v534
      %v6484 = vpop.f32.mrf.mxu0
      %v6485 = vadd.f32 0.0, %v6484
      %v6486 = vpop.f32.mrf.mxu0
      %v6487 = vadd.f32 0.0, %v6486
      %6488 = vmatmul.bf16.gmra.mxu0 %v535
      %v6489 = vpop.f32.mrf.mxu0
      %v6490 = vadd.f32 0.0, %v6489
      %v6491 = vpop.f32.mrf.mxu0
      %v6492 = vadd.f32 0.0, %v6491
      %6493 = vmatmul.bf16.gmra.mxu0 %v536
      %v6494 = vpop.f32.mrf.mxu0
      %v6495 = vadd.f32 0.0, %v6494
      %v6496 = vpop.f32.mrf.mxu0
      %v6497 = vadd.f32 0.0, %v6496
      %6498 = vmatmul.bf16.gmra.mxu0 %v537
      %v6499 = vpop.f32.mrf.mxu0
      %v6500 = vadd.f32 0.0, %v6499
      %v6501 = vpop.f32.mrf.mxu0
      %v6502 = vadd.f32 0.0, %v6501
      %6503 = vmatmul.bf16.gmra.mxu0 %v538
      %v6504 = vpop.f32.mrf.mxu0
      %v6505 = vadd.f32 0.0, %v6504
      %v6506 = vpop.f32.mrf.mxu0
      %v6507 = vadd.f32 0.0, %v6506
      %6508 = vmatmul.bf16.gmra.mxu0 %v539
      %v6509 = vpop.f32.mrf.mxu0
      %v6510 = vadd.f32 0.0, %v6509
      %v6511 = vpop.f32.mrf.mxu0
      %v6512 = vadd.f32 0.0, %v6511
      %6513 = vmatmul.bf16.gmra.mxu0 %v540
      %v6514 = vpop.f32.mrf.mxu0
      %v6515 = vadd.f32 0.0, %v6514
      %v6516 = vpop.f32.mrf.mxu0
      %v6517 = vadd.f32 0.0, %v6516
      %6518 = vmatmul.bf16.gmra.mxu0 %v541
      %v6519 = vpop.f32.mrf.mxu0
      %v6520 = vadd.f32 0.0, %v6519
      %v6521 = vpop.f32.mrf.mxu0
      %v6522 = vadd.f32 0.0, %v6521
      %6523 = vmatmul.bf16.gmra.mxu0 %v542
      %v6524 = vpop.f32.mrf.mxu0
      %v6525 = vadd.f32 0.0, %v6524
      %v6526 = vpop.f32.mrf.mxu0
      %v6527 = vadd.f32 0.0, %v6526
      %6528 = vmatmul.bf16.gmra.mxu0 %v543
      %v6529 = vpop.f32.mrf.mxu0
      %v6530 = vadd.f32 0.0, %v6529
      %v6531 = vpop.f32.mrf.mxu0
      %v6532 = vadd.f32 0.0, %v6531
      %6533 = vmatmul.bf16.gmra.mxu0 %v3773
      %v6534 = vpop.f32.mrf.mxu0
      %v6535 = vadd.f32 0.0, %v6534
      %v6536 = vpop.f32.mrf.mxu0
      %v6537 = vadd.f32 0.0, %v6536
      %6538 = vmatmul.bf16.gmra.mxu0 %v3774
      %v6539 = vpop.f32.mrf.mxu0
      %v6540 = vadd.f32 0.0, %v6539
      %v6541 = vpop.f32.mrf.mxu0
      %v6542 = vadd.f32 0.0, %v6541
      %6543 = vmatmul.bf16.gmra.mxu0 %v3775
      %v6544 = vpop.f32.mrf.mxu0
      %v6545 = vadd.f32 0.0, %v6544
      %v6546 = vpop.f32.mrf.mxu0
      %v6547 = vadd.f32 0.0, %v6546
      %6548 = vmatmul.bf16.gmra.mxu0 %v6362
      %v6549 = vpop.f32.mrf.mxu0
      %v6550 = vadd.f32 0.0, %v6549
      %v6551 = vpop.f32.mrf.mxu0
      %v6552 = vadd.f32 0.0, %v6551
      %6553 = vmatmul.bf16.gmra.mxu0 %v6363
      %v6554 = vpop.f32.mrf.mxu0
      %v6555 = vadd.f32 0.0, %v6554
      %v6556 = vpop.f32.mrf.mxu0
      %v6557 = vadd.f32 0.0, %v6556
      %6558 = vmatmul.bf16.gmra.mxu0 %v2372
      %v6559 = vpop.f32.mrf.mxu0
      %v6560 = vadd.f32 0.0, %v6559
      %v6561 = vpop.f32.mrf.mxu0
      %v6562 = vadd.f32 0.0, %v6561
      %6563 = vmatmul.bf16.gmra.mxu0 %v6364
      %v6564 = vpop.f32.mrf.mxu0
      %v6565 = vadd.f32 0.0, %v6564
      %v6566 = vpop.f32.mrf.mxu0
      %6567 = vdwg.mxu0
      %v6568 = vadd.f32 %v6311, %v6440
      %v6569 = vadd.f32 %v6312, %v6442
      %v6570 = vadd.f32 %v6313, %v6445
      %v6571 = vadd.f32 %v6314, %v6447
      %v6572 = vadd.f32 %v6315, %v6450
      %v6573 = vadd.f32 %v6316, %v6452
      %v6574 = vadd.f32 %v6317, %v6455
      %v6575 = vadd.f32 %v6318, %v6457
      %v6576 = vadd.f32 %v6319, %v6460
      %v6577 = vadd.f32 %v6320, %v6462
      %v6578 = vadd.f32 %v6321, %v6465
      %v6579 = vadd.f32 %v6322, %v6467
      %v6580 = vadd.f32 %v6323, %v6470
      %v6581 = vadd.f32 %v6324, %v6472
      %v6582 = vadd.f32 %v6325, %v6475
      %v6583 = vadd.f32 %v6326, %v6477
      %v6584 = vadd.f32 %v6327, %v6480
      %v6585 = vadd.f32 %v6328, %v6482
      %v6586 = vadd.f32 %v6329, %v6485
      %v6587 = vadd.f32 %v6330, %v6487
      %v6588 = vadd.f32 %v6331, %v6490
      %v6589 = vadd.f32 %v6332, %v6492
      %v6590 = vadd.f32 %v6333, %v6495
      %v6591 = vadd.f32 %v6334, %v6497
      %v6592 = vadd.f32 %v6335, %v6500
      %v6593 = vadd.f32 %v6336, %v6502
      %v6594 = vadd.f32 %v6337, %v6505
      %v6595 = vadd.f32 %v6338, %v6507
      %v6596 = vadd.f32 %v6339, %v6510
      %v6597 = vadd.f32 %v6340, %v6512
      %v6598 = vadd.f32 %v6341, %v6515
      %v6599 = vadd.f32 %v6342, %v6517
      %v6600 = vadd.f32 %v6343, %v6520
      %v6601 = vadd.f32 %v6344, %v6522
      %v6602 = vadd.f32 %v6345, %v6525
      %v6603 = vadd.f32 %v6346, %v6527
      %v6604 = vadd.f32 %v6347, %v6530
      %v6605 = vadd.f32 %v6348, %v6532
      %v6606 = vadd.f32 %v6349, %v6535
      %v6607 = vadd.f32 %v6350, %v6537
      %v6608 = vadd.f32 %v6351, %v6540
      %v6609 = vadd.f32 %v6352, %v6542
      %v6610 = vadd.f32 %v6353, %v6545
      %v6611 = vadd.f32 %v6354, %v6547
      %v6612 = vadd.f32 %v6355, %v6550
      %v6613 = vadd.f32 %v6356, %v6552
      %v6614 = vadd.f32 %v6357, %v6555
      %v6615 = vadd.f32 %v6358, %v6557
      %v6616 = vadd.f32 %v6359, %v6560
      %v6617 = vadd.f32 %v6360, %v6562
      %v6618 = vadd.f32 %v6361, %v6565
      %v6619 = vpack.c.bf16 %v988, %v4033
      %v6620 = vpack.c.bf16 %v1037, %v987
      %v6621 = vpack.c.bf16 %v1034, %v1034
      %s6622 = scalar_lea.vmem %s1, 1408
      %v6623 = vld [vmem:[%s6622] sm:$0xf]
      %v6624 = vld [vmem:[%s6622 + $0x4] sm:$0xf]
      %v6625 = vld [vmem:[%s6622 + $0x8] sm:$0xf]
      %v6626 = vld [vmem:[%s6622 + $0xc] sm:$0xf]
      %v6627 = vld [vmem:[%s6622 + $0x10] sm:$0xf]
      %v6628 = vld [vmem:[%s6622 + $0x14] sm:$0xf]
      %v6629 = vld [vmem:[%s6622 + $0x18] sm:$0xf]
      %v6630 = vld [vmem:[%s6622 + $0x1c] sm:$0xf]
      %v6631 = vld [vmem:[%s6622 + $0x20] sm:$0xf]
      %v6632 = vld [vmem:[%s6622 + $0x24] sm:$0xf]
      %v6633 = vld [vmem:[%s6622 + $0x28] sm:$0xf]
      %v6634 = vld [vmem:[%s6622 + $0x2c] sm:$0xf]
      %v6635 = vld [vmem:[%s6622 + $0x30] sm:$0xf]
      %v6636 = vld [vmem:[%s6622 + $0x34] sm:$0xf]
      %v6637 = vld [vmem:[%s6622 + $0x38] sm:$0xf]
      %v6638 = vld [vmem:[%s6622 + $0x3c] sm:$0xf]
      %v6655 = vunpack.c.l.b16 %v6623
      %v6656 = vunpack.c.l.b16 %v6624
      %v6657 = vunpack.c.l.b16 %v6625
      %v6658 = vunpack.c.l.b16 %v6626
      %v6659 = vunpack.c.l.b16 %v6627
      %v6660 = vunpack.c.l.b16 %v6628
      %v6661 = vunpack.c.l.b16 %v6629
      %v6662 = vunpack.c.l.b16 %v6630
      %v6663 = vunpack.c.l.b16 %v6631
      %v6664 = vunpack.c.l.b16 %v6632
      %v6665 = vunpack.c.l.b16 %v6633
      %v6666 = vunpack.c.l.b16 %v6634
      %v6667 = vunpack.c.l.b16 %v6635
      %v6668 = vunpack.c.l.b16 %v6636
      %v6669 = vunpack.c.l.b16 %v6637
      %v6670 = vunpack.c.l.b16 %v6638
      %v6671 = vpack.c.b16 %v6656, %v6655
      %v6672 = vpack.c.b16 %v6658, %v6657
      %v6673 = vpack.c.b16 %v6660, %v6659
      %v6674 = vpack.c.b16 %v6662, %v6661
      %v6675 = vpack.c.b16 %v6664, %v6663
      %v6676 = vpack.c.b16 %v6666, %v6665
      %v6677 = vpack.c.b16 %v6668, %v6667
      %v6678 = vpack.c.b16 %v6670, %v6669
      %6687 = vmatpush.bf16.msra.mxu0 %v6678
      %6688 = vmatpush.bf16.msra.mxu0 %v6677
      %6689 = vmatpush.bf16.msra.mxu0 %v6676
      %6690 = vmatpush.bf16.msra.mxu0 %v6675
      %6691 = vmatpush.bf16.msra.mxu0 %v6674
      %6692 = vmatpush.bf16.msra.mxu0 %v6673
      %6693 = vmatpush.bf16.msra.mxu0 %v6672
      %6694 = vmatpush.bf16.msra.mxu0 %v6671
      %6695 = vmatmul.bf16.gmra.mxu0 %v1044
      %v6696 = vpop.f32.mrf.mxu0
      %v6697 = vadd.f32 0.0, %v6696
      %v6698 = vpop.f32.mrf.mxu0
      %v6699 = vadd.f32 0.0, %v6698
      %6700 = vmatmul.bf16.gmra.mxu0 %v1045
      %v6701 = vpop.f32.mrf.mxu0
      %v6702 = vadd.f32 0.0, %v6701
      %v6703 = vpop.f32.mrf.mxu0
      %v6704 = vadd.f32 0.0, %v6703
      %6705 = vmatmul.bf16.gmra.mxu0 %v1046
      %v6706 = vpop.f32.mrf.mxu0
      %v6707 = vadd.f32 0.0, %v6706
      %v6708 = vpop.f32.mrf.mxu0
      %v6709 = vadd.f32 0.0, %v6708
      %6710 = vmatmul.bf16.gmra.mxu0 %v1047
      %v6711 = vpop.f32.mrf.mxu0
      %v6712 = vadd.f32 0.0, %v6711
      %v6713 = vpop.f32.mrf.mxu0
      %v6714 = vadd.f32 0.0, %v6713
      %6715 = vmatmul.bf16.gmra.mxu0 %v1048
      %v6716 = vpop.f32.mrf.mxu0
      %v6717 = vadd.f32 0.0, %v6716
      %v6718 = vpop.f32.mrf.mxu0
      %v6719 = vadd.f32 0.0, %v6718
      %6720 = vmatmul.bf16.gmra.mxu0 %v1049
      %v6721 = vpop.f32.mrf.mxu0
      %v6722 = vadd.f32 0.0, %v6721
      %v6723 = vpop.f32.mrf.mxu0
      %v6724 = vadd.f32 0.0, %v6723
      %6725 = vmatmul.bf16.gmra.mxu0 %v1050
      %v6726 = vpop.f32.mrf.mxu0
      %v6727 = vadd.f32 0.0, %v6726
      %v6728 = vpop.f32.mrf.mxu0
      %v6729 = vadd.f32 0.0, %v6728
      %6730 = vmatmul.bf16.gmra.mxu0 %v1051
      %v6731 = vpop.f32.mrf.mxu0
      %v6732 = vadd.f32 0.0, %v6731
      %v6733 = vpop.f32.mrf.mxu0
      %v6734 = vadd.f32 0.0, %v6733
      %6735 = vmatmul.bf16.gmra.mxu0 %v1052
      %v6736 = vpop.f32.mrf.mxu0
      %v6737 = vadd.f32 0.0, %v6736
      %v6738 = vpop.f32.mrf.mxu0
      %v6739 = vadd.f32 0.0, %v6738
      %6740 = vmatmul.bf16.gmra.mxu0 %v1053
      %v6741 = vpop.f32.mrf.mxu0
      %v6742 = vadd.f32 0.0, %v6741
      %v6743 = vpop.f32.mrf.mxu0
      %v6744 = vadd.f32 0.0, %v6743
      %6745 = vmatmul.bf16.gmra.mxu0 %v1054
      %v6746 = vpop.f32.mrf.mxu0
      %v6747 = vadd.f32 0.0, %v6746
      %v6748 = vpop.f32.mrf.mxu0
      %v6749 = vadd.f32 0.0, %v6748
      %6750 = vmatmul.bf16.gmra.mxu0 %v1055
      %v6751 = vpop.f32.mrf.mxu0
      %v6752 = vadd.f32 0.0, %v6751
      %v6753 = vpop.f32.mrf.mxu0
      %v6754 = vadd.f32 0.0, %v6753
      %6755 = vmatmul.bf16.gmra.mxu0 %v1056
      %v6756 = vpop.f32.mrf.mxu0
      %v6757 = vadd.f32 0.0, %v6756
      %v6758 = vpop.f32.mrf.mxu0
      %v6759 = vadd.f32 0.0, %v6758
      %6760 = vmatmul.bf16.gmra.mxu0 %v1057
      %v6761 = vpop.f32.mrf.mxu0
      %v6762 = vadd.f32 0.0, %v6761
      %v6763 = vpop.f32.mrf.mxu0
      %v6764 = vadd.f32 0.0, %v6763
      %6765 = vmatmul.bf16.gmra.mxu0 %v1058
      %v6766 = vpop.f32.mrf.mxu0
      %v6767 = vadd.f32 0.0, %v6766
      %v6768 = vpop.f32.mrf.mxu0
      %v6769 = vadd.f32 0.0, %v6768
      %6770 = vmatmul.bf16.gmra.mxu0 %v1059
      %v6771 = vpop.f32.mrf.mxu0
      %v6772 = vadd.f32 0.0, %v6771
      %v6773 = vpop.f32.mrf.mxu0
      %v6774 = vadd.f32 0.0, %v6773
      %6775 = vmatmul.bf16.gmra.mxu0 %v1060
      %v6776 = vpop.f32.mrf.mxu0
      %v6777 = vadd.f32 0.0, %v6776
      %v6778 = vpop.f32.mrf.mxu0
      %v6779 = vadd.f32 0.0, %v6778
      %6780 = vmatmul.bf16.gmra.mxu0 %v1061
      %v6781 = vpop.f32.mrf.mxu0
      %v6782 = vadd.f32 0.0, %v6781
      %v6783 = vpop.f32.mrf.mxu0
      %v6784 = vadd.f32 0.0, %v6783
      %6785 = vmatmul.bf16.gmra.mxu0 %v1062
      %v6786 = vpop.f32.mrf.mxu0
      %v6787 = vadd.f32 0.0, %v6786
      %v6788 = vpop.f32.mrf.mxu0
      %v6789 = vadd.f32 0.0, %v6788
      %6790 = vmatmul.bf16.gmra.mxu0 %v4036
      %v6791 = vpop.f32.mrf.mxu0
      %v6792 = vadd.f32 0.0, %v6791
      %v6793 = vpop.f32.mrf.mxu0
      %v6794 = vadd.f32 0.0, %v6793
      %6795 = vmatmul.bf16.gmra.mxu0 %v4037
      %v6796 = vpop.f32.mrf.mxu0
      %v6797 = vadd.f32 0.0, %v6796
      %v6798 = vpop.f32.mrf.mxu0
      %v6799 = vadd.f32 0.0, %v6798
      %6800 = vmatmul.bf16.gmra.mxu0 %v4038
      %v6801 = vpop.f32.mrf.mxu0
      %v6802 = vadd.f32 0.0, %v6801
      %v6803 = vpop.f32.mrf.mxu0
      %v6804 = vadd.f32 0.0, %v6803
      %6805 = vmatmul.bf16.gmra.mxu0 %v6619
      %v6806 = vpop.f32.mrf.mxu0
      %v6807 = vadd.f32 0.0, %v6806
      %v6808 = vpop.f32.mrf.mxu0
      %v6809 = vadd.f32 0.0, %v6808
      %6810 = vmatmul.bf16.gmra.mxu0 %v6620
      %v6811 = vpop.f32.mrf.mxu0
      %v6812 = vadd.f32 0.0, %v6811
      %v6813 = vpop.f32.mrf.mxu0
      %v6814 = vadd.f32 0.0, %v6813
      %6815 = vmatmul.bf16.gmra.mxu0 %v2658
      %v6816 = vpop.f32.mrf.mxu0
      %v6817 = vadd.f32 0.0, %v6816
      %v6818 = vpop.f32.mrf.mxu0
      %v6819 = vadd.f32 0.0, %v6818
      %6820 = vmatmul.bf16.gmra.mxu0 %v6621
      %v6821 = vpop.f32.mrf.mxu0
      %v6822 = vadd.f32 0.0, %v6821
      %v6823 = vpop.f32.mrf.mxu0
      %6824 = vdwg.mxu0
      %v6825 = vadd.f32 %v6568, %v6697
      %v6826 = vadd.f32 %v6569, %v6699
      %v6827 = vadd.f32 %v6570, %v6702
      %v6828 = vadd.f32 %v6571, %v6704
      %v6829 = vadd.f32 %v6572, %v6707
      %v6830 = vadd.f32 %v6573, %v6709
      %v6831 = vadd.f32 %v6574, %v6712
      %v6832 = vadd.f32 %v6575, %v6714
      %v6833 = vadd.f32 %v6576, %v6717
      %v6834 = vadd.f32 %v6577, %v6719
      %v6835 = vadd.f32 %v6578, %v6722
      %v6836 = vadd.f32 %v6579, %v6724
      %v6837 = vadd.f32 %v6580, %v6727
      %v6838 = vadd.f32 %v6581, %v6729
      %v6839 = vadd.f32 %v6582, %v6732
      %v6840 = vadd.f32 %v6583, %v6734
      %v6841 = vadd.f32 %v6584, %v6737
      %v6842 = vadd.f32 %v6585, %v6739
      %v6843 = vadd.f32 %v6586, %v6742
      %v6844 = vadd.f32 %v6587, %v6744
      %v6845 = vadd.f32 %v6588, %v6747
      %v6846 = vadd.f32 %v6589, %v6749
      %v6847 = vadd.f32 %v6590, %v6752
      %v6848 = vadd.f32 %v6591, %v6754
      %v6849 = vadd.f32 %v6592, %v6757
      %v6850 = vadd.f32 %v6593, %v6759
      %v6851 = vadd.f32 %v6594, %v6762
      %v6852 = vadd.f32 %v6595, %v6764
      %v6853 = vadd.f32 %v6596, %v6767
      %v6854 = vadd.f32 %v6597, %v6769
      %v6855 = vadd.f32 %v6598, %v6772
      %v6856 = vadd.f32 %v6599, %v6774
      %v6857 = vadd.f32 %v6600, %v6777
      %v6858 = vadd.f32 %v6601, %v6779
      %v6859 = vadd.f32 %v6602, %v6782
      %v6860 = vadd.f32 %v6603, %v6784
      %v6861 = vadd.f32 %v6604, %v6787
      %v6862 = vadd.f32 %v6605, %v6789
      %v6863 = vadd.f32 %v6606, %v6792
      %v6864 = vadd.f32 %v6607, %v6794
      %v6865 = vadd.f32 %v6608, %v6797
      %v6866 = vadd.f32 %v6609, %v6799
      %v6867 = vadd.f32 %v6610, %v6802
      %v6868 = vadd.f32 %v6611, %v6804
      %v6869 = vadd.f32 %v6612, %v6807
      %v6870 = vadd.f32 %v6613, %v6809
      %v6871 = vadd.f32 %v6614, %v6812
      %v6872 = vadd.f32 %v6615, %v6814
      %v6873 = vadd.f32 %v6616, %v6817
      %v6874 = vadd.f32 %v6617, %v6819
      %v6875 = vadd.f32 %v6618, %v6822
      %v6876 = vpack.c.bf16 %v1372, %v4296
      %v6877 = vpack.c.bf16 %v1421, %v1371
      %v6878 = vpack.c.bf16 %v1418, %v1418
      %s6879 = scalar_lea.vmem %s1, 1472
      %v6880 = vld [vmem:[%s6879] sm:$0xf]
      %v6881 = vld [vmem:[%s6879 + $0x4] sm:$0xf]
      %v6882 = vld [vmem:[%s6879 + $0x8] sm:$0xf]
      %v6883 = vld [vmem:[%s6879 + $0xc] sm:$0xf]
      %v6884 = vld [vmem:[%s6879 + $0x10] sm:$0xf]
      %v6885 = vld [vmem:[%s6879 + $0x14] sm:$0xf]
      %v6886 = vld [vmem:[%s6879 + $0x18] sm:$0xf]
      %v6887 = vld [vmem:[%s6879 + $0x1c] sm:$0xf]
      %v6888 = vld [vmem:[%s6879 + $0x20] sm:$0xf]
      %v6889 = vld [vmem:[%s6879 + $0x24] sm:$0xf]
      %v6890 = vld [vmem:[%s6879 + $0x28] sm:$0xf]
      %v6891 = vld [vmem:[%s6879 + $0x2c] sm:$0xf]
      %v6892 = vld [vmem:[%s6879 + $0x30] sm:$0xf]
      %v6893 = vld [vmem:[%s6879 + $0x34] sm:$0xf]
      %v6894 = vld [vmem:[%s6879 + $0x38] sm:$0xf]
      %v6895 = vld [vmem:[%s6879 + $0x3c] sm:$0xf]
      %v6912 = vunpack.c.l.b16 %v6880
      %v6913 = vunpack.c.l.b16 %v6881
      %v6914 = vunpack.c.l.b16 %v6882
      %v6915 = vunpack.c.l.b16 %v6883
      %v6916 = vunpack.c.l.b16 %v6884
      %v6917 = vunpack.c.l.b16 %v6885
      %v6918 = vunpack.c.l.b16 %v6886
      %v6919 = vunpack.c.l.b16 %v6887
      %v6920 = vunpack.c.l.b16 %v6888
      %v6921 = vunpack.c.l.b16 %v6889
      %v6922 = vunpack.c.l.b16 %v6890
      %v6923 = vunpack.c.l.b16 %v6891
      %v6924 = vunpack.c.l.b16 %v6892
      %v6925 = vunpack.c.l.b16 %v6893
      %v6926 = vunpack.c.l.b16 %v6894
      %v6927 = vunpack.c.l.b16 %v6895
      %v6928 = vpack.c.b16 %v6913, %v6912
      %v6929 = vpack.c.b16 %v6915, %v6914
      %v6930 = vpack.c.b16 %v6917, %v6916
      %v6931 = vpack.c.b16 %v6919, %v6918
      %v6932 = vpack.c.b16 %v6921, %v6920
      %v6933 = vpack.c.b16 %v6923, %v6922
      %v6934 = vpack.c.b16 %v6925, %v6924
      %v6935 = vpack.c.b16 %v6927, %v6926
      %6944 = vmatpush.bf16.msra.mxu0 %v6935
      %6945 = vmatpush.bf16.msra.mxu0 %v6934
      %6946 = vmatpush.bf16.msra.mxu0 %v6933
      %6947 = vmatpush.bf16.msra.mxu0 %v6932
      %6948 = vmatpush.bf16.msra.mxu0 %v6931
      %6949 = vmatpush.bf16.msra.mxu0 %v6930
      %6950 = vmatpush.bf16.msra.mxu0 %v6929
      %6951 = vmatpush.bf16.msra.mxu0 %v6928
      %6952 = vmatmul.bf16.gmra.mxu0 %v1428
      %v6953 = vpop.f32.mrf.mxu0
      %v6954 = vadd.f32 0.0, %v6953
      %v6955 = vpop.f32.mrf.mxu0
      %v6956 = vadd.f32 0.0, %v6955
      %6957 = vmatmul.bf16.gmra.mxu0 %v1429
      %v6958 = vpop.f32.mrf.mxu0
      %v6959 = vadd.f32 0.0, %v6958
      %v6960 = vpop.f32.mrf.mxu0
      %v6961 = vadd.f32 0.0, %v6960
      %6962 = vmatmul.bf16.gmra.mxu0 %v1430
      %v6963 = vpop.f32.mrf.mxu0
      %v6964 = vadd.f32 0.0, %v6963
      %v6965 = vpop.f32.mrf.mxu0
      %v6966 = vadd.f32 0.0, %v6965
      %6967 = vmatmul.bf16.gmra.mxu0 %v1431
      %v6968 = vpop.f32.mrf.mxu0
      %v6969 = vadd.f32 0.0, %v6968
      %v6970 = vpop.f32.mrf.mxu0
      %v6971 = vadd.f32 0.0, %v6970
      %6972 = vmatmul.bf16.gmra.mxu0 %v1432
      %v6973 = vpop.f32.mrf.mxu0
      %v6974 = vadd.f32 0.0, %v6973
      %v6975 = vpop.f32.mrf.mxu0
      %v6976 = vadd.f32 0.0, %v6975
      %6977 = vmatmul.bf16.gmra.mxu0 %v1433
      %v6978 = vpop.f32.mrf.mxu0
      %v6979 = vadd.f32 0.0, %v6978
      %v6980 = vpop.f32.mrf.mxu0
      %v6981 = vadd.f32 0.0, %v6980
      %6982 = vmatmul.bf16.gmra.mxu0 %v1434
      %v6983 = vpop.f32.mrf.mxu0
      %v6984 = vadd.f32 0.0, %v6983
      %v6985 = vpop.f32.mrf.mxu0
      %v6986 = vadd.f32 0.0, %v6985
      %6987 = vmatmul.bf16.gmra.mxu0 %v1435
      %v6988 = vpop.f32.mrf.mxu0
      %v6989 = vadd.f32 0.0, %v6988
      %v6990 = vpop.f32.mrf.mxu0
      %v6991 = vadd.f32 0.0, %v6990
      %6992 = vmatmul.bf16.gmra.mxu0 %v1436
      %v6993 = vpop.f32.mrf.mxu0
      %v6994 = vadd.f32 0.0, %v6993
      %v6995 = vpop.f32.mrf.mxu0
      %v6996 = vadd.f32 0.0, %v6995
      %6997 = vmatmul.bf16.gmra.mxu0 %v1437
      %v6998 = vpop.f32.mrf.mxu0
      %v6999 = vadd.f32 0.0, %v6998
      %v7000 = vpop.f32.mrf.mxu0
      %v7001 = vadd.f32 0.0, %v7000
      %7002 = vmatmul.bf16.gmra.mxu0 %v1438
      %v7003 = vpop.f32.mrf.mxu0
      %v7004 = vadd.f32 0.0, %v7003
      %v7005 = vpop.f32.mrf.mxu0
      %v7006 = vadd.f32 0.0, %v7005
      %7007 = vmatmul.bf16.gmra.mxu0 %v1439
      %v7008 = vpop.f32.mrf.mxu0
      %v7009 = vadd.f32 0.0, %v7008
      %v7010 = vpop.f32.mrf.mxu0
      %v7011 = vadd.f32 0.0, %v7010
      %7012 = vmatmul.bf16.gmra.mxu0 %v1440
      %v7013 = vpop.f32.mrf.mxu0
      %v7014 = vadd.f32 0.0, %v7013
      %v7015 = vpop.f32.mrf.mxu0
      %v7016 = vadd.f32 0.0, %v7015
      %7017 = vmatmul.bf16.gmra.mxu0 %v1441
      %v7018 = vpop.f32.mrf.mxu0
      %v7019 = vadd.f32 0.0, %v7018
      %v7020 = vpop.f32.mrf.mxu0
      %v7021 = vadd.f32 0.0, %v7020
      %7022 = vmatmul.bf16.gmra.mxu0 %v1442
      %v7023 = vpop.f32.mrf.mxu0
      %v7024 = vadd.f32 0.0, %v7023
      %v7025 = vpop.f32.mrf.mxu0
      %v7026 = vadd.f32 0.0, %v7025
      %7027 = vmatmul.bf16.gmra.mxu0 %v1443
      %v7028 = vpop.f32.mrf.mxu0
      %v7029 = vadd.f32 0.0, %v7028
      %v7030 = vpop.f32.mrf.mxu0
      %v7031 = vadd.f32 0.0, %v7030
      %7032 = vmatmul.bf16.gmra.mxu0 %v1444
      %v7033 = vpop.f32.mrf.mxu0
      %v7034 = vadd.f32 0.0, %v7033
      %v7035 = vpop.f32.mrf.mxu0
      %v7036 = vadd.f32 0.0, %v7035
      %7037 = vmatmul.bf16.gmra.mxu0 %v1445
      %v7038 = vpop.f32.mrf.mxu0
      %v7039 = vadd.f32 0.0, %v7038
      %v7040 = vpop.f32.mrf.mxu0
      %v7041 = vadd.f32 0.0, %v7040
      %7042 = vmatmul.bf16.gmra.mxu0 %v1446
      %v7043 = vpop.f32.mrf.mxu0
      %v7044 = vadd.f32 0.0, %v7043
      %v7045 = vpop.f32.mrf.mxu0
      %v7046 = vadd.f32 0.0, %v7045
      %7047 = vmatmul.bf16.gmra.mxu0 %v4299
      %v7048 = vpop.f32.mrf.mxu0
      %v7049 = vadd.f32 0.0, %v7048
      %v7050 = vpop.f32.mrf.mxu0
      %v7051 = vadd.f32 0.0, %v7050
      %7052 = vmatmul.bf16.gmra.mxu0 %v4300
      %v7053 = vpop.f32.mrf.mxu0
      %v7054 = vadd.f32 0.0, %v7053
      %v7055 = vpop.f32.mrf.mxu0
      %v7056 = vadd.f32 0.0, %v7055
      %7057 = vmatmul.bf16.gmra.mxu0 %v4301
      %v7058 = vpop.f32.mrf.mxu0
      %v7059 = vadd.f32 0.0, %v7058
      %v7060 = vpop.f32.mrf.mxu0
      %v7061 = vadd.f32 0.0, %v7060
      %7062 = vmatmul.bf16.gmra.mxu0 %v6876
      %v7063 = vpop.f32.mrf.mxu0
      %v7064 = vadd.f32 0.0, %v7063
      %v7065 = vpop.f32.mrf.mxu0
      %v7066 = vadd.f32 0.0, %v7065
      %7067 = vmatmul.bf16.gmra.mxu0 %v6877
      %v7068 = vpop.f32.mrf.mxu0
      %v7069 = vadd.f32 0.0, %v7068
      %v7070 = vpop.f32.mrf.mxu0
      %v7071 = vadd.f32 0.0, %v7070
      %7072 = vmatmul.bf16.gmra.mxu0 %v2944
      %v7073 = vpop.f32.mrf.mxu0
      %v7074 = vadd.f32 0.0, %v7073
      %v7075 = vpop.f32.mrf.mxu0
      %v7076 = vadd.f32 0.0, %v7075
      %7077 = vmatmul.bf16.gmra.mxu0 %v6878
      %v7078 = vpop.f32.mrf.mxu0
      %v7079 = vadd.f32 0.0, %v7078
      %v7080 = vpop.f32.mrf.mxu0
      %7081 = vdwg.mxu0
      %v7082 = vadd.f32 %v6825, %v6954
      %v7083 = vadd.f32 %v6826, %v6956
      %v7084 = vadd.f32 %v6827, %v6959
      %v7085 = vadd.f32 %v6828, %v6961
      %v7086 = vadd.f32 %v6829, %v6964
      %v7087 = vadd.f32 %v6830, %v6966
      %v7088 = vadd.f32 %v6831, %v6969
      %v7089 = vadd.f32 %v6832, %v6971
      %v7090 = vadd.f32 %v6833, %v6974
      %v7091 = vadd.f32 %v6834, %v6976
      %v7092 = vadd.f32 %v6835, %v6979
      %v7093 = vadd.f32 %v6836, %v6981
      %v7094 = vadd.f32 %v6837, %v6984
      %v7095 = vadd.f32 %v6838, %v6986
      %v7096 = vadd.f32 %v6839, %v6989
      %v7097 = vadd.f32 %v6840, %v6991
      %v7098 = vadd.f32 %v6841, %v6994
      %v7099 = vadd.f32 %v6842, %v6996
      %v7100 = vadd.f32 %v6843, %v6999
      %v7101 = vadd.f32 %v6844, %v7001
      %v7102 = vadd.f32 %v6845, %v7004
      %v7103 = vadd.f32 %v6846, %v7006
      %v7104 = vadd.f32 %v6847, %v7009
      %v7105 = vadd.f32 %v6848, %v7011
      %v7106 = vadd.f32 %v6849, %v7014
      %v7107 = vadd.f32 %v6850, %v7016
      %v7108 = vadd.f32 %v6851, %v7019
      %v7109 = vadd.f32 %v6852, %v7021
      %v7110 = vadd.f32 %v6853, %v7024
      %v7111 = vadd.f32 %v6854, %v7026
      %v7112 = vadd.f32 %v6855, %v7029
      %v7113 = vadd.f32 %v6856, %v7031
      %v7114 = vadd.f32 %v6857, %v7034
      %v7115 = vadd.f32 %v6858, %v7036
      %v7116 = vadd.f32 %v6859, %v7039
      %v7117 = vadd.f32 %v6860, %v7041
      %v7118 = vadd.f32 %v6861, %v7044
      %v7119 = vadd.f32 %v6862, %v7046
      %v7120 = vadd.f32 %v6863, %v7049
      %v7121 = vadd.f32 %v6864, %v7051
      %v7122 = vadd.f32 %v6865, %v7054
      %v7123 = vadd.f32 %v6866, %v7056
      %v7124 = vadd.f32 %v6867, %v7059
      %v7125 = vadd.f32 %v6868, %v7061
      %v7126 = vadd.f32 %v6869, %v7064
      %v7127 = vadd.f32 %v6870, %v7066
      %v7128 = vadd.f32 %v6871, %v7069
      %v7129 = vadd.f32 %v6872, %v7071
      %v7130 = vadd.f32 %v6873, %v7074
      %v7131 = vadd.f32 %v6874, %v7076
      %v7132 = vadd.f32 %v6875, %v7079
      %v7133 = vpack.c.bf16 %v1756, %v4559
      %v7134 = vpack.c.bf16 %v1805, %v1755
      %v7135 = vpack.c.bf16 %v1802, %v1802
      %s7136 = scalar_lea.vmem %s1, 1536
      %v7137 = vld [vmem:[%s7136] sm:$0xf]
      %v7138 = vld [vmem:[%s7136 + $0x4] sm:$0xf]
      %v7139 = vld [vmem:[%s7136 + $0x8] sm:$0xf]
      %v7140 = vld [vmem:[%s7136 + $0xc] sm:$0xf]
      %v7141 = vld [vmem:[%s7136 + $0x10] sm:$0xf]
      %v7142 = vld [vmem:[%s7136 + $0x14] sm:$0xf]
      %v7143 = vld [vmem:[%s7136 + $0x18] sm:$0xf]
      %v7144 = vld [vmem:[%s7136 + $0x1c] sm:$0xf]
      %v7145 = vld [vmem:[%s7136 + $0x20] sm:$0xf]
      %v7146 = vld [vmem:[%s7136 + $0x24] sm:$0xf]
      %v7147 = vld [vmem:[%s7136 + $0x28] sm:$0xf]
      %v7148 = vld [vmem:[%s7136 + $0x2c] sm:$0xf]
      %v7149 = vld [vmem:[%s7136 + $0x30] sm:$0xf]
      %v7150 = vld [vmem:[%s7136 + $0x34] sm:$0xf]
      %v7151 = vld [vmem:[%s7136 + $0x38] sm:$0xf]
      %v7152 = vld [vmem:[%s7136 + $0x3c] sm:$0xf]
      %v7169 = vunpack.c.l.b16 %v7137
      %v7170 = vunpack.c.l.b16 %v7138
      %v7171 = vunpack.c.l.b16 %v7139
      %v7172 = vunpack.c.l.b16 %v7140
      %v7173 = vunpack.c.l.b16 %v7141
      %v7174 = vunpack.c.l.b16 %v7142
      %v7175 = vunpack.c.l.b16 %v7143
      %v7176 = vunpack.c.l.b16 %v7144
      %v7177 = vunpack.c.l.b16 %v7145
      %v7178 = vunpack.c.l.b16 %v7146
      %v7179 = vunpack.c.l.b16 %v7147
      %v7180 = vunpack.c.l.b16 %v7148
      %v7181 = vunpack.c.l.b16 %v7149
      %v7182 = vunpack.c.l.b16 %v7150
      %v7183 = vunpack.c.l.b16 %v7151
      %v7184 = vunpack.c.l.b16 %v7152
      %v7185 = vpack.c.b16 %v7170, %v7169
      %v7186 = vpack.c.b16 %v7172, %v7171
      %v7187 = vpack.c.b16 %v7174, %v7173
      %v7188 = vpack.c.b16 %v7176, %v7175
      %v7189 = vpack.c.b16 %v7178, %v7177
      %v7190 = vpack.c.b16 %v7180, %v7179
      %v7191 = vpack.c.b16 %v7182, %v7181
      %v7192 = vpack.c.b16 %v7184, %v7183
      %7201 = vmatpush.bf16.msra.mxu0 %v7192
      %7202 = vmatpush.bf16.msra.mxu0 %v7191
      %7203 = vmatpush.bf16.msra.mxu0 %v7190
      %7204 = vmatpush.bf16.msra.mxu0 %v7189
      %7205 = vmatpush.bf16.msra.mxu0 %v7188
      %7206 = vmatpush.bf16.msra.mxu0 %v7187
      %7207 = vmatpush.bf16.msra.mxu0 %v7186
      %7208 = vmatpush.bf16.msra.mxu0 %v7185
      %7209 = vmatmul.bf16.gmra.mxu0 %v1812
      %v7210 = vpop.f32.mrf.mxu0
      %v7211 = vadd.f32 0.0, %v7210
      %v7212 = vpop.f32.mrf.mxu0
      %v7213 = vadd.f32 0.0, %v7212
      %7214 = vmatmul.bf16.gmra.mxu0 %v1813
      %v7215 = vpop.f32.mrf.mxu0
      %v7216 = vadd.f32 0.0, %v7215
      %v7217 = vpop.f32.mrf.mxu0
      %v7218 = vadd.f32 0.0, %v7217
      %7219 = vmatmul.bf16.gmra.mxu0 %v1814
      %v7220 = vpop.f32.mrf.mxu0
      %v7221 = vadd.f32 0.0, %v7220
      %v7222 = vpop.f32.mrf.mxu0
      %v7223 = vadd.f32 0.0, %v7222
      %7224 = vmatmul.bf16.gmra.mxu0 %v1815
      %v7225 = vpop.f32.mrf.mxu0
      %v7226 = vadd.f32 0.0, %v7225
      %v7227 = vpop.f32.mrf.mxu0
      %v7228 = vadd.f32 0.0, %v7227
      %7229 = vmatmul.bf16.gmra.mxu0 %v1816
      %v7230 = vpop.f32.mrf.mxu0
      %v7231 = vadd.f32 0.0, %v7230
      %v7232 = vpop.f32.mrf.mxu0
      %v7233 = vadd.f32 0.0, %v7232
      %7234 = vmatmul.bf16.gmra.mxu0 %v1817
      %v7235 = vpop.f32.mrf.mxu0
      %v7236 = vadd.f32 0.0, %v7235
      %v7237 = vpop.f32.mrf.mxu0
      %v7238 = vadd.f32 0.0, %v7237
      %7239 = vmatmul.bf16.gmra.mxu0 %v1818
      %v7240 = vpop.f32.mrf.mxu0
      %v7241 = vadd.f32 0.0, %v7240
      %v7242 = vpop.f32.mrf.mxu0
      %v7243 = vadd.f32 0.0, %v7242
      %7244 = vmatmul.bf16.gmra.mxu0 %v1819
      %v7245 = vpop.f32.mrf.mxu0
      %v7246 = vadd.f32 0.0, %v7245
      %v7247 = vpop.f32.mrf.mxu0
      %v7248 = vadd.f32 0.0, %v7247
      %7249 = vmatmul.bf16.gmra.mxu0 %v1820
      %v7250 = vpop.f32.mrf.mxu0
      %v7251 = vadd.f32 0.0, %v7250
      %v7252 = vpop.f32.mrf.mxu0
      %v7253 = vadd.f32 0.0, %v7252
      %7254 = vmatmul.bf16.gmra.mxu0 %v1821
      %v7255 = vpop.f32.mrf.mxu0
      %v7256 = vadd.f32 0.0, %v7255
      %v7257 = vpop.f32.mrf.mxu0
      %v7258 = vadd.f32 0.0, %v7257
      %7259 = vmatmul.bf16.gmra.mxu0 %v1822
      %v7260 = vpop.f32.mrf.mxu0
      %v7261 = vadd.f32 0.0, %v7260
      %v7262 = vpop.f32.mrf.mxu0
      %v7263 = vadd.f32 0.0, %v7262
      %7264 = vmatmul.bf16.gmra.mxu0 %v1823
      %v7265 = vpop.f32.mrf.mxu0
      %v7266 = vadd.f32 0.0, %v7265
      %v7267 = vpop.f32.mrf.mxu0
      %v7268 = vadd.f32 0.0, %v7267
      %7269 = vmatmul.bf16.gmra.mxu0 %v1824
      %v7270 = vpop.f32.mrf.mxu0
      %v7271 = vadd.f32 0.0, %v7270
      %v7272 = vpop.f32.mrf.mxu0
      %v7273 = vadd.f32 0.0, %v7272
      %7274 = vmatmul.bf16.gmra.mxu0 %v1825
      %v7275 = vpop.f32.mrf.mxu0
      %v7276 = vadd.f32 0.0, %v7275
      %v7277 = vpop.f32.mrf.mxu0
      %v7278 = vadd.f32 0.0, %v7277
      %7279 = vmatmul.bf16.gmra.mxu0 %v1826
      %v7280 = vpop.f32.mrf.mxu0
      %v7281 = vadd.f32 0.0, %v7280
      %v7282 = vpop.f32.mrf.mxu0
      %v7283 = vadd.f32 0.0, %v7282
      %7284 = vmatmul.bf16.gmra.mxu0 %v1827
      %v7285 = vpop.f32.mrf.mxu0
      %v7286 = vadd.f32 0.0, %v7285
      %v7287 = vpop.f32.mrf.mxu0
      %v7288 = vadd.f32 0.0, %v7287
      %7289 = vmatmul.bf16.gmra.mxu0 %v1828
      %v7290 = vpop.f32.mrf.mxu0
      %v7291 = vadd.f32 0.0, %v7290
      %v7292 = vpop.f32.mrf.mxu0
      %v7293 = vadd.f32 0.0, %v7292
      %7294 = vmatmul.bf16.gmra.mxu0 %v1829
      %v7295 = vpop.f32.mrf.mxu0
      %v7296 = vadd.f32 0.0, %v7295
      %v7297 = vpop.f32.mrf.mxu0
      %v7298 = vadd.f32 0.0, %v7297
      %7299 = vmatmul.bf16.gmra.mxu0 %v1830
      %v7300 = vpop.f32.mrf.mxu0
      %v7301 = vadd.f32 0.0, %v7300
      %v7302 = vpop.f32.mrf.mxu0
      %v7303 = vadd.f32 0.0, %v7302
      %7304 = vmatmul.bf16.gmra.mxu0 %v4562
      %v7305 = vpop.f32.mrf.mxu0
      %v7306 = vadd.f32 0.0, %v7305
      %v7307 = vpop.f32.mrf.mxu0
      %v7308 = vadd.f32 0.0, %v7307
      %7309 = vmatmul.bf16.gmra.mxu0 %v4563
      %v7310 = vpop.f32.mrf.mxu0
      %v7311 = vadd.f32 0.0, %v7310
      %v7312 = vpop.f32.mrf.mxu0
      %v7313 = vadd.f32 0.0, %v7312
      %7314 = vmatmul.bf16.gmra.mxu0 %v4564
      %v7315 = vpop.f32.mrf.mxu0
      %v7316 = vadd.f32 0.0, %v7315
      %v7317 = vpop.f32.mrf.mxu0
      %v7318 = vadd.f32 0.0, %v7317
      %7319 = vmatmul.bf16.gmra.mxu0 %v7133
      %v7320 = vpop.f32.mrf.mxu0
      %v7321 = vadd.f32 0.0, %v7320
      %v7322 = vpop.f32.mrf.mxu0
      %v7323 = vadd.f32 0.0, %v7322
      %7324 = vmatmul.bf16.gmra.mxu0 %v7134
      %v7325 = vpop.f32.mrf.mxu0
      %v7326 = vadd.f32 0.0, %v7325
      %v7327 = vpop.f32.mrf.mxu0
      %v7328 = vadd.f32 0.0, %v7327
      %7329 = vmatmul.bf16.gmra.mxu0 %v3230
      %v7330 = vpop.f32.mrf.mxu0
      %v7331 = vadd.f32 0.0, %v7330
      %v7332 = vpop.f32.mrf.mxu0
      %v7333 = vadd.f32 0.0, %v7332
      %7334 = vmatmul.bf16.gmra.mxu0 %v7135
      %v7335 = vpop.f32.mrf.mxu0
      %v7336 = vadd.f32 0.0, %v7335
      %v7337 = vpop.f32.mrf.mxu0
      %7338 = vdwg.mxu0
      %v7339 = vadd.f32 %v7082, %v7211
      %v7340 = vadd.f32 %v7083, %v7213
      %v7341 = vadd.f32 %v7084, %v7216
      %v7342 = vadd.f32 %v7085, %v7218
      %v7343 = vadd.f32 %v7086, %v7221
      %v7344 = vadd.f32 %v7087, %v7223
      %v7345 = vadd.f32 %v7088, %v7226
      %v7346 = vadd.f32 %v7089, %v7228
      %v7347 = vadd.f32 %v7090, %v7231
      %v7348 = vadd.f32 %v7091, %v7233
      %v7349 = vadd.f32 %v7092, %v7236
      %v7350 = vadd.f32 %v7093, %v7238
      %v7351 = vadd.f32 %v7094, %v7241
      %v7352 = vadd.f32 %v7095, %v7243
      %v7353 = vadd.f32 %v7096, %v7246
      %v7354 = vadd.f32 %v7097, %v7248
      %v7355 = vadd.f32 %v7098, %v7251
      %v7356 = vadd.f32 %v7099, %v7253
      %v7357 = vadd.f32 %v7100, %v7256
      %v7358 = vadd.f32 %v7101, %v7258
      %v7359 = vadd.f32 %v7102, %v7261
      %v7360 = vadd.f32 %v7103, %v7263
      %v7361 = vadd.f32 %v7104, %v7266
      %v7362 = vadd.f32 %v7105, %v7268
      %v7363 = vadd.f32 %v7106, %v7271
      %v7364 = vadd.f32 %v7107, %v7273
      %v7365 = vadd.f32 %v7108, %v7276
      %v7366 = vadd.f32 %v7109, %v7278
      %v7367 = vadd.f32 %v7110, %v7281
      %v7368 = vadd.f32 %v7111, %v7283
      %v7369 = vadd.f32 %v7112, %v7286
      %v7370 = vadd.f32 %v7113, %v7288
      %v7371 = vadd.f32 %v7114, %v7291
      %v7372 = vadd.f32 %v7115, %v7293
      %v7373 = vadd.f32 %v7116, %v7296
      %v7374 = vadd.f32 %v7117, %v7298
      %v7375 = vadd.f32 %v7118, %v7301
      %v7376 = vadd.f32 %v7119, %v7303
      %v7377 = vadd.f32 %v7120, %v7306
      %v7378 = vadd.f32 %v7121, %v7308
      %v7379 = vadd.f32 %v7122, %v7311
      %v7380 = vadd.f32 %v7123, %v7313
      %v7381 = vadd.f32 %v7124, %v7316
      %v7382 = vadd.f32 %v7125, %v7318
      %v7383 = vadd.f32 %v7126, %v7321
      %v7384 = vadd.f32 %v7127, %v7323
      %v7385 = vadd.f32 %v7128, %v7326
      %v7386 = vadd.f32 %v7129, %v7328
      %v7387 = vadd.f32 %v7130, %v7331
      %v7388 = vadd.f32 %v7131, %v7333
      %v7389 = vadd.f32 %v7132, %v7336
      %v7390 = vld [vmem:[%s2] sm:$0x1]
      %v7392 = vperm.slane %v7390, 0
      %v7394 = vadd.f32 %v7339, %v7392
      %v7395 = vadd.f32 %v7340, %v7392
      %v7396 = vadd.f32 %v7341, %v7392
      %v7397 = vadd.f32 %v7342, %v7392
      %v7398 = vadd.f32 %v7343, %v7392
      %v7399 = vadd.f32 %v7344, %v7392
      %v7400 = vadd.f32 %v7345, %v7392
      %v7401 = vadd.f32 %v7346, %v7392
      %v7402 = vadd.f32 %v7347, %v7392
      %v7403 = vadd.f32 %v7348, %v7392
      %v7404 = vadd.f32 %v7349, %v7392
      %v7405 = vadd.f32 %v7350, %v7392
      %v7406 = vadd.f32 %v7351, %v7392
      %v7407 = vadd.f32 %v7352, %v7392
      %v7408 = vadd.f32 %v7353, %v7392
      %v7409 = vadd.f32 %v7354, %v7392
      %v7410 = vadd.f32 %v7355, %v7392
      %v7411 = vadd.f32 %v7356, %v7392
      %v7412 = vadd.f32 %v7357, %v7392
      %v7413 = vadd.f32 %v7358, %v7392
      %v7414 = vadd.f32 %v7359, %v7392
      %v7415 = vadd.f32 %v7360, %v7392
      %v7416 = vadd.f32 %v7361, %v7392
      %v7417 = vadd.f32 %v7362, %v7392
      %v7418 = vadd.f32 %v7363, %v7392
      %v7419 = vadd.f32 %v7364, %v7392
      %v7420 = vadd.f32 %v7365, %v7392
      %v7421 = vadd.f32 %v7366, %v7392
      %v7422 = vadd.f32 %v7367, %v7392
      %v7423 = vadd.f32 %v7368, %v7392
      %v7424 = vadd.f32 %v7369, %v7392
      %v7425 = vadd.f32 %v7370, %v7392
      %v7426 = vadd.f32 %v7371, %v7392
      %v7427 = vadd.f32 %v7372, %v7392
      %v7428 = vadd.f32 %v7373, %v7392
      %v7429 = vadd.f32 %v7374, %v7392
      %v7430 = vadd.f32 %v7375, %v7392
      %v7431 = vadd.f32 %v7376, %v7392
      %v7432 = vadd.f32 %v7377, %v7392
      %v7433 = vadd.f32 %v7378, %v7392
      %v7434 = vadd.f32 %v7379, %v7392
      %v7435 = vadd.f32 %v7380, %v7392
      %v7436 = vadd.f32 %v7381, %v7392
      %v7437 = vadd.f32 %v7382, %v7392
      %v7438 = vadd.f32 %v7383, %v7392
      %v7439 = vadd.f32 %v7384, %v7392
      %v7440 = vadd.f32 %v7385, %v7392
      %v7441 = vadd.f32 %v7386, %v7392
      %v7442 = vadd.f32 %v7387, %v7392
      %v7443 = vadd.f32 %v7388, %v7392
      %v7444 = vadd.f32 %v7389, %v7392
      %v7445 = vmax.f32 %v7394, 0.0
      %v7446 = vmax.f32 %v7395, 0.0
      %v7447 = vmax.f32 %v7396, 0.0
      %v7448 = vmax.f32 %v7397, 0.0
      %v7449 = vmax.f32 %v7398, 0.0
      %v7450 = vmax.f32 %v7399, 0.0
      %v7451 = vmax.f32 %v7400, 0.0
      %v7452 = vmax.f32 %v7401, 0.0
      %v7453 = vmax.f32 %v7402, 0.0
      %v7454 = vmax.f32 %v7403, 0.0
      %v7455 = vmax.f32 %v7404, 0.0
      %v7456 = vmax.f32 %v7405, 0.0
      %v7457 = vmax.f32 %v7406, 0.0
      %v7458 = vmax.f32 %v7407, 0.0
      %v7459 = vmax.f32 %v7408, 0.0
      %v7460 = vmax.f32 %v7409, 0.0
      %v7461 = vmax.f32 %v7410, 0.0
      %v7462 = vmax.f32 %v7411, 0.0
      %v7463 = vmax.f32 %v7412, 0.0
      %v7464 = vmax.f32 %v7413, 0.0
      %v7465 = vmax.f32 %v7414, 0.0
      %v7466 = vmax.f32 %v7415, 0.0
      %v7467 = vmax.f32 %v7416, 0.0
      %v7468 = vmax.f32 %v7417, 0.0
      %v7469 = vmax.f32 %v7418, 0.0
      %v7470 = vmax.f32 %v7419, 0.0
      %v7471 = vmax.f32 %v7420, 0.0
      %v7472 = vmax.f32 %v7421, 0.0
      %v7473 = vmax.f32 %v7422, 0.0
      %v7474 = vmax.f32 %v7423, 0.0
      %v7475 = vmax.f32 %v7424, 0.0
      %v7476 = vmax.f32 %v7425, 0.0
      %v7477 = vmax.f32 %v7426, 0.0
      %v7478 = vmax.f32 %v7427, 0.0
      %v7479 = vmax.f32 %v7428, 0.0
      %v7480 = vmax.f32 %v7429, 0.0
      %v7481 = vmax.f32 %v7430, 0.0
      %v7482 = vmax.f32 %v7431, 0.0
      %v7483 = vmax.f32 %v7432, 0.0
      %v7484 = vmax.f32 %v7433, 0.0
      %v7485 = vmax.f32 %v7434, 0.0
      %v7486 = vmax.f32 %v7435, 0.0
      %v7487 = vmax.f32 %v7436, 0.0
      %v7488 = vmax.f32 %v7437, 0.0
      %v7489 = vmax.f32 %v7438, 0.0
      %v7490 = vmax.f32 %v7439, 0.0
      %v7491 = vmax.f32 %v7440, 0.0
      %v7492 = vmax.f32 %v7441, 0.0
      %v7493 = vmax.f32 %v7442, 0.0
      %v7494 = vmax.f32 %v7443, 0.0
      %v7495 = vmax.f32 %v7444, 0.0
      %v7496 = vmul.f32 %v253, %v7445
      %v7497 = vmul.f32 %v254, %v7446
      %v7498 = vmul.f32 %v255, %v7447
      %v7499 = vmul.f32 %v256, %v7448
      %v7500 = vmul.f32 %v257, %v7449
      %v7501 = vmul.f32 %v258, %v7450
      %v7502 = vmul.f32 %v256, %v7451
      %v7503 = vmul.f32 %v257, %v7452
      %v7504 = vmul.f32 %v258, %v7453
      %v7505 = vmul.f32 %v256, %v7454
      %v7506 = vmul.f32 %v257, %v7455
      %v7507 = vmul.f32 %v258, %v7456
      %v7508 = vmul.f32 %v256, %v7457
      %v7509 = vmul.f32 %v257, %v7458
      %v7510 = vmul.f32 %v258, %v7459
      %v7511 = vmul.f32 %v256, %v7460
      %v7512 = vmul.f32 %v257, %v7461
      %v7513 = vmul.f32 %v258, %v7462
      %v7514 = vmul.f32 %v256, %v7463
      %v7515 = vmul.f32 %v257, %v7464
      %v7516 = vmul.f32 %v258, %v7465
      %v7517 = vmul.f32 %v256, %v7466
      %v7518 = vmul.f32 %v257, %v7467
      %v7519 = vmul.f32 %v258, %v7468
      %v7520 = vmul.f32 %v256, %v7469
      %v7521 = vmul.f32 %v257, %v7470
      %v7522 = vmul.f32 %v258, %v7471
      %v7523 = vmul.f32 %v256, %v7472
      %v7524 = vmul.f32 %v257, %v7473
      %v7525 = vmul.f32 %v258, %v7474
      %v7526 = vmul.f32 %v256, %v7475
      %v7527 = vmul.f32 %v257, %v7476
      %v7528 = vmul.f32 %v258, %v7477
      %v7529 = vmul.f32 %v256, %v7478
      %v7530 = vmul.f32 %v257, %v7479
      %v7531 = vmul.f32 %v258, %v7480
      %v7532 = vmul.f32 %v256, %v7481
      %v7533 = vmul.f32 %v257, %v7482
      %v7534 = vmul.f32 %v258, %v7483
      %v7535 = vmul.f32 %v256, %v7484
      %v7536 = vmul.f32 %v257, %v7485
      %v7537 = vmul.f32 %v258, %v7486
      %v7538 = vmul.f32 %v256, %v7487
      %v7539 = vmul.f32 %v257, %v7488
      %v7540 = vmul.f32 %v258, %v7489
      %v7541 = vmul.f32 %v256, %v7490
      %v7542 = vmul.f32 %v257, %v7491
      %v7543 = vmul.f32 %v258, %v7492
      %v7544 = vmul.f32 %v253, %v7493
      %v7545 = vmul.f32 %v254, %v7494
      %v7546 = vmul.f32 %v255, %v7495
      %v7547 = vrot.slane %v7496, 7
      %v7548 = vrot.slane %v7497, 7
      %v7549 = vrot.slane %v7498, 7
      %v7550 = vrot.slane %v7499, 7
      %v7551 = vrot.slane %v7500, 7
      %v7552 = vrot.slane %v7501, 7
      %v7553 = vrot.slane %v7502, 7
      %v7554 = vrot.slane %v7503, 7
      %v7555 = vrot.slane %v7504, 7
      %v7556 = vrot.slane %v7505, 7
      %v7557 = vrot.slane %v7506, 7
      %v7558 = vrot.slane %v7507, 7
      %v7559 = vrot.slane %v7508, 7
      %v7560 = vrot.slane %v7509, 7
      %v7561 = vrot.slane %v7510, 7
      %v7562 = vrot.slane %v7511, 7
      %v7563 = vrot.slane %v7512, 7
      %v7564 = vrot.slane %v7513, 7
      %v7565 = vrot.slane %v7514, 7
      %v7566 = vrot.slane %v7515, 7
      %v7567 = vrot.slane %v7516, 7
      %v7568 = vrot.slane %v7517, 7
      %v7569 = vrot.slane %v7518, 7
      %v7570 = vrot.slane %v7519, 7
      %v7571 = vrot.slane %v7520, 7
      %v7572 = vrot.slane %v7521, 7
      %v7573 = vrot.slane %v7522, 7
      %v7574 = vrot.slane %v7523, 7
      %v7575 = vrot.slane %v7524, 7
      %v7576 = vrot.slane %v7525, 7
      %v7577 = vrot.slane %v7526, 7
      %v7578 = vrot.slane %v7527, 7
      %v7579 = vrot.slane %v7528, 7
      %v7580 = vrot.slane %v7529, 7
      %v7581 = vrot.slane %v7530, 7
      %v7582 = vrot.slane %v7531, 7
      %v7583 = vrot.slane %v7532, 7
      %v7584 = vrot.slane %v7533, 7
      %v7585 = vrot.slane %v7534, 7
      %v7586 = vrot.slane %v7535, 7
      %v7587 = vrot.slane %v7536, 7
      %v7588 = vrot.slane %v7537, 7
      %v7589 = vrot.slane %v7538, 7
      %v7590 = vrot.slane %v7539, 7
      %v7591 = vrot.slane %v7540, 7
      %v7592 = vrot.slane %v7541, 7
      %v7593 = vrot.slane %v7542, 7
      %v7594 = vrot.slane %v7543, 7
      %v7595 = vrot.slane %v7544, 7
      %v7596 = vrot.slane %v7545, 7
      %v7597 = vrot.slane %v7546, 7
      %v7598 = vsel %vm425, %v7596, %v7597
      %v7599 = vsel %vm425, %v7595, %v7596
      %v7600 = vsel %vm425, %v7594, %v7595
      %v7601 = vsel %vm425, %v7593, %v7594
      %v7602 = vsel %vm425, %v7592, %v7593
      %v7603 = vsel %vm425, %v7591, %v7592
      %v7604 = vsel %vm425, %v7590, %v7591
      %v7605 = vsel %vm425, %v7589, %v7590
      %v7606 = vsel %vm425, %v7588, %v7589
      %v7607 = vsel %vm425, %v7587, %v7588
      %v7608 = vsel %vm425, %v7586, %v7587
      %v7609 = vsel %vm425, %v7585, %v7586
      %v7610 = vsel %vm425, %v7584, %v7585
      %v7611 = vsel %vm425, %v7583, %v7584
      %v7612 = vsel %vm425, %v7582, %v7583
      %v7613 = vsel %vm425, %v7581, %v7582
      %v7614 = vsel %vm425, %v7580, %v7581
      %v7615 = vsel %vm425, %v7579, %v7580
      %v7616 = vsel %vm425, %v7578, %v7579
      %v7617 = vsel %vm425, %v7577, %v7578
      %v7618 = vsel %vm425, %v7576, %v7577
      %v7619 = vsel %vm425, %v7575, %v7576
      %v7620 = vsel %vm425, %v7574, %v7575
      %v7621 = vsel %vm425, %v7573, %v7574
      %v7622 = vsel %vm425, %v7572, %v7573
      %v7623 = vsel %vm425, %v7571, %v7572
      %v7624 = vsel %vm425, %v7570, %v7571
      %v7625 = vsel %vm425, %v7569, %v7570
      %v7626 = vsel %vm425, %v7568, %v7569
      %v7627 = vsel %vm425, %v7567, %v7568
      %v7628 = vsel %vm425, %v7566, %v7567
      %v7629 = vsel %vm425, %v7565, %v7566
      %v7630 = vsel %vm425, %v7564, %v7565
      %v7631 = vsel %vm425, %v7563, %v7564
      %v7632 = vsel %vm425, %v7562, %v7563
      %v7633 = vsel %vm425, %v7561, %v7562
      %v7634 = vsel %vm425, %v7560, %v7561
      %v7635 = vsel %vm425, %v7559, %v7560
      %v7636 = vsel %vm425, %v7558, %v7559
      %v7637 = vsel %vm425, %v7557, %v7558
      %v7638 = vsel %vm425, %v7556, %v7557
      %v7639 = vsel %vm425, %v7555, %v7556
      %v7640 = vsel %vm425, %v7554, %v7555
      %v7641 = vsel %vm425, %v7553, %v7554
      %v7642 = vsel %vm425, %v7552, %v7553
      %v7643 = vsel %vm425, %v7551, %v7552
      %v7644 = vsel %vm425, %v7550, %v7551
      %v7645 = vsel %vm425, %v7549, %v7550
      %v7646 = vsel %vm425, %v7548, %v7549
      %v7647 = vsel %vm425, %v7547, %v7548
      %v7648 = vsel %vm425, %v7597, %v7547
      %v7649 = vpack.c.bf16 %v7599, %v7600
      %v7650 = vpack.c.bf16 %v7648, %v7598
      %v7651 = vpack.c.bf16 %v7646, %v7647
      %v7652 = vpack.c.bf16 %v7644, %v7645
      %v7653 = vpack.c.bf16 %v7642, %v7643
      %v7654 = vpack.c.bf16 %v7640, %v7641
      %v7655 = vpack.c.bf16 %v7638, %v7639
      %v7656 = vpack.c.bf16 %v7636, %v7637
      %v7657 = vpack.c.bf16 %v7634, %v7635
      %v7658 = vpack.c.bf16 %v7632, %v7633
      %v7659 = vpack.c.bf16 %v7630, %v7631
      %v7660 = vpack.c.bf16 %v7628, %v7629
      %v7661 = vpack.c.bf16 %v7626, %v7627
      %v7662 = vpack.c.bf16 %v7624, %v7625
      %v7663 = vpack.c.bf16 %v7622, %v7623
      %v7664 = vpack.c.bf16 %v7620, %v7621
      %v7665 = vpack.c.bf16 %v7618, %v7619
      %v7666 = vpack.c.bf16 %v7616, %v7617
      %v7667 = vpack.c.bf16 %v7614, %v7615
      %v7668 = vpack.c.bf16 %v7612, %v7613
      %v7669 = vpack.c.bf16 %v7610, %v7611
      %v7670 = vpack.c.bf16 %v7608, %v7609
      %v7671 = vpack.c.bf16 %v7606, %v7607
      %v7672 = vpack.c.bf16 %v7604, %v7605
      %v7673 = vpack.c.bf16 %v7602, %v7603
      %v7674 = vpack.c.bf16 %v7601, %v7601
      %v7675 = vld [vmem:[%s3] sm:$0xf]
      %v7676 = vld [vmem:[%s3 + $0x4] sm:$0xf]
      %v7677 = vld [vmem:[%s3 + $0x8] sm:$0xf]
      %v7678 = vld [vmem:[%s3 + $0xc] sm:$0xf]
      %v7679 = vld [vmem:[%s3 + $0x10] sm:$0xf]
      %v7680 = vld [vmem:[%s3 + $0x14] sm:$0xf]
      %v7681 = vld [vmem:[%s3 + $0x18] sm:$0xf]
      %v7682 = vld [vmem:[%s3 + $0x1c] sm:$0xf]
      %v7683 = vld [vmem:[%s3 + $0x20] sm:$0xf]
      %v7684 = vld [vmem:[%s3 + $0x24] sm:$0xf]
      %v7685 = vld [vmem:[%s3 + $0x28] sm:$0xf]
      %v7686 = vld [vmem:[%s3 + $0x2c] sm:$0xf]
      %v7687 = vld [vmem:[%s3 + $0x30] sm:$0xf]
      %v7688 = vld [vmem:[%s3 + $0x34] sm:$0xf]
      %v7689 = vld [vmem:[%s3 + $0x38] sm:$0xf]
      %v7690 = vld [vmem:[%s3 + $0x3c] sm:$0xf]
      %v7691 = vpack.c.bf16 %v7545, %v7544
      %v7692 = vpack.c.bf16 %v7496, %v7546
      %v7693 = vpack.c.bf16 %v7498, %v7497
      %v7694 = vpack.c.bf16 %v7500, %v7499
      %v7695 = vpack.c.bf16 %v7502, %v7501
      %v7696 = vpack.c.bf16 %v7504, %v7503
      %v7697 = vpack.c.bf16 %v7506, %v7505
      %v7698 = vpack.c.bf16 %v7508, %v7507
      %v7699 = vpack.c.bf16 %v7510, %v7509
      %v7700 = vpack.c.bf16 %v7512, %v7511
      %v7701 = vpack.c.bf16 %v7514, %v7513
      %v7702 = vpack.c.bf16 %v7516, %v7515
      %v7703 = vpack.c.bf16 %v7518, %v7517
      %v7704 = vpack.c.bf16 %v7520, %v7519
      %v7705 = vpack.c.bf16 %v7522, %v7521
      %v7706 = vpack.c.bf16 %v7524, %v7523
      %v7707 = vpack.c.bf16 %v7526, %v7525
      %v7708 = vpack.c.bf16 %v7528, %v7527
      %v7709 = vpack.c.bf16 %v7530, %v7529
      %v7710 = vpack.c.bf16 %v7532, %v7531
      %v7711 = vpack.c.bf16 %v7534, %v7533
      %v7712 = vpack.c.bf16 %v7536, %v7535
      %v7713 = vpack.c.bf16 %v7538, %v7537
      %v7714 = vpack.c.bf16 %v7540, %v7539
      %v7715 = vpack.c.bf16 %v7542, %v7541
      %v7716 = vpack.c.bf16 %v7543, %v7543
      %s7717 = scalar_lea.vmem %s3, 64
      %v7718 = vld [vmem:[%s7717] sm:$0xf]
      %v7719 = vld [vmem:[%s7717 + $0x4] sm:$0xf]
      %v7720 = vld [vmem:[%s7717 + $0x8] sm:$0xf]
      %v7721 = vld [vmem:[%s7717 + $0xc] sm:$0xf]
      %v7722 = vld [vmem:[%s7717 + $0x10] sm:$0xf]
      %v7723 = vld [vmem:[%s7717 + $0x14] sm:$0xf]
      %v7724 = vld [vmem:[%s7717 + $0x18] sm:$0xf]
      %v7725 = vld [vmem:[%s7717 + $0x1c] sm:$0xf]
      %v7726 = vld [vmem:[%s7717 + $0x20] sm:$0xf]
      %v7727 = vld [vmem:[%s7717 + $0x24] sm:$0xf]
      %v7728 = vld [vmem:[%s7717 + $0x28] sm:$0xf]
      %v7729 = vld [vmem:[%s7717 + $0x2c] sm:$0xf]
      %v7730 = vld [vmem:[%s7717 + $0x30] sm:$0xf]
      %v7731 = vld [vmem:[%s7717 + $0x34] sm:$0xf]
      %v7732 = vld [vmem:[%s7717 + $0x38] sm:$0xf]
      %v7733 = vld [vmem:[%s7717 + $0x3c] sm:$0xf]
      %v7750 = vunpack.c.l.b16 %v7718
      %v7751 = vunpack.c.l.b16 %v7719
      %v7752 = vunpack.c.l.b16 %v7720
      %v7753 = vunpack.c.l.b16 %v7721
      %v7754 = vunpack.c.l.b16 %v7722
      %v7755 = vunpack.c.l.b16 %v7723
      %v7756 = vunpack.c.l.b16 %v7724
      %v7757 = vunpack.c.l.b16 %v7725
      %v7758 = vunpack.c.l.b16 %v7726
      %v7759 = vunpack.c.l.b16 %v7727
      %v7760 = vunpack.c.l.b16 %v7728
      %v7761 = vunpack.c.l.b16 %v7729
      %v7762 = vunpack.c.l.b16 %v7730
      %v7763 = vunpack.c.l.b16 %v7731
      %v7764 = vunpack.c.l.b16 %v7732
      %v7765 = vunpack.c.l.b16 %v7733
      %v7766 = vpack.c.b16 %v7751, %v7750
      %v7767 = vpack.c.b16 %v7753, %v7752
      %v7768 = vpack.c.b16 %v7755, %v7754
      %v7769 = vpack.c.b16 %v7757, %v7756
      %v7770 = vpack.c.b16 %v7759, %v7758
      %v7771 = vpack.c.b16 %v7761, %v7760
      %v7772 = vpack.c.b16 %v7763, %v7762
      %v7773 = vpack.c.b16 %v7765, %v7764
      %7782 = vmatpush.bf16.msra.mxu0 %v7773
      %7783 = vmatpush.bf16.msra.mxu0 %v7772
      %7784 = vmatpush.bf16.msra.mxu0 %v7771
      %7785 = vmatpush.bf16.msra.mxu0 %v7770
      %7786 = vmatpush.bf16.msra.mxu0 %v7769
      %7787 = vmatpush.bf16.msra.mxu0 %v7768
      %7788 = vmatpush.bf16.msra.mxu0 %v7767
      %7789 = vmatpush.bf16.msra.mxu0 %v7766
      %7790 = vmatmul.bf16.gmra.mxu0 %v7691
      %v7791 = vpop.f32.mrf.mxu0
      %v7792 = vadd.f32 0.0, %v7791
      %v7793 = vpop.f32.mrf.mxu0
      %v7794 = vadd.f32 0.0, %v7793
      %7795 = vmatmul.bf16.gmra.mxu0 %v7692
      %v7796 = vpop.f32.mrf.mxu0
      %v7797 = vadd.f32 0.0, %v7796
      %v7798 = vpop.f32.mrf.mxu0
      %v7799 = vadd.f32 0.0, %v7798
      %7800 = vmatmul.bf16.gmra.mxu0 %v7693
      %v7801 = vpop.f32.mrf.mxu0
      %v7802 = vadd.f32 0.0, %v7801
      %v7803 = vpop.f32.mrf.mxu0
      %v7804 = vadd.f32 0.0, %v7803
      %7805 = vmatmul.bf16.gmra.mxu0 %v7694
      %v7806 = vpop.f32.mrf.mxu0
      %v7807 = vadd.f32 0.0, %v7806
      %v7808 = vpop.f32.mrf.mxu0
      %v7809 = vadd.f32 0.0, %v7808
      %7810 = vmatmul.bf16.gmra.mxu0 %v7695
      %v7811 = vpop.f32.mrf.mxu0
      %v7812 = vadd.f32 0.0, %v7811
      %v7813 = vpop.f32.mrf.mxu0
      %v7814 = vadd.f32 0.0, %v7813
      %7815 = vmatmul.bf16.gmra.mxu0 %v7696
      %v7816 = vpop.f32.mrf.mxu0
      %v7817 = vadd.f32 0.0, %v7816
      %v7818 = vpop.f32.mrf.mxu0
      %v7819 = vadd.f32 0.0, %v7818
      %7820 = vmatmul.bf16.gmra.mxu0 %v7697
      %v7821 = vpop.f32.mrf.mxu0
      %v7822 = vadd.f32 0.0, %v7821
      %v7823 = vpop.f32.mrf.mxu0
      %v7824 = vadd.f32 0.0, %v7823
      %7825 = vmatmul.bf16.gmra.mxu0 %v7698
      %v7826 = vpop.f32.mrf.mxu0
      %v7827 = vadd.f32 0.0, %v7826
      %v7828 = vpop.f32.mrf.mxu0
      %v7829 = vadd.f32 0.0, %v7828
      %7830 = vmatmul.bf16.gmra.mxu0 %v7699
      %v7831 = vpop.f32.mrf.mxu0
      %v7832 = vadd.f32 0.0, %v7831
      %v7833 = vpop.f32.mrf.mxu0
      %v7834 = vadd.f32 0.0, %v7833
      %7835 = vmatmul.bf16.gmra.mxu0 %v7700
      %v7836 = vpop.f32.mrf.mxu0
      %v7837 = vadd.f32 0.0, %v7836
      %v7838 = vpop.f32.mrf.mxu0
      %v7839 = vadd.f32 0.0, %v7838
      %7840 = vmatmul.bf16.gmra.mxu0 %v7701
      %v7841 = vpop.f32.mrf.mxu0
      %v7842 = vadd.f32 0.0, %v7841
      %v7843 = vpop.f32.mrf.mxu0
      %v7844 = vadd.f32 0.0, %v7843
      %7845 = vmatmul.bf16.gmra.mxu0 %v7702
      %v7846 = vpop.f32.mrf.mxu0
      %v7847 = vadd.f32 0.0, %v7846
      %v7848 = vpop.f32.mrf.mxu0
      %v7849 = vadd.f32 0.0, %v7848
      %7850 = vmatmul.bf16.gmra.mxu0 %v7703
      %v7851 = vpop.f32.mrf.mxu0
      %v7852 = vadd.f32 0.0, %v7851
      %v7853 = vpop.f32.mrf.mxu0
      %v7854 = vadd.f32 0.0, %v7853
      %7855 = vmatmul.bf16.gmra.mxu0 %v7704
      %v7856 = vpop.f32.mrf.mxu0
      %v7857 = vadd.f32 0.0, %v7856
      %v7858 = vpop.f32.mrf.mxu0
      %v7859 = vadd.f32 0.0, %v7858
      %7860 = vmatmul.bf16.gmra.mxu0 %v7705
      %v7861 = vpop.f32.mrf.mxu0
      %v7862 = vadd.f32 0.0, %v7861
      %v7863 = vpop.f32.mrf.mxu0
      %v7864 = vadd.f32 0.0, %v7863
      %7865 = vmatmul.bf16.gmra.mxu0 %v7706
      %v7866 = vpop.f32.mrf.mxu0
      %v7867 = vadd.f32 0.0, %v7866
      %v7868 = vpop.f32.mrf.mxu0
      %v7869 = vadd.f32 0.0, %v7868
      %7870 = vmatmul.bf16.gmra.mxu0 %v7707
      %v7871 = vpop.f32.mrf.mxu0
      %v7872 = vadd.f32 0.0, %v7871
      %v7873 = vpop.f32.mrf.mxu0
      %v7874 = vadd.f32 0.0, %v7873
      %7875 = vmatmul.bf16.gmra.mxu0 %v7708
      %v7876 = vpop.f32.mrf.mxu0
      %v7877 = vadd.f32 0.0, %v7876
      %v7878 = vpop.f32.mrf.mxu0
      %v7879 = vadd.f32 0.0, %v7878
      %7880 = vmatmul.bf16.gmra.mxu0 %v7709
      %v7881 = vpop.f32.mrf.mxu0
      %v7882 = vadd.f32 0.0, %v7881
      %v7883 = vpop.f32.mrf.mxu0
      %v7884 = vadd.f32 0.0, %v7883
      %7885 = vmatmul.bf16.gmra.mxu0 %v7710
      %v7886 = vpop.f32.mrf.mxu0
      %v7887 = vadd.f32 0.0, %v7886
      %v7888 = vpop.f32.mrf.mxu0
      %v7889 = vadd.f32 0.0, %v7888
      %7890 = vmatmul.bf16.gmra.mxu0 %v7711
      %v7891 = vpop.f32.mrf.mxu0
      %v7892 = vadd.f32 0.0, %v7891
      %v7893 = vpop.f32.mrf.mxu0
      %v7894 = vadd.f32 0.0, %v7893
      %7895 = vmatmul.bf16.gmra.mxu0 %v7712
      %v7896 = vpop.f32.mrf.mxu0
      %v7897 = vadd.f32 0.0, %v7896
      %v7898 = vpop.f32.mrf.mxu0
      %v7899 = vadd.f32 0.0, %v7898
      %7900 = vmatmul.bf16.gmra.mxu0 %v7713
      %v7901 = vpop.f32.mrf.mxu0
      %v7902 = vadd.f32 0.0, %v7901
      %v7903 = vpop.f32.mrf.mxu0
      %v7904 = vadd.f32 0.0, %v7903
      %7905 = vmatmul.bf16.gmra.mxu0 %v7714
      %v7906 = vpop.f32.mrf.mxu0
      %v7907 = vadd.f32 0.0, %v7906
      %v7908 = vpop.f32.mrf.mxu0
      %v7909 = vadd.f32 0.0, %v7908
      %7910 = vmatmul.bf16.gmra.mxu0 %v7715
      %v7911 = vpop.f32.mrf.mxu0
      %v7912 = vadd.f32 0.0, %v7911
      %v7913 = vpop.f32.mrf.mxu0
      %v7914 = vadd.f32 0.0, %v7913
      %7915 = vmatmul.bf16.gmra.mxu0 %v7716
      %v7916 = vpop.f32.mrf.mxu0
      %v7917 = vadd.f32 0.0, %v7916
      %v7918 = vpop.f32.mrf.mxu0
      %7919 = vdwg.mxu0
      %v7936 = vunpack.c.l.b16 %v7675
      %v7937 = vunpack.c.l.b16 %v7676
      %v7938 = vunpack.c.l.b16 %v7677
      %v7939 = vunpack.c.l.b16 %v7678
      %v7940 = vunpack.c.l.b16 %v7679
      %v7941 = vunpack.c.l.b16 %v7680
      %v7942 = vunpack.c.l.b16 %v7681
      %v7943 = vunpack.c.l.b16 %v7682
      %v7944 = vunpack.c.l.b16 %v7683
      %v7945 = vunpack.c.l.b16 %v7684
      %v7946 = vunpack.c.l.b16 %v7685
      %v7947 = vunpack.c.l.b16 %v7686
      %v7948 = vunpack.c.l.b16 %v7687
      %v7949 = vunpack.c.l.b16 %v7688
      %v7950 = vunpack.c.l.b16 %v7689
      %v7951 = vunpack.c.l.b16 %v7690
      %v7952 = vpack.c.b16 %v7937, %v7936
      %v7953 = vpack.c.b16 %v7939, %v7938
      %v7954 = vpack.c.b16 %v7941, %v7940
      %v7955 = vpack.c.b16 %v7943, %v7942
      %v7956 = vpack.c.b16 %v7945, %v7944
      %v7957 = vpack.c.b16 %v7947, %v7946
      %v7958 = vpack.c.b16 %v7949, %v7948
      %v7959 = vpack.c.b16 %v7951, %v7950
      %7968 = vmatpush.bf16.msra.mxu0 %v7959
      %7969 = vmatpush.bf16.msra.mxu0 %v7958
      %7970 = vmatpush.bf16.msra.mxu0 %v7957
      %7971 = vmatpush.bf16.msra.mxu0 %v7956
      %7972 = vmatpush.bf16.msra.mxu0 %v7955
      %7973 = vmatpush.bf16.msra.mxu0 %v7954
      %7974 = vmatpush.bf16.msra.mxu0 %v7953
      %7975 = vmatpush.bf16.msra.mxu0 %v7952
      %7976 = vmatmul.bf16.gmra.mxu0 %v7649
      %v7977 = vpop.f32.mrf.mxu0
      %v7978 = vadd.f32 %v7792, %v7977
      %v7979 = vpop.f32.mrf.mxu0
      %v7980 = vadd.f32 %v7794, %v7979
      %7981 = vmatmul.bf16.gmra.mxu0 %v7650
      %v7982 = vpop.f32.mrf.mxu0
      %v7983 = vadd.f32 %v7797, %v7982
      %v7984 = vpop.f32.mrf.mxu0
      %v7985 = vadd.f32 %v7799, %v7984
      %7986 = vmatmul.bf16.gmra.mxu0 %v7651
      %v7987 = vpop.f32.mrf.mxu0
      %v7988 = vadd.f32 %v7802, %v7987
      %v7989 = vpop.f32.mrf.mxu0
      %v7990 = vadd.f32 %v7804, %v7989
      %7991 = vmatmul.bf16.gmra.mxu0 %v7652
      %v7992 = vpop.f32.mrf.mxu0
      %v7993 = vadd.f32 %v7807, %v7992
      %v7994 = vpop.f32.mrf.mxu0
      %v7995 = vadd.f32 %v7809, %v7994
      %7996 = vmatmul.bf16.gmra.mxu0 %v7653
      %v7997 = vpop.f32.mrf.mxu0
      %v7998 = vadd.f32 %v7812, %v7997
      %v7999 = vpop.f32.mrf.mxu0
      %v8000 = vadd.f32 %v7814, %v7999
      %8001 = vmatmul.bf16.gmra.mxu0 %v7654
      %v8002 = vpop.f32.mrf.mxu0
      %v8003 = vadd.f32 %v7817, %v8002
      %v8004 = vpop.f32.mrf.mxu0
      %v8005 = vadd.f32 %v7819, %v8004
      %8006 = vmatmul.bf16.gmra.mxu0 %v7655
      %v8007 = vpop.f32.mrf.mxu0
      %v8008 = vadd.f32 %v7822, %v8007
      %v8009 = vpop.f32.mrf.mxu0
      %v8010 = vadd.f32 %v7824, %v8009
      %8011 = vmatmul.bf16.gmra.mxu0 %v7656
      %v8012 = vpop.f32.mrf.mxu0
      %v8013 = vadd.f32 %v7827, %v8012
      %v8014 = vpop.f32.mrf.mxu0
      %v8015 = vadd.f32 %v7829, %v8014
      %8016 = vmatmul.bf16.gmra.mxu0 %v7657
      %v8017 = vpop.f32.mrf.mxu0
      %v8018 = vadd.f32 %v7832, %v8017
      %v8019 = vpop.f32.mrf.mxu0
      %v8020 = vadd.f32 %v7834, %v8019
      %8021 = vmatmul.bf16.gmra.mxu0 %v7658
      %v8022 = vpop.f32.mrf.mxu0
      %v8023 = vadd.f32 %v7837, %v8022
      %v8024 = vpop.f32.mrf.mxu0
      %v8025 = vadd.f32 %v7839, %v8024
      %8026 = vmatmul.bf16.gmra.mxu0 %v7659
      %v8027 = vpop.f32.mrf.mxu0
      %v8028 = vadd.f32 %v7842, %v8027
      %v8029 = vpop.f32.mrf.mxu0
      %v8030 = vadd.f32 %v7844, %v8029
      %8031 = vmatmul.bf16.gmra.mxu0 %v7660
      %v8032 = vpop.f32.mrf.mxu0
      %v8033 = vadd.f32 %v7847, %v8032
      %v8034 = vpop.f32.mrf.mxu0
      %v8035 = vadd.f32 %v7849, %v8034
      %8036 = vmatmul.bf16.gmra.mxu0 %v7661
      %v8037 = vpop.f32.mrf.mxu0
      %v8038 = vadd.f32 %v7852, %v8037
      %v8039 = vpop.f32.mrf.mxu0
      %v8040 = vadd.f32 %v7854, %v8039
      %8041 = vmatmul.bf16.gmra.mxu0 %v7662
      %v8042 = vpop.f32.mrf.mxu0
      %v8043 = vadd.f32 %v7857, %v8042
      %v8044 = vpop.f32.mrf.mxu0
      %v8045 = vadd.f32 %v7859, %v8044
      %8046 = vmatmul.bf16.gmra.mxu0 %v7663
      %v8047 = vpop.f32.mrf.mxu0
      %v8048 = vadd.f32 %v7862, %v8047
      %v8049 = vpop.f32.mrf.mxu0
      %v8050 = vadd.f32 %v7864, %v8049
      %8051 = vmatmul.bf16.gmra.mxu0 %v7664
      %v8052 = vpop.f32.mrf.mxu0
      %v8053 = vadd.f32 %v7867, %v8052
      %v8054 = vpop.f32.mrf.mxu0
      %v8055 = vadd.f32 %v7869, %v8054
      %8056 = vmatmul.bf16.gmra.mxu0 %v7665
      %v8057 = vpop.f32.mrf.mxu0
      %v8058 = vadd.f32 %v7872, %v8057
      %v8059 = vpop.f32.mrf.mxu0
      %v8060 = vadd.f32 %v7874, %v8059
      %8061 = vmatmul.bf16.gmra.mxu0 %v7666
      %v8062 = vpop.f32.mrf.mxu0
      %v8063 = vadd.f32 %v7877, %v8062
      %v8064 = vpop.f32.mrf.mxu0
      %v8065 = vadd.f32 %v7879, %v8064
      %8066 = vmatmul.bf16.gmra.mxu0 %v7667
      %v8067 = vpop.f32.mrf.mxu0
      %v8068 = vadd.f32 %v7882, %v8067
      %v8069 = vpop.f32.mrf.mxu0
      %v8070 = vadd.f32 %v7884, %v8069
      %8071 = vmatmul.bf16.gmra.mxu0 %v7668
      %v8072 = vpop.f32.mrf.mxu0
      %v8073 = vadd.f32 %v7887, %v8072
      %v8074 = vpop.f32.mrf.mxu0
      %v8075 = vadd.f32 %v7889, %v8074
      %8076 = vmatmul.bf16.gmra.mxu0 %v7669
      %v8077 = vpop.f32.mrf.mxu0
      %v8078 = vadd.f32 %v7892, %v8077
      %v8079 = vpop.f32.mrf.mxu0
      %v8080 = vadd.f32 %v7894, %v8079
      %8081 = vmatmul.bf16.gmra.mxu0 %v7670
      %v8082 = vpop.f32.mrf.mxu0
      %v8083 = vadd.f32 %v7897, %v8082
      %v8084 = vpop.f32.mrf.mxu0
      %v8085 = vadd.f32 %v7899, %v8084
      %8086 = vmatmul.bf16.gmra.mxu0 %v7671
      %v8087 = vpop.f32.mrf.mxu0
      %v8088 = vadd.f32 %v7902, %v8087
      %v8089 = vpop.f32.mrf.mxu0
      %v8090 = vadd.f32 %v7904, %v8089
      %8091 = vmatmul.bf16.gmra.mxu0 %v7672
      %v8092 = vpop.f32.mrf.mxu0
      %v8093 = vadd.f32 %v7907, %v8092
      %v8094 = vpop.f32.mrf.mxu0
      %v8095 = vadd.f32 %v7909, %v8094
      %8096 = vmatmul.bf16.gmra.mxu0 %v7673
      %v8097 = vpop.f32.mrf.mxu0
      %v8098 = vadd.f32 %v7912, %v8097
      %v8099 = vpop.f32.mrf.mxu0
      %v8100 = vadd.f32 %v7914, %v8099
      %8101 = vmatmul.bf16.gmra.mxu0 %v7674
      %v8102 = vpop.f32.mrf.mxu0
      %v8103 = vadd.f32 %v7917, %v8102
      %v8104 = vpop.f32.mrf.mxu0
      %8105 = vdwg.mxu0
      %v8106 = vrot.slane %v7496, 1
      %v8107 = vrot.slane %v7497, 1
      %v8108 = vrot.slane %v7498, 1
      %v8109 = vrot.slane %v7499, 1
      %v8110 = vrot.slane %v7500, 1
      %v8111 = vrot.slane %v7501, 1
      %v8112 = vrot.slane %v7502, 1
      %v8113 = vrot.slane %v7503, 1
      %v8114 = vrot.slane %v7504, 1
      %v8115 = vrot.slane %v7505, 1
      %v8116 = vrot.slane %v7506, 1
      %v8117 = vrot.slane %v7507, 1
      %v8118 = vrot.slane %v7508, 1
      %v8119 = vrot.slane %v7509, 1
      %v8120 = vrot.slane %v7510, 1
      %v8121 = vrot.slane %v7511, 1
      %v8122 = vrot.slane %v7512, 1
      %v8123 = vrot.slane %v7513, 1
      %v8124 = vrot.slane %v7514, 1
      %v8125 = vrot.slane %v7515, 1
      %v8126 = vrot.slane %v7516, 1
      %v8127 = vrot.slane %v7517, 1
      %v8128 = vrot.slane %v7518, 1
      %v8129 = vrot.slane %v7519, 1
      %v8130 = vrot.slane %v7520, 1
      %v8131 = vrot.slane %v7521, 1
      %v8132 = vrot.slane %v7522, 1
      %v8133 = vrot.slane %v7523, 1
      %v8134 = vrot.slane %v7524, 1
      %v8135 = vrot.slane %v7525, 1
      %v8136 = vrot.slane %v7526, 1
      %v8137 = vrot.slane %v7527, 1
      %v8138 = vrot.slane %v7528, 1
      %v8139 = vrot.slane %v7529, 1
      %v8140 = vrot.slane %v7530, 1
      %v8141 = vrot.slane %v7531, 1
      %v8142 = vrot.slane %v7532, 1
      %v8143 = vrot.slane %v7533, 1
      %v8144 = vrot.slane %v7534, 1
      %v8145 = vrot.slane %v7535, 1
      %v8146 = vrot.slane %v7536, 1
      %v8147 = vrot.slane %v7537, 1
      %v8148 = vrot.slane %v7538, 1
      %v8149 = vrot.slane %v7539, 1
      %v8150 = vrot.slane %v7540, 1
      %v8151 = vrot.slane %v7541, 1
      %v8152 = vrot.slane %v7542, 1
      %v8153 = vrot.slane %v7543, 1
      %v8154 = vrot.slane %v7544, 1
      %v8155 = vrot.slane %v7545, 1
      %v8156 = vrot.slane %v7546, 1
      %v8157 = vsel %vm986, %v8155, %v8156
      %v8158 = vsel %vm986, %v8154, %v8155
      %v8159 = vsel %vm986, %v8153, %v8154
      %v8160 = vsel %vm986, %v8152, %v8153
      %v8161 = vsel %vm986, %v8151, %v8152
      %v8162 = vsel %vm986, %v8150, %v8151
      %v8163 = vsel %vm986, %v8149, %v8150
      %v8164 = vsel %vm986, %v8148, %v8149
      %v8165 = vsel %vm986, %v8147, %v8148
      %v8166 = vsel %vm986, %v8146, %v8147
      %v8167 = vsel %vm986, %v8145, %v8146
      %v8168 = vsel %vm986, %v8144, %v8145
      %v8169 = vsel %vm986, %v8143, %v8144
      %v8170 = vsel %vm986, %v8142, %v8143
      %v8171 = vsel %vm986, %v8141, %v8142
      %v8172 = vsel %vm986, %v8140, %v8141
      %v8173 = vsel %vm986, %v8139, %v8140
      %v8174 = vsel %vm986, %v8138, %v8139
      %v8175 = vsel %vm986, %v8137, %v8138
      %v8176 = vsel %vm986, %v8136, %v8137
      %v8177 = vsel %vm986, %v8135, %v8136
      %v8178 = vsel %vm986, %v8134, %v8135
      %v8179 = vsel %vm986, %v8133, %v8134
      %v8180 = vsel %vm986, %v8132, %v8133
      %v8181 = vsel %vm986, %v8131, %v8132
      %v8182 = vsel %vm986, %v8130, %v8131
      %v8183 = vsel %vm986, %v8129, %v8130
      %v8184 = vsel %vm986, %v8128, %v8129
      %v8185 = vsel %vm986, %v8127, %v8128
      %v8186 = vsel %vm986, %v8126, %v8127
      %v8187 = vsel %vm986, %v8125, %v8126
      %v8188 = vsel %vm986, %v8124, %v8125
      %v8189 = vsel %vm986, %v8123, %v8124
      %v8190 = vsel %vm986, %v8122, %v8123
      %v8191 = vsel %vm986, %v8121, %v8122
      %v8192 = vsel %vm986, %v8120, %v8121
      %v8193 = vsel %vm986, %v8119, %v8120
      %v8194 = vsel %vm986, %v8118, %v8119
      %v8195 = vsel %vm986, %v8117, %v8118
      %v8196 = vsel %vm986, %v8116, %v8117
      %v8197 = vsel %vm986, %v8115, %v8116
      %v8198 = vsel %vm986, %v8114, %v8115
      %v8199 = vsel %vm986, %v8113, %v8114
      %v8200 = vsel %vm986, %v8112, %v8113
      %v8201 = vsel %vm986, %v8111, %v8112
      %v8202 = vsel %vm986, %v8110, %v8111
      %v8203 = vsel %vm986, %v8109, %v8110
      %v8204 = vsel %vm986, %v8108, %v8109
      %v8205 = vsel %vm986, %v8107, %v8108
      %v8206 = vsel %vm986, %v8106, %v8107
      %v8207 = vsel %vm986, %v8156, %v8106
      %v8208 = vpack.c.bf16 %v8157, %v8158
      %v8209 = vpack.c.bf16 %v8206, %v8207
      %v8210 = vpack.c.bf16 %v8204, %v8205
      %v8211 = vpack.c.bf16 %v8202, %v8203
      %v8212 = vpack.c.bf16 %v8200, %v8201
      %v8213 = vpack.c.bf16 %v8198, %v8199
      %v8214 = vpack.c.bf16 %v8196, %v8197
      %v8215 = vpack.c.bf16 %v8194, %v8195
      %v8216 = vpack.c.bf16 %v8192, %v8193
      %v8217 = vpack.c.bf16 %v8190, %v8191
      %v8218 = vpack.c.bf16 %v8188, %v8189
      %v8219 = vpack.c.bf16 %v8186, %v8187
      %v8220 = vpack.c.bf16 %v8184, %v8185
      %v8221 = vpack.c.bf16 %v8182, %v8183
      %v8222 = vpack.c.bf16 %v8180, %v8181
      %v8223 = vpack.c.bf16 %v8178, %v8179
      %v8224 = vpack.c.bf16 %v8176, %v8177
      %v8225 = vpack.c.bf16 %v8174, %v8175
      %v8226 = vpack.c.bf16 %v8172, %v8173
      %v8227 = vpack.c.bf16 %v8170, %v8171
      %v8228 = vpack.c.bf16 %v8168, %v8169
      %v8229 = vpack.c.bf16 %v8166, %v8167
      %v8230 = vpack.c.bf16 %v8164, %v8165
      %v8231 = vpack.c.bf16 %v8162, %v8163
      %v8232 = vpack.c.bf16 %v8160, %v8161
      %v8233 = vpack.c.bf16 %v8159, %v8159
      %s8234 = scalar_lea.vmem %s3, 128
      %v8235 = vld [vmem:[%s8234] sm:$0xf]
      %v8236 = vld [vmem:[%s8234 + $0x4] sm:$0xf]
      %v8237 = vld [vmem:[%s8234 + $0x8] sm:$0xf]
      %v8238 = vld [vmem:[%s8234 + $0xc] sm:$0xf]
      %v8239 = vld [vmem:[%s8234 + $0x10] sm:$0xf]
      %v8240 = vld [vmem:[%s8234 + $0x14] sm:$0xf]
      %v8241 = vld [vmem:[%s8234 + $0x18] sm:$0xf]
      %v8242 = vld [vmem:[%s8234 + $0x1c] sm:$0xf]
      %v8243 = vld [vmem:[%s8234 + $0x20] sm:$0xf]
      %v8244 = vld [vmem:[%s8234 + $0x24] sm:$0xf]
      %v8245 = vld [vmem:[%s8234 + $0x28] sm:$0xf]
      %v8246 = vld [vmem:[%s8234 + $0x2c] sm:$0xf]
      %v8247 = vld [vmem:[%s8234 + $0x30] sm:$0xf]
      %v8248 = vld [vmem:[%s8234 + $0x34] sm:$0xf]
      %v8249 = vld [vmem:[%s8234 + $0x38] sm:$0xf]
      %v8250 = vld [vmem:[%s8234 + $0x3c] sm:$0xf]
      %v8267 = vunpack.c.l.b16 %v8235
      %v8268 = vunpack.c.l.b16 %v8236
      %v8269 = vunpack.c.l.b16 %v8237
      %v8270 = vunpack.c.l.b16 %v8238
      %v8271 = vunpack.c.l.b16 %v8239
      %v8272 = vunpack.c.l.b16 %v8240
      %v8273 = vunpack.c.l.b16 %v8241
      %v8274 = vunpack.c.l.b16 %v8242
      %v8275 = vunpack.c.l.b16 %v8243
      %v8276 = vunpack.c.l.b16 %v8244
      %v8277 = vunpack.c.l.b16 %v8245
      %v8278 = vunpack.c.l.b16 %v8246
      %v8279 = vunpack.c.l.b16 %v8247
      %v8280 = vunpack.c.l.b16 %v8248
      %v8281 = vunpack.c.l.b16 %v8249
      %v8282 = vunpack.c.l.b16 %v8250
      %v8283 = vpack.c.b16 %v8268, %v8267
      %v8284 = vpack.c.b16 %v8270, %v8269
      %v8285 = vpack.c.b16 %v8272, %v8271
      %v8286 = vpack.c.b16 %v8274, %v8273
      %v8287 = vpack.c.b16 %v8276, %v8275
      %v8288 = vpack.c.b16 %v8278, %v8277
      %v8289 = vpack.c.b16 %v8280, %v8279
      %v8290 = vpack.c.b16 %v8282, %v8281
      %8299 = vmatpush.bf16.msra.mxu0 %v8290
      %8300 = vmatpush.bf16.msra.mxu0 %v8289
      %8301 = vmatpush.bf16.msra.mxu0 %v8288
      %8302 = vmatpush.bf16.msra.mxu0 %v8287
      %8303 = vmatpush.bf16.msra.mxu0 %v8286
      %8304 = vmatpush.bf16.msra.mxu0 %v8285
      %8305 = vmatpush.bf16.msra.mxu0 %v8284
      %8306 = vmatpush.bf16.msra.mxu0 %v8283
      %8307 = vmatmul.bf16.gmra.mxu0 %v8208
      %v8308 = vpop.f32.mrf.mxu0
      %v8309 = vadd.f32 0.0, %v8308
      %v8310 = vpop.f32.mrf.mxu0
      %v8311 = vadd.f32 0.0, %v8310
      %8312 = vmatmul.bf16.gmra.mxu0 %v8209
      %v8313 = vpop.f32.mrf.mxu0
      %v8314 = vadd.f32 0.0, %v8313
      %v8315 = vpop.f32.mrf.mxu0
      %v8316 = vadd.f32 0.0, %v8315
      %8317 = vmatmul.bf16.gmra.mxu0 %v8210
      %v8318 = vpop.f32.mrf.mxu0
      %v8319 = vadd.f32 0.0, %v8318
      %v8320 = vpop.f32.mrf.mxu0
      %v8321 = vadd.f32 0.0, %v8320
      %8322 = vmatmul.bf16.gmra.mxu0 %v8211
      %v8323 = vpop.f32.mrf.mxu0
      %v8324 = vadd.f32 0.0, %v8323
      %v8325 = vpop.f32.mrf.mxu0
      %v8326 = vadd.f32 0.0, %v8325
      %8327 = vmatmul.bf16.gmra.mxu0 %v8212
      %v8328 = vpop.f32.mrf.mxu0
      %v8329 = vadd.f32 0.0, %v8328
      %v8330 = vpop.f32.mrf.mxu0
      %v8331 = vadd.f32 0.0, %v8330
      %8332 = vmatmul.bf16.gmra.mxu0 %v8213
      %v8333 = vpop.f32.mrf.mxu0
      %v8334 = vadd.f32 0.0, %v8333
      %v8335 = vpop.f32.mrf.mxu0
      %v8336 = vadd.f32 0.0, %v8335
      %8337 = vmatmul.bf16.gmra.mxu0 %v8214
      %v8338 = vpop.f32.mrf.mxu0
      %v8339 = vadd.f32 0.0, %v8338
      %v8340 = vpop.f32.mrf.mxu0
      %v8341 = vadd.f32 0.0, %v8340
      %8342 = vmatmul.bf16.gmra.mxu0 %v8215
      %v8343 = vpop.f32.mrf.mxu0
      %v8344 = vadd.f32 0.0, %v8343
      %v8345 = vpop.f32.mrf.mxu0
      %v8346 = vadd.f32 0.0, %v8345
      %8347 = vmatmul.bf16.gmra.mxu0 %v8216
      %v8348 = vpop.f32.mrf.mxu0
      %v8349 = vadd.f32 0.0, %v8348
      %v8350 = vpop.f32.mrf.mxu0
      %v8351 = vadd.f32 0.0, %v8350
      %8352 = vmatmul.bf16.gmra.mxu0 %v8217
      %v8353 = vpop.f32.mrf.mxu0
      %v8354 = vadd.f32 0.0, %v8353
      %v8355 = vpop.f32.mrf.mxu0
      %v8356 = vadd.f32 0.0, %v8355
      %8357 = vmatmul.bf16.gmra.mxu0 %v8218
      %v8358 = vpop.f32.mrf.mxu0
      %v8359 = vadd.f32 0.0, %v8358
      %v8360 = vpop.f32.mrf.mxu0
      %v8361 = vadd.f32 0.0, %v8360
      %8362 = vmatmul.bf16.gmra.mxu0 %v8219
      %v8363 = vpop.f32.mrf.mxu0
      %v8364 = vadd.f32 0.0, %v8363
      %v8365 = vpop.f32.mrf.mxu0
      %v8366 = vadd.f32 0.0, %v8365
      %8367 = vmatmul.bf16.gmra.mxu0 %v8220
      %v8368 = vpop.f32.mrf.mxu0
      %v8369 = vadd.f32 0.0, %v8368
      %v8370 = vpop.f32.mrf.mxu0
      %v8371 = vadd.f32 0.0, %v8370
      %8372 = vmatmul.bf16.gmra.mxu0 %v8221
      %v8373 = vpop.f32.mrf.mxu0
      %v8374 = vadd.f32 0.0, %v8373
      %v8375 = vpop.f32.mrf.mxu0
      %v8376 = vadd.f32 0.0, %v8375
      %8377 = vmatmul.bf16.gmra.mxu0 %v8222
      %v8378 = vpop.f32.mrf.mxu0
      %v8379 = vadd.f32 0.0, %v8378
      %v8380 = vpop.f32.mrf.mxu0
      %v8381 = vadd.f32 0.0, %v8380
      %8382 = vmatmul.bf16.gmra.mxu0 %v8223
      %v8383 = vpop.f32.mrf.mxu0
      %v8384 = vadd.f32 0.0, %v8383
      %v8385 = vpop.f32.mrf.mxu0
      %v8386 = vadd.f32 0.0, %v8385
      %8387 = vmatmul.bf16.gmra.mxu0 %v8224
      %v8388 = vpop.f32.mrf.mxu0
      %v8389 = vadd.f32 0.0, %v8388
      %v8390 = vpop.f32.mrf.mxu0
      %v8391 = vadd.f32 0.0, %v8390
      %8392 = vmatmul.bf16.gmra.mxu0 %v8225
      %v8393 = vpop.f32.mrf.mxu0
      %v8394 = vadd.f32 0.0, %v8393
      %v8395 = vpop.f32.mrf.mxu0
      %v8396 = vadd.f32 0.0, %v8395
      %8397 = vmatmul.bf16.gmra.mxu0 %v8226
      %v8398 = vpop.f32.mrf.mxu0
      %v8399 = vadd.f32 0.0, %v8398
      %v8400 = vpop.f32.mrf.mxu0
      %v8401 = vadd.f32 0.0, %v8400
      %8402 = vmatmul.bf16.gmra.mxu0 %v8227
      %v8403 = vpop.f32.mrf.mxu0
      %v8404 = vadd.f32 0.0, %v8403
      %v8405 = vpop.f32.mrf.mxu0
      %v8406 = vadd.f32 0.0, %v8405
      %8407 = vmatmul.bf16.gmra.mxu0 %v8228
      %v8408 = vpop.f32.mrf.mxu0
      %v8409 = vadd.f32 0.0, %v8408
      %v8410 = vpop.f32.mrf.mxu0
      %v8411 = vadd.f32 0.0, %v8410
      %8412 = vmatmul.bf16.gmra.mxu0 %v8229
      %v8413 = vpop.f32.mrf.mxu0
      %v8414 = vadd.f32 0.0, %v8413
      %v8415 = vpop.f32.mrf.mxu0
      %v8416 = vadd.f32 0.0, %v8415
      %8417 = vmatmul.bf16.gmra.mxu0 %v8230
      %v8418 = vpop.f32.mrf.mxu0
      %v8419 = vadd.f32 0.0, %v8418
      %v8420 = vpop.f32.mrf.mxu0
      %v8421 = vadd.f32 0.0, %v8420
      %8422 = vmatmul.bf16.gmra.mxu0 %v8231
      %v8423 = vpop.f32.mrf.mxu0
      %v8424 = vadd.f32 0.0, %v8423
      %v8425 = vpop.f32.mrf.mxu0
      %v8426 = vadd.f32 0.0, %v8425
      %8427 = vmatmul.bf16.gmra.mxu0 %v8232
      %v8428 = vpop.f32.mrf.mxu0
      %v8429 = vadd.f32 0.0, %v8428
      %v8430 = vpop.f32.mrf.mxu0
      %v8431 = vadd.f32 0.0, %v8430
      %8432 = vmatmul.bf16.gmra.mxu0 %v8233
      %v8433 = vpop.f32.mrf.mxu0
      %v8434 = vadd.f32 0.0, %v8433
      %v8435 = vpop.f32.mrf.mxu0
      %8436 = vdwg.mxu0
      %v8437 = vadd.f32 %v7978, %v8309
      %v8438 = vadd.f32 %v7980, %v8311
      %v8439 = vadd.f32 %v7983, %v8314
      %v8440 = vadd.f32 %v7985, %v8316
      %v8441 = vadd.f32 %v7988, %v8319
      %v8442 = vadd.f32 %v7990, %v8321
      %v8443 = vadd.f32 %v7993, %v8324
      %v8444 = vadd.f32 %v7995, %v8326
      %v8445 = vadd.f32 %v7998, %v8329
      %v8446 = vadd.f32 %v8000, %v8331
      %v8447 = vadd.f32 %v8003, %v8334
      %v8448 = vadd.f32 %v8005, %v8336
      %v8449 = vadd.f32 %v8008, %v8339
      %v8450 = vadd.f32 %v8010, %v8341
      %v8451 = vadd.f32 %v8013, %v8344
      %v8452 = vadd.f32 %v8015, %v8346
      %v8453 = vadd.f32 %v8018, %v8349
      %v8454 = vadd.f32 %v8020, %v8351
      %v8455 = vadd.f32 %v8023, %v8354
      %v8456 = vadd.f32 %v8025, %v8356
      %v8457 = vadd.f32 %v8028, %v8359
      %v8458 = vadd.f32 %v8030, %v8361
      %v8459 = vadd.f32 %v8033, %v8364
      %v8460 = vadd.f32 %v8035, %v8366
      %v8461 = vadd.f32 %v8038, %v8369
      %v8462 = vadd.f32 %v8040, %v8371
      %v8463 = vadd.f32 %v8043, %v8374
      %v8464 = vadd.f32 %v8045, %v8376
      %v8465 = vadd.f32 %v8048, %v8379
      %v8466 = vadd.f32 %v8050, %v8381
      %v8467 = vadd.f32 %v8053, %v8384
      %v8468 = vadd.f32 %v8055, %v8386
      %v8469 = vadd.f32 %v8058, %v8389
      %v8470 = vadd.f32 %v8060, %v8391
      %v8471 = vadd.f32 %v8063, %v8394
      %v8472 = vadd.f32 %v8065, %v8396
      %v8473 = vadd.f32 %v8068, %v8399
      %v8474 = vadd.f32 %v8070, %v8401
      %v8475 = vadd.f32 %v8073, %v8404
      %v8476 = vadd.f32 %v8075, %v8406
      %v8477 = vadd.f32 %v8078, %v8409
      %v8478 = vadd.f32 %v8080, %v8411
      %v8479 = vadd.f32 %v8083, %v8414
      %v8480 = vadd.f32 %v8085, %v8416
      %v8481 = vadd.f32 %v8088, %v8419
      %v8482 = vadd.f32 %v8090, %v8421
      %v8483 = vadd.f32 %v8093, %v8424
      %v8484 = vadd.f32 %v8095, %v8426
      %v8485 = vadd.f32 %v8098, %v8429
      %v8486 = vadd.f32 %v8100, %v8431
      %v8487 = vadd.f32 %v8103, %v8434
      %v8488 = vpack.c.bf16 %v7647, %v7648
      %v8489 = vpack.c.bf16 %v7645, %v7646
      %v8490 = vpack.c.bf16 %v7643, %v7644
      %v8491 = vpack.c.bf16 %v7641, %v7642
      %v8492 = vpack.c.bf16 %v7639, %v7640
      %v8493 = vpack.c.bf16 %v7637, %v7638
      %v8494 = vpack.c.bf16 %v7635, %v7636
      %v8495 = vpack.c.bf16 %v7633, %v7634
      %v8496 = vpack.c.bf16 %v7631, %v7632
      %v8497 = vpack.c.bf16 %v7629, %v7630
      %v8498 = vpack.c.bf16 %v7627, %v7628
      %v8499 = vpack.c.bf16 %v7625, %v7626
      %v8500 = vpack.c.bf16 %v7623, %v7624
      %v8501 = vpack.c.bf16 %v7621, %v7622
      %v8502 = vpack.c.bf16 %v7619, %v7620
      %v8503 = vpack.c.bf16 %v7617, %v7618
      %v8504 = vpack.c.bf16 %v7615, %v7616
      %v8505 = vpack.c.bf16 %v7613, %v7614
      %v8506 = vpack.c.bf16 %v7611, %v7612
      %v8507 = vpack.c.bf16 %v7609, %v7610
      %v8508 = vpack.c.bf16 %v7607, %v7608
      %v8509 = vpack.c.bf16 %v7605, %v7606
      %v8510 = vpack.c.bf16 %v7603, %v7604
      %v8511 = vpack.c.bf16 %v7601, %v7602
      %v8512 = vpack.c.bf16 %v7598, %v7598
      %s8513 = scalar_lea.vmem %s3, 192
      %v8514 = vld [vmem:[%s8513] sm:$0xf]
      %v8515 = vld [vmem:[%s8513 + $0x4] sm:$0xf]
      %v8516 = vld [vmem:[%s8513 + $0x8] sm:$0xf]
      %v8517 = vld [vmem:[%s8513 + $0xc] sm:$0xf]
      %v8518 = vld [vmem:[%s8513 + $0x10] sm:$0xf]
      %v8519 = vld [vmem:[%s8513 + $0x14] sm:$0xf]
      %v8520 = vld [vmem:[%s8513 + $0x18] sm:$0xf]
      %v8521 = vld [vmem:[%s8513 + $0x1c] sm:$0xf]
      %v8522 = vld [vmem:[%s8513 + $0x20] sm:$0xf]
      %v8523 = vld [vmem:[%s8513 + $0x24] sm:$0xf]
      %v8524 = vld [vmem:[%s8513 + $0x28] sm:$0xf]
      %v8525 = vld [vmem:[%s8513 + $0x2c] sm:$0xf]
      %v8526 = vld [vmem:[%s8513 + $0x30] sm:$0xf]
      %v8527 = vld [vmem:[%s8513 + $0x34] sm:$0xf]
      %v8528 = vld [vmem:[%s8513 + $0x38] sm:$0xf]
      %v8529 = vld [vmem:[%s8513 + $0x3c] sm:$0xf]
      %v8546 = vunpack.c.l.b16 %v8514
      %v8547 = vunpack.c.l.b16 %v8515
      %v8548 = vunpack.c.l.b16 %v8516
      %v8549 = vunpack.c.l.b16 %v8517
      %v8550 = vunpack.c.l.b16 %v8518
      %v8551 = vunpack.c.l.b16 %v8519
      %v8552 = vunpack.c.l.b16 %v8520
      %v8553 = vunpack.c.l.b16 %v8521
      %v8554 = vunpack.c.l.b16 %v8522
      %v8555 = vunpack.c.l.b16 %v8523
      %v8556 = vunpack.c.l.b16 %v8524
      %v8557 = vunpack.c.l.b16 %v8525
      %v8558 = vunpack.c.l.b16 %v8526
      %v8559 = vunpack.c.l.b16 %v8527
      %v8560 = vunpack.c.l.b16 %v8528
      %v8561 = vunpack.c.l.b16 %v8529
      %v8562 = vpack.c.b16 %v8547, %v8546
      %v8563 = vpack.c.b16 %v8549, %v8548
      %v8564 = vpack.c.b16 %v8551, %v8550
      %v8565 = vpack.c.b16 %v8553, %v8552
      %v8566 = vpack.c.b16 %v8555, %v8554
      %v8567 = vpack.c.b16 %v8557, %v8556
      %v8568 = vpack.c.b16 %v8559, %v8558
      %v8569 = vpack.c.b16 %v8561, %v8560
      %8578 = vmatpush.bf16.msra.mxu0 %v8569
      %8579 = vmatpush.bf16.msra.mxu0 %v8568
      %8580 = vmatpush.bf16.msra.mxu0 %v8567
      %8581 = vmatpush.bf16.msra.mxu0 %v8566
      %8582 = vmatpush.bf16.msra.mxu0 %v8565
      %8583 = vmatpush.bf16.msra.mxu0 %v8564
      %8584 = vmatpush.bf16.msra.mxu0 %v8563
      %8585 = vmatpush.bf16.msra.mxu0 %v8562
      %8586 = vmatmul.bf16.gmra.mxu0 %v8488
      %v8587 = vpop.f32.mrf.mxu0
      %v8588 = vadd.f32 0.0, %v8587
      %v8589 = vpop.f32.mrf.mxu0
      %v8590 = vadd.f32 0.0, %v8589
      %8591 = vmatmul.bf16.gmra.mxu0 %v8489
      %v8592 = vpop.f32.mrf.mxu0
      %v8593 = vadd.f32 0.0, %v8592
      %v8594 = vpop.f32.mrf.mxu0
      %v8595 = vadd.f32 0.0, %v8594
      %8596 = vmatmul.bf16.gmra.mxu0 %v8490
      %v8597 = vpop.f32.mrf.mxu0
      %v8598 = vadd.f32 0.0, %v8597
      %v8599 = vpop.f32.mrf.mxu0
      %v8600 = vadd.f32 0.0, %v8599
      %8601 = vmatmul.bf16.gmra.mxu0 %v8491
      %v8602 = vpop.f32.mrf.mxu0
      %v8603 = vadd.f32 0.0, %v8602
      %v8604 = vpop.f32.mrf.mxu0
      %v8605 = vadd.f32 0.0, %v8604
      %8606 = vmatmul.bf16.gmra.mxu0 %v8492
      %v8607 = vpop.f32.mrf.mxu0
      %v8608 = vadd.f32 0.0, %v8607
      %v8609 = vpop.f32.mrf.mxu0
      %v8610 = vadd.f32 0.0, %v8609
      %8611 = vmatmul.bf16.gmra.mxu0 %v8493
      %v8612 = vpop.f32.mrf.mxu0
      %v8613 = vadd.f32 0.0, %v8612
      %v8614 = vpop.f32.mrf.mxu0
      %v8615 = vadd.f32 0.0, %v8614
      %8616 = vmatmul.bf16.gmra.mxu0 %v8494
      %v8617 = vpop.f32.mrf.mxu0
      %v8618 = vadd.f32 0.0, %v8617
      %v8619 = vpop.f32.mrf.mxu0
      %v8620 = vadd.f32 0.0, %v8619
      %8621 = vmatmul.bf16.gmra.mxu0 %v8495
      %v8622 = vpop.f32.mrf.mxu0
      %v8623 = vadd.f32 0.0, %v8622
      %v8624 = vpop.f32.mrf.mxu0
      %v8625 = vadd.f32 0.0, %v8624
      %8626 = vmatmul.bf16.gmra.mxu0 %v8496
      %v8627 = vpop.f32.mrf.mxu0
      %v8628 = vadd.f32 0.0, %v8627
      %v8629 = vpop.f32.mrf.mxu0
      %v8630 = vadd.f32 0.0, %v8629
      %8631 = vmatmul.bf16.gmra.mxu0 %v8497
      %v8632 = vpop.f32.mrf.mxu0
      %v8633 = vadd.f32 0.0, %v8632
      %v8634 = vpop.f32.mrf.mxu0
      %v8635 = vadd.f32 0.0, %v8634
      %8636 = vmatmul.bf16.gmra.mxu0 %v8498
      %v8637 = vpop.f32.mrf.mxu0
      %v8638 = vadd.f32 0.0, %v8637
      %v8639 = vpop.f32.mrf.mxu0
      %v8640 = vadd.f32 0.0, %v8639
      %8641 = vmatmul.bf16.gmra.mxu0 %v8499
      %v8642 = vpop.f32.mrf.mxu0
      %v8643 = vadd.f32 0.0, %v8642
      %v8644 = vpop.f32.mrf.mxu0
      %v8645 = vadd.f32 0.0, %v8644
      %8646 = vmatmul.bf16.gmra.mxu0 %v8500
      %v8647 = vpop.f32.mrf.mxu0
      %v8648 = vadd.f32 0.0, %v8647
      %v8649 = vpop.f32.mrf.mxu0
      %v8650 = vadd.f32 0.0, %v8649
      %8651 = vmatmul.bf16.gmra.mxu0 %v8501
      %v8652 = vpop.f32.mrf.mxu0
      %v8653 = vadd.f32 0.0, %v8652
      %v8654 = vpop.f32.mrf.mxu0
      %v8655 = vadd.f32 0.0, %v8654
      %8656 = vmatmul.bf16.gmra.mxu0 %v8502
      %v8657 = vpop.f32.mrf.mxu0
      %v8658 = vadd.f32 0.0, %v8657
      %v8659 = vpop.f32.mrf.mxu0
      %v8660 = vadd.f32 0.0, %v8659
      %8661 = vmatmul.bf16.gmra.mxu0 %v8503
      %v8662 = vpop.f32.mrf.mxu0
      %v8663 = vadd.f32 0.0, %v8662
      %v8664 = vpop.f32.mrf.mxu0
      %v8665 = vadd.f32 0.0, %v8664
      %8666 = vmatmul.bf16.gmra.mxu0 %v8504
      %v8667 = vpop.f32.mrf.mxu0
      %v8668 = vadd.f32 0.0, %v8667
      %v8669 = vpop.f32.mrf.mxu0
      %v8670 = vadd.f32 0.0, %v8669
      %8671 = vmatmul.bf16.gmra.mxu0 %v8505
      %v8672 = vpop.f32.mrf.mxu0
      %v8673 = vadd.f32 0.0, %v8672
      %v8674 = vpop.f32.mrf.mxu0
      %v8675 = vadd.f32 0.0, %v8674
      %8676 = vmatmul.bf16.gmra.mxu0 %v8506
      %v8677 = vpop.f32.mrf.mxu0
      %v8678 = vadd.f32 0.0, %v8677
      %v8679 = vpop.f32.mrf.mxu0
      %v8680 = vadd.f32 0.0, %v8679
      %8681 = vmatmul.bf16.gmra.mxu0 %v8507
      %v8682 = vpop.f32.mrf.mxu0
      %v8683 = vadd.f32 0.0, %v8682
      %v8684 = vpop.f32.mrf.mxu0
      %v8685 = vadd.f32 0.0, %v8684
      %8686 = vmatmul.bf16.gmra.mxu0 %v8508
      %v8687 = vpop.f32.mrf.mxu0
      %v8688 = vadd.f32 0.0, %v8687
      %v8689 = vpop.f32.mrf.mxu0
      %v8690 = vadd.f32 0.0, %v8689
      %8691 = vmatmul.bf16.gmra.mxu0 %v8509
      %v8692 = vpop.f32.mrf.mxu0
      %v8693 = vadd.f32 0.0, %v8692
      %v8694 = vpop.f32.mrf.mxu0
      %v8695 = vadd.f32 0.0, %v8694
      %8696 = vmatmul.bf16.gmra.mxu0 %v8510
      %v8697 = vpop.f32.mrf.mxu0
      %v8698 = vadd.f32 0.0, %v8697
      %v8699 = vpop.f32.mrf.mxu0
      %v8700 = vadd.f32 0.0, %v8699
      %8701 = vmatmul.bf16.gmra.mxu0 %v8511
      %v8702 = vpop.f32.mrf.mxu0
      %v8703 = vadd.f32 0.0, %v8702
      %v8704 = vpop.f32.mrf.mxu0
      %v8705 = vadd.f32 0.0, %v8704
      %8706 = vmatmul.bf16.gmra.mxu0 %v7649
      %v8707 = vpop.f32.mrf.mxu0
      %v8708 = vadd.f32 0.0, %v8707
      %v8709 = vpop.f32.mrf.mxu0
      %v8710 = vadd.f32 0.0, %v8709
      %8711 = vmatmul.bf16.gmra.mxu0 %v8512
      %v8712 = vpop.f32.mrf.mxu0
      %v8713 = vadd.f32 0.0, %v8712
      %v8714 = vpop.f32.mrf.mxu0
      %8715 = vdwg.mxu0
      %v8716 = vadd.f32 %v8437, %v8588
      %v8717 = vadd.f32 %v8438, %v8590
      %v8718 = vadd.f32 %v8439, %v8593
      %v8719 = vadd.f32 %v8440, %v8595
      %v8720 = vadd.f32 %v8441, %v8598
      %v8721 = vadd.f32 %v8442, %v8600
      %v8722 = vadd.f32 %v8443, %v8603
      %v8723 = vadd.f32 %v8444, %v8605
      %v8724 = vadd.f32 %v8445, %v8608
      %v8725 = vadd.f32 %v8446, %v8610
      %v8726 = vadd.f32 %v8447, %v8613
      %v8727 = vadd.f32 %v8448, %v8615
      %v8728 = vadd.f32 %v8449, %v8618
      %v8729 = vadd.f32 %v8450, %v8620
      %v8730 = vadd.f32 %v8451, %v8623
      %v8731 = vadd.f32 %v8452, %v8625
      %v8732 = vadd.f32 %v8453, %v8628
      %v8733 = vadd.f32 %v8454, %v8630
      %v8734 = vadd.f32 %v8455, %v8633
      %v8735 = vadd.f32 %v8456, %v8635
      %v8736 = vadd.f32 %v8457, %v8638
      %v8737 = vadd.f32 %v8458, %v8640
      %v8738 = vadd.f32 %v8459, %v8643
      %v8739 = vadd.f32 %v8460, %v8645
      %v8740 = vadd.f32 %v8461, %v8648
      %v8741 = vadd.f32 %v8462, %v8650
      %v8742 = vadd.f32 %v8463, %v8653
      %v8743 = vadd.f32 %v8464, %v8655
      %v8744 = vadd.f32 %v8465, %v8658
      %v8745 = vadd.f32 %v8466, %v8660
      %v8746 = vadd.f32 %v8467, %v8663
      %v8747 = vadd.f32 %v8468, %v8665
      %v8748 = vadd.f32 %v8469, %v8668
      %v8749 = vadd.f32 %v8470, %v8670
      %v8750 = vadd.f32 %v8471, %v8673
      %v8751 = vadd.f32 %v8472, %v8675
      %v8752 = vadd.f32 %v8473, %v8678
      %v8753 = vadd.f32 %v8474, %v8680
      %v8754 = vadd.f32 %v8475, %v8683
      %v8755 = vadd.f32 %v8476, %v8685
      %v8756 = vadd.f32 %v8477, %v8688
      %v8757 = vadd.f32 %v8478, %v8690
      %v8758 = vadd.f32 %v8479, %v8693
      %v8759 = vadd.f32 %v8480, %v8695
      %v8760 = vadd.f32 %v8481, %v8698
      %v8761 = vadd.f32 %v8482, %v8700
      %v8762 = vadd.f32 %v8483, %v8703
      %v8763 = vadd.f32 %v8484, %v8705
      %v8764 = vadd.f32 %v8485, %v8708
      %v8765 = vadd.f32 %v8486, %v8710
      %v8766 = vadd.f32 %v8487, %v8713
      %v8767 = vpack.c.bf16 %v7497, %v7496
      %v8768 = vpack.c.bf16 %v7499, %v7498
      %v8769 = vpack.c.bf16 %v7501, %v7500
      %v8770 = vpack.c.bf16 %v7503, %v7502
      %v8771 = vpack.c.bf16 %v7505, %v7504
      %v8772 = vpack.c.bf16 %v7507, %v7506
      %v8773 = vpack.c.bf16 %v7509, %v7508
      %v8774 = vpack.c.bf16 %v7511, %v7510
      %v8775 = vpack.c.bf16 %v7513, %v7512
      %v8776 = vpack.c.bf16 %v7515, %v7514
      %v8777 = vpack.c.bf16 %v7517, %v7516
      %v8778 = vpack.c.bf16 %v7519, %v7518
      %v8779 = vpack.c.bf16 %v7521, %v7520
      %v8780 = vpack.c.bf16 %v7523, %v7522
      %v8781 = vpack.c.bf16 %v7525, %v7524
      %v8782 = vpack.c.bf16 %v7527, %v7526
      %v8783 = vpack.c.bf16 %v7529, %v7528
      %v8784 = vpack.c.bf16 %v7531, %v7530
      %v8785 = vpack.c.bf16 %v7533, %v7532
      %v8786 = vpack.c.bf16 %v7535, %v7534
      %v8787 = vpack.c.bf16 %v7537, %v7536
      %v8788 = vpack.c.bf16 %v7539, %v7538
      %v8789 = vpack.c.bf16 %v7541, %v7540
      %v8790 = vpack.c.bf16 %v7543, %v7542
      %v8791 = vpack.c.bf16 %v7546, %v7546
      %s8792 = scalar_lea.vmem %s3, 256
      %v8793 = vld [vmem:[%s8792] sm:$0xf]
      %v8794 = vld [vmem:[%s8792 + $0x4] sm:$0xf]
      %v8795 = vld [vmem:[%s8792 + $0x8] sm:$0xf]
      %v8796 = vld [vmem:[%s8792 + $0xc] sm:$0xf]
      %v8797 = vld [vmem:[%s8792 + $0x10] sm:$0xf]
      %v8798 = vld [vmem:[%s8792 + $0x14] sm:$0xf]
      %v8799 = vld [vmem:[%s8792 + $0x18] sm:$0xf]
      %v8800 = vld [vmem:[%s8792 + $0x1c] sm:$0xf]
      %v8801 = vld [vmem:[%s8792 + $0x20] sm:$0xf]
      %v8802 = vld [vmem:[%s8792 + $0x24] sm:$0xf]
      %v8803 = vld [vmem:[%s8792 + $0x28] sm:$0xf]
      %v8804 = vld [vmem:[%s8792 + $0x2c] sm:$0xf]
      %v8805 = vld [vmem:[%s8792 + $0x30] sm:$0xf]
      %v8806 = vld [vmem:[%s8792 + $0x34] sm:$0xf]
      %v8807 = vld [vmem:[%s8792 + $0x38] sm:$0xf]
      %v8808 = vld [vmem:[%s8792 + $0x3c] sm:$0xf]
      %v8825 = vunpack.c.l.b16 %v8793
      %v8826 = vunpack.c.l.b16 %v8794
      %v8827 = vunpack.c.l.b16 %v8795
      %v8828 = vunpack.c.l.b16 %v8796
      %v8829 = vunpack.c.l.b16 %v8797
      %v8830 = vunpack.c.l.b16 %v8798
      %v8831 = vunpack.c.l.b16 %v8799
      %v8832 = vunpack.c.l.b16 %v8800
      %v8833 = vunpack.c.l.b16 %v8801
      %v8834 = vunpack.c.l.b16 %v8802
      %v8835 = vunpack.c.l.b16 %v8803
      %v8836 = vunpack.c.l.b16 %v8804
      %v8837 = vunpack.c.l.b16 %v8805
      %v8838 = vunpack.c.l.b16 %v8806
      %v8839 = vunpack.c.l.b16 %v8807
      %v8840 = vunpack.c.l.b16 %v8808
      %v8841 = vpack.c.b16 %v8826, %v8825
      %v8842 = vpack.c.b16 %v8828, %v8827
      %v8843 = vpack.c.b16 %v8830, %v8829
      %v8844 = vpack.c.b16 %v8832, %v8831
      %v8845 = vpack.c.b16 %v8834, %v8833
      %v8846 = vpack.c.b16 %v8836, %v8835
      %v8847 = vpack.c.b16 %v8838, %v8837
      %v8848 = vpack.c.b16 %v8840, %v8839
      %8857 = vmatpush.bf16.msra.mxu0 %v8848
      %8858 = vmatpush.bf16.msra.mxu0 %v8847
      %8859 = vmatpush.bf16.msra.mxu0 %v8846
      %8860 = vmatpush.bf16.msra.mxu0 %v8845
      %8861 = vmatpush.bf16.msra.mxu0 %v8844
      %8862 = vmatpush.bf16.msra.mxu0 %v8843
      %8863 = vmatpush.bf16.msra.mxu0 %v8842
      %8864 = vmatpush.bf16.msra.mxu0 %v8841
      %8865 = vmatmul.bf16.gmra.mxu0 %v8767
      %v8866 = vpop.f32.mrf.mxu0
      %v8867 = vadd.f32 0.0, %v8866
      %v8868 = vpop.f32.mrf.mxu0
      %v8869 = vadd.f32 0.0, %v8868
      %8870 = vmatmul.bf16.gmra.mxu0 %v8768
      %v8871 = vpop.f32.mrf.mxu0
      %v8872 = vadd.f32 0.0, %v8871
      %v8873 = vpop.f32.mrf.mxu0
      %v8874 = vadd.f32 0.0, %v8873
      %8875 = vmatmul.bf16.gmra.mxu0 %v8769
      %v8876 = vpop.f32.mrf.mxu0
      %v8877 = vadd.f32 0.0, %v8876
      %v8878 = vpop.f32.mrf.mxu0
      %v8879 = vadd.f32 0.0, %v8878
      %8880 = vmatmul.bf16.gmra.mxu0 %v8770
      %v8881 = vpop.f32.mrf.mxu0
      %v8882 = vadd.f32 0.0, %v8881
      %v8883 = vpop.f32.mrf.mxu0
      %v8884 = vadd.f32 0.0, %v8883
      %8885 = vmatmul.bf16.gmra.mxu0 %v8771
      %v8886 = vpop.f32.mrf.mxu0
      %v8887 = vadd.f32 0.0, %v8886
      %v8888 = vpop.f32.mrf.mxu0
      %v8889 = vadd.f32 0.0, %v8888
      %8890 = vmatmul.bf16.gmra.mxu0 %v8772
      %v8891 = vpop.f32.mrf.mxu0
      %v8892 = vadd.f32 0.0, %v8891
      %v8893 = vpop.f32.mrf.mxu0
      %v8894 = vadd.f32 0.0, %v8893
      %8895 = vmatmul.bf16.gmra.mxu0 %v8773
      %v8896 = vpop.f32.mrf.mxu0
      %v8897 = vadd.f32 0.0, %v8896
      %v8898 = vpop.f32.mrf.mxu0
      %v8899 = vadd.f32 0.0, %v8898
      %8900 = vmatmul.bf16.gmra.mxu0 %v8774
      %v8901 = vpop.f32.mrf.mxu0
      %v8902 = vadd.f32 0.0, %v8901
      %v8903 = vpop.f32.mrf.mxu0
      %v8904 = vadd.f32 0.0, %v8903
      %8905 = vmatmul.bf16.gmra.mxu0 %v8775
      %v8906 = vpop.f32.mrf.mxu0
      %v8907 = vadd.f32 0.0, %v8906
      %v8908 = vpop.f32.mrf.mxu0
      %v8909 = vadd.f32 0.0, %v8908
      %8910 = vmatmul.bf16.gmra.mxu0 %v8776
      %v8911 = vpop.f32.mrf.mxu0
      %v8912 = vadd.f32 0.0, %v8911
      %v8913 = vpop.f32.mrf.mxu0
      %v8914 = vadd.f32 0.0, %v8913
      %8915 = vmatmul.bf16.gmra.mxu0 %v8777
      %v8916 = vpop.f32.mrf.mxu0
      %v8917 = vadd.f32 0.0, %v8916
      %v8918 = vpop.f32.mrf.mxu0
      %v8919 = vadd.f32 0.0, %v8918
      %8920 = vmatmul.bf16.gmra.mxu0 %v8778
      %v8921 = vpop.f32.mrf.mxu0
      %v8922 = vadd.f32 0.0, %v8921
      %v8923 = vpop.f32.mrf.mxu0
      %v8924 = vadd.f32 0.0, %v8923
      %8925 = vmatmul.bf16.gmra.mxu0 %v8779
      %v8926 = vpop.f32.mrf.mxu0
      %v8927 = vadd.f32 0.0, %v8926
      %v8928 = vpop.f32.mrf.mxu0
      %v8929 = vadd.f32 0.0, %v8928
      %8930 = vmatmul.bf16.gmra.mxu0 %v8780
      %v8931 = vpop.f32.mrf.mxu0
      %v8932 = vadd.f32 0.0, %v8931
      %v8933 = vpop.f32.mrf.mxu0
      %v8934 = vadd.f32 0.0, %v8933
      %8935 = vmatmul.bf16.gmra.mxu0 %v8781
      %v8936 = vpop.f32.mrf.mxu0
      %v8937 = vadd.f32 0.0, %v8936
      %v8938 = vpop.f32.mrf.mxu0
      %v8939 = vadd.f32 0.0, %v8938
      %8940 = vmatmul.bf16.gmra.mxu0 %v8782
      %v8941 = vpop.f32.mrf.mxu0
      %v8942 = vadd.f32 0.0, %v8941
      %v8943 = vpop.f32.mrf.mxu0
      %v8944 = vadd.f32 0.0, %v8943
      %8945 = vmatmul.bf16.gmra.mxu0 %v8783
      %v8946 = vpop.f32.mrf.mxu0
      %v8947 = vadd.f32 0.0, %v8946
      %v8948 = vpop.f32.mrf.mxu0
      %v8949 = vadd.f32 0.0, %v8948
      %8950 = vmatmul.bf16.gmra.mxu0 %v8784
      %v8951 = vpop.f32.mrf.mxu0
      %v8952 = vadd.f32 0.0, %v8951
      %v8953 = vpop.f32.mrf.mxu0
      %v8954 = vadd.f32 0.0, %v8953
      %8955 = vmatmul.bf16.gmra.mxu0 %v8785
      %v8956 = vpop.f32.mrf.mxu0
      %v8957 = vadd.f32 0.0, %v8956
      %v8958 = vpop.f32.mrf.mxu0
      %v8959 = vadd.f32 0.0, %v8958
      %8960 = vmatmul.bf16.gmra.mxu0 %v8786
      %v8961 = vpop.f32.mrf.mxu0
      %v8962 = vadd.f32 0.0, %v8961
      %v8963 = vpop.f32.mrf.mxu0
      %v8964 = vadd.f32 0.0, %v8963
      %8965 = vmatmul.bf16.gmra.mxu0 %v8787
      %v8966 = vpop.f32.mrf.mxu0
      %v8967 = vadd.f32 0.0, %v8966
      %v8968 = vpop.f32.mrf.mxu0
      %v8969 = vadd.f32 0.0, %v8968
      %8970 = vmatmul.bf16.gmra.mxu0 %v8788
      %v8971 = vpop.f32.mrf.mxu0
      %v8972 = vadd.f32 0.0, %v8971
      %v8973 = vpop.f32.mrf.mxu0
      %v8974 = vadd.f32 0.0, %v8973
      %8975 = vmatmul.bf16.gmra.mxu0 %v8789
      %v8976 = vpop.f32.mrf.mxu0
      %v8977 = vadd.f32 0.0, %v8976
      %v8978 = vpop.f32.mrf.mxu0
      %v8979 = vadd.f32 0.0, %v8978
      %8980 = vmatmul.bf16.gmra.mxu0 %v8790
      %v8981 = vpop.f32.mrf.mxu0
      %v8982 = vadd.f32 0.0, %v8981
      %v8983 = vpop.f32.mrf.mxu0
      %v8984 = vadd.f32 0.0, %v8983
      %8985 = vmatmul.bf16.gmra.mxu0 %v7691
      %v8986 = vpop.f32.mrf.mxu0
      %v8987 = vadd.f32 0.0, %v8986
      %v8988 = vpop.f32.mrf.mxu0
      %v8989 = vadd.f32 0.0, %v8988
      %8990 = vmatmul.bf16.gmra.mxu0 %v8791
      %v8991 = vpop.f32.mrf.mxu0
      %v8992 = vadd.f32 0.0, %v8991
      %v8993 = vpop.f32.mrf.mxu0
      %8994 = vdwg.mxu0
      %v8995 = vadd.f32 %v8716, %v8867
      %v8996 = vadd.f32 %v8717, %v8869
      %v8997 = vadd.f32 %v8718, %v8872
      %v8998 = vadd.f32 %v8719, %v8874
      %v8999 = vadd.f32 %v8720, %v8877
      %v9000 = vadd.f32 %v8721, %v8879
      %v9001 = vadd.f32 %v8722, %v8882
      %v9002 = vadd.f32 %v8723, %v8884
      %v9003 = vadd.f32 %v8724, %v8887
      %v9004 = vadd.f32 %v8725, %v8889
      %v9005 = vadd.f32 %v8726, %v8892
      %v9006 = vadd.f32 %v8727, %v8894
      %v9007 = vadd.f32 %v8728, %v8897
      %v9008 = vadd.f32 %v8729, %v8899
      %v9009 = vadd.f32 %v8730, %v8902
      %v9010 = vadd.f32 %v8731, %v8904
      %v9011 = vadd.f32 %v8732, %v8907
      %v9012 = vadd.f32 %v8733, %v8909
      %v9013 = vadd.f32 %v8734, %v8912
      %v9014 = vadd.f32 %v8735, %v8914
      %v9015 = vadd.f32 %v8736, %v8917
      %v9016 = vadd.f32 %v8737, %v8919
      %v9017 = vadd.f32 %v8738, %v8922
      %v9018 = vadd.f32 %v8739, %v8924
      %v9019 = vadd.f32 %v8740, %v8927
      %v9020 = vadd.f32 %v8741, %v8929
      %v9021 = vadd.f32 %v8742, %v8932
      %v9022 = vadd.f32 %v8743, %v8934
      %v9023 = vadd.f32 %v8744, %v8937
      %v9024 = vadd.f32 %v8745, %v8939
      %v9025 = vadd.f32 %v8746, %v8942
      %v9026 = vadd.f32 %v8747, %v8944
      %v9027 = vadd.f32 %v8748, %v8947
      %v9028 = vadd.f32 %v8749, %v8949
      %v9029 = vadd.f32 %v8750, %v8952
      %v9030 = vadd.f32 %v8751, %v8954
      %v9031 = vadd.f32 %v8752, %v8957
      %v9032 = vadd.f32 %v8753, %v8959
      %v9033 = vadd.f32 %v8754, %v8962
      %v9034 = vadd.f32 %v8755, %v8964
      %v9035 = vadd.f32 %v8756, %v8967
      %v9036 = vadd.f32 %v8757, %v8969
      %v9037 = vadd.f32 %v8758, %v8972
      %v9038 = vadd.f32 %v8759, %v8974
      %v9039 = vadd.f32 %v8760, %v8977
      %v9040 = vadd.f32 %v8761, %v8979
      %v9041 = vadd.f32 %v8762, %v8982
      %v9042 = vadd.f32 %v8763, %v8984
      %v9043 = vadd.f32 %v8764, %v8987
      %v9044 = vadd.f32 %v8765, %v8989
      %v9045 = vadd.f32 %v8766, %v8992
      %v9046 = vpack.c.bf16 %v8205, %v8206
      %v9047 = vpack.c.bf16 %v8203, %v8204
      %v9048 = vpack.c.bf16 %v8201, %v8202
      %v9049 = vpack.c.bf16 %v8199, %v8200
      %v9050 = vpack.c.bf16 %v8197, %v8198
      %v9051 = vpack.c.bf16 %v8195, %v8196
      %v9052 = vpack.c.bf16 %v8193, %v8194
      %v9053 = vpack.c.bf16 %v8191, %v8192
      %v9054 = vpack.c.bf16 %v8189, %v8190
      %v9055 = vpack.c.bf16 %v8187, %v8188
      %v9056 = vpack.c.bf16 %v8185, %v8186
      %v9057 = vpack.c.bf16 %v8183, %v8184
      %v9058 = vpack.c.bf16 %v8181, %v8182
      %v9059 = vpack.c.bf16 %v8179, %v8180
      %v9060 = vpack.c.bf16 %v8177, %v8178
      %v9061 = vpack.c.bf16 %v8175, %v8176
      %v9062 = vpack.c.bf16 %v8173, %v8174
      %v9063 = vpack.c.bf16 %v8171, %v8172
      %v9064 = vpack.c.bf16 %v8169, %v8170
      %v9065 = vpack.c.bf16 %v8167, %v8168
      %v9066 = vpack.c.bf16 %v8165, %v8166
      %v9067 = vpack.c.bf16 %v8163, %v8164
      %v9068 = vpack.c.bf16 %v8161, %v8162
      %v9069 = vpack.c.bf16 %v8159, %v8160
      %v9070 = vpack.c.bf16 %v8207, %v8207
      %s9071 = scalar_lea.vmem %s3, 320
      %v9072 = vld [vmem:[%s9071] sm:$0xf]
      %v9073 = vld [vmem:[%s9071 + $0x4] sm:$0xf]
      %v9074 = vld [vmem:[%s9071 + $0x8] sm:$0xf]
      %v9075 = vld [vmem:[%s9071 + $0xc] sm:$0xf]
      %v9076 = vld [vmem:[%s9071 + $0x10] sm:$0xf]
      %v9077 = vld [vmem:[%s9071 + $0x14] sm:$0xf]
      %v9078 = vld [vmem:[%s9071 + $0x18] sm:$0xf]
      %v9079 = vld [vmem:[%s9071 + $0x1c] sm:$0xf]
      %v9080 = vld [vmem:[%s9071 + $0x20] sm:$0xf]
      %v9081 = vld [vmem:[%s9071 + $0x24] sm:$0xf]
      %v9082 = vld [vmem:[%s9071 + $0x28] sm:$0xf]
      %v9083 = vld [vmem:[%s9071 + $0x2c] sm:$0xf]
      %v9084 = vld [vmem:[%s9071 + $0x30] sm:$0xf]
      %v9085 = vld [vmem:[%s9071 + $0x34] sm:$0xf]
      %v9086 = vld [vmem:[%s9071 + $0x38] sm:$0xf]
      %v9087 = vld [vmem:[%s9071 + $0x3c] sm:$0xf]
      %v9104 = vunpack.c.l.b16 %v9072
      %v9105 = vunpack.c.l.b16 %v9073
      %v9106 = vunpack.c.l.b16 %v9074
      %v9107 = vunpack.c.l.b16 %v9075
      %v9108 = vunpack.c.l.b16 %v9076
      %v9109 = vunpack.c.l.b16 %v9077
      %v9110 = vunpack.c.l.b16 %v9078
      %v9111 = vunpack.c.l.b16 %v9079
      %v9112 = vunpack.c.l.b16 %v9080
      %v9113 = vunpack.c.l.b16 %v9081
      %v9114 = vunpack.c.l.b16 %v9082
      %v9115 = vunpack.c.l.b16 %v9083
      %v9116 = vunpack.c.l.b16 %v9084
      %v9117 = vunpack.c.l.b16 %v9085
      %v9118 = vunpack.c.l.b16 %v9086
      %v9119 = vunpack.c.l.b16 %v9087
      %v9120 = vpack.c.b16 %v9105, %v9104
      %v9121 = vpack.c.b16 %v9107, %v9106
      %v9122 = vpack.c.b16 %v9109, %v9108
      %v9123 = vpack.c.b16 %v9111, %v9110
      %v9124 = vpack.c.b16 %v9113, %v9112
      %v9125 = vpack.c.b16 %v9115, %v9114
      %v9126 = vpack.c.b16 %v9117, %v9116
      %v9127 = vpack.c.b16 %v9119, %v9118
      %9136 = vmatpush.bf16.msra.mxu0 %v9127
      %9137 = vmatpush.bf16.msra.mxu0 %v9126
      %9138 = vmatpush.bf16.msra.mxu0 %v9125
      %9139 = vmatpush.bf16.msra.mxu0 %v9124
      %9140 = vmatpush.bf16.msra.mxu0 %v9123
      %9141 = vmatpush.bf16.msra.mxu0 %v9122
      %9142 = vmatpush.bf16.msra.mxu0 %v9121
      %9143 = vmatpush.bf16.msra.mxu0 %v9120
      %9144 = vmatmul.bf16.gmra.mxu0 %v9046
      %v9145 = vpop.f32.mrf.mxu0
      %v9146 = vadd.f32 0.0, %v9145
      %v9147 = vpop.f32.mrf.mxu0
      %v9148 = vadd.f32 0.0, %v9147
      %9149 = vmatmul.bf16.gmra.mxu0 %v9047
      %v9150 = vpop.f32.mrf.mxu0
      %v9151 = vadd.f32 0.0, %v9150
      %v9152 = vpop.f32.mrf.mxu0
      %v9153 = vadd.f32 0.0, %v9152
      %9154 = vmatmul.bf16.gmra.mxu0 %v9048
      %v9155 = vpop.f32.mrf.mxu0
      %v9156 = vadd.f32 0.0, %v9155
      %v9157 = vpop.f32.mrf.mxu0
      %v9158 = vadd.f32 0.0, %v9157
      %9159 = vmatmul.bf16.gmra.mxu0 %v9049
      %v9160 = vpop.f32.mrf.mxu0
      %v9161 = vadd.f32 0.0, %v9160
      %v9162 = vpop.f32.mrf.mxu0
      %v9163 = vadd.f32 0.0, %v9162
      %9164 = vmatmul.bf16.gmra.mxu0 %v9050
      %v9165 = vpop.f32.mrf.mxu0
      %v9166 = vadd.f32 0.0, %v9165
      %v9167 = vpop.f32.mrf.mxu0
      %v9168 = vadd.f32 0.0, %v9167
      %9169 = vmatmul.bf16.gmra.mxu0 %v9051
      %v9170 = vpop.f32.mrf.mxu0
      %v9171 = vadd.f32 0.0, %v9170
      %v9172 = vpop.f32.mrf.mxu0
      %v9173 = vadd.f32 0.0, %v9172
      %9174 = vmatmul.bf16.gmra.mxu0 %v9052
      %v9175 = vpop.f32.mrf.mxu0
      %v9176 = vadd.f32 0.0, %v9175
      %v9177 = vpop.f32.mrf.mxu0
      %v9178 = vadd.f32 0.0, %v9177
      %9179 = vmatmul.bf16.gmra.mxu0 %v9053
      %v9180 = vpop.f32.mrf.mxu0
      %v9181 = vadd.f32 0.0, %v9180
      %v9182 = vpop.f32.mrf.mxu0
      %v9183 = vadd.f32 0.0, %v9182
      %9184 = vmatmul.bf16.gmra.mxu0 %v9054
      %v9185 = vpop.f32.mrf.mxu0
      %v9186 = vadd.f32 0.0, %v9185
      %v9187 = vpop.f32.mrf.mxu0
      %v9188 = vadd.f32 0.0, %v9187
      %9189 = vmatmul.bf16.gmra.mxu0 %v9055
      %v9190 = vpop.f32.mrf.mxu0
      %v9191 = vadd.f32 0.0, %v9190
      %v9192 = vpop.f32.mrf.mxu0
      %v9193 = vadd.f32 0.0, %v9192
      %9194 = vmatmul.bf16.gmra.mxu0 %v9056
      %v9195 = vpop.f32.mrf.mxu0
      %v9196 = vadd.f32 0.0, %v9195
      %v9197 = vpop.f32.mrf.mxu0
      %v9198 = vadd.f32 0.0, %v9197
      %9199 = vmatmul.bf16.gmra.mxu0 %v9057
      %v9200 = vpop.f32.mrf.mxu0
      %v9201 = vadd.f32 0.0, %v9200
      %v9202 = vpop.f32.mrf.mxu0
      %v9203 = vadd.f32 0.0, %v9202
      %9204 = vmatmul.bf16.gmra.mxu0 %v9058
      %v9205 = vpop.f32.mrf.mxu0
      %v9206 = vadd.f32 0.0, %v9205
      %v9207 = vpop.f32.mrf.mxu0
      %v9208 = vadd.f32 0.0, %v9207
      %9209 = vmatmul.bf16.gmra.mxu0 %v9059
      %v9210 = vpop.f32.mrf.mxu0
      %v9211 = vadd.f32 0.0, %v9210
      %v9212 = vpop.f32.mrf.mxu0
      %v9213 = vadd.f32 0.0, %v9212
      %9214 = vmatmul.bf16.gmra.mxu0 %v9060
      %v9215 = vpop.f32.mrf.mxu0
      %v9216 = vadd.f32 0.0, %v9215
      %v9217 = vpop.f32.mrf.mxu0
      %v9218 = vadd.f32 0.0, %v9217
      %9219 = vmatmul.bf16.gmra.mxu0 %v9061
      %v9220 = vpop.f32.mrf.mxu0
      %v9221 = vadd.f32 0.0, %v9220
      %v9222 = vpop.f32.mrf.mxu0
      %v9223 = vadd.f32 0.0, %v9222
      %9224 = vmatmul.bf16.gmra.mxu0 %v9062
      %v9225 = vpop.f32.mrf.mxu0
      %v9226 = vadd.f32 0.0, %v9225
      %v9227 = vpop.f32.mrf.mxu0
      %v9228 = vadd.f32 0.0, %v9227
      %9229 = vmatmul.bf16.gmra.mxu0 %v9063
      %v9230 = vpop.f32.mrf.mxu0
      %v9231 = vadd.f32 0.0, %v9230
      %v9232 = vpop.f32.mrf.mxu0
      %v9233 = vadd.f32 0.0, %v9232
      %9234 = vmatmul.bf16.gmra.mxu0 %v9064
      %v9235 = vpop.f32.mrf.mxu0
      %v9236 = vadd.f32 0.0, %v9235
      %v9237 = vpop.f32.mrf.mxu0
      %v9238 = vadd.f32 0.0, %v9237
      %9239 = vmatmul.bf16.gmra.mxu0 %v9065
      %v9240 = vpop.f32.mrf.mxu0
      %v9241 = vadd.f32 0.0, %v9240
      %v9242 = vpop.f32.mrf.mxu0
      %v9243 = vadd.f32 0.0, %v9242
      %9244 = vmatmul.bf16.gmra.mxu0 %v9066
      %v9245 = vpop.f32.mrf.mxu0
      %v9246 = vadd.f32 0.0, %v9245
      %v9247 = vpop.f32.mrf.mxu0
      %v9248 = vadd.f32 0.0, %v9247
      %9249 = vmatmul.bf16.gmra.mxu0 %v9067
      %v9250 = vpop.f32.mrf.mxu0
      %v9251 = vadd.f32 0.0, %v9250
      %v9252 = vpop.f32.mrf.mxu0
      %v9253 = vadd.f32 0.0, %v9252
      %9254 = vmatmul.bf16.gmra.mxu0 %v9068
      %v9255 = vpop.f32.mrf.mxu0
      %v9256 = vadd.f32 0.0, %v9255
      %v9257 = vpop.f32.mrf.mxu0
      %v9258 = vadd.f32 0.0, %v9257
      %9259 = vmatmul.bf16.gmra.mxu0 %v9069
      %v9260 = vpop.f32.mrf.mxu0
      %v9261 = vadd.f32 0.0, %v9260
      %v9262 = vpop.f32.mrf.mxu0
      %v9263 = vadd.f32 0.0, %v9262
      %9264 = vmatmul.bf16.gmra.mxu0 %v8208
      %v9265 = vpop.f32.mrf.mxu0
      %v9266 = vadd.f32 0.0, %v9265
      %v9267 = vpop.f32.mrf.mxu0
      %v9268 = vadd.f32 0.0, %v9267
      %9269 = vmatmul.bf16.gmra.mxu0 %v9070
      %v9270 = vpop.f32.mrf.mxu0
      %v9271 = vadd.f32 0.0, %v9270
      %v9272 = vpop.f32.mrf.mxu0
      %9273 = vdwg.mxu0
      %v9274 = vadd.f32 %v8995, %v9146
      %v9275 = vadd.f32 %v8996, %v9148
      %v9276 = vadd.f32 %v8997, %v9151
      %v9277 = vadd.f32 %v8998, %v9153
      %v9278 = vadd.f32 %v8999, %v9156
      %v9279 = vadd.f32 %v9000, %v9158
      %v9280 = vadd.f32 %v9001, %v9161
      %v9281 = vadd.f32 %v9002, %v9163
      %v9282 = vadd.f32 %v9003, %v9166
      %v9283 = vadd.f32 %v9004, %v9168
      %v9284 = vadd.f32 %v9005, %v9171
      %v9285 = vadd.f32 %v9006, %v9173
      %v9286 = vadd.f32 %v9007, %v9176
      %v9287 = vadd.f32 %v9008, %v9178
      %v9288 = vadd.f32 %v9009, %v9181
      %v9289 = vadd.f32 %v9010, %v9183
      %v9290 = vadd.f32 %v9011, %v9186
      %v9291 = vadd.f32 %v9012, %v9188
      %v9292 = vadd.f32 %v9013, %v9191
      %v9293 = vadd.f32 %v9014, %v9193
      %v9294 = vadd.f32 %v9015, %v9196
      %v9295 = vadd.f32 %v9016, %v9198
      %v9296 = vadd.f32 %v9017, %v9201
      %v9297 = vadd.f32 %v9018, %v9203
      %v9298 = vadd.f32 %v9019, %v9206
      %v9299 = vadd.f32 %v9020, %v9208
      %v9300 = vadd.f32 %v9021, %v9211
      %v9301 = vadd.f32 %v9022, %v9213
      %v9302 = vadd.f32 %v9023, %v9216
      %v9303 = vadd.f32 %v9024, %v9218
      %v9304 = vadd.f32 %v9025, %v9221
      %v9305 = vadd.f32 %v9026, %v9223
      %v9306 = vadd.f32 %v9027, %v9226
      %v9307 = vadd.f32 %v9028, %v9228
      %v9308 = vadd.f32 %v9029, %v9231
      %v9309 = vadd.f32 %v9030, %v9233
      %v9310 = vadd.f32 %v9031, %v9236
      %v9311 = vadd.f32 %v9032, %v9238
      %v9312 = vadd.f32 %v9033, %v9241
      %v9313 = vadd.f32 %v9034, %v9243
      %v9314 = vadd.f32 %v9035, %v9246
      %v9315 = vadd.f32 %v9036, %v9248
      %v9316 = vadd.f32 %v9037, %v9251
      %v9317 = vadd.f32 %v9038, %v9253
      %v9318 = vadd.f32 %v9039, %v9256
      %v9319 = vadd.f32 %v9040, %v9258
      %v9320 = vadd.f32 %v9041, %v9261
      %v9321 = vadd.f32 %v9042, %v9263
      %v9322 = vadd.f32 %v9043, %v9266
      %v9323 = vadd.f32 %v9044, %v9268
      %v9324 = vadd.f32 %v9045, %v9271
      %v9325 = vpack.c.bf16 %v7600, %v7601
      %v9326 = vpack.c.bf16 %v7598, %v7599
      %v9327 = vpack.c.bf16 %v7646, %v7646
      %s9328 = scalar_lea.vmem %s3, 384
      %v9329 = vld [vmem:[%s9328] sm:$0xf]
      %v9330 = vld [vmem:[%s9328 + $0x4] sm:$0xf]
      %v9331 = vld [vmem:[%s9328 + $0x8] sm:$0xf]
      %v9332 = vld [vmem:[%s9328 + $0xc] sm:$0xf]
      %v9333 = vld [vmem:[%s9328 + $0x10] sm:$0xf]
      %v9334 = vld [vmem:[%s9328 + $0x14] sm:$0xf]
      %v9335 = vld [vmem:[%s9328 + $0x18] sm:$0xf]
      %v9336 = vld [vmem:[%s9328 + $0x1c] sm:$0xf]
      %v9337 = vld [vmem:[%s9328 + $0x20] sm:$0xf]
      %v9338 = vld [vmem:[%s9328 + $0x24] sm:$0xf]
      %v9339 = vld [vmem:[%s9328 + $0x28] sm:$0xf]
      %v9340 = vld [vmem:[%s9328 + $0x2c] sm:$0xf]
      %v9341 = vld [vmem:[%s9328 + $0x30] sm:$0xf]
      %v9342 = vld [vmem:[%s9328 + $0x34] sm:$0xf]
      %v9343 = vld [vmem:[%s9328 + $0x38] sm:$0xf]
      %v9344 = vld [vmem:[%s9328 + $0x3c] sm:$0xf]
      %v9361 = vunpack.c.l.b16 %v9329
      %v9362 = vunpack.c.l.b16 %v9330
      %v9363 = vunpack.c.l.b16 %v9331
      %v9364 = vunpack.c.l.b16 %v9332
      %v9365 = vunpack.c.l.b16 %v9333
      %v9366 = vunpack.c.l.b16 %v9334
      %v9367 = vunpack.c.l.b16 %v9335
      %v9368 = vunpack.c.l.b16 %v9336
      %v9369 = vunpack.c.l.b16 %v9337
      %v9370 = vunpack.c.l.b16 %v9338
      %v9371 = vunpack.c.l.b16 %v9339
      %v9372 = vunpack.c.l.b16 %v9340
      %v9373 = vunpack.c.l.b16 %v9341
      %v9374 = vunpack.c.l.b16 %v9342
      %v9375 = vunpack.c.l.b16 %v9343
      %v9376 = vunpack.c.l.b16 %v9344
      %v9377 = vpack.c.b16 %v9362, %v9361
      %v9378 = vpack.c.b16 %v9364, %v9363
      %v9379 = vpack.c.b16 %v9366, %v9365
      %v9380 = vpack.c.b16 %v9368, %v9367
      %v9381 = vpack.c.b16 %v9370, %v9369
      %v9382 = vpack.c.b16 %v9372, %v9371
      %v9383 = vpack.c.b16 %v9374, %v9373
      %v9384 = vpack.c.b16 %v9376, %v9375
      %9393 = vmatpush.bf16.msra.mxu0 %v9384
      %9394 = vmatpush.bf16.msra.mxu0 %v9383
      %9395 = vmatpush.bf16.msra.mxu0 %v9382
      %9396 = vmatpush.bf16.msra.mxu0 %v9381
      %9397 = vmatpush.bf16.msra.mxu0 %v9380
      %9398 = vmatpush.bf16.msra.mxu0 %v9379
      %9399 = vmatpush.bf16.msra.mxu0 %v9378
      %9400 = vmatpush.bf16.msra.mxu0 %v9377
      %9401 = vmatmul.bf16.gmra.mxu0 %v7652
      %v9402 = vpop.f32.mrf.mxu0
      %v9403 = vadd.f32 0.0, %v9402
      %v9404 = vpop.f32.mrf.mxu0
      %v9405 = vadd.f32 0.0, %v9404
      %9406 = vmatmul.bf16.gmra.mxu0 %v7653
      %v9407 = vpop.f32.mrf.mxu0
      %v9408 = vadd.f32 0.0, %v9407
      %v9409 = vpop.f32.mrf.mxu0
      %v9410 = vadd.f32 0.0, %v9409
      %9411 = vmatmul.bf16.gmra.mxu0 %v7654
      %v9412 = vpop.f32.mrf.mxu0
      %v9413 = vadd.f32 0.0, %v9412
      %v9414 = vpop.f32.mrf.mxu0
      %v9415 = vadd.f32 0.0, %v9414
      %9416 = vmatmul.bf16.gmra.mxu0 %v7655
      %v9417 = vpop.f32.mrf.mxu0
      %v9418 = vadd.f32 0.0, %v9417
      %v9419 = vpop.f32.mrf.mxu0
      %v9420 = vadd.f32 0.0, %v9419
      %9421 = vmatmul.bf16.gmra.mxu0 %v7656
      %v9422 = vpop.f32.mrf.mxu0
      %v9423 = vadd.f32 0.0, %v9422
      %v9424 = vpop.f32.mrf.mxu0
      %v9425 = vadd.f32 0.0, %v9424
      %9426 = vmatmul.bf16.gmra.mxu0 %v7657
      %v9427 = vpop.f32.mrf.mxu0
      %v9428 = vadd.f32 0.0, %v9427
      %v9429 = vpop.f32.mrf.mxu0
      %v9430 = vadd.f32 0.0, %v9429
      %9431 = vmatmul.bf16.gmra.mxu0 %v7658
      %v9432 = vpop.f32.mrf.mxu0
      %v9433 = vadd.f32 0.0, %v9432
      %v9434 = vpop.f32.mrf.mxu0
      %v9435 = vadd.f32 0.0, %v9434
      %9436 = vmatmul.bf16.gmra.mxu0 %v7659
      %v9437 = vpop.f32.mrf.mxu0
      %v9438 = vadd.f32 0.0, %v9437
      %v9439 = vpop.f32.mrf.mxu0
      %v9440 = vadd.f32 0.0, %v9439
      %9441 = vmatmul.bf16.gmra.mxu0 %v7660
      %v9442 = vpop.f32.mrf.mxu0
      %v9443 = vadd.f32 0.0, %v9442
      %v9444 = vpop.f32.mrf.mxu0
      %v9445 = vadd.f32 0.0, %v9444
      %9446 = vmatmul.bf16.gmra.mxu0 %v7661
      %v9447 = vpop.f32.mrf.mxu0
      %v9448 = vadd.f32 0.0, %v9447
      %v9449 = vpop.f32.mrf.mxu0
      %v9450 = vadd.f32 0.0, %v9449
      %9451 = vmatmul.bf16.gmra.mxu0 %v7662
      %v9452 = vpop.f32.mrf.mxu0
      %v9453 = vadd.f32 0.0, %v9452
      %v9454 = vpop.f32.mrf.mxu0
      %v9455 = vadd.f32 0.0, %v9454
      %9456 = vmatmul.bf16.gmra.mxu0 %v7663
      %v9457 = vpop.f32.mrf.mxu0
      %v9458 = vadd.f32 0.0, %v9457
      %v9459 = vpop.f32.mrf.mxu0
      %v9460 = vadd.f32 0.0, %v9459
      %9461 = vmatmul.bf16.gmra.mxu0 %v7664
      %v9462 = vpop.f32.mrf.mxu0
      %v9463 = vadd.f32 0.0, %v9462
      %v9464 = vpop.f32.mrf.mxu0
      %v9465 = vadd.f32 0.0, %v9464
      %9466 = vmatmul.bf16.gmra.mxu0 %v7665
      %v9467 = vpop.f32.mrf.mxu0
      %v9468 = vadd.f32 0.0, %v9467
      %v9469 = vpop.f32.mrf.mxu0
      %v9470 = vadd.f32 0.0, %v9469
      %9471 = vmatmul.bf16.gmra.mxu0 %v7666
      %v9472 = vpop.f32.mrf.mxu0
      %v9473 = vadd.f32 0.0, %v9472
      %v9474 = vpop.f32.mrf.mxu0
      %v9475 = vadd.f32 0.0, %v9474
      %9476 = vmatmul.bf16.gmra.mxu0 %v7667
      %v9477 = vpop.f32.mrf.mxu0
      %v9478 = vadd.f32 0.0, %v9477
      %v9479 = vpop.f32.mrf.mxu0
      %v9480 = vadd.f32 0.0, %v9479
      %9481 = vmatmul.bf16.gmra.mxu0 %v7668
      %v9482 = vpop.f32.mrf.mxu0
      %v9483 = vadd.f32 0.0, %v9482
      %v9484 = vpop.f32.mrf.mxu0
      %v9485 = vadd.f32 0.0, %v9484
      %9486 = vmatmul.bf16.gmra.mxu0 %v7669
      %v9487 = vpop.f32.mrf.mxu0
      %v9488 = vadd.f32 0.0, %v9487
      %v9489 = vpop.f32.mrf.mxu0
      %v9490 = vadd.f32 0.0, %v9489
      %9491 = vmatmul.bf16.gmra.mxu0 %v7670
      %v9492 = vpop.f32.mrf.mxu0
      %v9493 = vadd.f32 0.0, %v9492
      %v9494 = vpop.f32.mrf.mxu0
      %v9495 = vadd.f32 0.0, %v9494
      %9496 = vmatmul.bf16.gmra.mxu0 %v7671
      %v9497 = vpop.f32.mrf.mxu0
      %v9498 = vadd.f32 0.0, %v9497
      %v9499 = vpop.f32.mrf.mxu0
      %v9500 = vadd.f32 0.0, %v9499
      %9501 = vmatmul.bf16.gmra.mxu0 %v7672
      %v9502 = vpop.f32.mrf.mxu0
      %v9503 = vadd.f32 0.0, %v9502
      %v9504 = vpop.f32.mrf.mxu0
      %v9505 = vadd.f32 0.0, %v9504
      %9506 = vmatmul.bf16.gmra.mxu0 %v7673
      %v9507 = vpop.f32.mrf.mxu0
      %v9508 = vadd.f32 0.0, %v9507
      %v9509 = vpop.f32.mrf.mxu0
      %v9510 = vadd.f32 0.0, %v9509
      %9511 = vmatmul.bf16.gmra.mxu0 %v9325
      %v9512 = vpop.f32.mrf.mxu0
      %v9513 = vadd.f32 0.0, %v9512
      %v9514 = vpop.f32.mrf.mxu0
      %v9515 = vadd.f32 0.0, %v9514
      %9516 = vmatmul.bf16.gmra.mxu0 %v9326
      %v9517 = vpop.f32.mrf.mxu0
      %v9518 = vadd.f32 0.0, %v9517
      %v9519 = vpop.f32.mrf.mxu0
      %v9520 = vadd.f32 0.0, %v9519
      %9521 = vmatmul.bf16.gmra.mxu0 %v8488
      %v9522 = vpop.f32.mrf.mxu0
      %v9523 = vadd.f32 0.0, %v9522
      %v9524 = vpop.f32.mrf.mxu0
      %v9525 = vadd.f32 0.0, %v9524
      %9526 = vmatmul.bf16.gmra.mxu0 %v9327
      %v9527 = vpop.f32.mrf.mxu0
      %v9528 = vadd.f32 0.0, %v9527
      %v9529 = vpop.f32.mrf.mxu0
      %9530 = vdwg.mxu0
      %v9531 = vadd.f32 %v9274, %v9403
      %v9532 = vadd.f32 %v9275, %v9405
      %v9533 = vadd.f32 %v9276, %v9408
      %v9534 = vadd.f32 %v9277, %v9410
      %v9535 = vadd.f32 %v9278, %v9413
      %v9536 = vadd.f32 %v9279, %v9415
      %v9537 = vadd.f32 %v9280, %v9418
      %v9538 = vadd.f32 %v9281, %v9420
      %v9539 = vadd.f32 %v9282, %v9423
      %v9540 = vadd.f32 %v9283, %v9425
      %v9541 = vadd.f32 %v9284, %v9428
      %v9542 = vadd.f32 %v9285, %v9430
      %v9543 = vadd.f32 %v9286, %v9433
      %v9544 = vadd.f32 %v9287, %v9435
      %v9545 = vadd.f32 %v9288, %v9438
      %v9546 = vadd.f32 %v9289, %v9440
      %v9547 = vadd.f32 %v9290, %v9443
      %v9548 = vadd.f32 %v9291, %v9445
      %v9549 = vadd.f32 %v9292, %v9448
      %v9550 = vadd.f32 %v9293, %v9450
      %v9551 = vadd.f32 %v9294, %v9453
      %v9552 = vadd.f32 %v9295, %v9455
      %v9553 = vadd.f32 %v9296, %v9458
      %v9554 = vadd.f32 %v9297, %v9460
      %v9555 = vadd.f32 %v9298, %v9463
      %v9556 = vadd.f32 %v9299, %v9465
      %v9557 = vadd.f32 %v9300, %v9468
      %v9558 = vadd.f32 %v9301, %v9470
      %v9559 = vadd.f32 %v9302, %v9473
      %v9560 = vadd.f32 %v9303, %v9475
      %v9561 = vadd.f32 %v9304, %v9478
      %v9562 = vadd.f32 %v9305, %v9480
      %v9563 = vadd.f32 %v9306, %v9483
      %v9564 = vadd.f32 %v9307, %v9485
      %v9565 = vadd.f32 %v9308, %v9488
      %v9566 = vadd.f32 %v9309, %v9490
      %v9567 = vadd.f32 %v9310, %v9493
      %v9568 = vadd.f32 %v9311, %v9495
      %v9569 = vadd.f32 %v9312, %v9498
      %v9570 = vadd.f32 %v9313, %v9500
      %v9571 = vadd.f32 %v9314, %v9503
      %v9572 = vadd.f32 %v9315, %v9505
      %v9573 = vadd.f32 %v9316, %v9508
      %v9574 = vadd.f32 %v9317, %v9510
      %v9575 = vadd.f32 %v9318, %v9513
      %v9576 = vadd.f32 %v9319, %v9515
      %v9577 = vadd.f32 %v9320, %v9518
      %v9578 = vadd.f32 %v9321, %v9520
      %v9579 = vadd.f32 %v9322, %v9523
      %v9580 = vadd.f32 %v9323, %v9525
      %v9581 = vadd.f32 %v9324, %v9528
      %v9582 = vpack.c.bf16 %v7544, %v7543
      %v9583 = vpack.c.bf16 %v7546, %v7545
      %v9584 = vpack.c.bf16 %v7498, %v7498
      %s9585 = scalar_lea.vmem %s3, 448
      %v9586 = vld [vmem:[%s9585] sm:$0xf]
      %v9587 = vld [vmem:[%s9585 + $0x4] sm:$0xf]
      %v9588 = vld [vmem:[%s9585 + $0x8] sm:$0xf]
      %v9589 = vld [vmem:[%s9585 + $0xc] sm:$0xf]
      %v9590 = vld [vmem:[%s9585 + $0x10] sm:$0xf]
      %v9591 = vld [vmem:[%s9585 + $0x14] sm:$0xf]
      %v9592 = vld [vmem:[%s9585 + $0x18] sm:$0xf]
      %v9593 = vld [vmem:[%s9585 + $0x1c] sm:$0xf]
      %v9594 = vld [vmem:[%s9585 + $0x20] sm:$0xf]
      %v9595 = vld [vmem:[%s9585 + $0x24] sm:$0xf]
      %v9596 = vld [vmem:[%s9585 + $0x28] sm:$0xf]
      %v9597 = vld [vmem:[%s9585 + $0x2c] sm:$0xf]
      %v9598 = vld [vmem:[%s9585 + $0x30] sm:$0xf]
      %v9599 = vld [vmem:[%s9585 + $0x34] sm:$0xf]
      %v9600 = vld [vmem:[%s9585 + $0x38] sm:$0xf]
      %v9601 = vld [vmem:[%s9585 + $0x3c] sm:$0xf]
      %v9618 = vunpack.c.l.b16 %v9586
      %v9619 = vunpack.c.l.b16 %v9587
      %v9620 = vunpack.c.l.b16 %v9588
      %v9621 = vunpack.c.l.b16 %v9589
      %v9622 = vunpack.c.l.b16 %v9590
      %v9623 = vunpack.c.l.b16 %v9591
      %v9624 = vunpack.c.l.b16 %v9592
      %v9625 = vunpack.c.l.b16 %v9593
      %v9626 = vunpack.c.l.b16 %v9594
      %v9627 = vunpack.c.l.b16 %v9595
      %v9628 = vunpack.c.l.b16 %v9596
      %v9629 = vunpack.c.l.b16 %v9597
      %v9630 = vunpack.c.l.b16 %v9598
      %v9631 = vunpack.c.l.b16 %v9599
      %v9632 = vunpack.c.l.b16 %v9600
      %v9633 = vunpack.c.l.b16 %v9601
      %v9634 = vpack.c.b16 %v9619, %v9618
      %v9635 = vpack.c.b16 %v9621, %v9620
      %v9636 = vpack.c.b16 %v9623, %v9622
      %v9637 = vpack.c.b16 %v9625, %v9624
      %v9638 = vpack.c.b16 %v9627, %v9626
      %v9639 = vpack.c.b16 %v9629, %v9628
      %v9640 = vpack.c.b16 %v9631, %v9630
      %v9641 = vpack.c.b16 %v9633, %v9632
      %9650 = vmatpush.bf16.msra.mxu0 %v9641
      %9651 = vmatpush.bf16.msra.mxu0 %v9640
      %9652 = vmatpush.bf16.msra.mxu0 %v9639
      %9653 = vmatpush.bf16.msra.mxu0 %v9638
      %9654 = vmatpush.bf16.msra.mxu0 %v9637
      %9655 = vmatpush.bf16.msra.mxu0 %v9636
      %9656 = vmatpush.bf16.msra.mxu0 %v9635
      %9657 = vmatpush.bf16.msra.mxu0 %v9634
      %9658 = vmatmul.bf16.gmra.mxu0 %v7694
      %v9659 = vpop.f32.mrf.mxu0
      %v9660 = vadd.f32 0.0, %v9659
      %v9661 = vpop.f32.mrf.mxu0
      %v9662 = vadd.f32 0.0, %v9661
      %9663 = vmatmul.bf16.gmra.mxu0 %v7695
      %v9664 = vpop.f32.mrf.mxu0
      %v9665 = vadd.f32 0.0, %v9664
      %v9666 = vpop.f32.mrf.mxu0
      %v9667 = vadd.f32 0.0, %v9666
      %9668 = vmatmul.bf16.gmra.mxu0 %v7696
      %v9669 = vpop.f32.mrf.mxu0
      %v9670 = vadd.f32 0.0, %v9669
      %v9671 = vpop.f32.mrf.mxu0
      %v9672 = vadd.f32 0.0, %v9671
      %9673 = vmatmul.bf16.gmra.mxu0 %v7697
      %v9674 = vpop.f32.mrf.mxu0
      %v9675 = vadd.f32 0.0, %v9674
      %v9676 = vpop.f32.mrf.mxu0
      %v9677 = vadd.f32 0.0, %v9676
      %9678 = vmatmul.bf16.gmra.mxu0 %v7698
      %v9679 = vpop.f32.mrf.mxu0
      %v9680 = vadd.f32 0.0, %v9679
      %v9681 = vpop.f32.mrf.mxu0
      %v9682 = vadd.f32 0.0, %v9681
      %9683 = vmatmul.bf16.gmra.mxu0 %v7699
      %v9684 = vpop.f32.mrf.mxu0
      %v9685 = vadd.f32 0.0, %v9684
      %v9686 = vpop.f32.mrf.mxu0
      %v9687 = vadd.f32 0.0, %v9686
      %9688 = vmatmul.bf16.gmra.mxu0 %v7700
      %v9689 = vpop.f32.mrf.mxu0
      %v9690 = vadd.f32 0.0, %v9689
      %v9691 = vpop.f32.mrf.mxu0
      %v9692 = vadd.f32 0.0, %v9691
      %9693 = vmatmul.bf16.gmra.mxu0 %v7701
      %v9694 = vpop.f32.mrf.mxu0
      %v9695 = vadd.f32 0.0, %v9694
      %v9696 = vpop.f32.mrf.mxu0
      %v9697 = vadd.f32 0.0, %v9696
      %9698 = vmatmul.bf16.gmra.mxu0 %v7702
      %v9699 = vpop.f32.mrf.mxu0
      %v9700 = vadd.f32 0.0, %v9699
      %v9701 = vpop.f32.mrf.mxu0
      %v9702 = vadd.f32 0.0, %v9701
      %9703 = vmatmul.bf16.gmra.mxu0 %v7703
      %v9704 = vpop.f32.mrf.mxu0
      %v9705 = vadd.f32 0.0, %v9704
      %v9706 = vpop.f32.mrf.mxu0
      %v9707 = vadd.f32 0.0, %v9706
      %9708 = vmatmul.bf16.gmra.mxu0 %v7704
      %v9709 = vpop.f32.mrf.mxu0
      %v9710 = vadd.f32 0.0, %v9709
      %v9711 = vpop.f32.mrf.mxu0
      %v9712 = vadd.f32 0.0, %v9711
      %9713 = vmatmul.bf16.gmra.mxu0 %v7705
      %v9714 = vpop.f32.mrf.mxu0
      %v9715 = vadd.f32 0.0, %v9714
      %v9716 = vpop.f32.mrf.mxu0
      %v9717 = vadd.f32 0.0, %v9716
      %9718 = vmatmul.bf16.gmra.mxu0 %v7706
      %v9719 = vpop.f32.mrf.mxu0
      %v9720 = vadd.f32 0.0, %v9719
      %v9721 = vpop.f32.mrf.mxu0
      %v9722 = vadd.f32 0.0, %v9721
      %9723 = vmatmul.bf16.gmra.mxu0 %v7707
      %v9724 = vpop.f32.mrf.mxu0
      %v9725 = vadd.f32 0.0, %v9724
      %v9726 = vpop.f32.mrf.mxu0
      %v9727 = vadd.f32 0.0, %v9726
      %9728 = vmatmul.bf16.gmra.mxu0 %v7708
      %v9729 = vpop.f32.mrf.mxu0
      %v9730 = vadd.f32 0.0, %v9729
      %v9731 = vpop.f32.mrf.mxu0
      %v9732 = vadd.f32 0.0, %v9731
      %9733 = vmatmul.bf16.gmra.mxu0 %v7709
      %v9734 = vpop.f32.mrf.mxu0
      %v9735 = vadd.f32 0.0, %v9734
      %v9736 = vpop.f32.mrf.mxu0
      %v9737 = vadd.f32 0.0, %v9736
      %9738 = vmatmul.bf16.gmra.mxu0 %v7710
      %v9739 = vpop.f32.mrf.mxu0
      %v9740 = vadd.f32 0.0, %v9739
      %v9741 = vpop.f32.mrf.mxu0
      %v9742 = vadd.f32 0.0, %v9741
      %9743 = vmatmul.bf16.gmra.mxu0 %v7711
      %v9744 = vpop.f32.mrf.mxu0
      %v9745 = vadd.f32 0.0, %v9744
      %v9746 = vpop.f32.mrf.mxu0
      %v9747 = vadd.f32 0.0, %v9746
      %9748 = vmatmul.bf16.gmra.mxu0 %v7712
      %v9749 = vpop.f32.mrf.mxu0
      %v9750 = vadd.f32 0.0, %v9749
      %v9751 = vpop.f32.mrf.mxu0
      %v9752 = vadd.f32 0.0, %v9751
      %9753 = vmatmul.bf16.gmra.mxu0 %v7713
      %v9754 = vpop.f32.mrf.mxu0
      %v9755 = vadd.f32 0.0, %v9754
      %v9756 = vpop.f32.mrf.mxu0
      %v9757 = vadd.f32 0.0, %v9756
      %9758 = vmatmul.bf16.gmra.mxu0 %v7714
      %v9759 = vpop.f32.mrf.mxu0
      %v9760 = vadd.f32 0.0, %v9759
      %v9761 = vpop.f32.mrf.mxu0
      %v9762 = vadd.f32 0.0, %v9761
      %9763 = vmatmul.bf16.gmra.mxu0 %v7715
      %v9764 = vpop.f32.mrf.mxu0
      %v9765 = vadd.f32 0.0, %v9764
      %v9766 = vpop.f32.mrf.mxu0
      %v9767 = vadd.f32 0.0, %v9766
      %9768 = vmatmul.bf16.gmra.mxu0 %v9582
      %v9769 = vpop.f32.mrf.mxu0
      %v9770 = vadd.f32 0.0, %v9769
      %v9771 = vpop.f32.mrf.mxu0
      %v9772 = vadd.f32 0.0, %v9771
      %9773 = vmatmul.bf16.gmra.mxu0 %v9583
      %v9774 = vpop.f32.mrf.mxu0
      %v9775 = vadd.f32 0.0, %v9774
      %v9776 = vpop.f32.mrf.mxu0
      %v9777 = vadd.f32 0.0, %v9776
      %9778 = vmatmul.bf16.gmra.mxu0 %v8767
      %v9779 = vpop.f32.mrf.mxu0
      %v9780 = vadd.f32 0.0, %v9779
      %v9781 = vpop.f32.mrf.mxu0
      %v9782 = vadd.f32 0.0, %v9781
      %9783 = vmatmul.bf16.gmra.mxu0 %v9584
      %v9784 = vpop.f32.mrf.mxu0
      %v9785 = vadd.f32 0.0, %v9784
      %v9786 = vpop.f32.mrf.mxu0
      %9787 = vdwg.mxu0
      %v9788 = vadd.f32 %v9531, %v9660
      %v9789 = vadd.f32 %v9532, %v9662
      %v9790 = vadd.f32 %v9533, %v9665
      %v9791 = vadd.f32 %v9534, %v9667
      %v9792 = vadd.f32 %v9535, %v9670
      %v9793 = vadd.f32 %v9536, %v9672
      %v9794 = vadd.f32 %v9537, %v9675
      %v9795 = vadd.f32 %v9538, %v9677
      %v9796 = vadd.f32 %v9539, %v9680
      %v9797 = vadd.f32 %v9540, %v9682
      %v9798 = vadd.f32 %v9541, %v9685
      %v9799 = vadd.f32 %v9542, %v9687
      %v9800 = vadd.f32 %v9543, %v9690
      %v9801 = vadd.f32 %v9544, %v9692
      %v9802 = vadd.f32 %v9545, %v9695
      %v9803 = vadd.f32 %v9546, %v9697
      %v9804 = vadd.f32 %v9547, %v9700
      %v9805 = vadd.f32 %v9548, %v9702
      %v9806 = vadd.f32 %v9549, %v9705
      %v9807 = vadd.f32 %v9550, %v9707
      %v9808 = vadd.f32 %v9551, %v9710
      %v9809 = vadd.f32 %v9552, %v9712
      %v9810 = vadd.f32 %v9553, %v9715
      %v9811 = vadd.f32 %v9554, %v9717
      %v9812 = vadd.f32 %v9555, %v9720
      %v9813 = vadd.f32 %v9556, %v9722
      %v9814 = vadd.f32 %v9557, %v9725
      %v9815 = vadd.f32 %v9558, %v9727
      %v9816 = vadd.f32 %v9559, %v9730
      %v9817 = vadd.f32 %v9560, %v9732
      %v9818 = vadd.f32 %v9561, %v9735
      %v9819 = vadd.f32 %v9562, %v9737
      %v9820 = vadd.f32 %v9563, %v9740
      %v9821 = vadd.f32 %v9564, %v9742
      %v9822 = vadd.f32 %v9565, %v9745
      %v9823 = vadd.f32 %v9566, %v9747
      %v9824 = vadd.f32 %v9567, %v9750
      %v9825 = vadd.f32 %v9568, %v9752
      %v9826 = vadd.f32 %v9569, %v9755
      %v9827 = vadd.f32 %v9570, %v9757
      %v9828 = vadd.f32 %v9571, %v9760
      %v9829 = vadd.f32 %v9572, %v9762
      %v9830 = vadd.f32 %v9573, %v9765
      %v9831 = vadd.f32 %v9574, %v9767
      %v9832 = vadd.f32 %v9575, %v9770
      %v9833 = vadd.f32 %v9576, %v9772
      %v9834 = vadd.f32 %v9577, %v9775
      %v9835 = vadd.f32 %v9578, %v9777
      %v9836 = vadd.f32 %v9579, %v9780
      %v9837 = vadd.f32 %v9580, %v9782
      %v9838 = vadd.f32 %v9581, %v9785
      %v9839 = vpack.c.bf16 %v8158, %v8159
      %v9840 = vpack.c.bf16 %v8207, %v8157
      %v9841 = vpack.c.bf16 %v8204, %v8204
      %s9842 = scalar_lea.vmem %s3, 512
      %v9843 = vld [vmem:[%s9842] sm:$0xf]
      %v9844 = vld [vmem:[%s9842 + $0x4] sm:$0xf]
      %v9845 = vld [vmem:[%s9842 + $0x8] sm:$0xf]
      %v9846 = vld [vmem:[%s9842 + $0xc] sm:$0xf]
      %v9847 = vld [vmem:[%s9842 + $0x10] sm:$0xf]
      %v9848 = vld [vmem:[%s9842 + $0x14] sm:$0xf]
      %v9849 = vld [vmem:[%s9842 + $0x18] sm:$0xf]
      %v9850 = vld [vmem:[%s9842 + $0x1c] sm:$0xf]
      %v9851 = vld [vmem:[%s9842 + $0x20] sm:$0xf]
      %v9852 = vld [vmem:[%s9842 + $0x24] sm:$0xf]
      %v9853 = vld [vmem:[%s9842 + $0x28] sm:$0xf]
      %v9854 = vld [vmem:[%s9842 + $0x2c] sm:$0xf]
      %v9855 = vld [vmem:[%s9842 + $0x30] sm:$0xf]
      %v9856 = vld [vmem:[%s9842 + $0x34] sm:$0xf]
      %v9857 = vld [vmem:[%s9842 + $0x38] sm:$0xf]
      %v9858 = vld [vmem:[%s9842 + $0x3c] sm:$0xf]
      %v9875 = vunpack.c.l.b16 %v9843
      %v9876 = vunpack.c.l.b16 %v9844
      %v9877 = vunpack.c.l.b16 %v9845
      %v9878 = vunpack.c.l.b16 %v9846
      %v9879 = vunpack.c.l.b16 %v9847
      %v9880 = vunpack.c.l.b16 %v9848
      %v9881 = vunpack.c.l.b16 %v9849
      %v9882 = vunpack.c.l.b16 %v9850
      %v9883 = vunpack.c.l.b16 %v9851
      %v9884 = vunpack.c.l.b16 %v9852
      %v9885 = vunpack.c.l.b16 %v9853
      %v9886 = vunpack.c.l.b16 %v9854
      %v9887 = vunpack.c.l.b16 %v9855
      %v9888 = vunpack.c.l.b16 %v9856
      %v9889 = vunpack.c.l.b16 %v9857
      %v9890 = vunpack.c.l.b16 %v9858
      %v9891 = vpack.c.b16 %v9876, %v9875
      %v9892 = vpack.c.b16 %v9878, %v9877
      %v9893 = vpack.c.b16 %v9880, %v9879
      %v9894 = vpack.c.b16 %v9882, %v9881
      %v9895 = vpack.c.b16 %v9884, %v9883
      %v9896 = vpack.c.b16 %v9886, %v9885
      %v9897 = vpack.c.b16 %v9888, %v9887
      %v9898 = vpack.c.b16 %v9890, %v9889
      %9907 = vmatpush.bf16.msra.mxu0 %v9898
      %9908 = vmatpush.bf16.msra.mxu0 %v9897
      %9909 = vmatpush.bf16.msra.mxu0 %v9896
      %9910 = vmatpush.bf16.msra.mxu0 %v9895
      %9911 = vmatpush.bf16.msra.mxu0 %v9894
      %9912 = vmatpush.bf16.msra.mxu0 %v9893
      %9913 = vmatpush.bf16.msra.mxu0 %v9892
      %9914 = vmatpush.bf16.msra.mxu0 %v9891
      %9915 = vmatmul.bf16.gmra.mxu0 %v8211
      %v9916 = vpop.f32.mrf.mxu0
      %v9917 = vadd.f32 0.0, %v9916
      %v9918 = vpop.f32.mrf.mxu0
      %v9919 = vadd.f32 0.0, %v9918
      %9920 = vmatmul.bf16.gmra.mxu0 %v8212
      %v9921 = vpop.f32.mrf.mxu0
      %v9922 = vadd.f32 0.0, %v9921
      %v9923 = vpop.f32.mrf.mxu0
      %v9924 = vadd.f32 0.0, %v9923
      %9925 = vmatmul.bf16.gmra.mxu0 %v8213
      %v9926 = vpop.f32.mrf.mxu0
      %v9927 = vadd.f32 0.0, %v9926
      %v9928 = vpop.f32.mrf.mxu0
      %v9929 = vadd.f32 0.0, %v9928
      %9930 = vmatmul.bf16.gmra.mxu0 %v8214
      %v9931 = vpop.f32.mrf.mxu0
      %v9932 = vadd.f32 0.0, %v9931
      %v9933 = vpop.f32.mrf.mxu0
      %v9934 = vadd.f32 0.0, %v9933
      %9935 = vmatmul.bf16.gmra.mxu0 %v8215
      %v9936 = vpop.f32.mrf.mxu0
      %v9937 = vadd.f32 0.0, %v9936
      %v9938 = vpop.f32.mrf.mxu0
      %v9939 = vadd.f32 0.0, %v9938
      %9940 = vmatmul.bf16.gmra.mxu0 %v8216
      %v9941 = vpop.f32.mrf.mxu0
      %v9942 = vadd.f32 0.0, %v9941
      %v9943 = vpop.f32.mrf.mxu0
      %v9944 = vadd.f32 0.0, %v9943
      %9945 = vmatmul.bf16.gmra.mxu0 %v8217
      %v9946 = vpop.f32.mrf.mxu0
      %v9947 = vadd.f32 0.0, %v9946
      %v9948 = vpop.f32.mrf.mxu0
      %v9949 = vadd.f32 0.0, %v9948
      %9950 = vmatmul.bf16.gmra.mxu0 %v8218
      %v9951 = vpop.f32.mrf.mxu0
      %v9952 = vadd.f32 0.0, %v9951
      %v9953 = vpop.f32.mrf.mxu0
      %v9954 = vadd.f32 0.0, %v9953
      %9955 = vmatmul.bf16.gmra.mxu0 %v8219
      %v9956 = vpop.f32.mrf.mxu0
      %v9957 = vadd.f32 0.0, %v9956
      %v9958 = vpop.f32.mrf.mxu0
      %v9959 = vadd.f32 0.0, %v9958
      %9960 = vmatmul.bf16.gmra.mxu0 %v8220
      %v9961 = vpop.f32.mrf.mxu0
      %v9962 = vadd.f32 0.0, %v9961
      %v9963 = vpop.f32.mrf.mxu0
      %v9964 = vadd.f32 0.0, %v9963
      %9965 = vmatmul.bf16.gmra.mxu0 %v8221
      %v9966 = vpop.f32.mrf.mxu0
      %v9967 = vadd.f32 0.0, %v9966
      %v9968 = vpop.f32.mrf.mxu0
      %v9969 = vadd.f32 0.0, %v9968
      %9970 = vmatmul.bf16.gmra.mxu0 %v8222
      %v9971 = vpop.f32.mrf.mxu0
      %v9972 = vadd.f32 0.0, %v9971
      %v9973 = vpop.f32.mrf.mxu0
      %v9974 = vadd.f32 0.0, %v9973
      %9975 = vmatmul.bf16.gmra.mxu0 %v8223
      %v9976 = vpop.f32.mrf.mxu0
      %v9977 = vadd.f32 0.0, %v9976
      %v9978 = vpop.f32.mrf.mxu0
      %v9979 = vadd.f32 0.0, %v9978
      %9980 = vmatmul.bf16.gmra.mxu0 %v8224
      %v9981 = vpop.f32.mrf.mxu0
      %v9982 = vadd.f32 0.0, %v9981
      %v9983 = vpop.f32.mrf.mxu0
      %v9984 = vadd.f32 0.0, %v9983
      %9985 = vmatmul.bf16.gmra.mxu0 %v8225
      %v9986 = vpop.f32.mrf.mxu0
      %v9987 = vadd.f32 0.0, %v9986
      %v9988 = vpop.f32.mrf.mxu0
      %v9989 = vadd.f32 0.0, %v9988
      %9990 = vmatmul.bf16.gmra.mxu0 %v8226
      %v9991 = vpop.f32.mrf.mxu0
      %v9992 = vadd.f32 0.0, %v9991
      %v9993 = vpop.f32.mrf.mxu0
      %v9994 = vadd.f32 0.0, %v9993
      %9995 = vmatmul.bf16.gmra.mxu0 %v8227
      %v9996 = vpop.f32.mrf.mxu0
      %v9997 = vadd.f32 0.0, %v9996
      %v9998 = vpop.f32.mrf.mxu0
      %v9999 = vadd.f32 0.0, %v9998
      %10000 = vmatmul.bf16.gmra.mxu0 %v8228
      %v10001 = vpop.f32.mrf.mxu0
      %v10002 = vadd.f32 0.0, %v10001
      %v10003 = vpop.f32.mrf.mxu0
      %v10004 = vadd.f32 0.0, %v10003
      %10005 = vmatmul.bf16.gmra.mxu0 %v8229
      %v10006 = vpop.f32.mrf.mxu0
      %v10007 = vadd.f32 0.0, %v10006
      %v10008 = vpop.f32.mrf.mxu0
      %v10009 = vadd.f32 0.0, %v10008
      %10010 = vmatmul.bf16.gmra.mxu0 %v8230
      %v10011 = vpop.f32.mrf.mxu0
      %v10012 = vadd.f32 0.0, %v10011
      %v10013 = vpop.f32.mrf.mxu0
      %v10014 = vadd.f32 0.0, %v10013
      %10015 = vmatmul.bf16.gmra.mxu0 %v8231
      %v10016 = vpop.f32.mrf.mxu0
      %v10017 = vadd.f32 0.0, %v10016
      %v10018 = vpop.f32.mrf.mxu0
      %v10019 = vadd.f32 0.0, %v10018
      %10020 = vmatmul.bf16.gmra.mxu0 %v8232
      %v10021 = vpop.f32.mrf.mxu0
      %v10022 = vadd.f32 0.0, %v10021
      %v10023 = vpop.f32.mrf.mxu0
      %v10024 = vadd.f32 0.0, %v10023
      %10025 = vmatmul.bf16.gmra.mxu0 %v9839
      %v10026 = vpop.f32.mrf.mxu0
      %v10027 = vadd.f32 0.0, %v10026
      %v10028 = vpop.f32.mrf.mxu0
      %v10029 = vadd.f32 0.0, %v10028
      %10030 = vmatmul.bf16.gmra.mxu0 %v9840
      %v10031 = vpop.f32.mrf.mxu0
      %v10032 = vadd.f32 0.0, %v10031
      %v10033 = vpop.f32.mrf.mxu0
      %v10034 = vadd.f32 0.0, %v10033
      %10035 = vmatmul.bf16.gmra.mxu0 %v9046
      %v10036 = vpop.f32.mrf.mxu0
      %v10037 = vadd.f32 0.0, %v10036
      %v10038 = vpop.f32.mrf.mxu0
      %v10039 = vadd.f32 0.0, %v10038
      %10040 = vmatmul.bf16.gmra.mxu0 %v9841
      %v10041 = vpop.f32.mrf.mxu0
      %v10042 = vadd.f32 0.0, %v10041
      %v10043 = vpop.f32.mrf.mxu0
      %10044 = vdwg.mxu0
      %v10045 = vadd.f32 %v9788, %v9917
      %v10046 = vadd.f32 %v9789, %v9919
      %v10047 = vadd.f32 %v9790, %v9922
      %v10048 = vadd.f32 %v9791, %v9924
      %v10049 = vadd.f32 %v9792, %v9927
      %v10050 = vadd.f32 %v9793, %v9929
      %v10051 = vadd.f32 %v9794, %v9932
      %v10052 = vadd.f32 %v9795, %v9934
      %v10053 = vadd.f32 %v9796, %v9937
      %v10054 = vadd.f32 %v9797, %v9939
      %v10055 = vadd.f32 %v9798, %v9942
      %v10056 = vadd.f32 %v9799, %v9944
      %v10057 = vadd.f32 %v9800, %v9947
      %v10058 = vadd.f32 %v9801, %v9949
      %v10059 = vadd.f32 %v9802, %v9952
      %v10060 = vadd.f32 %v9803, %v9954
      %v10061 = vadd.f32 %v9804, %v9957
      %v10062 = vadd.f32 %v9805, %v9959
      %v10063 = vadd.f32 %v9806, %v9962
      %v10064 = vadd.f32 %v9807, %v9964
      %v10065 = vadd.f32 %v9808, %v9967
      %v10066 = vadd.f32 %v9809, %v9969
      %v10067 = vadd.f32 %v9810, %v9972
      %v10068 = vadd.f32 %v9811, %v9974
      %v10069 = vadd.f32 %v9812, %v9977
      %v10070 = vadd.f32 %v9813, %v9979
      %v10071 = vadd.f32 %v9814, %v9982
      %v10072 = vadd.f32 %v9815, %v9984
      %v10073 = vadd.f32 %v9816, %v9987
      %v10074 = vadd.f32 %v9817, %v9989
      %v10075 = vadd.f32 %v9818, %v9992
      %v10076 = vadd.f32 %v9819, %v9994
      %v10077 = vadd.f32 %v9820, %v9997
      %v10078 = vadd.f32 %v9821, %v9999
      %v10079 = vadd.f32 %v9822, %v10002
      %v10080 = vadd.f32 %v9823, %v10004
      %v10081 = vadd.f32 %v9824, %v10007
      %v10082 = vadd.f32 %v9825, %v10009
      %v10083 = vadd.f32 %v9826, %v10012
      %v10084 = vadd.f32 %v9827, %v10014
      %v10085 = vadd.f32 %v9828, %v10017
      %v10086 = vadd.f32 %v9829, %v10019
      %v10087 = vadd.f32 %v9830, %v10022
      %v10088 = vadd.f32 %v9831, %v10024
      %v10089 = vadd.f32 %v9832, %v10027
      %v10090 = vadd.f32 %v9833, %v10029
      %v10091 = vadd.f32 %v9834, %v10032
      %v10092 = vadd.f32 %v9835, %v10034
      %v10093 = vadd.f32 %v9836, %v10037
      %v10094 = vadd.f32 %v9837, %v10039
      %v10095 = vadd.f32 %v9838, %v10042
      %v10096 = vld [vmem:[%s4] sm:$0x1]
      %v10098 = vperm.slane %v10096, 0
      %v10100 = vadd.f32 %v10045, %v10098
      %v10101 = vadd.f32 %v10046, %v10098
      %v10102 = vadd.f32 %v10047, %v10098
      %v10103 = vadd.f32 %v10048, %v10098
      %v10104 = vadd.f32 %v10049, %v10098
      %v10105 = vadd.f32 %v10050, %v10098
      %v10106 = vadd.f32 %v10051, %v10098
      %v10107 = vadd.f32 %v10052, %v10098
      %v10108 = vadd.f32 %v10053, %v10098
      %v10109 = vadd.f32 %v10054, %v10098
      %v10110 = vadd.f32 %v10055, %v10098
      %v10111 = vadd.f32 %v10056, %v10098
      %v10112 = vadd.f32 %v10057, %v10098
      %v10113 = vadd.f32 %v10058, %v10098
      %v10114 = vadd.f32 %v10059, %v10098
      %v10115 = vadd.f32 %v10060, %v10098
      %v10116 = vadd.f32 %v10061, %v10098
      %v10117 = vadd.f32 %v10062, %v10098
      %v10118 = vadd.f32 %v10063, %v10098
      %v10119 = vadd.f32 %v10064, %v10098
      %v10120 = vadd.f32 %v10065, %v10098
      %v10121 = vadd.f32 %v10066, %v10098
      %v10122 = vadd.f32 %v10067, %v10098
      %v10123 = vadd.f32 %v10068, %v10098
      %v10124 = vadd.f32 %v10069, %v10098
      %v10125 = vadd.f32 %v10070, %v10098
      %v10126 = vadd.f32 %v10071, %v10098
      %v10127 = vadd.f32 %v10072, %v10098
      %v10128 = vadd.f32 %v10073, %v10098
      %v10129 = vadd.f32 %v10074, %v10098
      %v10130 = vadd.f32 %v10075, %v10098
      %v10131 = vadd.f32 %v10076, %v10098
      %v10132 = vadd.f32 %v10077, %v10098
      %v10133 = vadd.f32 %v10078, %v10098
      %v10134 = vadd.f32 %v10079, %v10098
      %v10135 = vadd.f32 %v10080, %v10098
      %v10136 = vadd.f32 %v10081, %v10098
      %v10137 = vadd.f32 %v10082, %v10098
      %v10138 = vadd.f32 %v10083, %v10098
      %v10139 = vadd.f32 %v10084, %v10098
      %v10140 = vadd.f32 %v10085, %v10098
      %v10141 = vadd.f32 %v10086, %v10098
      %v10142 = vadd.f32 %v10087, %v10098
      %v10143 = vadd.f32 %v10088, %v10098
      %v10144 = vadd.f32 %v10089, %v10098
      %v10145 = vadd.f32 %v10090, %v10098
      %v10146 = vadd.f32 %v10091, %v10098
      %v10147 = vadd.f32 %v10092, %v10098
      %v10148 = vadd.f32 %v10093, %v10098
      %v10149 = vadd.f32 %v10094, %v10098
      %v10150 = vadd.f32 %v10095, %v10098
      %v10151 = vmax.f32 %v10100, 0.0
      %v10152 = vmax.f32 %v10101, 0.0
      %v10153 = vmax.f32 %v10102, 0.0
      %v10154 = vmax.f32 %v10103, 0.0
      %v10155 = vmax.f32 %v10104, 0.0
      %v10156 = vmax.f32 %v10105, 0.0
      %v10157 = vmax.f32 %v10106, 0.0
      %v10158 = vmax.f32 %v10107, 0.0
      %v10159 = vmax.f32 %v10108, 0.0
      %v10160 = vmax.f32 %v10109, 0.0
      %v10161 = vmax.f32 %v10110, 0.0
      %v10162 = vmax.f32 %v10111, 0.0
      %v10163 = vmax.f32 %v10112, 0.0
      %v10164 = vmax.f32 %v10113, 0.0
      %v10165 = vmax.f32 %v10114, 0.0
      %v10166 = vmax.f32 %v10115, 0.0
      %v10167 = vmax.f32 %v10116, 0.0
      %v10168 = vmax.f32 %v10117, 0.0
      %v10169 = vmax.f32 %v10118, 0.0
      %v10170 = vmax.f32 %v10119, 0.0
      %v10171 = vmax.f32 %v10120, 0.0
      %v10172 = vmax.f32 %v10121, 0.0
      %v10173 = vmax.f32 %v10122, 0.0
      %v10174 = vmax.f32 %v10123, 0.0
      %v10175 = vmax.f32 %v10124, 0.0
      %v10176 = vmax.f32 %v10125, 0.0
      %v10177 = vmax.f32 %v10126, 0.0
      %v10178 = vmax.f32 %v10127, 0.0
      %v10179 = vmax.f32 %v10128, 0.0
      %v10180 = vmax.f32 %v10129, 0.0
      %v10181 = vmax.f32 %v10130, 0.0
      %v10182 = vmax.f32 %v10131, 0.0
      %v10183 = vmax.f32 %v10132, 0.0
      %v10184 = vmax.f32 %v10133, 0.0
      %v10185 = vmax.f32 %v10134, 0.0
      %v10186 = vmax.f32 %v10135, 0.0
      %v10187 = vmax.f32 %v10136, 0.0
      %v10188 = vmax.f32 %v10137, 0.0
      %v10189 = vmax.f32 %v10138, 0.0
      %v10190 = vmax.f32 %v10139, 0.0
      %v10191 = vmax.f32 %v10140, 0.0
      %v10192 = vmax.f32 %v10141, 0.0
      %v10193 = vmax.f32 %v10142, 0.0
      %v10194 = vmax.f32 %v10143, 0.0
      %v10195 = vmax.f32 %v10144, 0.0
      %v10196 = vmax.f32 %v10145, 0.0
      %v10197 = vmax.f32 %v10146, 0.0
      %v10198 = vmax.f32 %v10147, 0.0
      %v10199 = vmax.f32 %v10148, 0.0
      %v10200 = vmax.f32 %v10149, 0.0
      %v10201 = vmax.f32 %v10150, 0.0
      %v10202 = vmul.f32 %v253, %v10151
      %v10203 = vmul.f32 %v254, %v10152
      %v10204 = vmul.f32 %v255, %v10153
      %v10205 = vmul.f32 %v256, %v10154
      %v10206 = vmul.f32 %v257, %v10155
      %v10207 = vmul.f32 %v258, %v10156
      %v10208 = vmul.f32 %v256, %v10157
      %v10209 = vmul.f32 %v257, %v10158
      %v10210 = vmul.f32 %v258, %v10159
      %v10211 = vmul.f32 %v256, %v10160
      %v10212 = vmul.f32 %v257, %v10161
      %v10213 = vmul.f32 %v258, %v10162
      %v10214 = vmul.f32 %v256, %v10163
      %v10215 = vmul.f32 %v257, %v10164
      %v10216 = vmul.f32 %v258, %v10165
      %v10217 = vmul.f32 %v256, %v10166
      %v10218 = vmul.f32 %v257, %v10167
      %v10219 = vmul.f32 %v258, %v10168
      %v10220 = vmul.f32 %v256, %v10169
      %v10221 = vmul.f32 %v257, %v10170
      %v10222 = vmul.f32 %v258, %v10171
      %v10223 = vmul.f32 %v256, %v10172
      %v10224 = vmul.f32 %v257, %v10173
      %v10225 = vmul.f32 %v258, %v10174
      %v10226 = vmul.f32 %v256, %v10175
      %v10227 = vmul.f32 %v257, %v10176
      %v10228 = vmul.f32 %v258, %v10177
      %v10229 = vmul.f32 %v256, %v10178
      %v10230 = vmul.f32 %v257, %v10179
      %v10231 = vmul.f32 %v258, %v10180
      %v10232 = vmul.f32 %v256, %v10181
      %v10233 = vmul.f32 %v257, %v10182
      %v10234 = vmul.f32 %v258, %v10183
      %v10235 = vmul.f32 %v256, %v10184
      %v10236 = vmul.f32 %v257, %v10185
      %v10237 = vmul.f32 %v258, %v10186
      %v10238 = vmul.f32 %v256, %v10187
      %v10239 = vmul.f32 %v257, %v10188
      %v10240 = vmul.f32 %v258, %v10189
      %v10241 = vmul.f32 %v256, %v10190
      %v10242 = vmul.f32 %v257, %v10191
      %v10243 = vmul.f32 %v258, %v10192
      %v10244 = vmul.f32 %v256, %v10193
      %v10245 = vmul.f32 %v257, %v10194
      %v10246 = vmul.f32 %v258, %v10195
      %v10247 = vmul.f32 %v256, %v10196
      %v10248 = vmul.f32 %v257, %v10197
      %v10249 = vmul.f32 %v258, %v10198
      %v10250 = vmul.f32 %v253, %v10199
      %v10251 = vmul.f32 %v254, %v10200
      %v10252 = vmul.f32 %v255, %v10201
      %v10253 = vpack.c.bf16 %v10202, %v10202
      %v10254 = vpack.c.bf16 %v10203, %v10203
      %v10255 = vpack.c.bf16 %v10204, %v10204
      %v10256 = vpack.c.bf16 %v10205, %v10205
      %v10257 = vpack.c.bf16 %v10206, %v10206
      %v10258 = vpack.c.bf16 %v10207, %v10207
      %v10259 = vpack.c.bf16 %v10208, %v10208
      %v10260 = vpack.c.bf16 %v10209, %v10209
      %v10261 = vpack.c.bf16 %v10210, %v10210
      %v10262 = vpack.c.bf16 %v10211, %v10211
      %v10263 = vpack.c.bf16 %v10212, %v10212
      %v10264 = vpack.c.bf16 %v10213, %v10213
      %v10265 = vpack.c.bf16 %v10214, %v10214
      %v10266 = vpack.c.bf16 %v10215, %v10215
      %v10267 = vpack.c.bf16 %v10216, %v10216
      %v10268 = vpack.c.bf16 %v10217, %v10217
      %v10269 = vpack.c.bf16 %v10218, %v10218
      %v10270 = vpack.c.bf16 %v10219, %v10219
      %v10271 = vpack.c.bf16 %v10220, %v10220
      %v10272 = vpack.c.bf16 %v10221, %v10221
      %v10273 = vpack.c.bf16 %v10222, %v10222
      %v10274 = vpack.c.bf16 %v10223, %v10223
      %v10275 = vpack.c.bf16 %v10224, %v10224
      %v10276 = vpack.c.bf16 %v10225, %v10225
      %v10277 = vpack.c.bf16 %v10226, %v10226
      %v10278 = vpack.c.bf16 %v10227, %v10227
      %v10279 = vpack.c.bf16 %v10228, %v10228
      %v10280 = vpack.c.bf16 %v10229, %v10229
      %v10281 = vpack.c.bf16 %v10230, %v10230
      %v10282 = vpack.c.bf16 %v10231, %v10231
      %v10283 = vpack.c.bf16 %v10232, %v10232
      %v10284 = vpack.c.bf16 %v10233, %v10233
      %v10285 = vpack.c.bf16 %v10234, %v10234
      %v10286 = vpack.c.bf16 %v10235, %v10235
      %v10287 = vpack.c.bf16 %v10236, %v10236
      %v10288 = vpack.c.bf16 %v10237, %v10237
      %v10289 = vpack.c.bf16 %v10238, %v10238
      %v10290 = vpack.c.bf16 %v10239, %v10239
      %v10291 = vpack.c.bf16 %v10240, %v10240
      %v10292 = vpack.c.bf16 %v10241, %v10241
      %v10293 = vpack.c.bf16 %v10242, %v10242
      %v10294 = vpack.c.bf16 %v10243, %v10243
      %v10295 = vpack.c.bf16 %v10244, %v10244
      %v10296 = vpack.c.bf16 %v10245, %v10245
      %v10297 = vpack.c.bf16 %v10246, %v10246
      %v10298 = vpack.c.bf16 %v10247, %v10247
      %v10299 = vpack.c.bf16 %v10248, %v10248
      %v10300 = vpack.c.bf16 %v10249, %v10249
      %v10301 = vpack.c.bf16 %v10250, %v10250
      %v10302 = vpack.c.bf16 %v10251, %v10251
      %v10303 = vpack.c.bf16 %v10252, %v10252
      %10304 = vst [vmem:[%s224] sm:$0xf] %v10253
      %10305 = vst [vmem:[%s224 + $0x4] sm:$0xf] %v10254
      %10306 = vst [vmem:[%s224 + $0x8] sm:$0xf] %v10255
      %10307 = vst [vmem:[%s224 + $0xc] sm:$0xf] %v10256
      %10308 = vst [vmem:[%s224 + $0x10] sm:$0xf] %v10257
      %10309 = vst [vmem:[%s224 + $0x14] sm:$0xf] %v10258
      %10310 = vst [vmem:[%s224 + $0x18] sm:$0xf] %v10259
      %10311 = vst [vmem:[%s224 + $0x1c] sm:$0xf] %v10260
      %10312 = vst [vmem:[%s224 + $0x20] sm:$0xf] %v10261
      %10313 = vst [vmem:[%s224 + $0x24] sm:$0xf] %v10262
      %10314 = vst [vmem:[%s224 + $0x28] sm:$0xf] %v10263
      %10315 = vst [vmem:[%s224 + $0x2c] sm:$0xf] %v10264
      %10316 = vst [vmem:[%s224 + $0x30] sm:$0xf] %v10265
      %10317 = vst [vmem:[%s224 + $0x34] sm:$0xf] %v10266
      %10318 = vst [vmem:[%s224 + $0x38] sm:$0xf] %v10267
      %10319 = vst [vmem:[%s224 + $0x3c] sm:$0xf] %v10268
      %10320 = vst [vmem:[%s224 + $0x40] sm:$0xf] %v10269
      %10321 = vst [vmem:[%s224 + $0x44] sm:$0xf] %v10270
      %10322 = vst [vmem:[%s224 + $0x48] sm:$0xf] %v10271
      %10323 = vst [vmem:[%s224 + $0x4c] sm:$0xf] %v10272
      %10324 = vst [vmem:[%s224 + $0x50] sm:$0xf] %v10273
      %10325 = vst [vmem:[%s224 + $0x54] sm:$0xf] %v10274
      %10326 = vst [vmem:[%s224 + $0x58] sm:$0xf] %v10275
      %10327 = vst [vmem:[%s224 + $0x5c] sm:$0xf] %v10276
      %10328 = vst [vmem:[%s224 + $0x60] sm:$0xf] %v10277
      %10329 = vst [vmem:[%s224 + $0x64] sm:$0xf] %v10278
      %10330 = vst [vmem:[%s224 + $0x68] sm:$0xf] %v10279
      %10331 = vst [vmem:[%s224 + $0x6c] sm:$0xf] %v10280
      %10332 = vst [vmem:[%s224 + $0x70] sm:$0xf] %v10281
      %10333 = vst [vmem:[%s224 + $0x74] sm:$0xf] %v10282
      %10334 = vst [vmem:[%s224 + $0x78] sm:$0xf] %v10283
      %10335 = vst [vmem:[%s224 + $0x7c] sm:$0xf] %v10284
      %10336 = vst [vmem:[%s224 + $0x80] sm:$0xf] %v10285
      %10337 = vst [vmem:[%s224 + $0x84] sm:$0xf] %v10286
      %10338 = vst [vmem:[%s224 + $0x88] sm:$0xf] %v10287
      %10339 = vst [vmem:[%s224 + $0x8c] sm:$0xf] %v10288
      %10340 = vst [vmem:[%s224 + $0x90] sm:$0xf] %v10289
      %10341 = vst [vmem:[%s224 + $0x94] sm:$0xf] %v10290
      %10342 = vst [vmem:[%s224 + $0x98] sm:$0xf] %v10291
      %10343 = vst [vmem:[%s224 + $0x9c] sm:$0xf] %v10292
      %10344 = vst [vmem:[%s224 + $0xa0] sm:$0xf] %v10293
      %10345 = vst [vmem:[%s224 + $0xa4] sm:$0xf] %v10294
      %10346 = vst [vmem:[%s224 + $0xa8] sm:$0xf] %v10295
      %10347 = vst [vmem:[%s224 + $0xac] sm:$0xf] %v10296
      %10348 = vst [vmem:[%s224 + $0xb0] sm:$0xf] %v10297
      %10349 = vst [vmem:[%s224 + $0xb4] sm:$0xf] %v10298
      %10350 = vst [vmem:[%s224 + $0xb8] sm:$0xf] %v10299
      %10351 = vst [vmem:[%s224 + $0xbc] sm:$0xf] %v10300
      %10352 = vst [vmem:[%s224 + $0xc0] sm:$0xf] %v10301
      %10353 = vst [vmem:[%s224 + $0xc4] sm:$0xf] %v10302
      %10354 = vst [vmem:[%s224 + $0xc8] sm:$0xf] %v10303
      %p10355 = scmp.lt.s32.totalorder %s16, 1
      %s10356 = scalar_select %p10355, %s16, 1
      %s10357 = smul.addr %s10356, 51
      %s10358 = smul.addr %s10357, 4
      %s10359 = scalar_lea.vmem %s5, %s10358
      // Predicated region
      $region41: #{hhn_sconvb_forward.2} parent=39 // pred_check
        %p10360 = pneg %p144
      $region42: #{hhn_sconvb_forward.2} parent=39 // pred_check_branch
        %10362 = sbr.rel (%p10360) target = $region44
      $region43: #{hhn_sconvb_forward.2} parent=39 // pred_region
        _
      $region44: #{hhn_sconvb_forward.2} parent=39 // pred_fallthru
        _
    $region40: #{hhn_sconvb_forward.2} parent=5 // pred_fallthru
      _
    %p10363 = scmp.le.s32.totalorder 2, %s11
    // Predicated region
    $region45: #{hhn_sconvb_forward.2} parent=5 // pred_check
      %p10364 = pneg %p10363
    $region46: #{hhn_sconvb_forward.2} parent=5 // pred_check_branch
      %10366 = sbr.rel (%p10364) target = $region48
    $region47: #{hhn_sconvb_forward.2} parent=5 // pred_region
      %s10367 = ssub.s32 %s11, 2
      // Predicated region
      $region49: #{hhn_sconvb_forward.2} parent=47 // pred_check
        %p10368 = pneg %p150
      $region50: #{hhn_sconvb_forward.2} parent=47 // pred_check_branch
        %10370 = sbr.rel (%p10368) target = $region52
      $region51: #{hhn_sconvb_forward.2} parent=47 // pred_region
        %p10371 = scmp.lt.s32.totalorder %s17, 1
        %s10372 = scalar_select %p10371, %s17, 1
        %s10373 = smul.addr %s10372, 51
        %s10374 = smul.addr %s10373, 4
        %s10375 = scalar_lea.vmem %s5, %s10374
      $region52: #{hhn_sconvb_forward.2} parent=47 // pred_fallthru
        _
    $region48: #{hhn_sconvb_forward.2} parent=5 // pred_fallthru
      _
  $region6: #{hhn_sconvb_forward.2} parent=0 // loop_footer
    %s15 = sadd.s32 1, %s11
  $region7: #{hhn_sconvb_forward.2} parent=0 // loop_footer_branch
    %10 = sbr.rel target = $region3
  $region8: #{hhn_sconvb_forward.2} parent=0 // loop_exit
    _

</llo_original>
